<compile_context>
chip_gen: v5e
topology: v5e:2x2
jax: 0.10.0
libtpu: 0.0.40
codegen_flags: <defaults>
</compile_context>

<pallas_src>
import functools

import jax
import jax.numpy as jnp
from jax.experimental import pallas as pl
from jax.experimental.pallas import tpu as pltpu

KSIZE = 5
C1_OUT = 20        # conv1 output channels (torch layout)
C2_OUT = 50        # conv2 output channels (torch layout)
FC1_OUT = 500
C1_PAD = 32        # conv1 channels padded -> conv2 im2col K = 25*32 = 800
C2_PAD = 64        # conv2 channels padded -> FC1 input K = 16*64 = 1024
FC1_PAD = 512      # FC1 width padded -> lane-dense hidden, 16-aligned K for FC2


def _round_up(n, m):
    return ((n + m - 1) // m) * m


# ---------------------------------------------------------------------------
# The single fused kernel
# ---------------------------------------------------------------------------

def _lenet5_kernel(p1_ref, w1_ref, b1_ref, w2_ref, b2_ref, w3_ref, b3_ref,
                   w4_ref, b4_ref, out_ref, pool1_ref, *, batch, bpad):
    """Fused LeNet-5 forward.  All refs are whole-array VMEM blocks.

    p1_ref : (16 * 36 * bpad, kpad) bf16 parity-decomposed im2col of the input.
             Block index = (py*2+px)*4 + (qy*2+qx) where (py,px) is the 2x2 pool-window
             position and (qy,qx) the parity of the pooled position (P,Q)=(2Ys+qy,2Xs+qx).
             Within a block: row = (Ys*6 + Xs)*bpad + b   (spatial-major, batch-minor).
    """
    assert bpad % 8 == 0
    blk = 36 * bpad        # rows of one (qy,qx) pool1 parity block
    span = 4 * blk         # rows of one (py,px) group of p1 / z
    rows2 = 22 * bpad      # rows of one conv2-output-parity slab (T = Y2s*6 + X2s <= 21)

    # -------- conv1: one matmul over all 16 parity blocks, pool fused as a max ------
    z = jnp.dot(p1_ref[...], w1_ref[...], preferred_element_type=jnp.float32)
    pooled = jnp.maximum(jnp.maximum(z[0 * span:1 * span], z[1 * span:2 * span]),
                         jnp.maximum(z[2 * span:3 * span], z[3 * span:4 * span]))
    pool1_ref[...] = jnp.maximum(pooled + b1_ref[...], 0.0)
    # pool1_ref layout: parity (qy,qx) block at offset (qy*2+qx)*blk, row = t*bpad + b
    # with t = Ys*6 + Xs (Ys, Xs in [0,6)), channels padded to C1_PAD (pad lanes == 0).

    # -------- conv2: single im2col slab (all slices 8-row aligned) + one K=800 dot ---
    par_slabs = []
    for p2y in range(2):
        for p2x in range(2):
            pieces = []
            for i in range(KSIZE):
                for j in range(KSIZE):
                    ry, dy = (p2y + i) % 2, (p2y + i) // 2
                    rx, dx = (p2x + j) % 2, (p2x + j) // 2
                    s0 = (ry * 2 + rx) * blk + (dy * 6 + dx) * bpad
                    # max read = (14 + 22) * bpad == 36 * bpad: exactly fits the block.
                    pieces.append(pool1_ref[pl.ds(s0, rows2), :])
            par_slabs.append(jnp.concatenate(pieces, axis=1))       # (rows2, 25*C1_PAD)
    slab = jnp.concatenate(par_slabs, axis=0).astype(jnp.bfloat16)  # (4*rows2, 800)
    conv2 = jnp.dot(slab, w2_ref[...], preferred_element_type=jnp.float32)
    conv2 = jnp.maximum(conv2 + b2_ref[...], 0.0)
    pool2 = jnp.maximum(
        jnp.maximum(conv2[0 * rows2:1 * rows2], conv2[1 * rows2:2 * rows2]),
        jnp.maximum(conv2[2 * rows2:3 * rows2], conv2[3 * rows2:4 * rows2]))
    # pool2 row layout: (Y2s*6 + X2s)*bpad + b, valid for Y2s, X2s in [0,4).

    # -------- classifier: FC1 as one K=1024 matmul, FC2, softmax ---------------------
    fc_pieces = []
    for y2 in range(4):
        for x2 in range(4):
            t = y2 * 6 + x2
            fc_pieces.append(pool2[t * bpad:(t + 1) * bpad, :])      # (bpad, C2_PAD)
    fc_in = jnp.concatenate(fc_pieces, axis=1).astype(jnp.bfloat16)  # (bpad, 1024)
    h = jnp.dot(fc_in, w3_ref[...], preferred_element_type=jnp.float32)
    h = jnp.maximum(h + b3_ref[...], 0.0)                            # (bpad, 512)

    logits = jnp.dot(h.astype(jnp.bfloat16), w4_ref[...],
                     preferred_element_type=jnp.float32) + b4_ref[...]
    m = jnp.max(logits, axis=-1, keepdims=True)
    e = jnp.exp(logits - m)
    s = jnp.sum(e, axis=-1, keepdims=True)
    # Exact reciprocal (approx=True would break the sum-to-1 check at 1e-5).
    out_ref[...] = (e * pl.reciprocal(s, approx=False))[:batch]


# ---------------------------------------------------------------------------
# Parameter handling (one-time packing) and input glue
# ---------------------------------------------------------------------------

def init_params(key, in_channel, out_size):
    """PyTorch-default-style init U(-1/sqrt(fan_in), +1/sqrt(fan_in)), torch layouts."""
    def uniform(k, shape, fan_in):
        bound = 1.0 / jnp.sqrt(fan_in)
        return jax.random.uniform(k, shape, jnp.float32, -bound, bound)

    ks = jax.random.split(key, 8)
    fan1 = in_channel * KSIZE * KSIZE
    fan2 = C1_OUT * KSIZE * KSIZE
    return {
        "w1": uniform(ks[0], (C1_OUT, in_channel, KSIZE, KSIZE), fan1),
        "b1": uniform(ks[1], (C1_OUT,), fan1),
        "w2": uniform(ks[2], (C2_OUT, C1_OUT, KSIZE, KSIZE), fan2),
        "b2": uniform(ks[3], (C2_OUT,), fan2),
        "w3": uniform(ks[4], (FC1_OUT, 800), 800),
        "b3": uniform(ks[5], (FC1_OUT,), 800),
        "w4": uniform(ks[6], (out_size, FC1_OUT), FC1_OUT),
        "b4": uniform(ks[7], (out_size,), FC1_OUT),
    }


def pack_params(params):
    """One-time repack: bf16 matmul weights, pre-transposed/flattened, channel dims
    zero-padded to C1_PAD / C2_PAD / FC1_PAD so kernel slices are lane-regular."""
    c1_out, in_channel, k, _ = params["w1"].shape
    kdim = in_channel * k * k
    kpad = _round_up(kdim, 16)
    bf = jnp.bfloat16

    w1 = params["w1"].reshape(c1_out, kdim).T                         # (kdim, 20)
    w1 = jnp.pad(w1, ((0, kpad - kdim), (0, C1_PAD - c1_out)))        # (kpad, 32)

    w2 = params["w2"].transpose(2, 3, 1, 0)                           # (5,5,20,50) [i,j,c,o]
    w2 = jnp.pad(w2, ((0, 0), (0, 0), (0, C1_PAD - C1_OUT), (0, C2_PAD - C2_OUT)))
    w2 = w2.reshape(KSIZE * KSIZE * C1_PAD, C2_PAD)                   # (800, 64)

    w3 = params["w3"].reshape(FC1_OUT, C2_OUT, 4, 4).transpose(2, 3, 1, 0)  # [y,x,c,n]
    w3 = w3.reshape(16, C2_OUT, FC1_OUT)
    w3 = jnp.pad(w3, ((0, 0), (0, C2_PAD - C2_OUT), (0, FC1_PAD - FC1_OUT)))
    w3 = w3.reshape(16 * C2_PAD, FC1_PAD)                             # (1024, 512)

    w4 = jnp.pad(params["w4"].T, ((0, FC1_PAD - FC1_OUT), (0, 0)))    # (512, out)

    return {
        "w1": w1.astype(bf),
        "b1": jnp.pad(params["b1"], (0, C1_PAD - c1_out)).reshape(1, -1),
        "w2": w2.astype(bf),
        "b2": jnp.pad(params["b2"], (0, C2_PAD - C2_OUT)).reshape(1, -1),
        "w3": w3.astype(bf),
        "b3": jnp.pad(params["b3"], (0, FC1_PAD - FC1_OUT)).reshape(1, -1),
        "w4": w4.astype(bf),
        "b4": params["b4"].reshape(1, -1),
    }


def _build_conv1_blocks(x, kpad, bpad):
    """Parity-decomposed im2col of the network input (tiny wrapper-side glue).

    Returns (16 * 36 * bpad, kpad) bf16; row layout documented in _lenet5_kernel.
    """
    B, C, H, _ = x.shape
    oh = H - KSIZE + 1                                                # 24
    cols = []
    for c in range(C):
        for i in range(KSIZE):
            for j in range(KSIZE):
                cols.append(x[:, c, i:i + oh, j:j + oh])
    patches = jnp.stack(cols, axis=-1)                                # (B, 24, 24, C*25)
    kdim = patches.shape[-1]
    blocks = []
    for py in range(2):
        for px in range(2):
            for qy in range(2):
                for qx in range(2):
                    blk = patches[:, 2 * qy + py::4, 2 * qx + px::4, :]   # (B, 6, 6, kdim)
                    blk = blk.reshape(B, 36, kdim).transpose(1, 0, 2)     # (36, B, kdim)
                    blk = jnp.pad(blk, ((0, 0), (0, bpad - B), (0, kpad - kdim)))
                    blocks.append(blk.reshape(36 * bpad, kpad))
    return jnp.concatenate(blocks, axis=0).astype(jnp.bfloat16)


def lenet5_forward(packed, x):
    """x: (B, C, 28, 28) f32 NCHW -> (B, out_size) softmax probabilities."""
    B = x.shape[0]
    bpad = _round_up(B, 8)
    kpad = packed["w1"].shape[0]
    out_size = packed["w4"].shape[1]
    p1 = _build_conv1_blocks(x, kpad, bpad)

    in_specs = [pl.BlockSpec(memory_space=pltpu.MemorySpace.VMEM) for _ in range(9)]
    return pl.pallas_call(
        functools.partial(_lenet5_kernel, batch=B, bpad=bpad),
        out_shape=jax.ShapeDtypeStruct((B, out_size), jnp.float32),
        in_specs=in_specs,
        out_specs=pl.BlockSpec(memory_space=pltpu.MemorySpace.VMEM),
        scratch_shapes=[pltpu.VMEM((4 * 36 * bpad, C1_PAD), jnp.float32)],
    )(p1, packed["w1"], packed["b1"], packed["w2"], packed["b2"],
      packed["w3"], packed["b3"], packed["w4"], packed["b4"])


# ---------------------------------------------------------------------------
# Plain-JAX reference (for a correctness cross-check)
# ---------------------------------------------------------------------------

def lenet5_reference(params, x):
    hp = jax.lax.Precision.HIGHEST

    def conv_relu(h, w, b):
        h = jax.lax.conv_general_dilated(
            h, w, window_strides=(1, 1), padding="VALID",
            dimension_numbers=("NCHW", "OIHW", "NCHW"), precision=hp)
        return jax.nn.relu(h + b[None, :, None, None])

    def pool(h):
        return jax.lax.reduce_window(h, -jnp.inf, jax.lax.max,
                                     (1, 1, 2, 2), (1, 1, 2, 2), "VALID")

    h = pool(conv_relu(x, params["w1"], params["b1"]))
    h = pool(conv_relu(h, params["w2"], params["b2"]))
    h = h.reshape(h.shape[0], -1)
    h = jax.nn.relu(jnp.dot(h, params["w3"].T, precision=hp) + params["b3"])
    logits = jnp.dot(h, params["w4"].T, precision=hp) + params["b4"]
    return jax.nn.softmax(logits, axis=-1)


if __name__ == "__main__":
    # Linear(800, 500) pins the geometry: 28 -> conv5 -> 24 -> pool -> 12 -> conv5 -> 8
    # -> pool -> 4, with 50 * 4 * 4 = 800.
    batch, in_channel, img_size, out_size = 2, 1, 28, 10

    key = jax.random.PRNGKey(0)
    k_param, k_input = jax.random.split(key)
    params = init_params(k_param, in_channel, out_size)
    packed = pack_params(params)
    x = jax.random.normal(k_input, (batch, in_channel, img_size, img_size), jnp.float32)

    out = jax.block_until_ready(jax.jit(lenet5_forward)(packed, x))

    assert out.shape == (batch, out_size)
    assert bool(jnp.all(jnp.abs(jnp.sum(out, axis=-1) - 1.0) < 1e-5))

    ref = jax.block_until_ready(jax.jit(lenet5_reference)(params, x))
    # Loose tolerance: matmul operands are bf16 (reference runs at HIGHEST precision).
    assert bool(jnp.max(jnp.abs(out - ref)) < 3e-2), "kernel disagrees with reference"

    print("KERNEL_OK")
</pallas_src>

<mosaic_0001>
module attributes {stable_mosaic.version = 11 : i64} {
  func.func @_lenet5_kernel(%arg0: memref<4608x32xbf16, #tpu.memory_space<vmem>>, %arg1: memref<32x32xbf16, #tpu.memory_space<vmem>>, %arg2: memref<1x32xf32, #tpu.memory_space<vmem>>, %arg3: memref<800x64xbf16, #tpu.memory_space<vmem>>, %arg4: memref<1x64xf32, #tpu.memory_space<vmem>>, %arg5: memref<1024x512xbf16, #tpu.memory_space<vmem>>, %arg6: memref<1x512xf32, #tpu.memory_space<vmem>>, %arg7: memref<512x10xbf16, #tpu.memory_space<vmem>>, %arg8: memref<1x10xf32, #tpu.memory_space<vmem>>, %arg9: memref<2x10xf32, #tpu.memory_space<vmem>>, %arg10: memref<1152x32xf32, #tpu.memory_space<vmem>>) attributes {dimension_semantics = [], scalar_prefetch = 0 : i64, scratch_operands = 1 : i64, tpu.core_type = #tpu.core_type<tc>} {
    %c0 = arith.constant 0 : index
    %c0_0 = arith.constant 0 : index
    %0 = vector.load %arg0[%c0, %c0_0] : memref<4608x32xbf16, #tpu.memory_space<vmem>>, vector<4608x32xbf16>
    %c0_1 = arith.constant 0 : index
    %c0_2 = arith.constant 0 : index
    %1 = vector.load %arg1[%c0_1, %c0_2] : memref<32x32xbf16, #tpu.memory_space<vmem>>, vector<32x32xbf16>
    %cst = arith.constant dense<0.000000e+00> : vector<4608x32xf32>
    %2 = tpu.matmul %0, %1, %cst {dimension_numbers = #tpu.dot_dimension_numbers<[1], [0], [0], [1], [0, 0, 1, 1], [], []>} : vector<4608x32xbf16>, vector<32x32xbf16>, vector<4608x32xf32> -> vector<4608x32xf32>
    %3 = vector.extract_strided_slice %2 {offsets = [0, 0], sizes = [1152, 32], strides = [1, 1]} : vector<4608x32xf32> to vector<1152x32xf32>
    %4 = vector.extract_strided_slice %2 {offsets = [1152, 0], sizes = [1152, 32], strides = [1, 1]} : vector<4608x32xf32> to vector<1152x32xf32>
    %5 = arith.maximumf %3, %4 : vector<1152x32xf32>
    %6 = vector.extract_strided_slice %2 {offsets = [2304, 0], sizes = [1152, 32], strides = [1, 1]} : vector<4608x32xf32> to vector<1152x32xf32>
    %7 = vector.extract_strided_slice %2 {offsets = [3456, 0], sizes = [1152, 32], strides = [1, 1]} : vector<4608x32xf32> to vector<1152x32xf32>
    %8 = arith.maximumf %6, %7 : vector<1152x32xf32>
    %9 = arith.maximumf %5, %8 : vector<1152x32xf32>
    %c0_3 = arith.constant 0 : index
    %c0_4 = arith.constant 0 : index
    %10 = vector.load %arg2[%c0_3, %c0_4] : memref<1x32xf32, #tpu.memory_space<vmem>>, vector<1x32xf32>
    %11 = vector.broadcast %10 : vector<1x32xf32> to vector<1152x32xf32>
    %12 = arith.addf %9, %11 : vector<1152x32xf32>
    %cst_5 = arith.constant 0.000000e+00 : f32
    %13 = vector.broadcast %cst_5 : f32 to vector<1152x32xf32>
    %14 = arith.maximumf %12, %13 : vector<1152x32xf32>
    %c0_6 = arith.constant 0 : index
    %c0_7 = arith.constant 0 : index
    %15 = vector.load %arg10[%c0_6, %c0_7] : memref<1152x32xf32, #tpu.memory_space<vmem>>, vector<1152x32xf32>
    tpu.vector_store %arg10[%c0_6, %c0_7], %14 {strides = array<i32>} : memref<1152x32xf32, #tpu.memory_space<vmem>>, vector<1152x32xf32>,
    %c0_8 = arith.constant 0 : index
    %c0_9 = arith.constant 0 : index
    %16 = vector.load %arg10[%c0_8, %c0_9] : memref<1152x32xf32, #tpu.memory_space<vmem>>, vector<176x32xf32>
    %c288 = arith.constant 288 : index
    %c0_10 = arith.constant 0 : index
    %17 = vector.load %arg10[%c288, %c0_10] : memref<1152x32xf32, #tpu.memory_space<vmem>>, vector<176x32xf32>
    %c8 = arith.constant 8 : index
    %c0_11 = arith.constant 0 : index
    %18 = vector.load %arg10[%c8, %c0_11] : memref<1152x32xf32, #tpu.memory_space<vmem>>, vector<176x32xf32>
    %c296 = arith.constant 296 : index
    %c0_12 = arith.constant 0 : index
    %19 = vector.load %arg10[%c296, %c0_12] : memref<1152x32xf32, #tpu.memory_space<vmem>>, vector<176x32xf32>
    %c16 = arith.constant 16 : index
    %c0_13 = arith.constant 0 : index
    %20 = vector.load %arg10[%c16, %c0_13] : memref<1152x32xf32, #tpu.memory_space<vmem>>, vector<176x32xf32>
    %c576 = arith.constant 576 : index
    %c0_14 = arith.constant 0 : index
    %21 = vector.load %arg10[%c576, %c0_14] : memref<1152x32xf32, #tpu.memory_space<vmem>>, vector<176x32xf32>
    %c864 = arith.constant 864 : index
    %c0_15 = arith.constant 0 : index
    %22 = vector.load %arg10[%c864, %c0_15] : memref<1152x32xf32, #tpu.memory_space<vmem>>, vector<176x32xf32>
    %c584 = arith.constant 584 : index
    %c0_16 = arith.constant 0 : index
    %23 = vector.load %arg10[%c584, %c0_16] : memref<1152x32xf32, #tpu.memory_space<vmem>>, vector<176x32xf32>
    %c872 = arith.constant 872 : index
    %c0_17 = arith.constant 0 : index
    %24 = vector.load %arg10[%c872, %c0_17] : memref<1152x32xf32, #tpu.memory_space<vmem>>, vector<176x32xf32>
    %c592 = arith.constant 592 : index
    %c0_18 = arith.constant 0 : index
    %25 = vector.load %arg10[%c592, %c0_18] : memref<1152x32xf32, #tpu.memory_space<vmem>>, vector<176x32xf32>
    %c48 = arith.constant 48 : index
    %c0_19 = arith.constant 0 : index
    %26 = vector.load %arg10[%c48, %c0_19] : memref<1152x32xf32, #tpu.memory_space<vmem>>, vector<176x32xf32>
    %c336 = arith.constant 336 : index
    %c0_20 = arith.constant 0 : index
    %27 = vector.load %arg10[%c336, %c0_20] : memref<1152x32xf32, #tpu.memory_space<vmem>>, vector<176x32xf32>
    %c56 = arith.constant 56 : index
    %c0_21 = arith.constant 0 : index
    %28 = vector.load %arg10[%c56, %c0_21] : memref<1152x32xf32, #tpu.memory_space<vmem>>, vector<176x32xf32>
    %c344 = arith.constant 344 : index
    %c0_22 = arith.constant 0 : index
    %29 = vector.load %arg10[%c344, %c0_22] : memref<1152x32xf32, #tpu.memory_space<vmem>>, vector<176x32xf32>
    %c64 = arith.constant 64 : index
    %c0_23 = arith.constant 0 : index
    %30 = vector.load %arg10[%c64, %c0_23] : memref<1152x32xf32, #tpu.memory_space<vmem>>, vector<176x32xf32>
    %c624 = arith.constant 624 : index
    %c0_24 = arith.constant 0 : index
    %31 = vector.load %arg10[%c624, %c0_24] : memref<1152x32xf32, #tpu.memory_space<vmem>>, vector<176x32xf32>
    %c912 = arith.constant 912 : index
    %c0_25 = arith.constant 0 : index
    %32 = vector.load %arg10[%c912, %c0_25] : memref<1152x32xf32, #tpu.memory_space<vmem>>, vector<176x32xf32>
    %c632 = arith.constant 632 : index
    %c0_26 = arith.constant 0 : index
    %33 = vector.load %arg10[%c632, %c0_26] : memref<1152x32xf32, #tpu.memory_space<vmem>>, vector<176x32xf32>
    %c920 = arith.constant 920 : index
    %c0_27 = arith.constant 0 : index
    %34 = vector.load %arg10[%c920, %c0_27] : memref<1152x32xf32, #tpu.memory_space<vmem>>, vector<176x32xf32>
    %c640 = arith.constant 640 : index
    %c0_28 = arith.constant 0 : index
    %35 = vector.load %arg10[%c640, %c0_28] : memref<1152x32xf32, #tpu.memory_space<vmem>>, vector<176x32xf32>
    %c96 = arith.constant 96 : index
    %c0_29 = arith.constant 0 : index
    %36 = vector.load %arg10[%c96, %c0_29] : memref<1152x32xf32, #tpu.memory_space<vmem>>, vector<176x32xf32>
    %c384 = arith.constant 384 : index
    %c0_30 = arith.constant 0 : index
    %37 = vector.load %arg10[%c384, %c0_30] : memref<1152x32xf32, #tpu.memory_space<vmem>>, vector<176x32xf32>
    %c104 = arith.constant 104 : index
    %c0_31 = arith.constant 0 : index
    %38 = vector.load %arg10[%c104, %c0_31] : memref<1152x32xf32, #tpu.memory_space<vmem>>, vector<176x32xf32>
    %c392 = arith.constant 392 : index
    %c0_32 = arith.constant 0 : index
    %39 = vector.load %arg10[%c392, %c0_32] : memref<1152x32xf32, #tpu.memory_space<vmem>>, vector<176x32xf32>
    %c112 = arith.constant 112 : index
    %c0_33 = arith.constant 0 : index
    %40 = vector.load %arg10[%c112, %c0_33] : memref<1152x32xf32, #tpu.memory_space<vmem>>, vector<176x32xf32>
    %41 = tpu.concatenate %16, %17, %18, %19, %20, %21, %22, %23, %24, %25, %26, %27, %28, %29, %30, %31 in 1 : vector<176x32xf32>, vector<176x32xf32>, vector<176x32xf32>, vector<176x32xf32>, vector<176x32xf32>, vector<176x32xf32>, vector<176x32xf32>, vector<176x32xf32>, vector<176x32xf32>, vector<176x32xf32>, vector<176x32xf32>, vector<176x32xf32>, vector<176x32xf32>, vector<176x32xf32>, vector<176x32xf32>, vector<176x32xf32> -> vector<176x512xf32>
    %42 = tpu.concatenate %32, %33, %34, %35, %36, %37, %38, %39, %40 in 1 : vector<176x32xf32>, vector<176x32xf32>, vector<176x32xf32>, vector<176x32xf32>, vector<176x32xf32>, vector<176x32xf32>, vector<176x32xf32>, vector<176x32xf32>, vector<176x32xf32> -> vector<176x288xf32>
    %43 = tpu.concatenate %41, %42 in 1 : vector<176x512xf32>, vector<176x288xf32> -> vector<176x800xf32>
    %c288_34 = arith.constant 288 : index
    %c0_35 = arith.constant 0 : index
    %44 = vector.load %arg10[%c288_34, %c0_35] : memref<1152x32xf32, #tpu.memory_space<vmem>>, vector<176x32xf32>
    %c8_36 = arith.constant 8 : index
    %c0_37 = arith.constant 0 : index
    %45 = vector.load %arg10[%c8_36, %c0_37] : memref<1152x32xf32, #tpu.memory_space<vmem>>, vector<176x32xf32>
    %c296_38 = arith.constant 296 : index
    %c0_39 = arith.constant 0 : index
    %46 = vector.load %arg10[%c296_38, %c0_39] : memref<1152x32xf32, #tpu.memory_space<vmem>>, vector<176x32xf32>
    %c16_40 = arith.constant 16 : index
    %c0_41 = arith.constant 0 : index
    %47 = vector.load %arg10[%c16_40, %c0_41] : memref<1152x32xf32, #tpu.memory_space<vmem>>, vector<176x32xf32>
    %c304 = arith.constant 304 : index
    %c0_42 = arith.constant 0 : index
    %48 = vector.load %arg10[%c304, %c0_42] : memref<1152x32xf32, #tpu.memory_space<vmem>>, vector<176x32xf32>
    %c864_43 = arith.constant 864 : index
    %c0_44 = arith.constant 0 : index
    %49 = vector.load %arg10[%c864_43, %c0_44] : memref<1152x32xf32, #tpu.memory_space<vmem>>, vector<176x32xf32>
    %c584_45 = arith.constant 584 : index
    %c0_46 = arith.constant 0 : index
    %50 = vector.load %arg10[%c584_45, %c0_46] : memref<1152x32xf32, #tpu.memory_space<vmem>>, vector<176x32xf32>
    %c872_47 = arith.constant 872 : index
    %c0_48 = arith.constant 0 : index
    %51 = vector.load %arg10[%c872_47, %c0_48] : memref<1152x32xf32, #tpu.memory_space<vmem>>, vector<176x32xf32>
    %c592_49 = arith.constant 592 : index
    %c0_50 = arith.constant 0 : index
    %52 = vector.load %arg10[%c592_49, %c0_50] : memref<1152x32xf32, #tpu.memory_space<vmem>>, vector<176x32xf32>
    %c880 = arith.constant 880 : index
    %c0_51 = arith.constant 0 : index
    %53 = vector.load %arg10[%c880, %c0_51] : memref<1152x32xf32, #tpu.memory_space<vmem>>, vector<176x32xf32>
    %c336_52 = arith.constant 336 : index
    %c0_53 = arith.constant 0 : index
    %54 = vector.load %arg10[%c336_52, %c0_53] : memref<1152x32xf32, #tpu.memory_space<vmem>>, vector<176x32xf32>
    %c56_54 = arith.constant 56 : index
    %c0_55 = arith.constant 0 : index
    %55 = vector.load %arg10[%c56_54, %c0_55] : memref<1152x32xf32, #tpu.memory_space<vmem>>, vector<176x32xf32>
    %c344_56 = arith.constant 344 : index
    %c0_57 = arith.constant 0 : index
    %56 = vector.load %arg10[%c344_56, %c0_57] : memref<1152x32xf32, #tpu.memory_space<vmem>>, vector<176x32xf32>
    %c64_58 = arith.constant 64 : index
    %c0_59 = arith.constant 0 : index
    %57 = vector.load %arg10[%c64_58, %c0_59] : memref<1152x32xf32, #tpu.memory_space<vmem>>, vector<176x32xf32>
    %c352 = arith.constant 352 : index
    %c0_60 = arith.constant 0 : index
    %58 = vector.load %arg10[%c352, %c0_60] : memref<1152x32xf32, #tpu.memory_space<vmem>>, vector<176x32xf32>
    %c912_61 = arith.constant 912 : index
    %c0_62 = arith.constant 0 : index
    %59 = vector.load %arg10[%c912_61, %c0_62] : memref<1152x32xf32, #tpu.memory_space<vmem>>, vector<176x32xf32>
    %c632_63 = arith.constant 632 : index
    %c0_64 = arith.constant 0 : index
    %60 = vector.load %arg10[%c632_63, %c0_64] : memref<1152x32xf32, #tpu.memory_space<vmem>>, vector<176x32xf32>
    %c920_65 = arith.constant 920 : index
    %c0_66 = arith.constant 0 : index
    %61 = vector.load %arg10[%c920_65, %c0_66] : memref<1152x32xf32, #tpu.memory_space<vmem>>, vector<176x32xf32>
    %c640_67 = arith.constant 640 : index
    %c0_68 = arith.constant 0 : index
    %62 = vector.load %arg10[%c640_67, %c0_68] : memref<1152x32xf32, #tpu.memory_space<vmem>>, vector<176x32xf32>
    %c928 = arith.constant 928 : index
    %c0_69 = arith.constant 0 : index
    %63 = vector.load %arg10[%c928, %c0_69] : memref<1152x32xf32, #tpu.memory_space<vmem>>, vector<176x32xf32>
    %c384_70 = arith.constant 384 : index
    %c0_71 = arith.constant 0 : index
    %64 = vector.load %arg10[%c384_70, %c0_71] : memref<1152x32xf32, #tpu.memory_space<vmem>>, vector<176x32xf32>
    %c104_72 = arith.constant 104 : index
    %c0_73 = arith.constant 0 : index
    %65 = vector.load %arg10[%c104_72, %c0_73] : memref<1152x32xf32, #tpu.memory_space<vmem>>, vector<176x32xf32>
    %c392_74 = arith.constant 392 : index
    %c0_75 = arith.constant 0 : index
    %66 = vector.load %arg10[%c392_74, %c0_75] : memref<1152x32xf32, #tpu.memory_space<vmem>>, vector<176x32xf32>
    %c112_76 = arith.constant 112 : index
    %c0_77 = arith.constant 0 : index
    %67 = vector.load %arg10[%c112_76, %c0_77] : memref<1152x32xf32, #tpu.memory_space<vmem>>, vector<176x32xf32>
    %c400 = arith.constant 400 : index
    %c0_78 = arith.constant 0 : index
    %68 = vector.load %arg10[%c400, %c0_78] : memref<1152x32xf32, #tpu.memory_space<vmem>>, vector<176x32xf32>
    %69 = tpu.concatenate %44, %45, %46, %47, %48, %49, %50, %51, %52, %53, %54, %55, %56, %57, %58, %59 in 1 : vector<176x32xf32>, vector<176x32xf32>, vector<176x32xf32>, vector<176x32xf32>, vector<176x32xf32>, vector<176x32xf32>, vector<176x32xf32>, vector<176x32xf32>, vector<176x32xf32>, vector<176x32xf32>, vector<176x32xf32>, vector<176x32xf32>, vector<176x32xf32>, vector<176x32xf32>, vector<176x32xf32>, vector<176x32xf32> -> vector<176x512xf32>
    %70 = tpu.concatenate %60, %61, %62, %63, %64, %65, %66, %67, %68 in 1 : vector<176x32xf32>, vector<176x32xf32>, vector<176x32xf32>, vector<176x32xf32>, vector<176x32xf32>, vector<176x32xf32>, vector<176x32xf32>, vector<176x32xf32>, vector<176x32xf32> -> vector<176x288xf32>
    %71 = tpu.concatenate %69, %70 in 1 : vector<176x512xf32>, vector<176x288xf32> -> vector<176x800xf32>
    %c576_79 = arith.constant 576 : index
    %c0_80 = arith.constant 0 : index
    %72 = vector.load %arg10[%c576_79, %c0_80] : memref<1152x32xf32, #tpu.memory_space<vmem>>, vector<176x32xf32>
    %c864_81 = arith.constant 864 : index
    %c0_82 = arith.constant 0 : index
    %73 = vector.load %arg10[%c864_81, %c0_82] : memref<1152x32xf32, #tpu.memory_space<vmem>>, vector<176x32xf32>
    %c584_83 = arith.constant 584 : index
    %c0_84 = arith.constant 0 : index
    %74 = vector.load %arg10[%c584_83, %c0_84] : memref<1152x32xf32, #tpu.memory_space<vmem>>, vector<176x32xf32>
    %c872_85 = arith.constant 872 : index
    %c0_86 = arith.constant 0 : index
    %75 = vector.load %arg10[%c872_85, %c0_86] : memref<1152x32xf32, #tpu.memory_space<vmem>>, vector<176x32xf32>
    %c592_87 = arith.constant 592 : index
    %c0_88 = arith.constant 0 : index
    %76 = vector.load %arg10[%c592_87, %c0_88] : memref<1152x32xf32, #tpu.memory_space<vmem>>, vector<176x32xf32>
    %c48_89 = arith.constant 48 : index
    %c0_90 = arith.constant 0 : index
    %77 = vector.load %arg10[%c48_89, %c0_90] : memref<1152x32xf32, #tpu.memory_space<vmem>>, vector<176x32xf32>
    %c336_91 = arith.constant 336 : index
    %c0_92 = arith.constant 0 : index
    %78 = vector.load %arg10[%c336_91, %c0_92] : memref<1152x32xf32, #tpu.memory_space<vmem>>, vector<176x32xf32>
    %c56_93 = arith.constant 56 : index
    %c0_94 = arith.constant 0 : index
    %79 = vector.load %arg10[%c56_93, %c0_94] : memref<1152x32xf32, #tpu.memory_space<vmem>>, vector<176x32xf32>
    %c344_95 = arith.constant 344 : index
    %c0_96 = arith.constant 0 : index
    %80 = vector.load %arg10[%c344_95, %c0_96] : memref<1152x32xf32, #tpu.memory_space<vmem>>, vector<176x32xf32>
    %c64_97 = arith.constant 64 : index
    %c0_98 = arith.constant 0 : index
    %81 = vector.load %arg10[%c64_97, %c0_98] : memref<1152x32xf32, #tpu.memory_space<vmem>>, vector<176x32xf32>
    %c624_99 = arith.constant 624 : index
    %c0_100 = arith.constant 0 : index
    %82 = vector.load %arg10[%c624_99, %c0_100] : memref<1152x32xf32, #tpu.memory_space<vmem>>, vector<176x32xf32>
    %c912_101 = arith.constant 912 : index
    %c0_102 = arith.constant 0 : index
    %83 = vector.load %arg10[%c912_101, %c0_102] : memref<1152x32xf32, #tpu.memory_space<vmem>>, vector<176x32xf32>
    %c632_103 = arith.constant 632 : index
    %c0_104 = arith.constant 0 : index
    %84 = vector.load %arg10[%c632_103, %c0_104] : memref<1152x32xf32, #tpu.memory_space<vmem>>, vector<176x32xf32>
    %c920_105 = arith.constant 920 : index
    %c0_106 = arith.constant 0 : index
    %85 = vector.load %arg10[%c920_105, %c0_106] : memref<1152x32xf32, #tpu.memory_space<vmem>>, vector<176x32xf32>
    %c640_107 = arith.constant 640 : index
    %c0_108 = arith.constant 0 : index
    %86 = vector.load %arg10[%c640_107, %c0_108] : memref<1152x32xf32, #tpu.memory_space<vmem>>, vector<176x32xf32>
    %c96_109 = arith.constant 96 : index
    %c0_110 = arith.constant 0 : index
    %87 = vector.load %arg10[%c96_109, %c0_110] : memref<1152x32xf32, #tpu.memory_space<vmem>>, vector<176x32xf32>
    %c384_111 = arith.constant 384 : index
    %c0_112 = arith.constant 0 : index
    %88 = vector.load %arg10[%c384_111, %c0_112] : memref<1152x32xf32, #tpu.memory_space<vmem>>, vector<176x32xf32>
    %c104_113 = arith.constant 104 : index
    %c0_114 = arith.constant 0 : index
    %89 = vector.load %arg10[%c104_113, %c0_114] : memref<1152x32xf32, #tpu.memory_space<vmem>>, vector<176x32xf32>
    %c392_115 = arith.constant 392 : index
    %c0_116 = arith.constant 0 : index
    %90 = vector.load %arg10[%c392_115, %c0_116] : memref<1152x32xf32, #tpu.memory_space<vmem>>, vector<176x32xf32>
    %c112_117 = arith.constant 112 : index
    %c0_118 = arith.constant 0 : index
    %91 = vector.load %arg10[%c112_117, %c0_118] : memref<1152x32xf32, #tpu.memory_space<vmem>>, vector<176x32xf32>
    %c672 = arith.constant 672 : index
    %c0_119 = arith.constant 0 : index
    %92 = vector.load %arg10[%c672, %c0_119] : memref<1152x32xf32, #tpu.memory_space<vmem>>, vector<176x32xf32>
    %c960 = arith.constant 960 : index
    %c0_120 = arith.constant 0 : index
    %93 = vector.load %arg10[%c960, %c0_120] : memref<1152x32xf32, #tpu.memory_space<vmem>>, vector<176x32xf32>
    %c680 = arith.constant 680 : index
    %c0_121 = arith.constant 0 : index
    %94 = vector.load %arg10[%c680, %c0_121] : memref<1152x32xf32, #tpu.memory_space<vmem>>, vector<176x32xf32>
    %c968 = arith.constant 968 : index
    %c0_122 = arith.constant 0 : index
    %95 = vector.load %arg10[%c968, %c0_122] : memref<1152x32xf32, #tpu.memory_space<vmem>>, vector<176x32xf32>
    %c688 = arith.constant 688 : index
    %c0_123 = arith.constant 0 : index
    %96 = vector.load %arg10[%c688, %c0_123] : memref<1152x32xf32, #tpu.memory_space<vmem>>, vector<176x32xf32>
    %97 = tpu.concatenate %72, %73, %74, %75, %76, %77, %78, %79, %80, %81, %82, %83, %84, %85, %86, %87 in 1 : vector<176x32xf32>, vector<176x32xf32>, vector<176x32xf32>, vector<176x32xf32>, vector<176x32xf32>, vector<176x32xf32>, vector<176x32xf32>, vector<176x32xf32>, vector<176x32xf32>, vector<176x32xf32>, vector<176x32xf32>, vector<176x32xf32>, vector<176x32xf32>, vector<176x32xf32>, vector<176x32xf32>, vector<176x32xf32> -> vector<176x512xf32>
    %98 = tpu.concatenate %88, %89, %90, %91, %92, %93, %94, %95, %96 in 1 : vector<176x32xf32>, vector<176x32xf32>, vector<176x32xf32>, vector<176x32xf32>, vector<176x32xf32>, vector<176x32xf32>, vector<176x32xf32>, vector<176x32xf32>, vector<176x32xf32> -> vector<176x288xf32>
    %99 = tpu.concatenate %97, %98 in 1 : vector<176x512xf32>, vector<176x288xf32> -> vector<176x800xf32>
    %c864_124 = arith.constant 864 : index
    %c0_125 = arith.constant 0 : index
    %100 = vector.load %arg10[%c864_124, %c0_125] : memref<1152x32xf32, #tpu.memory_space<vmem>>, vector<176x32xf32>
    %c584_126 = arith.constant 584 : index
    %c0_127 = arith.constant 0 : index
    %101 = vector.load %arg10[%c584_126, %c0_127] : memref<1152x32xf32, #tpu.memory_space<vmem>>, vector<176x32xf32>
    %c872_128 = arith.constant 872 : index
    %c0_129 = arith.constant 0 : index
    %102 = vector.load %arg10[%c872_128, %c0_129] : memref<1152x32xf32, #tpu.memory_space<vmem>>, vector<176x32xf32>
    %c592_130 = arith.constant 592 : index
    %c0_131 = arith.constant 0 : index
    %103 = vector.load %arg10[%c592_130, %c0_131] : memref<1152x32xf32, #tpu.memory_space<vmem>>, vector<176x32xf32>
    %c880_132 = arith.constant 880 : index
    %c0_133 = arith.constant 0 : index
    %104 = vector.load %arg10[%c880_132, %c0_133] : memref<1152x32xf32, #tpu.memory_space<vmem>>, vector<176x32xf32>
    %c336_134 = arith.constant 336 : index
    %c0_135 = arith.constant 0 : index
    %105 = vector.load %arg10[%c336_134, %c0_135] : memref<1152x32xf32, #tpu.memory_space<vmem>>, vector<176x32xf32>
    %c56_136 = arith.constant 56 : index
    %c0_137 = arith.constant 0 : index
    %106 = vector.load %arg10[%c56_136, %c0_137] : memref<1152x32xf32, #tpu.memory_space<vmem>>, vector<176x32xf32>
    %c344_138 = arith.constant 344 : index
    %c0_139 = arith.constant 0 : index
    %107 = vector.load %arg10[%c344_138, %c0_139] : memref<1152x32xf32, #tpu.memory_space<vmem>>, vector<176x32xf32>
    %c64_140 = arith.constant 64 : index
    %c0_141 = arith.constant 0 : index
    %108 = vector.load %arg10[%c64_140, %c0_141] : memref<1152x32xf32, #tpu.memory_space<vmem>>, vector<176x32xf32>
    %c352_142 = arith.constant 352 : index
    %c0_143 = arith.constant 0 : index
    %109 = vector.load %arg10[%c352_142, %c0_143] : memref<1152x32xf32, #tpu.memory_space<vmem>>, vector<176x32xf32>
    %c912_144 = arith.constant 912 : index
    %c0_145 = arith.constant 0 : index
    %110 = vector.load %arg10[%c912_144, %c0_145] : memref<1152x32xf32, #tpu.memory_space<vmem>>, vector<176x32xf32>
    %c632_146 = arith.constant 632 : index
    %c0_147 = arith.constant 0 : index
    %111 = vector.load %arg10[%c632_146, %c0_147] : memref<1152x32xf32, #tpu.memory_space<vmem>>, vector<176x32xf32>
    %c920_148 = arith.constant 920 : index
    %c0_149 = arith.constant 0 : index
    %112 = vector.load %arg10[%c920_148, %c0_149] : memref<1152x32xf32, #tpu.memory_space<vmem>>, vector<176x32xf32>
    %c640_150 = arith.constant 640 : index
    %c0_151 = arith.constant 0 : index
    %113 = vector.load %arg10[%c640_150, %c0_151] : memref<1152x32xf32, #tpu.memory_space<vmem>>, vector<176x32xf32>
    %c928_152 = arith.constant 928 : index
    %c0_153 = arith.constant 0 : index
    %114 = vector.load %arg10[%c928_152, %c0_153] : memref<1152x32xf32, #tpu.memory_space<vmem>>, vector<176x32xf32>
    %c384_154 = arith.constant 384 : index
    %c0_155 = arith.constant 0 : index
    %115 = vector.load %arg10[%c384_154, %c0_155] : memref<1152x32xf32, #tpu.memory_space<vmem>>, vector<176x32xf32>
    %c104_156 = arith.constant 104 : index
    %c0_157 = arith.constant 0 : index
    %116 = vector.load %arg10[%c104_156, %c0_157] : memref<1152x32xf32, #tpu.memory_space<vmem>>, vector<176x32xf32>
    %c392_158 = arith.constant 392 : index
    %c0_159 = arith.constant 0 : index
    %117 = vector.load %arg10[%c392_158, %c0_159] : memref<1152x32xf32, #tpu.memory_space<vmem>>, vector<176x32xf32>
    %c112_160 = arith.constant 112 : index
    %c0_161 = arith.constant 0 : index
    %118 = vector.load %arg10[%c112_160, %c0_161] : memref<1152x32xf32, #tpu.memory_space<vmem>>, vector<176x32xf32>
    %c400_162 = arith.constant 400 : index
    %c0_163 = arith.constant 0 : index
    %119 = vector.load %arg10[%c400_162, %c0_163] : memref<1152x32xf32, #tpu.memory_space<vmem>>, vector<176x32xf32>
    %c960_164 = arith.constant 960 : index
    %c0_165 = arith.constant 0 : index
    %120 = vector.load %arg10[%c960_164, %c0_165] : memref<1152x32xf32, #tpu.memory_space<vmem>>, vector<176x32xf32>
    %c680_166 = arith.constant 680 : index
    %c0_167 = arith.constant 0 : index
    %121 = vector.load %arg10[%c680_166, %c0_167] : memref<1152x32xf32, #tpu.memory_space<vmem>>, vector<176x32xf32>
    %c968_168 = arith.constant 968 : index
    %c0_169 = arith.constant 0 : index
    %122 = vector.load %arg10[%c968_168, %c0_169] : memref<1152x32xf32, #tpu.memory_space<vmem>>, vector<176x32xf32>
    %c688_170 = arith.constant 688 : index
    %c0_171 = arith.constant 0 : index
    %123 = vector.load %arg10[%c688_170, %c0_171] : memref<1152x32xf32, #tpu.memory_space<vmem>>, vector<176x32xf32>
    %c976 = arith.constant 976 : index
    %c0_172 = arith.constant 0 : index
    %124 = vector.load %arg10[%c976, %c0_172] : memref<1152x32xf32, #tpu.memory_space<vmem>>, vector<176x32xf32>
    %125 = tpu.concatenate %100, %101, %102, %103, %104, %105, %106, %107, %108, %109, %110, %111, %112, %113, %114, %115 in 1 : vector<176x32xf32>, vector<176x32xf32>, vector<176x32xf32>, vector<176x32xf32>, vector<176x32xf32>, vector<176x32xf32>, vector<176x32xf32>, vector<176x32xf32>, vector<176x32xf32>, vector<176x32xf32>, vector<176x32xf32>, vector<176x32xf32>, vector<176x32xf32>, vector<176x32xf32>, vector<176x32xf32>, vector<176x32xf32> -> vector<176x512xf32>
    %126 = tpu.concatenate %116, %117, %118, %119, %120, %121, %122, %123, %124 in 1 : vector<176x32xf32>, vector<176x32xf32>, vector<176x32xf32>, vector<176x32xf32>, vector<176x32xf32>, vector<176x32xf32>, vector<176x32xf32>, vector<176x32xf32>, vector<176x32xf32> -> vector<176x288xf32>
    %127 = tpu.concatenate %125, %126 in 1 : vector<176x512xf32>, vector<176x288xf32> -> vector<176x800xf32>
    %128 = tpu.concatenate %43, %71, %99, %127 in 0 : vector<176x800xf32>, vector<176x800xf32>, vector<176x800xf32>, vector<176x800xf32> -> vector<704x800xf32>
    %129 = arith.truncf %128 : vector<704x800xf32> to vector<704x800xbf16>
    %c0_173 = arith.constant 0 : index
    %c0_174 = arith.constant 0 : index
    %130 = vector.load %arg3[%c0_173, %c0_174] : memref<800x64xbf16, #tpu.memory_space<vmem>>, vector<800x64xbf16>
    %cst_175 = arith.constant dense<0.000000e+00> : vector<704x64xf32>
    %131 = tpu.matmul %129, %130, %cst_175 {dimension_numbers = #tpu.dot_dimension_numbers<[1], [0], [0], [1], [0, 0, 1, 1], [], []>} : vector<704x800xbf16>, vector<800x64xbf16>, vector<704x64xf32> -> vector<704x64xf32>
    %c0_176 = arith.constant 0 : index
    %c0_177 = arith.constant 0 : index
    %132 = vector.load %arg4[%c0_176, %c0_177] : memref<1x64xf32, #tpu.memory_space<vmem>>, vector<1x64xf32>
    %133 = vector.broadcast %132 : vector<1x64xf32> to vector<704x64xf32>
    %134 = arith.addf %131, %133 : vector<704x64xf32>
    %cst_178 = arith.constant 0.000000e+00 : f32
    %135 = vector.broadcast %cst_178 : f32 to vector<704x64xf32>
    %136 = arith.maximumf %134, %135 : vector<704x64xf32>
    %137 = vector.extract_strided_slice %136 {offsets = [0, 0], sizes = [176, 64], strides = [1, 1]} : vector<704x64xf32> to vector<176x64xf32>
    %138 = vector.extract_strided_slice %136 {offsets = [176, 0], sizes = [176, 64], strides = [1, 1]} : vector<704x64xf32> to vector<176x64xf32>
    %139 = arith.maximumf %137, %138 : vector<176x64xf32>
    %140 = vector.extract_strided_slice %136 {offsets = [352, 0], sizes = [176, 64], strides = [1, 1]} : vector<704x64xf32> to vector<176x64xf32>
    %141 = vector.extract_strided_slice %136 {offsets = [528, 0], sizes = [176, 64], strides = [1, 1]} : vector<704x64xf32> to vector<176x64xf32>
    %142 = arith.maximumf %140, %141 : vector<176x64xf32>
    %143 = arith.maximumf %139, %142 : vector<176x64xf32>
    %144 = vector.extract_strided_slice %143 {offsets = [0, 0], sizes = [8, 64], strides = [1, 1]} : vector<176x64xf32> to vector<8x64xf32>
    %145 = vector.extract_strided_slice %143 {offsets = [8, 0], sizes = [8, 64], strides = [1, 1]} : vector<176x64xf32> to vector<8x64xf32>
    %146 = vector.extract_strided_slice %143 {offsets = [16, 0], sizes = [8, 64], strides = [1, 1]} : vector<176x64xf32> to vector<8x64xf32>
    %147 = vector.extract_strided_slice %143 {offsets = [24, 0], sizes = [8, 64], strides = [1, 1]} : vector<176x64xf32> to vector<8x64xf32>
    %148 = vector.extract_strided_slice %143 {offsets = [48, 0], sizes = [8, 64], strides = [1, 1]} : vector<176x64xf32> to vector<8x64xf32>
    %149 = vector.extract_strided_slice %143 {offsets = [56, 0], sizes = [8, 64], strides = [1, 1]} : vector<176x64xf32> to vector<8x64xf32>
    %150 = vector.extract_strided_slice %143 {offsets = [64, 0], sizes = [8, 64], strides = [1, 1]} : vector<176x64xf32> to vector<8x64xf32>
    %151 = vector.extract_strided_slice %143 {offsets = [72, 0], sizes = [8, 64], strides = [1, 1]} : vector<176x64xf32> to vector<8x64xf32>
    %152 = vector.extract_strided_slice %143 {offsets = [96, 0], sizes = [8, 64], strides = [1, 1]} : vector<176x64xf32> to vector<8x64xf32>
    %153 = vector.extract_strided_slice %143 {offsets = [104, 0], sizes = [8, 64], strides = [1, 1]} : vector<176x64xf32> to vector<8x64xf32>
    %154 = vector.extract_strided_slice %143 {offsets = [112, 0], sizes = [8, 64], strides = [1, 1]} : vector<176x64xf32> to vector<8x64xf32>
    %155 = vector.extract_strided_slice %143 {offsets = [120, 0], sizes = [8, 64], strides = [1, 1]} : vector<176x64xf32> to vector<8x64xf32>
    %156 = vector.extract_strided_slice %143 {offsets = [144, 0], sizes = [8, 64], strides = [1, 1]} : vector<176x64xf32> to vector<8x64xf32>
    %157 = vector.extract_strided_slice %143 {offsets = [152, 0], sizes = [8, 64], strides = [1, 1]} : vector<176x64xf32> to vector<8x64xf32>
    %158 = vector.extract_strided_slice %143 {offsets = [160, 0], sizes = [8, 64], strides = [1, 1]} : vector<176x64xf32> to vector<8x64xf32>
    %159 = vector.extract_strided_slice %143 {offsets = [168, 0], sizes = [8, 64], strides = [1, 1]} : vector<176x64xf32> to vector<8x64xf32>
    %160 = tpu.concatenate %144, %145, %146, %147, %148, %149, %150, %151, %152, %153, %154, %155, %156, %157, %158, %159 in 1 : vector<8x64xf32>, vector<8x64xf32>, vector<8x64xf32>, vector<8x64xf32>, vector<8x64xf32>, vector<8x64xf32>, vector<8x64xf32>, vector<8x64xf32>, vector<8x64xf32>, vector<8x64xf32>, vector<8x64xf32>, vector<8x64xf32>, vector<8x64xf32>, vector<8x64xf32>, vector<8x64xf32>, vector<8x64xf32> -> vector<8x1024xf32>
    %161 = arith.truncf %160 : vector<8x1024xf32> to vector<8x1024xbf16>
    %c0_179 = arith.constant 0 : index
    %c0_180 = arith.constant 0 : index
    %162 = vector.load %arg5[%c0_179, %c0_180] : memref<1024x512xbf16, #tpu.memory_space<vmem>>, vector<1024x512xbf16>
    %cst_181 = arith.constant dense<0.000000e+00> : vector<8x512xf32>
    %163 = tpu.matmul %161, %162, %cst_181 {dimension_numbers = #tpu.dot_dimension_numbers<[1], [0], [0], [1], [0, 0, 1, 1], [], []>} : vector<8x1024xbf16>, vector<1024x512xbf16>, vector<8x512xf32> -> vector<8x512xf32>
    %c0_182 = arith.constant 0 : index
    %c0_183 = arith.constant 0 : index
    %164 = vector.load %arg6[%c0_182, %c0_183] : memref<1x512xf32, #tpu.memory_space<vmem>>, vector<1x512xf32>
    %165 = vector.broadcast %164 : vector<1x512xf32> to vector<8x512xf32>
    %166 = arith.addf %163, %165 : vector<8x512xf32>
    %cst_184 = arith.constant 0.000000e+00 : f32
    %167 = vector.broadcast %cst_184 : f32 to vector<8x512xf32>
    %168 = arith.maximumf %166, %167 : vector<8x512xf32>
    %169 = arith.truncf %168 : vector<8x512xf32> to vector<8x512xbf16>
    %c0_185 = arith.constant 0 : index
    %c0_186 = arith.constant 0 : index
    %170 = vector.load %arg7[%c0_185, %c0_186] : memref<512x10xbf16, #tpu.memory_space<vmem>>, vector<512x10xbf16>
    %cst_187 = arith.constant dense<0.000000e+00> : vector<8x10xf32>
    %171 = tpu.matmul %169, %170, %cst_187 {dimension_numbers = #tpu.dot_dimension_numbers<[1], [0], [0], [1], [0, 0, 1, 1], [], []>} : vector<8x512xbf16>, vector<512x10xbf16>, vector<8x10xf32> -> vector<8x10xf32>
    %c0_188 = arith.constant 0 : index
    %c0_189 = arith.constant 0 : index
    %172 = vector.load %arg8[%c0_188, %c0_189] : memref<1x10xf32, #tpu.memory_space<vmem>>, vector<1x10xf32>
    %173 = vector.broadcast %172 : vector<1x10xf32> to vector<8x10xf32>
    %174 = arith.addf %171, %173 : vector<8x10xf32>
    %cst_190 = arith.constant dense<0xFF800000> : vector<8xf32>
    %175 = vector.multi_reduction <maximumf>, %174, %cst_190 [1] : vector<8x10xf32> to vector<8xf32>
    %176 = vector.shape_cast %175 : vector<8xf32> to vector<8x1xf32>
    %177 = vector.broadcast %176 : vector<8x1xf32> to vector<8x10xf32>
    %178 = arith.subf %174, %177 : vector<8x10xf32>
    %179 = math.exp %178 : vector<8x10xf32>
    %cst_191 = arith.constant dense<0.000000e+00> : vector<8xf32>
    %180 = vector.multi_reduction <add>, %179, %cst_191 [1] : vector<8x10xf32> to vector<8xf32>
    %181 = vector.shape_cast %180 : vector<8xf32> to vector<8x1xf32>
    %182 = tpu.reciprocal %181 : vector<8x1xf32> -> vector<8x1xf32>
    %183 = vector.broadcast %182 : vector<8x1xf32> to vector<8x10xf32>
    %184 = arith.mulf %179, %183 : vector<8x10xf32>
    %185 = vector.extract_strided_slice %184 {offsets = [0, 0], sizes = [2, 10], strides = [1, 1]} : vector<8x10xf32> to vector<2x10xf32>
    %c0_192 = arith.constant 0 : index
    %c0_193 = arith.constant 0 : index
    %186 = vector.load %arg9[%c0_192, %c0_193] : memref<2x10xf32, #tpu.memory_space<vmem>>, vector<2x10xf32>
    tpu.vector_store %arg9[%c0_192, %c0_193], %185 {strides = array<i32>} : memref<2x10xf32, #tpu.memory_space<vmem>>, vector<2x10xf32>,
    return
  }
}

</mosaic_0001>

<llo_original>
// kernel: lenet5_forward.1
$region0: #{lenet5_forward.1}
  #allocation0 [shape = 'u32[]', space=smem, size = 0x4, offset = 0x4, fixed_abs, tag = 'smem constant byte address 0x4 - core index']
  #allocation1 [shape = 'u32[72,128]{1,0:T(1,128)}', space=vmem, size = 0x9000, scoped, tag = 'internal scratch']
  #allocation2 [shape = 'f32[1152,32]{1,0:T(8,128)}', space=vmem, size = 0x90000, scoped, tag = 'scratch operand']
  %s0 = inlined_call_operand.vmem [shape: bf16[4608,32], index: 0, kind: input, shape index: {}]
  %s1 = inlined_call_operand.vmem [shape: bf16[32,32], index: 1, kind: input, shape index: {}]
  %s2 = inlined_call_operand.vmem [shape: f32[1,32], index: 2, kind: input, shape index: {}]
  %s3 = inlined_call_operand.vmem [shape: bf16[800,64], index: 3, kind: input, shape index: {}]
  %s4 = inlined_call_operand.vmem [shape: f32[1,64], index: 4, kind: input, shape index: {}]
  %s5 = inlined_call_operand.vmem [shape: bf16[1024,512], index: 5, kind: input, shape index: {}]
  %s6 = inlined_call_operand.vmem [shape: f32[1,512], index: 6, kind: input, shape index: {}]
  %s7 = inlined_call_operand.vmem [shape: bf16[512,10], index: 7, kind: input, shape index: {}]
  %s8 = inlined_call_operand.vmem [shape: f32[1,10], index: 8, kind: input, shape index: {}]
  %s9 = inlined_call_operand.hbm [shape: f32[2,10], index: 9, kind: output, shape index: {}]
  %s10 = sld [smem:[#allocation0]]
  $region46: #{lenet5_forward.1} parent=0
    _
  %s12 = ssub.s32 1, %s10
  %s13 = scalar_select 0, %s12, %s10
  $region1: #{lenet5_forward.1} parent=0
    #allocation3 [shape = 'u8[1024]{0}', space=vmem, size = 0x400, scoped, tag = 'output window, operand 0, single buffered']
    #allocation4 [shape = 's32[1]{0}', space=sflag, size = 0x4, scoped, tag = 'scoped memory for lenet5_forward.1']
    %14 = vsyncpa [#allocation4], 0
    // Predicated region
    $region2: #{lenet5_forward.1} parent=1 // pred_check
      _
    $region3: #{lenet5_forward.1} parent=1 // pred_check_branch
      %16 = sbr.rel (0) target = $region5
    $region4: #{lenet5_forward.1} parent=1 // pred_region
      _
    $region5: #{lenet5_forward.1} parent=1 // pred_fallthru
      _
    // Predicated region
    $region6: #{lenet5_forward.1} parent=1 // pred_check
      _
    $region7: #{lenet5_forward.1} parent=1 // pred_check_branch
      %18 = sbr.rel (0) target = $region9
    $region8: #{lenet5_forward.1} parent=1 // pred_region
      _
    $region9: #{lenet5_forward.1} parent=1 // pred_fallthru
      _
    // Predicated region
    $region10: #{lenet5_forward.1} parent=1 // pred_check
      _
    $region11: #{lenet5_forward.1} parent=1 // pred_check_branch
      %20 = sbr.rel (0) target = $region13
    $region12: #{lenet5_forward.1} parent=1 // pred_region
      _
    $region13: #{lenet5_forward.1} parent=1 // pred_fallthru
      _
    // Predicated region
    $region14: #{lenet5_forward.1} parent=1 // pred_check
      _
    $region15: #{lenet5_forward.1} parent=1 // pred_check_branch
      %22 = sbr.rel (0) target = $region17
    $region16: #{lenet5_forward.1} parent=1 // pred_region
      _
    $region17: #{lenet5_forward.1} parent=1 // pred_fallthru
      _
    // Predicated region
    $region18: #{lenet5_forward.1} parent=1 // pred_check
      _
    $region19: #{lenet5_forward.1} parent=1 // pred_check_branch
      %24 = sbr.rel (0) target = $region21
    $region20: #{lenet5_forward.1} parent=1 // pred_region
      _
    $region21: #{lenet5_forward.1} parent=1 // pred_fallthru
      _
    // Predicated region
    $region22: #{lenet5_forward.1} parent=1 // pred_check
      _
    $region23: #{lenet5_forward.1} parent=1 // pred_check_branch
      %26 = sbr.rel (0) target = $region25
    $region24: #{lenet5_forward.1} parent=1 // pred_region
      _
    $region25: #{lenet5_forward.1} parent=1 // pred_fallthru
      _
    // Predicated region
    $region26: #{lenet5_forward.1} parent=1 // pred_check
      _
    $region27: #{lenet5_forward.1} parent=1 // pred_check_branch
      %28 = sbr.rel (0) target = $region29
    $region28: #{lenet5_forward.1} parent=1 // pred_region
      _
    $region29: #{lenet5_forward.1} parent=1 // pred_fallthru
      _
    // Predicated region
    $region30: #{lenet5_forward.1} parent=1 // pred_check
      _
    $region31: #{lenet5_forward.1} parent=1 // pred_check_branch
      %30 = sbr.rel (0) target = $region33
    $region32: #{lenet5_forward.1} parent=1 // pred_region
      _
    $region33: #{lenet5_forward.1} parent=1 // pred_fallthru
      _
    // Predicated region
    $region34: #{lenet5_forward.1} parent=1 // pred_check
      _
    $region35: #{lenet5_forward.1} parent=1 // pred_check_branch
      %32 = sbr.rel (0) target = $region37
    $region36: #{lenet5_forward.1} parent=1 // pred_region
      _
    $region37: #{lenet5_forward.1} parent=1 // pred_fallthru
      _
    %v34 = vld [vmem:[%s0] sm:$0xf]
    %v35 = vld [vmem:[%s0 + $0x4] sm:$0xf]
    %v36 = vld [vmem:[%s0 + $0x8] sm:$0xf]
    %v37 = vld [vmem:[%s0 + $0xc] sm:$0xf]
    %v38 = vld [vmem:[%s0 + $0x10] sm:$0xf]
    %v39 = vld [vmem:[%s0 + $0x14] sm:$0xf]
    %v40 = vld [vmem:[%s0 + $0x18] sm:$0xf]
    %v41 = vld [vmem:[%s0 + $0x1c] sm:$0xf]
    %v42 = vld [vmem:[%s0 + $0x20] sm:$0xf]
    %v43 = vld [vmem:[%s0 + $0x24] sm:$0xf]
    %v44 = vld [vmem:[%s0 + $0x28] sm:$0xf]
    %v45 = vld [vmem:[%s0 + $0x2c] sm:$0xf]
    %v46 = vld [vmem:[%s0 + $0x30] sm:$0xf]
    %v47 = vld [vmem:[%s0 + $0x34] sm:$0xf]
    %v48 = vld [vmem:[%s0 + $0x38] sm:$0xf]
    %v49 = vld [vmem:[%s0 + $0x3c] sm:$0xf]
    %v50 = vld [vmem:[%s0 + $0x40] sm:$0xf]
    %v51 = vld [vmem:[%s0 + $0x44] sm:$0xf]
    %v52 = vld [vmem:[%s0 + $0x48] sm:$0xf]
    %v53 = vld [vmem:[%s0 + $0x4c] sm:$0xf]
    %v54 = vld [vmem:[%s0 + $0x50] sm:$0xf]
    %v55 = vld [vmem:[%s0 + $0x54] sm:$0xf]
    %v56 = vld [vmem:[%s0 + $0x58] sm:$0xf]
    %v57 = vld [vmem:[%s0 + $0x5c] sm:$0xf]
    %v58 = vld [vmem:[%s0 + $0x60] sm:$0xf]
    %v59 = vld [vmem:[%s0 + $0x64] sm:$0xf]
    %v60 = vld [vmem:[%s0 + $0x68] sm:$0xf]
    %v61 = vld [vmem:[%s0 + $0x6c] sm:$0xf]
    %v62 = vld [vmem:[%s0 + $0x70] sm:$0xf]
    %v63 = vld [vmem:[%s0 + $0x74] sm:$0xf]
    %v64 = vld [vmem:[%s0 + $0x78] sm:$0xf]
    %v65 = vld [vmem:[%s0 + $0x7c] sm:$0xf]
    %v66 = vld [vmem:[%s0 + $0x80] sm:$0xf]
    %v67 = vld [vmem:[%s0 + $0x84] sm:$0xf]
    %v68 = vld [vmem:[%s0 + $0x88] sm:$0xf]
    %v69 = vld [vmem:[%s0 + $0x8c] sm:$0xf]
    %v70 = vld [vmem:[%s0 + $0x90] sm:$0xf]
    %v71 = vld [vmem:[%s0 + $0x94] sm:$0xf]
    %v72 = vld [vmem:[%s0 + $0x98] sm:$0xf]
    %v73 = vld [vmem:[%s0 + $0x9c] sm:$0xf]
    %v74 = vld [vmem:[%s0 + $0xa0] sm:$0xf]
    %v75 = vld [vmem:[%s0 + $0xa4] sm:$0xf]
    %v76 = vld [vmem:[%s0 + $0xa8] sm:$0xf]
    %v77 = vld [vmem:[%s0 + $0xac] sm:$0xf]
    %v78 = vld [vmem:[%s0 + $0xb0] sm:$0xf]
    %v79 = vld [vmem:[%s0 + $0xb4] sm:$0xf]
    %v80 = vld [vmem:[%s0 + $0xb8] sm:$0xf]
    %v81 = vld [vmem:[%s0 + $0xbc] sm:$0xf]
    %v82 = vld [vmem:[%s0 + $0xc0] sm:$0xf]
    %v83 = vld [vmem:[%s0 + $0xc4] sm:$0xf]
    %v84 = vld [vmem:[%s0 + $0xc8] sm:$0xf]
    %v85 = vld [vmem:[%s0 + $0xcc] sm:$0xf]
    %v86 = vld [vmem:[%s0 + $0xd0] sm:$0xf]
    %v87 = vld [vmem:[%s0 + $0xd4] sm:$0xf]
    %v88 = vld [vmem:[%s0 + $0xd8] sm:$0xf]
    %v89 = vld [vmem:[%s0 + $0xdc] sm:$0xf]
    %v90 = vld [vmem:[%s0 + $0xe0] sm:$0xf]
    %v91 = vld [vmem:[%s0 + $0xe4] sm:$0xf]
    %v92 = vld [vmem:[%s0 + $0xe8] sm:$0xf]
    %v93 = vld [vmem:[%s0 + $0xec] sm:$0xf]
    %v94 = vld [vmem:[%s0 + $0xf0] sm:$0xf]
    %v95 = vld [vmem:[%s0 + $0xf4] sm:$0xf]
    %v96 = vld [vmem:[%s0 + $0xf8] sm:$0xf]
    %v97 = vld [vmem:[%s0 + $0xfc] sm:$0xf]
    %v98 = vld [vmem:[%s0 + $0x100] sm:$0xf]
    %v99 = vld [vmem:[%s0 + $0x104] sm:$0xf]
    %v100 = vld [vmem:[%s0 + $0x108] sm:$0xf]
    %v101 = vld [vmem:[%s0 + $0x10c] sm:$0xf]
    %v102 = vld [vmem:[%s0 + $0x110] sm:$0xf]
    %v103 = vld [vmem:[%s0 + $0x114] sm:$0xf]
    %v104 = vld [vmem:[%s0 + $0x118] sm:$0xf]
    %v105 = vld [vmem:[%s0 + $0x11c] sm:$0xf]
    %v106 = vld [vmem:[%s0 + $0x120] sm:$0xf]
    %v107 = vld [vmem:[%s0 + $0x124] sm:$0xf]
    %v108 = vld [vmem:[%s0 + $0x128] sm:$0xf]
    %v109 = vld [vmem:[%s0 + $0x12c] sm:$0xf]
    %v110 = vld [vmem:[%s0 + $0x130] sm:$0xf]
    %v111 = vld [vmem:[%s0 + $0x134] sm:$0xf]
    %v112 = vld [vmem:[%s0 + $0x138] sm:$0xf]
    %v113 = vld [vmem:[%s0 + $0x13c] sm:$0xf]
    %v114 = vld [vmem:[%s0 + $0x140] sm:$0xf]
    %v115 = vld [vmem:[%s0 + $0x144] sm:$0xf]
    %v116 = vld [vmem:[%s0 + $0x148] sm:$0xf]
    %v117 = vld [vmem:[%s0 + $0x14c] sm:$0xf]
    %v118 = vld [vmem:[%s0 + $0x150] sm:$0xf]
    %v119 = vld [vmem:[%s0 + $0x154] sm:$0xf]
    %v120 = vld [vmem:[%s0 + $0x158] sm:$0xf]
    %v121 = vld [vmem:[%s0 + $0x15c] sm:$0xf]
    %v122 = vld [vmem:[%s0 + $0x160] sm:$0xf]
    %v123 = vld [vmem:[%s0 + $0x164] sm:$0xf]
    %v124 = vld [vmem:[%s0 + $0x168] sm:$0xf]
    %v125 = vld [vmem:[%s0 + $0x16c] sm:$0xf]
    %v126 = vld [vmem:[%s0 + $0x170] sm:$0xf]
    %v127 = vld [vmem:[%s0 + $0x174] sm:$0xf]
    %v128 = vld [vmem:[%s0 + $0x178] sm:$0xf]
    %v129 = vld [vmem:[%s0 + $0x17c] sm:$0xf]
    %v130 = vld [vmem:[%s0 + $0x180] sm:$0xf]
    %v131 = vld [vmem:[%s0 + $0x184] sm:$0xf]
    %v132 = vld [vmem:[%s0 + $0x188] sm:$0xf]
    %v133 = vld [vmem:[%s0 + $0x18c] sm:$0xf]
    %v134 = vld [vmem:[%s0 + $0x190] sm:$0xf]
    %v135 = vld [vmem:[%s0 + $0x194] sm:$0xf]
    %v136 = vld [vmem:[%s0 + $0x198] sm:$0xf]
    %v137 = vld [vmem:[%s0 + $0x19c] sm:$0xf]
    %v138 = vld [vmem:[%s0 + $0x1a0] sm:$0xf]
    %v139 = vld [vmem:[%s0 + $0x1a4] sm:$0xf]
    %v140 = vld [vmem:[%s0 + $0x1a8] sm:$0xf]
    %v141 = vld [vmem:[%s0 + $0x1ac] sm:$0xf]
    %v142 = vld [vmem:[%s0 + $0x1b0] sm:$0xf]
    %v143 = vld [vmem:[%s0 + $0x1b4] sm:$0xf]
    %v144 = vld [vmem:[%s0 + $0x1b8] sm:$0xf]
    %v145 = vld [vmem:[%s0 + $0x1bc] sm:$0xf]
    %v146 = vld [vmem:[%s0 + $0x1c0] sm:$0xf]
    %v147 = vld [vmem:[%s0 + $0x1c4] sm:$0xf]
    %v148 = vld [vmem:[%s0 + $0x1c8] sm:$0xf]
    %v149 = vld [vmem:[%s0 + $0x1cc] sm:$0xf]
    %v150 = vld [vmem:[%s0 + $0x1d0] sm:$0xf]
    %v151 = vld [vmem:[%s0 + $0x1d4] sm:$0xf]
    %v152 = vld [vmem:[%s0 + $0x1d8] sm:$0xf]
    %v153 = vld [vmem:[%s0 + $0x1dc] sm:$0xf]
    %v154 = vld [vmem:[%s0 + $0x1e0] sm:$0xf]
    %v155 = vld [vmem:[%s0 + $0x1e4] sm:$0xf]
    %v156 = vld [vmem:[%s0 + $0x1e8] sm:$0xf]
    %v157 = vld [vmem:[%s0 + $0x1ec] sm:$0xf]
    %v158 = vld [vmem:[%s0 + $0x1f0] sm:$0xf]
    %v159 = vld [vmem:[%s0 + $0x1f4] sm:$0xf]
    %v160 = vld [vmem:[%s0 + $0x1f8] sm:$0xf]
    %v161 = vld [vmem:[%s0 + $0x1fc] sm:$0xf]
    %v162 = vld [vmem:[%s0 + $0x200] sm:$0xf]
    %v163 = vld [vmem:[%s0 + $0x204] sm:$0xf]
    %v164 = vld [vmem:[%s0 + $0x208] sm:$0xf]
    %v165 = vld [vmem:[%s0 + $0x20c] sm:$0xf]
    %v166 = vld [vmem:[%s0 + $0x210] sm:$0xf]
    %v167 = vld [vmem:[%s0 + $0x214] sm:$0xf]
    %v168 = vld [vmem:[%s0 + $0x218] sm:$0xf]
    %v169 = vld [vmem:[%s0 + $0x21c] sm:$0xf]
    %v170 = vld [vmem:[%s0 + $0x220] sm:$0xf]
    %v171 = vld [vmem:[%s0 + $0x224] sm:$0xf]
    %v172 = vld [vmem:[%s0 + $0x228] sm:$0xf]
    %v173 = vld [vmem:[%s0 + $0x22c] sm:$0xf]
    %v174 = vld [vmem:[%s0 + $0x230] sm:$0xf]
    %v175 = vld [vmem:[%s0 + $0x234] sm:$0xf]
    %v176 = vld [vmem:[%s0 + $0x238] sm:$0xf]
    %v177 = vld [vmem:[%s0 + $0x23c] sm:$0xf]
    %v178 = vld [vmem:[%s0 + $0x240] sm:$0xf]
    %v179 = vld [vmem:[%s0 + $0x244] sm:$0xf]
    %v180 = vld [vmem:[%s0 + $0x248] sm:$0xf]
    %v181 = vld [vmem:[%s0 + $0x24c] sm:$0xf]
    %v182 = vld [vmem:[%s0 + $0x250] sm:$0xf]
    %v183 = vld [vmem:[%s0 + $0x254] sm:$0xf]
    %v184 = vld [vmem:[%s0 + $0x258] sm:$0xf]
    %v185 = vld [vmem:[%s0 + $0x25c] sm:$0xf]
    %v186 = vld [vmem:[%s0 + $0x260] sm:$0xf]
    %v187 = vld [vmem:[%s0 + $0x264] sm:$0xf]
    %v188 = vld [vmem:[%s0 + $0x268] sm:$0xf]
    %v189 = vld [vmem:[%s0 + $0x26c] sm:$0xf]
    %v190 = vld [vmem:[%s0 + $0x270] sm:$0xf]
    %v191 = vld [vmem:[%s0 + $0x274] sm:$0xf]
    %v192 = vld [vmem:[%s0 + $0x278] sm:$0xf]
    %v193 = vld [vmem:[%s0 + $0x27c] sm:$0xf]
    %v194 = vld [vmem:[%s0 + $0x280] sm:$0xf]
    %v195 = vld [vmem:[%s0 + $0x284] sm:$0xf]
    %v196 = vld [vmem:[%s0 + $0x288] sm:$0xf]
    %v197 = vld [vmem:[%s0 + $0x28c] sm:$0xf]
    %v198 = vld [vmem:[%s0 + $0x290] sm:$0xf]
    %v199 = vld [vmem:[%s0 + $0x294] sm:$0xf]
    %v200 = vld [vmem:[%s0 + $0x298] sm:$0xf]
    %v201 = vld [vmem:[%s0 + $0x29c] sm:$0xf]
    %v202 = vld [vmem:[%s0 + $0x2a0] sm:$0xf]
    %v203 = vld [vmem:[%s0 + $0x2a4] sm:$0xf]
    %v204 = vld [vmem:[%s0 + $0x2a8] sm:$0xf]
    %v205 = vld [vmem:[%s0 + $0x2ac] sm:$0xf]
    %v206 = vld [vmem:[%s0 + $0x2b0] sm:$0xf]
    %v207 = vld [vmem:[%s0 + $0x2b4] sm:$0xf]
    %v208 = vld [vmem:[%s0 + $0x2b8] sm:$0xf]
    %v209 = vld [vmem:[%s0 + $0x2bc] sm:$0xf]
    %v210 = vld [vmem:[%s0 + $0x2c0] sm:$0xf]
    %v211 = vld [vmem:[%s0 + $0x2c4] sm:$0xf]
    %v212 = vld [vmem:[%s0 + $0x2c8] sm:$0xf]
    %v213 = vld [vmem:[%s0 + $0x2cc] sm:$0xf]
    %v214 = vld [vmem:[%s0 + $0x2d0] sm:$0xf]
    %v215 = vld [vmem:[%s0 + $0x2d4] sm:$0xf]
    %v216 = vld [vmem:[%s0 + $0x2d8] sm:$0xf]
    %v217 = vld [vmem:[%s0 + $0x2dc] sm:$0xf]
    %v218 = vld [vmem:[%s0 + $0x2e0] sm:$0xf]
    %v219 = vld [vmem:[%s0 + $0x2e4] sm:$0xf]
    %v220 = vld [vmem:[%s0 + $0x2e8] sm:$0xf]
    %v221 = vld [vmem:[%s0 + $0x2ec] sm:$0xf]
    %v222 = vld [vmem:[%s0 + $0x2f0] sm:$0xf]
    %v223 = vld [vmem:[%s0 + $0x2f4] sm:$0xf]
    %v224 = vld [vmem:[%s0 + $0x2f8] sm:$0xf]
    %v225 = vld [vmem:[%s0 + $0x2fc] sm:$0xf]
    %v226 = vld [vmem:[%s0 + $0x300] sm:$0xf]
    %v227 = vld [vmem:[%s0 + $0x304] sm:$0xf]
    %v228 = vld [vmem:[%s0 + $0x308] sm:$0xf]
    %v229 = vld [vmem:[%s0 + $0x30c] sm:$0xf]
    %v230 = vld [vmem:[%s0 + $0x310] sm:$0xf]
    %v231 = vld [vmem:[%s0 + $0x314] sm:$0xf]
    %v232 = vld [vmem:[%s0 + $0x318] sm:$0xf]
    %v233 = vld [vmem:[%s0 + $0x31c] sm:$0xf]
    %v234 = vld [vmem:[%s0 + $0x320] sm:$0xf]
    %v235 = vld [vmem:[%s0 + $0x324] sm:$0xf]
    %v236 = vld [vmem:[%s0 + $0x328] sm:$0xf]
    %v237 = vld [vmem:[%s0 + $0x32c] sm:$0xf]
    %v238 = vld [vmem:[%s0 + $0x330] sm:$0xf]
    %v239 = vld [vmem:[%s0 + $0x334] sm:$0xf]
    %v240 = vld [vmem:[%s0 + $0x338] sm:$0xf]
    %v241 = vld [vmem:[%s0 + $0x33c] sm:$0xf]
    %v242 = vld [vmem:[%s0 + $0x340] sm:$0xf]
    %v243 = vld [vmem:[%s0 + $0x344] sm:$0xf]
    %v244 = vld [vmem:[%s0 + $0x348] sm:$0xf]
    %v245 = vld [vmem:[%s0 + $0x34c] sm:$0xf]
    %v246 = vld [vmem:[%s0 + $0x350] sm:$0xf]
    %v247 = vld [vmem:[%s0 + $0x354] sm:$0xf]
    %v248 = vld [vmem:[%s0 + $0x358] sm:$0xf]
    %v249 = vld [vmem:[%s0 + $0x35c] sm:$0xf]
    %v250 = vld [vmem:[%s0 + $0x360] sm:$0xf]
    %v251 = vld [vmem:[%s0 + $0x364] sm:$0xf]
    %v252 = vld [vmem:[%s0 + $0x368] sm:$0xf]
    %v253 = vld [vmem:[%s0 + $0x36c] sm:$0xf]
    %v254 = vld [vmem:[%s0 + $0x370] sm:$0xf]
    %v255 = vld [vmem:[%s0 + $0x374] sm:$0xf]
    %v256 = vld [vmem:[%s0 + $0x378] sm:$0xf]
    %v257 = vld [vmem:[%s0 + $0x37c] sm:$0xf]
    %v258 = vld [vmem:[%s0 + $0x380] sm:$0xf]
    %v259 = vld [vmem:[%s0 + $0x384] sm:$0xf]
    %v260 = vld [vmem:[%s0 + $0x388] sm:$0xf]
    %v261 = vld [vmem:[%s0 + $0x38c] sm:$0xf]
    %v262 = vld [vmem:[%s0 + $0x390] sm:$0xf]
    %v263 = vld [vmem:[%s0 + $0x394] sm:$0xf]
    %v264 = vld [vmem:[%s0 + $0x398] sm:$0xf]
    %v265 = vld [vmem:[%s0 + $0x39c] sm:$0xf]
    %v266 = vld [vmem:[%s0 + $0x3a0] sm:$0xf]
    %v267 = vld [vmem:[%s0 + $0x3a4] sm:$0xf]
    %v268 = vld [vmem:[%s0 + $0x3a8] sm:$0xf]
    %v269 = vld [vmem:[%s0 + $0x3ac] sm:$0xf]
    %v270 = vld [vmem:[%s0 + $0x3b0] sm:$0xf]
    %v271 = vld [vmem:[%s0 + $0x3b4] sm:$0xf]
    %v272 = vld [vmem:[%s0 + $0x3b8] sm:$0xf]
    %v273 = vld [vmem:[%s0 + $0x3bc] sm:$0xf]
    %v274 = vld [vmem:[%s0 + $0x3c0] sm:$0xf]
    %v275 = vld [vmem:[%s0 + $0x3c4] sm:$0xf]
    %v276 = vld [vmem:[%s0 + $0x3c8] sm:$0xf]
    %v277 = vld [vmem:[%s0 + $0x3cc] sm:$0xf]
    %v278 = vld [vmem:[%s0 + $0x3d0] sm:$0xf]
    %v279 = vld [vmem:[%s0 + $0x3d4] sm:$0xf]
    %v280 = vld [vmem:[%s0 + $0x3d8] sm:$0xf]
    %v281 = vld [vmem:[%s0 + $0x3dc] sm:$0xf]
    %v282 = vld [vmem:[%s0 + $0x3e0] sm:$0xf]
    %v283 = vld [vmem:[%s0 + $0x3e4] sm:$0xf]
    %v284 = vld [vmem:[%s0 + $0x3e8] sm:$0xf]
    %v285 = vld [vmem:[%s0 + $0x3ec] sm:$0xf]
    %v286 = vld [vmem:[%s0 + $0x3f0] sm:$0xf]
    %v287 = vld [vmem:[%s0 + $0x3f4] sm:$0xf]
    %v288 = vld [vmem:[%s0 + $0x3f8] sm:$0xf]
    %v289 = vld [vmem:[%s0 + $0x3fc] sm:$0xf]
    %v290 = vld [vmem:[%s0 + $0x400] sm:$0xf]
    %v291 = vld [vmem:[%s0 + $0x404] sm:$0xf]
    %v292 = vld [vmem:[%s0 + $0x408] sm:$0xf]
    %v293 = vld [vmem:[%s0 + $0x40c] sm:$0xf]
    %v294 = vld [vmem:[%s0 + $0x410] sm:$0xf]
    %v295 = vld [vmem:[%s0 + $0x414] sm:$0xf]
    %v296 = vld [vmem:[%s0 + $0x418] sm:$0xf]
    %v297 = vld [vmem:[%s0 + $0x41c] sm:$0xf]
    %v298 = vld [vmem:[%s0 + $0x420] sm:$0xf]
    %v299 = vld [vmem:[%s0 + $0x424] sm:$0xf]
    %v300 = vld [vmem:[%s0 + $0x428] sm:$0xf]
    %v301 = vld [vmem:[%s0 + $0x42c] sm:$0xf]
    %v302 = vld [vmem:[%s0 + $0x430] sm:$0xf]
    %v303 = vld [vmem:[%s0 + $0x434] sm:$0xf]
    %v304 = vld [vmem:[%s0 + $0x438] sm:$0xf]
    %v305 = vld [vmem:[%s0 + $0x43c] sm:$0xf]
    %v306 = vld [vmem:[%s0 + $0x440] sm:$0xf]
    %v307 = vld [vmem:[%s0 + $0x444] sm:$0xf]
    %v308 = vld [vmem:[%s0 + $0x448] sm:$0xf]
    %v309 = vld [vmem:[%s0 + $0x44c] sm:$0xf]
    %v310 = vld [vmem:[%s0 + $0x450] sm:$0xf]
    %v311 = vld [vmem:[%s0 + $0x454] sm:$0xf]
    %v312 = vld [vmem:[%s0 + $0x458] sm:$0xf]
    %v313 = vld [vmem:[%s0 + $0x45c] sm:$0xf]
    %v314 = vld [vmem:[%s0 + $0x460] sm:$0xf]
    %v315 = vld [vmem:[%s0 + $0x464] sm:$0xf]
    %v316 = vld [vmem:[%s0 + $0x468] sm:$0xf]
    %v317 = vld [vmem:[%s0 + $0x46c] sm:$0xf]
    %v318 = vld [vmem:[%s0 + $0x470] sm:$0xf]
    %v319 = vld [vmem:[%s0 + $0x474] sm:$0xf]
    %v320 = vld [vmem:[%s0 + $0x478] sm:$0xf]
    %v321 = vld [vmem:[%s0 + $0x47c] sm:$0xf]
    %v322 = vld [vmem:[%s0 + $0x480] sm:$0xf]
    %v323 = vld [vmem:[%s0 + $0x484] sm:$0xf]
    %v324 = vld [vmem:[%s0 + $0x488] sm:$0xf]
    %v325 = vld [vmem:[%s0 + $0x48c] sm:$0xf]
    %v326 = vld [vmem:[%s0 + $0x490] sm:$0xf]
    %v327 = vld [vmem:[%s0 + $0x494] sm:$0xf]
    %v328 = vld [vmem:[%s0 + $0x498] sm:$0xf]
    %v329 = vld [vmem:[%s0 + $0x49c] sm:$0xf]
    %v330 = vld [vmem:[%s0 + $0x4a0] sm:$0xf]
    %v331 = vld [vmem:[%s0 + $0x4a4] sm:$0xf]
    %v332 = vld [vmem:[%s0 + $0x4a8] sm:$0xf]
    %v333 = vld [vmem:[%s0 + $0x4ac] sm:$0xf]
    %v334 = vld [vmem:[%s0 + $0x4b0] sm:$0xf]
    %v335 = vld [vmem:[%s0 + $0x4b4] sm:$0xf]
    %v336 = vld [vmem:[%s0 + $0x4b8] sm:$0xf]
    %v337 = vld [vmem:[%s0 + $0x4bc] sm:$0xf]
    %v338 = vld [vmem:[%s0 + $0x4c0] sm:$0xf]
    %v339 = vld [vmem:[%s0 + $0x4c4] sm:$0xf]
    %v340 = vld [vmem:[%s0 + $0x4c8] sm:$0xf]
    %v341 = vld [vmem:[%s0 + $0x4cc] sm:$0xf]
    %v342 = vld [vmem:[%s0 + $0x4d0] sm:$0xf]
    %v343 = vld [vmem:[%s0 + $0x4d4] sm:$0xf]
    %v344 = vld [vmem:[%s0 + $0x4d8] sm:$0xf]
    %v345 = vld [vmem:[%s0 + $0x4dc] sm:$0xf]
    %v346 = vld [vmem:[%s0 + $0x4e0] sm:$0xf]
    %v347 = vld [vmem:[%s0 + $0x4e4] sm:$0xf]
    %v348 = vld [vmem:[%s0 + $0x4e8] sm:$0xf]
    %v349 = vld [vmem:[%s0 + $0x4ec] sm:$0xf]
    %v350 = vld [vmem:[%s0 + $0x4f0] sm:$0xf]
    %v351 = vld [vmem:[%s0 + $0x4f4] sm:$0xf]
    %v352 = vld [vmem:[%s0 + $0x4f8] sm:$0xf]
    %v353 = vld [vmem:[%s0 + $0x4fc] sm:$0xf]
    %v354 = vld [vmem:[%s0 + $0x500] sm:$0xf]
    %v355 = vld [vmem:[%s0 + $0x504] sm:$0xf]
    %v356 = vld [vmem:[%s0 + $0x508] sm:$0xf]
    %v357 = vld [vmem:[%s0 + $0x50c] sm:$0xf]
    %v358 = vld [vmem:[%s0 + $0x510] sm:$0xf]
    %v359 = vld [vmem:[%s0 + $0x514] sm:$0xf]
    %v360 = vld [vmem:[%s0 + $0x518] sm:$0xf]
    %v361 = vld [vmem:[%s0 + $0x51c] sm:$0xf]
    %v362 = vld [vmem:[%s0 + $0x520] sm:$0xf]
    %v363 = vld [vmem:[%s0 + $0x524] sm:$0xf]
    %v364 = vld [vmem:[%s0 + $0x528] sm:$0xf]
    %v365 = vld [vmem:[%s0 + $0x52c] sm:$0xf]
    %v366 = vld [vmem:[%s0 + $0x530] sm:$0xf]
    %v367 = vld [vmem:[%s0 + $0x534] sm:$0xf]
    %v368 = vld [vmem:[%s0 + $0x538] sm:$0xf]
    %v369 = vld [vmem:[%s0 + $0x53c] sm:$0xf]
    %v370 = vld [vmem:[%s0 + $0x540] sm:$0xf]
    %v371 = vld [vmem:[%s0 + $0x544] sm:$0xf]
    %v372 = vld [vmem:[%s0 + $0x548] sm:$0xf]
    %v373 = vld [vmem:[%s0 + $0x54c] sm:$0xf]
    %v374 = vld [vmem:[%s0 + $0x550] sm:$0xf]
    %v375 = vld [vmem:[%s0 + $0x554] sm:$0xf]
    %v376 = vld [vmem:[%s0 + $0x558] sm:$0xf]
    %v377 = vld [vmem:[%s0 + $0x55c] sm:$0xf]
    %v378 = vld [vmem:[%s0 + $0x560] sm:$0xf]
    %v379 = vld [vmem:[%s0 + $0x564] sm:$0xf]
    %v380 = vld [vmem:[%s0 + $0x568] sm:$0xf]
    %v381 = vld [vmem:[%s0 + $0x56c] sm:$0xf]
    %v382 = vld [vmem:[%s0 + $0x570] sm:$0xf]
    %v383 = vld [vmem:[%s0 + $0x574] sm:$0xf]
    %v384 = vld [vmem:[%s0 + $0x578] sm:$0xf]
    %v385 = vld [vmem:[%s0 + $0x57c] sm:$0xf]
    %v386 = vld [vmem:[%s0 + $0x580] sm:$0xf]
    %v387 = vld [vmem:[%s0 + $0x584] sm:$0xf]
    %v388 = vld [vmem:[%s0 + $0x588] sm:$0xf]
    %v389 = vld [vmem:[%s0 + $0x58c] sm:$0xf]
    %v390 = vld [vmem:[%s0 + $0x590] sm:$0xf]
    %v391 = vld [vmem:[%s0 + $0x594] sm:$0xf]
    %v392 = vld [vmem:[%s0 + $0x598] sm:$0xf]
    %v393 = vld [vmem:[%s0 + $0x59c] sm:$0xf]
    %v394 = vld [vmem:[%s0 + $0x5a0] sm:$0xf]
    %v395 = vld [vmem:[%s0 + $0x5a4] sm:$0xf]
    %v396 = vld [vmem:[%s0 + $0x5a8] sm:$0xf]
    %v397 = vld [vmem:[%s0 + $0x5ac] sm:$0xf]
    %v398 = vld [vmem:[%s0 + $0x5b0] sm:$0xf]
    %v399 = vld [vmem:[%s0 + $0x5b4] sm:$0xf]
    %v400 = vld [vmem:[%s0 + $0x5b8] sm:$0xf]
    %v401 = vld [vmem:[%s0 + $0x5bc] sm:$0xf]
    %v402 = vld [vmem:[%s0 + $0x5c0] sm:$0xf]
    %v403 = vld [vmem:[%s0 + $0x5c4] sm:$0xf]
    %v404 = vld [vmem:[%s0 + $0x5c8] sm:$0xf]
    %v405 = vld [vmem:[%s0 + $0x5cc] sm:$0xf]
    %v406 = vld [vmem:[%s0 + $0x5d0] sm:$0xf]
    %v407 = vld [vmem:[%s0 + $0x5d4] sm:$0xf]
    %v408 = vld [vmem:[%s0 + $0x5d8] sm:$0xf]
    %v409 = vld [vmem:[%s0 + $0x5dc] sm:$0xf]
    %v410 = vld [vmem:[%s0 + $0x5e0] sm:$0xf]
    %v411 = vld [vmem:[%s0 + $0x5e4] sm:$0xf]
    %v412 = vld [vmem:[%s0 + $0x5e8] sm:$0xf]
    %v413 = vld [vmem:[%s0 + $0x5ec] sm:$0xf]
    %v414 = vld [vmem:[%s0 + $0x5f0] sm:$0xf]
    %v415 = vld [vmem:[%s0 + $0x5f4] sm:$0xf]
    %v416 = vld [vmem:[%s0 + $0x5f8] sm:$0xf]
    %v417 = vld [vmem:[%s0 + $0x5fc] sm:$0xf]
    %v418 = vld [vmem:[%s0 + $0x600] sm:$0xf]
    %v419 = vld [vmem:[%s0 + $0x604] sm:$0xf]
    %v420 = vld [vmem:[%s0 + $0x608] sm:$0xf]
    %v421 = vld [vmem:[%s0 + $0x60c] sm:$0xf]
    %v422 = vld [vmem:[%s0 + $0x610] sm:$0xf]
    %v423 = vld [vmem:[%s0 + $0x614] sm:$0xf]
    %v424 = vld [vmem:[%s0 + $0x618] sm:$0xf]
    %v425 = vld [vmem:[%s0 + $0x61c] sm:$0xf]
    %v426 = vld [vmem:[%s0 + $0x620] sm:$0xf]
    %v427 = vld [vmem:[%s0 + $0x624] sm:$0xf]
    %v428 = vld [vmem:[%s0 + $0x628] sm:$0xf]
    %v429 = vld [vmem:[%s0 + $0x62c] sm:$0xf]
    %v430 = vld [vmem:[%s0 + $0x630] sm:$0xf]
    %v431 = vld [vmem:[%s0 + $0x634] sm:$0xf]
    %v432 = vld [vmem:[%s0 + $0x638] sm:$0xf]
    %v433 = vld [vmem:[%s0 + $0x63c] sm:$0xf]
    %v434 = vld [vmem:[%s0 + $0x640] sm:$0xf]
    %v435 = vld [vmem:[%s0 + $0x644] sm:$0xf]
    %v436 = vld [vmem:[%s0 + $0x648] sm:$0xf]
    %v437 = vld [vmem:[%s0 + $0x64c] sm:$0xf]
    %v438 = vld [vmem:[%s0 + $0x650] sm:$0xf]
    %v439 = vld [vmem:[%s0 + $0x654] sm:$0xf]
    %v440 = vld [vmem:[%s0 + $0x658] sm:$0xf]
    %v441 = vld [vmem:[%s0 + $0x65c] sm:$0xf]
    %v442 = vld [vmem:[%s0 + $0x660] sm:$0xf]
    %v443 = vld [vmem:[%s0 + $0x664] sm:$0xf]
    %v444 = vld [vmem:[%s0 + $0x668] sm:$0xf]
    %v445 = vld [vmem:[%s0 + $0x66c] sm:$0xf]
    %v446 = vld [vmem:[%s0 + $0x670] sm:$0xf]
    %v447 = vld [vmem:[%s0 + $0x674] sm:$0xf]
    %v448 = vld [vmem:[%s0 + $0x678] sm:$0xf]
    %v449 = vld [vmem:[%s0 + $0x67c] sm:$0xf]
    %v450 = vld [vmem:[%s0 + $0x680] sm:$0xf]
    %v451 = vld [vmem:[%s0 + $0x684] sm:$0xf]
    %v452 = vld [vmem:[%s0 + $0x688] sm:$0xf]
    %v453 = vld [vmem:[%s0 + $0x68c] sm:$0xf]
    %v454 = vld [vmem:[%s0 + $0x690] sm:$0xf]
    %v455 = vld [vmem:[%s0 + $0x694] sm:$0xf]
    %v456 = vld [vmem:[%s0 + $0x698] sm:$0xf]
    %v457 = vld [vmem:[%s0 + $0x69c] sm:$0xf]
    %v458 = vld [vmem:[%s0 + $0x6a0] sm:$0xf]
    %v459 = vld [vmem:[%s0 + $0x6a4] sm:$0xf]
    %v460 = vld [vmem:[%s0 + $0x6a8] sm:$0xf]
    %v461 = vld [vmem:[%s0 + $0x6ac] sm:$0xf]
    %v462 = vld [vmem:[%s0 + $0x6b0] sm:$0xf]
    %v463 = vld [vmem:[%s0 + $0x6b4] sm:$0xf]
    %v464 = vld [vmem:[%s0 + $0x6b8] sm:$0xf]
    %v465 = vld [vmem:[%s0 + $0x6bc] sm:$0xf]
    %v466 = vld [vmem:[%s0 + $0x6c0] sm:$0xf]
    %v467 = vld [vmem:[%s0 + $0x6c4] sm:$0xf]
    %v468 = vld [vmem:[%s0 + $0x6c8] sm:$0xf]
    %v469 = vld [vmem:[%s0 + $0x6cc] sm:$0xf]
    %v470 = vld [vmem:[%s0 + $0x6d0] sm:$0xf]
    %v471 = vld [vmem:[%s0 + $0x6d4] sm:$0xf]
    %v472 = vld [vmem:[%s0 + $0x6d8] sm:$0xf]
    %v473 = vld [vmem:[%s0 + $0x6dc] sm:$0xf]
    %v474 = vld [vmem:[%s0 + $0x6e0] sm:$0xf]
    %v475 = vld [vmem:[%s0 + $0x6e4] sm:$0xf]
    %v476 = vld [vmem:[%s0 + $0x6e8] sm:$0xf]
    %v477 = vld [vmem:[%s0 + $0x6ec] sm:$0xf]
    %v478 = vld [vmem:[%s0 + $0x6f0] sm:$0xf]
    %v479 = vld [vmem:[%s0 + $0x6f4] sm:$0xf]
    %v480 = vld [vmem:[%s0 + $0x6f8] sm:$0xf]
    %v481 = vld [vmem:[%s0 + $0x6fc] sm:$0xf]
    %v482 = vld [vmem:[%s0 + $0x700] sm:$0xf]
    %v483 = vld [vmem:[%s0 + $0x704] sm:$0xf]
    %v484 = vld [vmem:[%s0 + $0x708] sm:$0xf]
    %v485 = vld [vmem:[%s0 + $0x70c] sm:$0xf]
    %v486 = vld [vmem:[%s0 + $0x710] sm:$0xf]
    %v487 = vld [vmem:[%s0 + $0x714] sm:$0xf]
    %v488 = vld [vmem:[%s0 + $0x718] sm:$0xf]
    %v489 = vld [vmem:[%s0 + $0x71c] sm:$0xf]
    %v490 = vld [vmem:[%s0 + $0x720] sm:$0xf]
    %v491 = vld [vmem:[%s0 + $0x724] sm:$0xf]
    %v492 = vld [vmem:[%s0 + $0x728] sm:$0xf]
    %v493 = vld [vmem:[%s0 + $0x72c] sm:$0xf]
    %v494 = vld [vmem:[%s0 + $0x730] sm:$0xf]
    %v495 = vld [vmem:[%s0 + $0x734] sm:$0xf]
    %v496 = vld [vmem:[%s0 + $0x738] sm:$0xf]
    %v497 = vld [vmem:[%s0 + $0x73c] sm:$0xf]
    %v498 = vld [vmem:[%s0 + $0x740] sm:$0xf]
    %v499 = vld [vmem:[%s0 + $0x744] sm:$0xf]
    %v500 = vld [vmem:[%s0 + $0x748] sm:$0xf]
    %v501 = vld [vmem:[%s0 + $0x74c] sm:$0xf]
    %v502 = vld [vmem:[%s0 + $0x750] sm:$0xf]
    %v503 = vld [vmem:[%s0 + $0x754] sm:$0xf]
    %v504 = vld [vmem:[%s0 + $0x758] sm:$0xf]
    %v505 = vld [vmem:[%s0 + $0x75c] sm:$0xf]
    %v506 = vld [vmem:[%s0 + $0x760] sm:$0xf]
    %v507 = vld [vmem:[%s0 + $0x764] sm:$0xf]
    %v508 = vld [vmem:[%s0 + $0x768] sm:$0xf]
    %v509 = vld [vmem:[%s0 + $0x76c] sm:$0xf]
    %v510 = vld [vmem:[%s0 + $0x770] sm:$0xf]
    %v511 = vld [vmem:[%s0 + $0x774] sm:$0xf]
    %v512 = vld [vmem:[%s0 + $0x778] sm:$0xf]
    %v513 = vld [vmem:[%s0 + $0x77c] sm:$0xf]
    %v514 = vld [vmem:[%s0 + $0x780] sm:$0xf]
    %v515 = vld [vmem:[%s0 + $0x784] sm:$0xf]
    %v516 = vld [vmem:[%s0 + $0x788] sm:$0xf]
    %v517 = vld [vmem:[%s0 + $0x78c] sm:$0xf]
    %v518 = vld [vmem:[%s0 + $0x790] sm:$0xf]
    %v519 = vld [vmem:[%s0 + $0x794] sm:$0xf]
    %v520 = vld [vmem:[%s0 + $0x798] sm:$0xf]
    %v521 = vld [vmem:[%s0 + $0x79c] sm:$0xf]
    %v522 = vld [vmem:[%s0 + $0x7a0] sm:$0xf]
    %v523 = vld [vmem:[%s0 + $0x7a4] sm:$0xf]
    %v524 = vld [vmem:[%s0 + $0x7a8] sm:$0xf]
    %v525 = vld [vmem:[%s0 + $0x7ac] sm:$0xf]
    %v526 = vld [vmem:[%s0 + $0x7b0] sm:$0xf]
    %v527 = vld [vmem:[%s0 + $0x7b4] sm:$0xf]
    %v528 = vld [vmem:[%s0 + $0x7b8] sm:$0xf]
    %v529 = vld [vmem:[%s0 + $0x7bc] sm:$0xf]
    %v530 = vld [vmem:[%s0 + $0x7c0] sm:$0xf]
    %v531 = vld [vmem:[%s0 + $0x7c4] sm:$0xf]
    %v532 = vld [vmem:[%s0 + $0x7c8] sm:$0xf]
    %v533 = vld [vmem:[%s0 + $0x7cc] sm:$0xf]
    %v534 = vld [vmem:[%s0 + $0x7d0] sm:$0xf]
    %v535 = vld [vmem:[%s0 + $0x7d4] sm:$0xf]
    %v536 = vld [vmem:[%s0 + $0x7d8] sm:$0xf]
    %v537 = vld [vmem:[%s0 + $0x7dc] sm:$0xf]
    %v538 = vld [vmem:[%s0 + $0x7e0] sm:$0xf]
    %v539 = vld [vmem:[%s0 + $0x7e4] sm:$0xf]
    %v540 = vld [vmem:[%s0 + $0x7e8] sm:$0xf]
    %v541 = vld [vmem:[%s0 + $0x7ec] sm:$0xf]
    %v542 = vld [vmem:[%s0 + $0x7f0] sm:$0xf]
    %v543 = vld [vmem:[%s0 + $0x7f4] sm:$0xf]
    %v544 = vld [vmem:[%s0 + $0x7f8] sm:$0xf]
    %v545 = vld [vmem:[%s0 + $0x7fc] sm:$0xf]
    %v546 = vld [vmem:[%s0 + $0x800] sm:$0xf]
    %v547 = vld [vmem:[%s0 + $0x804] sm:$0xf]
    %v548 = vld [vmem:[%s0 + $0x808] sm:$0xf]
    %v549 = vld [vmem:[%s0 + $0x80c] sm:$0xf]
    %v550 = vld [vmem:[%s0 + $0x810] sm:$0xf]
    %v551 = vld [vmem:[%s0 + $0x814] sm:$0xf]
    %v552 = vld [vmem:[%s0 + $0x818] sm:$0xf]
    %v553 = vld [vmem:[%s0 + $0x81c] sm:$0xf]
    %v554 = vld [vmem:[%s0 + $0x820] sm:$0xf]
    %v555 = vld [vmem:[%s0 + $0x824] sm:$0xf]
    %v556 = vld [vmem:[%s0 + $0x828] sm:$0xf]
    %v557 = vld [vmem:[%s0 + $0x82c] sm:$0xf]
    %v558 = vld [vmem:[%s0 + $0x830] sm:$0xf]
    %v559 = vld [vmem:[%s0 + $0x834] sm:$0xf]
    %v560 = vld [vmem:[%s0 + $0x838] sm:$0xf]
    %v561 = vld [vmem:[%s0 + $0x83c] sm:$0xf]
    %v562 = vld [vmem:[%s0 + $0x840] sm:$0xf]
    %v563 = vld [vmem:[%s0 + $0x844] sm:$0xf]
    %v564 = vld [vmem:[%s0 + $0x848] sm:$0xf]
    %v565 = vld [vmem:[%s0 + $0x84c] sm:$0xf]
    %v566 = vld [vmem:[%s0 + $0x850] sm:$0xf]
    %v567 = vld [vmem:[%s0 + $0x854] sm:$0xf]
    %v568 = vld [vmem:[%s0 + $0x858] sm:$0xf]
    %v569 = vld [vmem:[%s0 + $0x85c] sm:$0xf]
    %v570 = vld [vmem:[%s0 + $0x860] sm:$0xf]
    %v571 = vld [vmem:[%s0 + $0x864] sm:$0xf]
    %v572 = vld [vmem:[%s0 + $0x868] sm:$0xf]
    %v573 = vld [vmem:[%s0 + $0x86c] sm:$0xf]
    %v574 = vld [vmem:[%s0 + $0x870] sm:$0xf]
    %v575 = vld [vmem:[%s0 + $0x874] sm:$0xf]
    %v576 = vld [vmem:[%s0 + $0x878] sm:$0xf]
    %v577 = vld [vmem:[%s0 + $0x87c] sm:$0xf]
    %v578 = vld [vmem:[%s0 + $0x880] sm:$0xf]
    %v579 = vld [vmem:[%s0 + $0x884] sm:$0xf]
    %v580 = vld [vmem:[%s0 + $0x888] sm:$0xf]
    %v581 = vld [vmem:[%s0 + $0x88c] sm:$0xf]
    %v582 = vld [vmem:[%s0 + $0x890] sm:$0xf]
    %v583 = vld [vmem:[%s0 + $0x894] sm:$0xf]
    %v584 = vld [vmem:[%s0 + $0x898] sm:$0xf]
    %v585 = vld [vmem:[%s0 + $0x89c] sm:$0xf]
    %v586 = vld [vmem:[%s0 + $0x8a0] sm:$0xf]
    %v587 = vld [vmem:[%s0 + $0x8a4] sm:$0xf]
    %v588 = vld [vmem:[%s0 + $0x8a8] sm:$0xf]
    %v589 = vld [vmem:[%s0 + $0x8ac] sm:$0xf]
    %v590 = vld [vmem:[%s0 + $0x8b0] sm:$0xf]
    %v591 = vld [vmem:[%s0 + $0x8b4] sm:$0xf]
    %v592 = vld [vmem:[%s0 + $0x8b8] sm:$0xf]
    %v593 = vld [vmem:[%s0 + $0x8bc] sm:$0xf]
    %v594 = vld [vmem:[%s0 + $0x8c0] sm:$0xf]
    %v595 = vld [vmem:[%s0 + $0x8c4] sm:$0xf]
    %v596 = vld [vmem:[%s0 + $0x8c8] sm:$0xf]
    %v597 = vld [vmem:[%s0 + $0x8cc] sm:$0xf]
    %v598 = vld [vmem:[%s0 + $0x8d0] sm:$0xf]
    %v599 = vld [vmem:[%s0 + $0x8d4] sm:$0xf]
    %v600 = vld [vmem:[%s0 + $0x8d8] sm:$0xf]
    %v601 = vld [vmem:[%s0 + $0x8dc] sm:$0xf]
    %v602 = vld [vmem:[%s0 + $0x8e0] sm:$0xf]
    %v603 = vld [vmem:[%s0 + $0x8e4] sm:$0xf]
    %v604 = vld [vmem:[%s0 + $0x8e8] sm:$0xf]
    %v605 = vld [vmem:[%s0 + $0x8ec] sm:$0xf]
    %v606 = vld [vmem:[%s0 + $0x8f0] sm:$0xf]
    %v607 = vld [vmem:[%s0 + $0x8f4] sm:$0xf]
    %v608 = vld [vmem:[%s0 + $0x8f8] sm:$0xf]
    %v609 = vld [vmem:[%s0 + $0x8fc] sm:$0xf]
    %v610 = vld [vmem:[%s1] sm:$0xf]
    %v611 = vld [vmem:[%s1 + $0x4] sm:$0xf]
    %v612 = vld [vmem:[%s1 + $0x8] sm:$0xf]
    %v613 = vld [vmem:[%s1 + $0xc] sm:$0xf]
    %v1190 = vunpack.c.l.b16 %v34
    %v1191 = vunpack.c.l.b16 %v35
    %v1192 = vunpack.c.l.b16 %v36
    %v1193 = vunpack.c.l.b16 %v37
    %v1194 = vunpack.c.l.b16 %v38
    %v1195 = vunpack.c.l.b16 %v39
    %v1196 = vunpack.c.l.b16 %v40
    %v1197 = vunpack.c.l.b16 %v41
    %v1198 = vunpack.c.l.b16 %v42
    %v1199 = vunpack.c.l.b16 %v43
    %v1200 = vunpack.c.l.b16 %v44
    %v1201 = vunpack.c.l.b16 %v45
    %v1202 = vunpack.c.l.b16 %v46
    %v1203 = vunpack.c.l.b16 %v47
    %v1204 = vunpack.c.l.b16 %v48
    %v1205 = vunpack.c.l.b16 %v49
    %v1206 = vunpack.c.l.b16 %v50
    %v1207 = vunpack.c.l.b16 %v51
    %v1208 = vunpack.c.l.b16 %v52
    %v1209 = vunpack.c.l.b16 %v53
    %v1210 = vunpack.c.l.b16 %v54
    %v1211 = vunpack.c.l.b16 %v55
    %v1212 = vunpack.c.l.b16 %v56
    %v1213 = vunpack.c.l.b16 %v57
    %v1214 = vunpack.c.l.b16 %v58
    %v1215 = vunpack.c.l.b16 %v59
    %v1216 = vunpack.c.l.b16 %v60
    %v1217 = vunpack.c.l.b16 %v61
    %v1218 = vunpack.c.l.b16 %v62
    %v1219 = vunpack.c.l.b16 %v63
    %v1220 = vunpack.c.l.b16 %v64
    %v1221 = vunpack.c.l.b16 %v65
    %v1222 = vunpack.c.l.b16 %v66
    %v1223 = vunpack.c.l.b16 %v67
    %v1224 = vunpack.c.l.b16 %v68
    %v1225 = vunpack.c.l.b16 %v69
    %v1226 = vunpack.c.l.b16 %v70
    %v1227 = vunpack.c.l.b16 %v71
    %v1228 = vunpack.c.l.b16 %v72
    %v1229 = vunpack.c.l.b16 %v73
    %v1230 = vunpack.c.l.b16 %v74
    %v1231 = vunpack.c.l.b16 %v75
    %v1232 = vunpack.c.l.b16 %v76
    %v1233 = vunpack.c.l.b16 %v77
    %v1234 = vunpack.c.l.b16 %v78
    %v1235 = vunpack.c.l.b16 %v79
    %v1236 = vunpack.c.l.b16 %v80
    %v1237 = vunpack.c.l.b16 %v81
    %v1238 = vunpack.c.l.b16 %v82
    %v1239 = vunpack.c.l.b16 %v83
    %v1240 = vunpack.c.l.b16 %v84
    %v1241 = vunpack.c.l.b16 %v85
    %v1242 = vunpack.c.l.b16 %v86
    %v1243 = vunpack.c.l.b16 %v87
    %v1244 = vunpack.c.l.b16 %v88
    %v1245 = vunpack.c.l.b16 %v89
    %v1246 = vunpack.c.l.b16 %v90
    %v1247 = vunpack.c.l.b16 %v91
    %v1248 = vunpack.c.l.b16 %v92
    %v1249 = vunpack.c.l.b16 %v93
    %v1250 = vunpack.c.l.b16 %v94
    %v1251 = vunpack.c.l.b16 %v95
    %v1252 = vunpack.c.l.b16 %v96
    %v1253 = vunpack.c.l.b16 %v97
    %v1254 = vunpack.c.l.b16 %v98
    %v1255 = vunpack.c.l.b16 %v99
    %v1256 = vunpack.c.l.b16 %v100
    %v1257 = vunpack.c.l.b16 %v101
    %v1258 = vunpack.c.l.b16 %v102
    %v1259 = vunpack.c.l.b16 %v103
    %v1260 = vunpack.c.l.b16 %v104
    %v1261 = vunpack.c.l.b16 %v105
    %v1262 = vunpack.c.l.b16 %v106
    %v1263 = vunpack.c.l.b16 %v107
    %v1264 = vunpack.c.l.b16 %v108
    %v1265 = vunpack.c.l.b16 %v109
    %v1266 = vunpack.c.l.b16 %v110
    %v1267 = vunpack.c.l.b16 %v111
    %v1268 = vunpack.c.l.b16 %v112
    %v1269 = vunpack.c.l.b16 %v113
    %v1270 = vunpack.c.l.b16 %v114
    %v1271 = vunpack.c.l.b16 %v115
    %v1272 = vunpack.c.l.b16 %v116
    %v1273 = vunpack.c.l.b16 %v117
    %v1274 = vunpack.c.l.b16 %v118
    %v1275 = vunpack.c.l.b16 %v119
    %v1276 = vunpack.c.l.b16 %v120
    %v1277 = vunpack.c.l.b16 %v121
    %v1278 = vunpack.c.l.b16 %v122
    %v1279 = vunpack.c.l.b16 %v123
    %v1280 = vunpack.c.l.b16 %v124
    %v1281 = vunpack.c.l.b16 %v125
    %v1282 = vunpack.c.l.b16 %v126
    %v1283 = vunpack.c.l.b16 %v127
    %v1284 = vunpack.c.l.b16 %v128
    %v1285 = vunpack.c.l.b16 %v129
    %v1286 = vunpack.c.l.b16 %v130
    %v1287 = vunpack.c.l.b16 %v131
    %v1288 = vunpack.c.l.b16 %v132
    %v1289 = vunpack.c.l.b16 %v133
    %v1290 = vunpack.c.l.b16 %v134
    %v1291 = vunpack.c.l.b16 %v135
    %v1292 = vunpack.c.l.b16 %v136
    %v1293 = vunpack.c.l.b16 %v137
    %v1294 = vunpack.c.l.b16 %v138
    %v1295 = vunpack.c.l.b16 %v139
    %v1296 = vunpack.c.l.b16 %v140
    %v1297 = vunpack.c.l.b16 %v141
    %v1298 = vunpack.c.l.b16 %v142
    %v1299 = vunpack.c.l.b16 %v143
    %v1300 = vunpack.c.l.b16 %v144
    %v1301 = vunpack.c.l.b16 %v145
    %v1302 = vunpack.c.l.b16 %v146
    %v1303 = vunpack.c.l.b16 %v147
    %v1304 = vunpack.c.l.b16 %v148
    %v1305 = vunpack.c.l.b16 %v149
    %v1306 = vunpack.c.l.b16 %v150
    %v1307 = vunpack.c.l.b16 %v151
    %v1308 = vunpack.c.l.b16 %v152
    %v1309 = vunpack.c.l.b16 %v153
    %v1310 = vunpack.c.l.b16 %v154
    %v1311 = vunpack.c.l.b16 %v155
    %v1312 = vunpack.c.l.b16 %v156
    %v1313 = vunpack.c.l.b16 %v157
    %v1314 = vunpack.c.l.b16 %v158
    %v1315 = vunpack.c.l.b16 %v159
    %v1316 = vunpack.c.l.b16 %v160
    %v1317 = vunpack.c.l.b16 %v161
    %v1318 = vunpack.c.l.b16 %v162
    %v1319 = vunpack.c.l.b16 %v163
    %v1320 = vunpack.c.l.b16 %v164
    %v1321 = vunpack.c.l.b16 %v165
    %v1322 = vunpack.c.l.b16 %v166
    %v1323 = vunpack.c.l.b16 %v167
    %v1324 = vunpack.c.l.b16 %v168
    %v1325 = vunpack.c.l.b16 %v169
    %v1326 = vunpack.c.l.b16 %v170
    %v1327 = vunpack.c.l.b16 %v171
    %v1328 = vunpack.c.l.b16 %v172
    %v1329 = vunpack.c.l.b16 %v173
    %v1330 = vunpack.c.l.b16 %v174
    %v1331 = vunpack.c.l.b16 %v175
    %v1332 = vunpack.c.l.b16 %v176
    %v1333 = vunpack.c.l.b16 %v177
    %v1334 = vunpack.c.l.b16 %v178
    %v1335 = vunpack.c.l.b16 %v179
    %v1336 = vunpack.c.l.b16 %v180
    %v1337 = vunpack.c.l.b16 %v181
    %v1338 = vunpack.c.l.b16 %v182
    %v1339 = vunpack.c.l.b16 %v183
    %v1340 = vunpack.c.l.b16 %v184
    %v1341 = vunpack.c.l.b16 %v185
    %v1342 = vunpack.c.l.b16 %v186
    %v1343 = vunpack.c.l.b16 %v187
    %v1344 = vunpack.c.l.b16 %v188
    %v1345 = vunpack.c.l.b16 %v189
    %v1346 = vunpack.c.l.b16 %v190
    %v1347 = vunpack.c.l.b16 %v191
    %v1348 = vunpack.c.l.b16 %v192
    %v1349 = vunpack.c.l.b16 %v193
    %v1350 = vunpack.c.l.b16 %v194
    %v1351 = vunpack.c.l.b16 %v195
    %v1352 = vunpack.c.l.b16 %v196
    %v1353 = vunpack.c.l.b16 %v197
    %v1354 = vunpack.c.l.b16 %v198
    %v1355 = vunpack.c.l.b16 %v199
    %v1356 = vunpack.c.l.b16 %v200
    %v1357 = vunpack.c.l.b16 %v201
    %v1358 = vunpack.c.l.b16 %v202
    %v1359 = vunpack.c.l.b16 %v203
    %v1360 = vunpack.c.l.b16 %v204
    %v1361 = vunpack.c.l.b16 %v205
    %v1362 = vunpack.c.l.b16 %v206
    %v1363 = vunpack.c.l.b16 %v207
    %v1364 = vunpack.c.l.b16 %v208
    %v1365 = vunpack.c.l.b16 %v209
    %v1366 = vunpack.c.l.b16 %v210
    %v1367 = vunpack.c.l.b16 %v211
    %v1368 = vunpack.c.l.b16 %v212
    %v1369 = vunpack.c.l.b16 %v213
    %v1370 = vunpack.c.l.b16 %v214
    %v1371 = vunpack.c.l.b16 %v215
    %v1372 = vunpack.c.l.b16 %v216
    %v1373 = vunpack.c.l.b16 %v217
    %v1374 = vunpack.c.l.b16 %v218
    %v1375 = vunpack.c.l.b16 %v219
    %v1376 = vunpack.c.l.b16 %v220
    %v1377 = vunpack.c.l.b16 %v221
    %v1378 = vunpack.c.l.b16 %v222
    %v1379 = vunpack.c.l.b16 %v223
    %v1380 = vunpack.c.l.b16 %v224
    %v1381 = vunpack.c.l.b16 %v225
    %v1382 = vunpack.c.l.b16 %v226
    %v1383 = vunpack.c.l.b16 %v227
    %v1384 = vunpack.c.l.b16 %v228
    %v1385 = vunpack.c.l.b16 %v229
    %v1386 = vunpack.c.l.b16 %v230
    %v1387 = vunpack.c.l.b16 %v231
    %v1388 = vunpack.c.l.b16 %v232
    %v1389 = vunpack.c.l.b16 %v233
    %v1390 = vunpack.c.l.b16 %v234
    %v1391 = vunpack.c.l.b16 %v235
    %v1392 = vunpack.c.l.b16 %v236
    %v1393 = vunpack.c.l.b16 %v237
    %v1394 = vunpack.c.l.b16 %v238
    %v1395 = vunpack.c.l.b16 %v239
    %v1396 = vunpack.c.l.b16 %v240
    %v1397 = vunpack.c.l.b16 %v241
    %v1398 = vunpack.c.l.b16 %v242
    %v1399 = vunpack.c.l.b16 %v243
    %v1400 = vunpack.c.l.b16 %v244
    %v1401 = vunpack.c.l.b16 %v245
    %v1402 = vunpack.c.l.b16 %v246
    %v1403 = vunpack.c.l.b16 %v247
    %v1404 = vunpack.c.l.b16 %v248
    %v1405 = vunpack.c.l.b16 %v249
    %v1406 = vunpack.c.l.b16 %v250
    %v1407 = vunpack.c.l.b16 %v251
    %v1408 = vunpack.c.l.b16 %v252
    %v1409 = vunpack.c.l.b16 %v253
    %v1410 = vunpack.c.l.b16 %v254
    %v1411 = vunpack.c.l.b16 %v255
    %v1412 = vunpack.c.l.b16 %v256
    %v1413 = vunpack.c.l.b16 %v257
    %v1414 = vunpack.c.l.b16 %v258
    %v1415 = vunpack.c.l.b16 %v259
    %v1416 = vunpack.c.l.b16 %v260
    %v1417 = vunpack.c.l.b16 %v261
    %v1418 = vunpack.c.l.b16 %v262
    %v1419 = vunpack.c.l.b16 %v263
    %v1420 = vunpack.c.l.b16 %v264
    %v1421 = vunpack.c.l.b16 %v265
    %v1422 = vunpack.c.l.b16 %v266
    %v1423 = vunpack.c.l.b16 %v267
    %v1424 = vunpack.c.l.b16 %v268
    %v1425 = vunpack.c.l.b16 %v269
    %v1426 = vunpack.c.l.b16 %v270
    %v1427 = vunpack.c.l.b16 %v271
    %v1428 = vunpack.c.l.b16 %v272
    %v1429 = vunpack.c.l.b16 %v273
    %v1430 = vunpack.c.l.b16 %v274
    %v1431 = vunpack.c.l.b16 %v275
    %v1432 = vunpack.c.l.b16 %v276
    %v1433 = vunpack.c.l.b16 %v277
    %v1434 = vunpack.c.l.b16 %v278
    %v1435 = vunpack.c.l.b16 %v279
    %v1436 = vunpack.c.l.b16 %v280
    %v1437 = vunpack.c.l.b16 %v281
    %v1438 = vunpack.c.l.b16 %v282
    %v1439 = vunpack.c.l.b16 %v283
    %v1440 = vunpack.c.l.b16 %v284
    %v1441 = vunpack.c.l.b16 %v285
    %v1442 = vunpack.c.l.b16 %v286
    %v1443 = vunpack.c.l.b16 %v287
    %v1444 = vunpack.c.l.b16 %v288
    %v1445 = vunpack.c.l.b16 %v289
    %v1446 = vunpack.c.l.b16 %v290
    %v1447 = vunpack.c.l.b16 %v291
    %v1448 = vunpack.c.l.b16 %v292
    %v1449 = vunpack.c.l.b16 %v293
    %v1450 = vunpack.c.l.b16 %v294
    %v1451 = vunpack.c.l.b16 %v295
    %v1452 = vunpack.c.l.b16 %v296
    %v1453 = vunpack.c.l.b16 %v297
    %v1454 = vunpack.c.l.b16 %v298
    %v1455 = vunpack.c.l.b16 %v299
    %v1456 = vunpack.c.l.b16 %v300
    %v1457 = vunpack.c.l.b16 %v301
    %v1458 = vunpack.c.l.b16 %v302
    %v1459 = vunpack.c.l.b16 %v303
    %v1460 = vunpack.c.l.b16 %v304
    %v1461 = vunpack.c.l.b16 %v305
    %v1462 = vunpack.c.l.b16 %v306
    %v1463 = vunpack.c.l.b16 %v307
    %v1464 = vunpack.c.l.b16 %v308
    %v1465 = vunpack.c.l.b16 %v309
    %v1466 = vunpack.c.l.b16 %v310
    %v1467 = vunpack.c.l.b16 %v311
    %v1468 = vunpack.c.l.b16 %v312
    %v1469 = vunpack.c.l.b16 %v313
    %v1470 = vunpack.c.l.b16 %v314
    %v1471 = vunpack.c.l.b16 %v315
    %v1472 = vunpack.c.l.b16 %v316
    %v1473 = vunpack.c.l.b16 %v317
    %v1474 = vunpack.c.l.b16 %v318
    %v1475 = vunpack.c.l.b16 %v319
    %v1476 = vunpack.c.l.b16 %v320
    %v1477 = vunpack.c.l.b16 %v321
    %v1478 = vunpack.c.l.b16 %v322
    %v1479 = vunpack.c.l.b16 %v323
    %v1480 = vunpack.c.l.b16 %v324
    %v1481 = vunpack.c.l.b16 %v325
    %v1482 = vunpack.c.l.b16 %v326
    %v1483 = vunpack.c.l.b16 %v327
    %v1484 = vunpack.c.l.b16 %v328
    %v1485 = vunpack.c.l.b16 %v329
    %v1486 = vunpack.c.l.b16 %v330
    %v1487 = vunpack.c.l.b16 %v331
    %v1488 = vunpack.c.l.b16 %v332
    %v1489 = vunpack.c.l.b16 %v333
    %v1490 = vunpack.c.l.b16 %v334
    %v1491 = vunpack.c.l.b16 %v335
    %v1492 = vunpack.c.l.b16 %v336
    %v1493 = vunpack.c.l.b16 %v337
    %v1494 = vunpack.c.l.b16 %v338
    %v1495 = vunpack.c.l.b16 %v339
    %v1496 = vunpack.c.l.b16 %v340
    %v1497 = vunpack.c.l.b16 %v341
    %v1498 = vunpack.c.l.b16 %v342
    %v1499 = vunpack.c.l.b16 %v343
    %v1500 = vunpack.c.l.b16 %v344
    %v1501 = vunpack.c.l.b16 %v345
    %v1502 = vunpack.c.l.b16 %v346
    %v1503 = vunpack.c.l.b16 %v347
    %v1504 = vunpack.c.l.b16 %v348
    %v1505 = vunpack.c.l.b16 %v349
    %v1506 = vunpack.c.l.b16 %v350
    %v1507 = vunpack.c.l.b16 %v351
    %v1508 = vunpack.c.l.b16 %v352
    %v1509 = vunpack.c.l.b16 %v353
    %v1510 = vunpack.c.l.b16 %v354
    %v1511 = vunpack.c.l.b16 %v355
    %v1512 = vunpack.c.l.b16 %v356
    %v1513 = vunpack.c.l.b16 %v357
    %v1514 = vunpack.c.l.b16 %v358
    %v1515 = vunpack.c.l.b16 %v359
    %v1516 = vunpack.c.l.b16 %v360
    %v1517 = vunpack.c.l.b16 %v361
    %v1518 = vunpack.c.l.b16 %v362
    %v1519 = vunpack.c.l.b16 %v363
    %v1520 = vunpack.c.l.b16 %v364
    %v1521 = vunpack.c.l.b16 %v365
    %v1522 = vunpack.c.l.b16 %v366
    %v1523 = vunpack.c.l.b16 %v367
    %v1524 = vunpack.c.l.b16 %v368
    %v1525 = vunpack.c.l.b16 %v369
    %v1526 = vunpack.c.l.b16 %v370
    %v1527 = vunpack.c.l.b16 %v371
    %v1528 = vunpack.c.l.b16 %v372
    %v1529 = vunpack.c.l.b16 %v373
    %v1530 = vunpack.c.l.b16 %v374
    %v1531 = vunpack.c.l.b16 %v375
    %v1532 = vunpack.c.l.b16 %v376
    %v1533 = vunpack.c.l.b16 %v377
    %v1534 = vunpack.c.l.b16 %v378
    %v1535 = vunpack.c.l.b16 %v379
    %v1536 = vunpack.c.l.b16 %v380
    %v1537 = vunpack.c.l.b16 %v381
    %v1538 = vunpack.c.l.b16 %v382
    %v1539 = vunpack.c.l.b16 %v383
    %v1540 = vunpack.c.l.b16 %v384
    %v1541 = vunpack.c.l.b16 %v385
    %v1542 = vunpack.c.l.b16 %v386
    %v1543 = vunpack.c.l.b16 %v387
    %v1544 = vunpack.c.l.b16 %v388
    %v1545 = vunpack.c.l.b16 %v389
    %v1546 = vunpack.c.l.b16 %v390
    %v1547 = vunpack.c.l.b16 %v391
    %v1548 = vunpack.c.l.b16 %v392
    %v1549 = vunpack.c.l.b16 %v393
    %v1550 = vunpack.c.l.b16 %v394
    %v1551 = vunpack.c.l.b16 %v395
    %v1552 = vunpack.c.l.b16 %v396
    %v1553 = vunpack.c.l.b16 %v397
    %v1554 = vunpack.c.l.b16 %v398
    %v1555 = vunpack.c.l.b16 %v399
    %v1556 = vunpack.c.l.b16 %v400
    %v1557 = vunpack.c.l.b16 %v401
    %v1558 = vunpack.c.l.b16 %v402
    %v1559 = vunpack.c.l.b16 %v403
    %v1560 = vunpack.c.l.b16 %v404
    %v1561 = vunpack.c.l.b16 %v405
    %v1562 = vunpack.c.l.b16 %v406
    %v1563 = vunpack.c.l.b16 %v407
    %v1564 = vunpack.c.l.b16 %v408
    %v1565 = vunpack.c.l.b16 %v409
    %v1566 = vunpack.c.l.b16 %v410
    %v1567 = vunpack.c.l.b16 %v411
    %v1568 = vunpack.c.l.b16 %v412
    %v1569 = vunpack.c.l.b16 %v413
    %v1570 = vunpack.c.l.b16 %v414
    %v1571 = vunpack.c.l.b16 %v415
    %v1572 = vunpack.c.l.b16 %v416
    %v1573 = vunpack.c.l.b16 %v417
    %v1574 = vunpack.c.l.b16 %v418
    %v1575 = vunpack.c.l.b16 %v419
    %v1576 = vunpack.c.l.b16 %v420
    %v1577 = vunpack.c.l.b16 %v421
    %v1578 = vunpack.c.l.b16 %v422
    %v1579 = vunpack.c.l.b16 %v423
    %v1580 = vunpack.c.l.b16 %v424
    %v1581 = vunpack.c.l.b16 %v425
    %v1582 = vunpack.c.l.b16 %v426
    %v1583 = vunpack.c.l.b16 %v427
    %v1584 = vunpack.c.l.b16 %v428
    %v1585 = vunpack.c.l.b16 %v429
    %v1586 = vunpack.c.l.b16 %v430
    %v1587 = vunpack.c.l.b16 %v431
    %v1588 = vunpack.c.l.b16 %v432
    %v1589 = vunpack.c.l.b16 %v433
    %v1590 = vunpack.c.l.b16 %v434
    %v1591 = vunpack.c.l.b16 %v435
    %v1592 = vunpack.c.l.b16 %v436
    %v1593 = vunpack.c.l.b16 %v437
    %v1594 = vunpack.c.l.b16 %v438
    %v1595 = vunpack.c.l.b16 %v439
    %v1596 = vunpack.c.l.b16 %v440
    %v1597 = vunpack.c.l.b16 %v441
    %v1598 = vunpack.c.l.b16 %v442
    %v1599 = vunpack.c.l.b16 %v443
    %v1600 = vunpack.c.l.b16 %v444
    %v1601 = vunpack.c.l.b16 %v445
    %v1602 = vunpack.c.l.b16 %v446
    %v1603 = vunpack.c.l.b16 %v447
    %v1604 = vunpack.c.l.b16 %v448
    %v1605 = vunpack.c.l.b16 %v449
    %v1606 = vunpack.c.l.b16 %v450
    %v1607 = vunpack.c.l.b16 %v451
    %v1608 = vunpack.c.l.b16 %v452
    %v1609 = vunpack.c.l.b16 %v453
    %v1610 = vunpack.c.l.b16 %v454
    %v1611 = vunpack.c.l.b16 %v455
    %v1612 = vunpack.c.l.b16 %v456
    %v1613 = vunpack.c.l.b16 %v457
    %v1614 = vunpack.c.l.b16 %v458
    %v1615 = vunpack.c.l.b16 %v459
    %v1616 = vunpack.c.l.b16 %v460
    %v1617 = vunpack.c.l.b16 %v461
    %v1618 = vunpack.c.l.b16 %v462
    %v1619 = vunpack.c.l.b16 %v463
    %v1620 = vunpack.c.l.b16 %v464
    %v1621 = vunpack.c.l.b16 %v465
    %v1622 = vunpack.c.l.b16 %v466
    %v1623 = vunpack.c.l.b16 %v467
    %v1624 = vunpack.c.l.b16 %v468
    %v1625 = vunpack.c.l.b16 %v469
    %v1626 = vunpack.c.l.b16 %v470
    %v1627 = vunpack.c.l.b16 %v471
    %v1628 = vunpack.c.l.b16 %v472
    %v1629 = vunpack.c.l.b16 %v473
    %v1630 = vunpack.c.l.b16 %v474
    %v1631 = vunpack.c.l.b16 %v475
    %v1632 = vunpack.c.l.b16 %v476
    %v1633 = vunpack.c.l.b16 %v477
    %v1634 = vunpack.c.l.b16 %v478
    %v1635 = vunpack.c.l.b16 %v479
    %v1636 = vunpack.c.l.b16 %v480
    %v1637 = vunpack.c.l.b16 %v481
    %v1638 = vunpack.c.l.b16 %v482
    %v1639 = vunpack.c.l.b16 %v483
    %v1640 = vunpack.c.l.b16 %v484
    %v1641 = vunpack.c.l.b16 %v485
    %v1642 = vunpack.c.l.b16 %v486
    %v1643 = vunpack.c.l.b16 %v487
    %v1644 = vunpack.c.l.b16 %v488
    %v1645 = vunpack.c.l.b16 %v489
    %v1646 = vunpack.c.l.b16 %v490
    %v1647 = vunpack.c.l.b16 %v491
    %v1648 = vunpack.c.l.b16 %v492
    %v1649 = vunpack.c.l.b16 %v493
    %v1650 = vunpack.c.l.b16 %v494
    %v1651 = vunpack.c.l.b16 %v495
    %v1652 = vunpack.c.l.b16 %v496
    %v1653 = vunpack.c.l.b16 %v497
    %v1654 = vunpack.c.l.b16 %v498
    %v1655 = vunpack.c.l.b16 %v499
    %v1656 = vunpack.c.l.b16 %v500
    %v1657 = vunpack.c.l.b16 %v501
    %v1658 = vunpack.c.l.b16 %v502
    %v1659 = vunpack.c.l.b16 %v503
    %v1660 = vunpack.c.l.b16 %v504
    %v1661 = vunpack.c.l.b16 %v505
    %v1662 = vunpack.c.l.b16 %v506
    %v1663 = vunpack.c.l.b16 %v507
    %v1664 = vunpack.c.l.b16 %v508
    %v1665 = vunpack.c.l.b16 %v509
    %v1666 = vunpack.c.l.b16 %v510
    %v1667 = vunpack.c.l.b16 %v511
    %v1668 = vunpack.c.l.b16 %v512
    %v1669 = vunpack.c.l.b16 %v513
    %v1670 = vunpack.c.l.b16 %v514
    %v1671 = vunpack.c.l.b16 %v515
    %v1672 = vunpack.c.l.b16 %v516
    %v1673 = vunpack.c.l.b16 %v517
    %v1674 = vunpack.c.l.b16 %v518
    %v1675 = vunpack.c.l.b16 %v519
    %v1676 = vunpack.c.l.b16 %v520
    %v1677 = vunpack.c.l.b16 %v521
    %v1678 = vunpack.c.l.b16 %v522
    %v1679 = vunpack.c.l.b16 %v523
    %v1680 = vunpack.c.l.b16 %v524
    %v1681 = vunpack.c.l.b16 %v525
    %v1682 = vunpack.c.l.b16 %v526
    %v1683 = vunpack.c.l.b16 %v527
    %v1684 = vunpack.c.l.b16 %v528
    %v1685 = vunpack.c.l.b16 %v529
    %v1686 = vunpack.c.l.b16 %v530
    %v1687 = vunpack.c.l.b16 %v531
    %v1688 = vunpack.c.l.b16 %v532
    %v1689 = vunpack.c.l.b16 %v533
    %v1690 = vunpack.c.l.b16 %v534
    %v1691 = vunpack.c.l.b16 %v535
    %v1692 = vunpack.c.l.b16 %v536
    %v1693 = vunpack.c.l.b16 %v537
    %v1694 = vunpack.c.l.b16 %v538
    %v1695 = vunpack.c.l.b16 %v539
    %v1696 = vunpack.c.l.b16 %v540
    %v1697 = vunpack.c.l.b16 %v541
    %v1698 = vunpack.c.l.b16 %v542
    %v1699 = vunpack.c.l.b16 %v543
    %v1700 = vunpack.c.l.b16 %v544
    %v1701 = vunpack.c.l.b16 %v545
    %v1702 = vunpack.c.l.b16 %v546
    %v1703 = vunpack.c.l.b16 %v547
    %v1704 = vunpack.c.l.b16 %v548
    %v1705 = vunpack.c.l.b16 %v549
    %v1706 = vunpack.c.l.b16 %v550
    %v1707 = vunpack.c.l.b16 %v551
    %v1708 = vunpack.c.l.b16 %v552
    %v1709 = vunpack.c.l.b16 %v553
    %v1710 = vunpack.c.l.b16 %v554
    %v1711 = vunpack.c.l.b16 %v555
    %v1712 = vunpack.c.l.b16 %v556
    %v1713 = vunpack.c.l.b16 %v557
    %v1714 = vunpack.c.l.b16 %v558
    %v1715 = vunpack.c.l.b16 %v559
    %v1716 = vunpack.c.l.b16 %v560
    %v1717 = vunpack.c.l.b16 %v561
    %v1718 = vunpack.c.l.b16 %v562
    %v1719 = vunpack.c.l.b16 %v563
    %v1720 = vunpack.c.l.b16 %v564
    %v1721 = vunpack.c.l.b16 %v565
    %v1722 = vunpack.c.l.b16 %v566
    %v1723 = vunpack.c.l.b16 %v567
    %v1724 = vunpack.c.l.b16 %v568
    %v1725 = vunpack.c.l.b16 %v569
    %v1726 = vunpack.c.l.b16 %v570
    %v1727 = vunpack.c.l.b16 %v571
    %v1728 = vunpack.c.l.b16 %v572
    %v1729 = vunpack.c.l.b16 %v573
    %v1730 = vunpack.c.l.b16 %v574
    %v1731 = vunpack.c.l.b16 %v575
    %v1732 = vunpack.c.l.b16 %v576
    %v1733 = vunpack.c.l.b16 %v577
    %v1734 = vunpack.c.l.b16 %v578
    %v1735 = vunpack.c.l.b16 %v579
    %v1736 = vunpack.c.l.b16 %v580
    %v1737 = vunpack.c.l.b16 %v581
    %v1738 = vunpack.c.l.b16 %v582
    %v1739 = vunpack.c.l.b16 %v583
    %v1740 = vunpack.c.l.b16 %v584
    %v1741 = vunpack.c.l.b16 %v585
    %v1742 = vunpack.c.l.b16 %v586
    %v1743 = vunpack.c.l.b16 %v587
    %v1744 = vunpack.c.l.b16 %v588
    %v1745 = vunpack.c.l.b16 %v589
    %v1746 = vunpack.c.l.b16 %v590
    %v1747 = vunpack.c.l.b16 %v591
    %v1748 = vunpack.c.l.b16 %v592
    %v1749 = vunpack.c.l.b16 %v593
    %v1750 = vunpack.c.l.b16 %v594
    %v1751 = vunpack.c.l.b16 %v595
    %v1752 = vunpack.c.l.b16 %v596
    %v1753 = vunpack.c.l.b16 %v597
    %v1754 = vunpack.c.l.b16 %v598
    %v1755 = vunpack.c.l.b16 %v599
    %v1756 = vunpack.c.l.b16 %v600
    %v1757 = vunpack.c.l.b16 %v601
    %v1758 = vunpack.c.l.b16 %v602
    %v1759 = vunpack.c.l.b16 %v603
    %v1760 = vunpack.c.l.b16 %v604
    %v1761 = vunpack.c.l.b16 %v605
    %v1762 = vunpack.c.l.b16 %v606
    %v1763 = vunpack.c.l.b16 %v607
    %v1764 = vunpack.c.l.b16 %v608
    %v1765 = vunpack.c.l.b16 %v609
    %v1766 = vpack.c.b16 %v1191, %v1190
    %v1767 = vpack.c.b16 %v1193, %v1192
    %v1768 = vpack.c.b16 %v1195, %v1194
    %v1769 = vpack.c.b16 %v1197, %v1196
    %v1770 = vpack.c.b16 %v1199, %v1198
    %v1771 = vpack.c.b16 %v1201, %v1200
    %v1772 = vpack.c.b16 %v1203, %v1202
    %v1773 = vpack.c.b16 %v1205, %v1204
    %v1774 = vpack.c.b16 %v1207, %v1206
    %v1775 = vpack.c.b16 %v1209, %v1208
    %v1776 = vpack.c.b16 %v1211, %v1210
    %v1777 = vpack.c.b16 %v1213, %v1212
    %v1778 = vpack.c.b16 %v1215, %v1214
    %v1779 = vpack.c.b16 %v1217, %v1216
    %v1780 = vpack.c.b16 %v1219, %v1218
    %v1781 = vpack.c.b16 %v1221, %v1220
    %v1782 = vpack.c.b16 %v1223, %v1222
    %v1783 = vpack.c.b16 %v1225, %v1224
    %v1784 = vpack.c.b16 %v1227, %v1226
    %v1785 = vpack.c.b16 %v1229, %v1228
    %v1786 = vpack.c.b16 %v1231, %v1230
    %v1787 = vpack.c.b16 %v1233, %v1232
    %v1788 = vpack.c.b16 %v1235, %v1234
    %v1789 = vpack.c.b16 %v1237, %v1236
    %v1790 = vpack.c.b16 %v1239, %v1238
    %v1791 = vpack.c.b16 %v1241, %v1240
    %v1792 = vpack.c.b16 %v1243, %v1242
    %v1793 = vpack.c.b16 %v1245, %v1244
    %v1794 = vpack.c.b16 %v1247, %v1246
    %v1795 = vpack.c.b16 %v1249, %v1248
    %v1796 = vpack.c.b16 %v1251, %v1250
    %v1797 = vpack.c.b16 %v1253, %v1252
    %v1798 = vpack.c.b16 %v1255, %v1254
    %v1799 = vpack.c.b16 %v1257, %v1256
    %v1800 = vpack.c.b16 %v1259, %v1258
    %v1801 = vpack.c.b16 %v1261, %v1260
    %v1802 = vpack.c.b16 %v1263, %v1262
    %v1803 = vpack.c.b16 %v1265, %v1264
    %v1804 = vpack.c.b16 %v1267, %v1266
    %v1805 = vpack.c.b16 %v1269, %v1268
    %v1806 = vpack.c.b16 %v1271, %v1270
    %v1807 = vpack.c.b16 %v1273, %v1272
    %v1808 = vpack.c.b16 %v1275, %v1274
    %v1809 = vpack.c.b16 %v1277, %v1276
    %v1810 = vpack.c.b16 %v1279, %v1278
    %v1811 = vpack.c.b16 %v1281, %v1280
    %v1812 = vpack.c.b16 %v1283, %v1282
    %v1813 = vpack.c.b16 %v1285, %v1284
    %v1814 = vpack.c.b16 %v1287, %v1286
    %v1815 = vpack.c.b16 %v1289, %v1288
    %v1816 = vpack.c.b16 %v1291, %v1290
    %v1817 = vpack.c.b16 %v1293, %v1292
    %v1818 = vpack.c.b16 %v1295, %v1294
    %v1819 = vpack.c.b16 %v1297, %v1296
    %v1820 = vpack.c.b16 %v1299, %v1298
    %v1821 = vpack.c.b16 %v1301, %v1300
    %v1822 = vpack.c.b16 %v1303, %v1302
    %v1823 = vpack.c.b16 %v1305, %v1304
    %v1824 = vpack.c.b16 %v1307, %v1306
    %v1825 = vpack.c.b16 %v1309, %v1308
    %v1826 = vpack.c.b16 %v1311, %v1310
    %v1827 = vpack.c.b16 %v1313, %v1312
    %v1828 = vpack.c.b16 %v1315, %v1314
    %v1829 = vpack.c.b16 %v1317, %v1316
    %v1830 = vpack.c.b16 %v1319, %v1318
    %v1831 = vpack.c.b16 %v1321, %v1320
    %v1832 = vpack.c.b16 %v1323, %v1322
    %v1833 = vpack.c.b16 %v1325, %v1324
    %v1834 = vpack.c.b16 %v1327, %v1326
    %v1835 = vpack.c.b16 %v1329, %v1328
    %v1836 = vpack.c.b16 %v1331, %v1330
    %v1837 = vpack.c.b16 %v1333, %v1332
    %v1838 = vpack.c.b16 %v1335, %v1334
    %v1839 = vpack.c.b16 %v1337, %v1336
    %v1840 = vpack.c.b16 %v1339, %v1338
    %v1841 = vpack.c.b16 %v1341, %v1340
    %v1842 = vpack.c.b16 %v1343, %v1342
    %v1843 = vpack.c.b16 %v1345, %v1344
    %v1844 = vpack.c.b16 %v1347, %v1346
    %v1845 = vpack.c.b16 %v1349, %v1348
    %v1846 = vpack.c.b16 %v1351, %v1350
    %v1847 = vpack.c.b16 %v1353, %v1352
    %v1848 = vpack.c.b16 %v1355, %v1354
    %v1849 = vpack.c.b16 %v1357, %v1356
    %v1850 = vpack.c.b16 %v1359, %v1358
    %v1851 = vpack.c.b16 %v1361, %v1360
    %v1852 = vpack.c.b16 %v1363, %v1362
    %v1853 = vpack.c.b16 %v1365, %v1364
    %v1854 = vpack.c.b16 %v1367, %v1366
    %v1855 = vpack.c.b16 %v1369, %v1368
    %v1856 = vpack.c.b16 %v1371, %v1370
    %v1857 = vpack.c.b16 %v1373, %v1372
    %v1858 = vpack.c.b16 %v1375, %v1374
    %v1859 = vpack.c.b16 %v1377, %v1376
    %v1860 = vpack.c.b16 %v1379, %v1378
    %v1861 = vpack.c.b16 %v1381, %v1380
    %v1862 = vpack.c.b16 %v1383, %v1382
    %v1863 = vpack.c.b16 %v1385, %v1384
    %v1864 = vpack.c.b16 %v1387, %v1386
    %v1865 = vpack.c.b16 %v1389, %v1388
    %v1866 = vpack.c.b16 %v1391, %v1390
    %v1867 = vpack.c.b16 %v1393, %v1392
    %v1868 = vpack.c.b16 %v1395, %v1394
    %v1869 = vpack.c.b16 %v1397, %v1396
    %v1870 = vpack.c.b16 %v1399, %v1398
    %v1871 = vpack.c.b16 %v1401, %v1400
    %v1872 = vpack.c.b16 %v1403, %v1402
    %v1873 = vpack.c.b16 %v1405, %v1404
    %v1874 = vpack.c.b16 %v1407, %v1406
    %v1875 = vpack.c.b16 %v1409, %v1408
    %v1876 = vpack.c.b16 %v1411, %v1410
    %v1877 = vpack.c.b16 %v1413, %v1412
    %v1878 = vpack.c.b16 %v1415, %v1414
    %v1879 = vpack.c.b16 %v1417, %v1416
    %v1880 = vpack.c.b16 %v1419, %v1418
    %v1881 = vpack.c.b16 %v1421, %v1420
    %v1882 = vpack.c.b16 %v1423, %v1422
    %v1883 = vpack.c.b16 %v1425, %v1424
    %v1884 = vpack.c.b16 %v1427, %v1426
    %v1885 = vpack.c.b16 %v1429, %v1428
    %v1886 = vpack.c.b16 %v1431, %v1430
    %v1887 = vpack.c.b16 %v1433, %v1432
    %v1888 = vpack.c.b16 %v1435, %v1434
    %v1889 = vpack.c.b16 %v1437, %v1436
    %v1890 = vpack.c.b16 %v1439, %v1438
    %v1891 = vpack.c.b16 %v1441, %v1440
    %v1892 = vpack.c.b16 %v1443, %v1442
    %v1893 = vpack.c.b16 %v1445, %v1444
    %v1894 = vpack.c.b16 %v1447, %v1446
    %v1895 = vpack.c.b16 %v1449, %v1448
    %v1896 = vpack.c.b16 %v1451, %v1450
    %v1897 = vpack.c.b16 %v1453, %v1452
    %v1898 = vpack.c.b16 %v1455, %v1454
    %v1899 = vpack.c.b16 %v1457, %v1456
    %v1900 = vpack.c.b16 %v1459, %v1458
    %v1901 = vpack.c.b16 %v1461, %v1460
    %v1902 = vpack.c.b16 %v1463, %v1462
    %v1903 = vpack.c.b16 %v1465, %v1464
    %v1904 = vpack.c.b16 %v1467, %v1466
    %v1905 = vpack.c.b16 %v1469, %v1468
    %v1906 = vpack.c.b16 %v1471, %v1470
    %v1907 = vpack.c.b16 %v1473, %v1472
    %v1908 = vpack.c.b16 %v1475, %v1474
    %v1909 = vpack.c.b16 %v1477, %v1476
    %v1910 = vpack.c.b16 %v1479, %v1478
    %v1911 = vpack.c.b16 %v1481, %v1480
    %v1912 = vpack.c.b16 %v1483, %v1482
    %v1913 = vpack.c.b16 %v1485, %v1484
    %v1914 = vpack.c.b16 %v1487, %v1486
    %v1915 = vpack.c.b16 %v1489, %v1488
    %v1916 = vpack.c.b16 %v1491, %v1490
    %v1917 = vpack.c.b16 %v1493, %v1492
    %v1918 = vpack.c.b16 %v1495, %v1494
    %v1919 = vpack.c.b16 %v1497, %v1496
    %v1920 = vpack.c.b16 %v1499, %v1498
    %v1921 = vpack.c.b16 %v1501, %v1500
    %v1922 = vpack.c.b16 %v1503, %v1502
    %v1923 = vpack.c.b16 %v1505, %v1504
    %v1924 = vpack.c.b16 %v1507, %v1506
    %v1925 = vpack.c.b16 %v1509, %v1508
    %v1926 = vpack.c.b16 %v1511, %v1510
    %v1927 = vpack.c.b16 %v1513, %v1512
    %v1928 = vpack.c.b16 %v1515, %v1514
    %v1929 = vpack.c.b16 %v1517, %v1516
    %v1930 = vpack.c.b16 %v1519, %v1518
    %v1931 = vpack.c.b16 %v1521, %v1520
    %v1932 = vpack.c.b16 %v1523, %v1522
    %v1933 = vpack.c.b16 %v1525, %v1524
    %v1934 = vpack.c.b16 %v1527, %v1526
    %v1935 = vpack.c.b16 %v1529, %v1528
    %v1936 = vpack.c.b16 %v1531, %v1530
    %v1937 = vpack.c.b16 %v1533, %v1532
    %v1938 = vpack.c.b16 %v1535, %v1534
    %v1939 = vpack.c.b16 %v1537, %v1536
    %v1940 = vpack.c.b16 %v1539, %v1538
    %v1941 = vpack.c.b16 %v1541, %v1540
    %v1942 = vpack.c.b16 %v1543, %v1542
    %v1943 = vpack.c.b16 %v1545, %v1544
    %v1944 = vpack.c.b16 %v1547, %v1546
    %v1945 = vpack.c.b16 %v1549, %v1548
    %v1946 = vpack.c.b16 %v1551, %v1550
    %v1947 = vpack.c.b16 %v1553, %v1552
    %v1948 = vpack.c.b16 %v1555, %v1554
    %v1949 = vpack.c.b16 %v1557, %v1556
    %v1950 = vpack.c.b16 %v1559, %v1558
    %v1951 = vpack.c.b16 %v1561, %v1560
    %v1952 = vpack.c.b16 %v1563, %v1562
    %v1953 = vpack.c.b16 %v1565, %v1564
    %v1954 = vpack.c.b16 %v1567, %v1566
    %v1955 = vpack.c.b16 %v1569, %v1568
    %v1956 = vpack.c.b16 %v1571, %v1570
    %v1957 = vpack.c.b16 %v1573, %v1572
    %v1958 = vpack.c.b16 %v1575, %v1574
    %v1959 = vpack.c.b16 %v1577, %v1576
    %v1960 = vpack.c.b16 %v1579, %v1578
    %v1961 = vpack.c.b16 %v1581, %v1580
    %v1962 = vpack.c.b16 %v1583, %v1582
    %v1963 = vpack.c.b16 %v1585, %v1584
    %v1964 = vpack.c.b16 %v1587, %v1586
    %v1965 = vpack.c.b16 %v1589, %v1588
    %v1966 = vpack.c.b16 %v1591, %v1590
    %v1967 = vpack.c.b16 %v1593, %v1592
    %v1968 = vpack.c.b16 %v1595, %v1594
    %v1969 = vpack.c.b16 %v1597, %v1596
    %v1970 = vpack.c.b16 %v1599, %v1598
    %v1971 = vpack.c.b16 %v1601, %v1600
    %v1972 = vpack.c.b16 %v1603, %v1602
    %v1973 = vpack.c.b16 %v1605, %v1604
    %v1974 = vpack.c.b16 %v1607, %v1606
    %v1975 = vpack.c.b16 %v1609, %v1608
    %v1976 = vpack.c.b16 %v1611, %v1610
    %v1977 = vpack.c.b16 %v1613, %v1612
    %v1978 = vpack.c.b16 %v1615, %v1614
    %v1979 = vpack.c.b16 %v1617, %v1616
    %v1980 = vpack.c.b16 %v1619, %v1618
    %v1981 = vpack.c.b16 %v1621, %v1620
    %v1982 = vpack.c.b16 %v1623, %v1622
    %v1983 = vpack.c.b16 %v1625, %v1624
    %v1984 = vpack.c.b16 %v1627, %v1626
    %v1985 = vpack.c.b16 %v1629, %v1628
    %v1986 = vpack.c.b16 %v1631, %v1630
    %v1987 = vpack.c.b16 %v1633, %v1632
    %v1988 = vpack.c.b16 %v1635, %v1634
    %v1989 = vpack.c.b16 %v1637, %v1636
    %v1990 = vpack.c.b16 %v1639, %v1638
    %v1991 = vpack.c.b16 %v1641, %v1640
    %v1992 = vpack.c.b16 %v1643, %v1642
    %v1993 = vpack.c.b16 %v1645, %v1644
    %v1994 = vpack.c.b16 %v1647, %v1646
    %v1995 = vpack.c.b16 %v1649, %v1648
    %v1996 = vpack.c.b16 %v1651, %v1650
    %v1997 = vpack.c.b16 %v1653, %v1652
    %v1998 = vpack.c.b16 %v1655, %v1654
    %v1999 = vpack.c.b16 %v1657, %v1656
    %v2000 = vpack.c.b16 %v1659, %v1658
    %v2001 = vpack.c.b16 %v1661, %v1660
    %v2002 = vpack.c.b16 %v1663, %v1662
    %v2003 = vpack.c.b16 %v1665, %v1664
    %v2004 = vpack.c.b16 %v1667, %v1666
    %v2005 = vpack.c.b16 %v1669, %v1668
    %v2006 = vpack.c.b16 %v1671, %v1670
    %v2007 = vpack.c.b16 %v1673, %v1672
    %v2008 = vpack.c.b16 %v1675, %v1674
    %v2009 = vpack.c.b16 %v1677, %v1676
    %v2010 = vpack.c.b16 %v1679, %v1678
    %v2011 = vpack.c.b16 %v1681, %v1680
    %v2012 = vpack.c.b16 %v1683, %v1682
    %v2013 = vpack.c.b16 %v1685, %v1684
    %v2014 = vpack.c.b16 %v1687, %v1686
    %v2015 = vpack.c.b16 %v1689, %v1688
    %v2016 = vpack.c.b16 %v1691, %v1690
    %v2017 = vpack.c.b16 %v1693, %v1692
    %v2018 = vpack.c.b16 %v1695, %v1694
    %v2019 = vpack.c.b16 %v1697, %v1696
    %v2020 = vpack.c.b16 %v1699, %v1698
    %v2021 = vpack.c.b16 %v1701, %v1700
    %v2022 = vpack.c.b16 %v1703, %v1702
    %v2023 = vpack.c.b16 %v1705, %v1704
    %v2024 = vpack.c.b16 %v1707, %v1706
    %v2025 = vpack.c.b16 %v1709, %v1708
    %v2026 = vpack.c.b16 %v1711, %v1710
    %v2027 = vpack.c.b16 %v1713, %v1712
    %v2028 = vpack.c.b16 %v1715, %v1714
    %v2029 = vpack.c.b16 %v1717, %v1716
    %v2030 = vpack.c.b16 %v1719, %v1718
    %v2031 = vpack.c.b16 %v1721, %v1720
    %v2032 = vpack.c.b16 %v1723, %v1722
    %v2033 = vpack.c.b16 %v1725, %v1724
    %v2034 = vpack.c.b16 %v1727, %v1726
    %v2035 = vpack.c.b16 %v1729, %v1728
    %v2036 = vpack.c.b16 %v1731, %v1730
    %v2037 = vpack.c.b16 %v1733, %v1732
    %v2038 = vpack.c.b16 %v1735, %v1734
    %v2039 = vpack.c.b16 %v1737, %v1736
    %v2040 = vpack.c.b16 %v1739, %v1738
    %v2041 = vpack.c.b16 %v1741, %v1740
    %v2042 = vpack.c.b16 %v1743, %v1742
    %v2043 = vpack.c.b16 %v1745, %v1744
    %v2044 = vpack.c.b16 %v1747, %v1746
    %v2045 = vpack.c.b16 %v1749, %v1748
    %v2046 = vpack.c.b16 %v1751, %v1750
    %v2047 = vpack.c.b16 %v1753, %v1752
    %v2048 = vpack.c.b16 %v1755, %v1754
    %v2049 = vpack.c.b16 %v1757, %v1756
    %v2050 = vpack.c.b16 %v1759, %v1758
    %v2051 = vpack.c.b16 %v1761, %v1760
    %v2052 = vpack.c.b16 %v1763, %v1762
    %v2053 = vpack.c.b16 %v1765, %v1764
    %v2058 = vunpack.c.l.b16 %v610
    %v2059 = vunpack.c.l.b16 %v611
    %v2060 = vunpack.c.l.b16 %v612
    %v2061 = vunpack.c.l.b16 %v613
    %v2062 = vpack.c.b16 %v2059, %v2058
    %v2063 = vpack.c.b16 %v2061, %v2060
    %vm2066 = vcmask 261120
    %v2068 = vsel %vm2066, %v1766, 0
    %v2071 = vsel %vm2066, %v1767, 0
    %v2074 = vsel %vm2066, %v1768, 0
    %v2077 = vsel %vm2066, %v1769, 0
    %v2080 = vsel %vm2066, %v1770, 0
    %v2083 = vsel %vm2066, %v1771, 0
    %v2086 = vsel %vm2066, %v1772, 0
    %v2089 = vsel %vm2066, %v1773, 0
    %v2092 = vsel %vm2066, %v1774, 0
    %v2095 = vsel %vm2066, %v1775, 0
    %v2098 = vsel %vm2066, %v1776, 0
    %v2101 = vsel %vm2066, %v1777, 0
    %v2104 = vsel %vm2066, %v1778, 0
    %v2107 = vsel %vm2066, %v1779, 0
    %v2110 = vsel %vm2066, %v1780, 0
    %v2113 = vsel %vm2066, %v1781, 0
    %v2116 = vsel %vm2066, %v1782, 0
    %v2119 = vsel %vm2066, %v1783, 0
    %v2122 = vsel %vm2066, %v1784, 0
    %v2125 = vsel %vm2066, %v1785, 0
    %v2128 = vsel %vm2066, %v1786, 0
    %v2131 = vsel %vm2066, %v1787, 0
    %v2134 = vsel %vm2066, %v1788, 0
    %v2137 = vsel %vm2066, %v1789, 0
    %v2140 = vsel %vm2066, %v1790, 0
    %v2143 = vsel %vm2066, %v1791, 0
    %v2146 = vsel %vm2066, %v1792, 0
    %v2149 = vsel %vm2066, %v1793, 0
    %v2152 = vsel %vm2066, %v1794, 0
    %v2155 = vsel %vm2066, %v1795, 0
    %v2158 = vsel %vm2066, %v1796, 0
    %v2161 = vsel %vm2066, %v1797, 0
    %v2164 = vsel %vm2066, %v1798, 0
    %v2167 = vsel %vm2066, %v1799, 0
    %v2170 = vsel %vm2066, %v1800, 0
    %v2173 = vsel %vm2066, %v1801, 0
    %v2176 = vsel %vm2066, %v1802, 0
    %v2179 = vsel %vm2066, %v1803, 0
    %v2182 = vsel %vm2066, %v1804, 0
    %v2185 = vsel %vm2066, %v1805, 0
    %v2188 = vsel %vm2066, %v1806, 0
    %v2191 = vsel %vm2066, %v1807, 0
    %v2194 = vsel %vm2066, %v1808, 0
    %v2197 = vsel %vm2066, %v1809, 0
    %v2200 = vsel %vm2066, %v1810, 0
    %v2203 = vsel %vm2066, %v1811, 0
    %v2206 = vsel %vm2066, %v1812, 0
    %v2209 = vsel %vm2066, %v1813, 0
    %v2212 = vsel %vm2066, %v1814, 0
    %v2215 = vsel %vm2066, %v1815, 0
    %v2218 = vsel %vm2066, %v1816, 0
    %v2221 = vsel %vm2066, %v1817, 0
    %v2224 = vsel %vm2066, %v1818, 0
    %v2227 = vsel %vm2066, %v1819, 0
    %v2230 = vsel %vm2066, %v1820, 0
    %v2233 = vsel %vm2066, %v1821, 0
    %v2236 = vsel %vm2066, %v1822, 0
    %v2239 = vsel %vm2066, %v1823, 0
    %v2242 = vsel %vm2066, %v1824, 0
    %v2245 = vsel %vm2066, %v1825, 0
    %v2248 = vsel %vm2066, %v1826, 0
    %v2251 = vsel %vm2066, %v1827, 0
    %v2254 = vsel %vm2066, %v1828, 0
    %v2257 = vsel %vm2066, %v1829, 0
    %v2260 = vsel %vm2066, %v1830, 0
    %v2263 = vsel %vm2066, %v1831, 0
    %v2266 = vsel %vm2066, %v1832, 0
    %v2269 = vsel %vm2066, %v1833, 0
    %v2272 = vsel %vm2066, %v1834, 0
    %v2275 = vsel %vm2066, %v1835, 0
    %v2278 = vsel %vm2066, %v1836, 0
    %v2281 = vsel %vm2066, %v1837, 0
    %v2284 = vsel %vm2066, %v1838, 0
    %v2287 = vsel %vm2066, %v1839, 0
    %v2290 = vsel %vm2066, %v1840, 0
    %v2293 = vsel %vm2066, %v1841, 0
    %v2296 = vsel %vm2066, %v1842, 0
    %v2299 = vsel %vm2066, %v1843, 0
    %v2302 = vsel %vm2066, %v1844, 0
    %v2305 = vsel %vm2066, %v1845, 0
    %v2308 = vsel %vm2066, %v1846, 0
    %v2311 = vsel %vm2066, %v1847, 0
    %v2314 = vsel %vm2066, %v1848, 0
    %v2317 = vsel %vm2066, %v1849, 0
    %v2320 = vsel %vm2066, %v1850, 0
    %v2323 = vsel %vm2066, %v1851, 0
    %v2326 = vsel %vm2066, %v1852, 0
    %v2329 = vsel %vm2066, %v1853, 0
    %v2332 = vsel %vm2066, %v1854, 0
    %v2335 = vsel %vm2066, %v1855, 0
    %v2338 = vsel %vm2066, %v1856, 0
    %v2341 = vsel %vm2066, %v1857, 0
    %v2344 = vsel %vm2066, %v1858, 0
    %v2347 = vsel %vm2066, %v1859, 0
    %v2350 = vsel %vm2066, %v1860, 0
    %v2353 = vsel %vm2066, %v1861, 0
    %v2356 = vsel %vm2066, %v1862, 0
    %v2359 = vsel %vm2066, %v1863, 0
    %v2362 = vsel %vm2066, %v1864, 0
    %v2365 = vsel %vm2066, %v1865, 0
    %v2368 = vsel %vm2066, %v1866, 0
    %v2371 = vsel %vm2066, %v1867, 0
    %v2374 = vsel %vm2066, %v1868, 0
    %v2377 = vsel %vm2066, %v1869, 0
    %v2380 = vsel %vm2066, %v1870, 0
    %v2383 = vsel %vm2066, %v1871, 0
    %v2386 = vsel %vm2066, %v1872, 0
    %v2389 = vsel %vm2066, %v1873, 0
    %v2392 = vsel %vm2066, %v1874, 0
    %v2395 = vsel %vm2066, %v1875, 0
    %v2398 = vsel %vm2066, %v1876, 0
    %v2401 = vsel %vm2066, %v1877, 0
    %v2404 = vsel %vm2066, %v1878, 0
    %v2407 = vsel %vm2066, %v1879, 0
    %v2410 = vsel %vm2066, %v1880, 0
    %v2413 = vsel %vm2066, %v1881, 0
    %v2416 = vsel %vm2066, %v1882, 0
    %v2419 = vsel %vm2066, %v1883, 0
    %v2422 = vsel %vm2066, %v1884, 0
    %v2425 = vsel %vm2066, %v1885, 0
    %v2428 = vsel %vm2066, %v1886, 0
    %v2431 = vsel %vm2066, %v1887, 0
    %v2434 = vsel %vm2066, %v1888, 0
    %v2437 = vsel %vm2066, %v1889, 0
    %v2440 = vsel %vm2066, %v1890, 0
    %v2443 = vsel %vm2066, %v1891, 0
    %v2446 = vsel %vm2066, %v1892, 0
    %v2449 = vsel %vm2066, %v1893, 0
    %v2452 = vsel %vm2066, %v1894, 0
    %v2455 = vsel %vm2066, %v1895, 0
    %v2458 = vsel %vm2066, %v1896, 0
    %v2461 = vsel %vm2066, %v1897, 0
    %v2464 = vsel %vm2066, %v1898, 0
    %v2467 = vsel %vm2066, %v1899, 0
    %v2470 = vsel %vm2066, %v1900, 0
    %v2473 = vsel %vm2066, %v1901, 0
    %v2476 = vsel %vm2066, %v1902, 0
    %v2479 = vsel %vm2066, %v1903, 0
    %v2482 = vsel %vm2066, %v1904, 0
    %v2485 = vsel %vm2066, %v1905, 0
    %v2488 = vsel %vm2066, %v1906, 0
    %v2491 = vsel %vm2066, %v1907, 0
    %v2494 = vsel %vm2066, %v1908, 0
    %v2497 = vsel %vm2066, %v1909, 0
    %v2500 = vsel %vm2066, %v1910, 0
    %v2503 = vsel %vm2066, %v1911, 0
    %v2506 = vsel %vm2066, %v1912, 0
    %v2509 = vsel %vm2066, %v1913, 0
    %v2512 = vsel %vm2066, %v1914, 0
    %v2515 = vsel %vm2066, %v1915, 0
    %v2518 = vsel %vm2066, %v1916, 0
    %v2521 = vsel %vm2066, %v1917, 0
    %v2524 = vsel %vm2066, %v1918, 0
    %v2527 = vsel %vm2066, %v1919, 0
    %v2530 = vsel %vm2066, %v1920, 0
    %v2533 = vsel %vm2066, %v1921, 0
    %v2536 = vsel %vm2066, %v1922, 0
    %v2539 = vsel %vm2066, %v1923, 0
    %v2542 = vsel %vm2066, %v1924, 0
    %v2545 = vsel %vm2066, %v1925, 0
    %v2548 = vsel %vm2066, %v1926, 0
    %v2551 = vsel %vm2066, %v1927, 0
    %v2554 = vsel %vm2066, %v1928, 0
    %v2557 = vsel %vm2066, %v1929, 0
    %v2560 = vsel %vm2066, %v1930, 0
    %v2563 = vsel %vm2066, %v1931, 0
    %v2566 = vsel %vm2066, %v1932, 0
    %v2569 = vsel %vm2066, %v1933, 0
    %v2572 = vsel %vm2066, %v1934, 0
    %v2575 = vsel %vm2066, %v1935, 0
    %v2578 = vsel %vm2066, %v1936, 0
    %v2581 = vsel %vm2066, %v1937, 0
    %v2584 = vsel %vm2066, %v1938, 0
    %v2587 = vsel %vm2066, %v1939, 0
    %v2590 = vsel %vm2066, %v1940, 0
    %v2593 = vsel %vm2066, %v1941, 0
    %v2596 = vsel %vm2066, %v1942, 0
    %v2599 = vsel %vm2066, %v1943, 0
    %v2602 = vsel %vm2066, %v1944, 0
    %v2605 = vsel %vm2066, %v1945, 0
    %v2608 = vsel %vm2066, %v1946, 0
    %v2611 = vsel %vm2066, %v1947, 0
    %v2614 = vsel %vm2066, %v1948, 0
    %v2617 = vsel %vm2066, %v1949, 0
    %v2620 = vsel %vm2066, %v1950, 0
    %v2623 = vsel %vm2066, %v1951, 0
    %v2626 = vsel %vm2066, %v1952, 0
    %v2629 = vsel %vm2066, %v1953, 0
    %v2632 = vsel %vm2066, %v1954, 0
    %v2635 = vsel %vm2066, %v1955, 0
    %v2638 = vsel %vm2066, %v1956, 0
    %v2641 = vsel %vm2066, %v1957, 0
    %v2644 = vsel %vm2066, %v1958, 0
    %v2647 = vsel %vm2066, %v1959, 0
    %v2650 = vsel %vm2066, %v1960, 0
    %v2653 = vsel %vm2066, %v1961, 0
    %v2656 = vsel %vm2066, %v1962, 0
    %v2659 = vsel %vm2066, %v1963, 0
    %v2662 = vsel %vm2066, %v1964, 0
    %v2665 = vsel %vm2066, %v1965, 0
    %v2668 = vsel %vm2066, %v1966, 0
    %v2671 = vsel %vm2066, %v1967, 0
    %v2674 = vsel %vm2066, %v1968, 0
    %v2677 = vsel %vm2066, %v1969, 0
    %v2680 = vsel %vm2066, %v1970, 0
    %v2683 = vsel %vm2066, %v1971, 0
    %v2686 = vsel %vm2066, %v1972, 0
    %v2689 = vsel %vm2066, %v1973, 0
    %v2692 = vsel %vm2066, %v1974, 0
    %v2695 = vsel %vm2066, %v1975, 0
    %v2698 = vsel %vm2066, %v1976, 0
    %v2701 = vsel %vm2066, %v1977, 0
    %v2704 = vsel %vm2066, %v1978, 0
    %v2707 = vsel %vm2066, %v1979, 0
    %v2710 = vsel %vm2066, %v1980, 0
    %v2713 = vsel %vm2066, %v1981, 0
    %v2716 = vsel %vm2066, %v1982, 0
    %v2719 = vsel %vm2066, %v1983, 0
    %v2722 = vsel %vm2066, %v1984, 0
    %v2725 = vsel %vm2066, %v1985, 0
    %v2728 = vsel %vm2066, %v1986, 0
    %v2731 = vsel %vm2066, %v1987, 0
    %v2734 = vsel %vm2066, %v1988, 0
    %v2737 = vsel %vm2066, %v1989, 0
    %v2740 = vsel %vm2066, %v1990, 0
    %v2743 = vsel %vm2066, %v1991, 0
    %v2746 = vsel %vm2066, %v1992, 0
    %v2749 = vsel %vm2066, %v1993, 0
    %v2752 = vsel %vm2066, %v1994, 0
    %v2755 = vsel %vm2066, %v1995, 0
    %v2758 = vsel %vm2066, %v1996, 0
    %v2761 = vsel %vm2066, %v1997, 0
    %v2764 = vsel %vm2066, %v1998, 0
    %v2767 = vsel %vm2066, %v1999, 0
    %v2770 = vsel %vm2066, %v2000, 0
    %v2773 = vsel %vm2066, %v2001, 0
    %v2776 = vsel %vm2066, %v2002, 0
    %v2779 = vsel %vm2066, %v2003, 0
    %v2782 = vsel %vm2066, %v2004, 0
    %v2785 = vsel %vm2066, %v2005, 0
    %v2788 = vsel %vm2066, %v2006, 0
    %v2791 = vsel %vm2066, %v2007, 0
    %v2794 = vsel %vm2066, %v2008, 0
    %v2797 = vsel %vm2066, %v2009, 0
    %v2800 = vsel %vm2066, %v2010, 0
    %v2803 = vsel %vm2066, %v2011, 0
    %v2806 = vsel %vm2066, %v2012, 0
    %v2809 = vsel %vm2066, %v2013, 0
    %v2812 = vsel %vm2066, %v2014, 0
    %v2815 = vsel %vm2066, %v2015, 0
    %v2818 = vsel %vm2066, %v2016, 0
    %v2821 = vsel %vm2066, %v2017, 0
    %v2824 = vsel %vm2066, %v2018, 0
    %v2827 = vsel %vm2066, %v2019, 0
    %v2830 = vsel %vm2066, %v2020, 0
    %v2833 = vsel %vm2066, %v2021, 0
    %v2836 = vsel %vm2066, %v2022, 0
    %v2839 = vsel %vm2066, %v2023, 0
    %v2842 = vsel %vm2066, %v2024, 0
    %v2845 = vsel %vm2066, %v2025, 0
    %v2848 = vsel %vm2066, %v2026, 0
    %v2851 = vsel %vm2066, %v2027, 0
    %v2854 = vsel %vm2066, %v2028, 0
    %v2857 = vsel %vm2066, %v2029, 0
    %v2860 = vsel %vm2066, %v2030, 0
    %v2863 = vsel %vm2066, %v2031, 0
    %v2866 = vsel %vm2066, %v2032, 0
    %v2869 = vsel %vm2066, %v2033, 0
    %v2872 = vsel %vm2066, %v2034, 0
    %v2875 = vsel %vm2066, %v2035, 0
    %v2878 = vsel %vm2066, %v2036, 0
    %v2881 = vsel %vm2066, %v2037, 0
    %v2884 = vsel %vm2066, %v2038, 0
    %v2887 = vsel %vm2066, %v2039, 0
    %v2890 = vsel %vm2066, %v2040, 0
    %v2893 = vsel %vm2066, %v2041, 0
    %v2896 = vsel %vm2066, %v2042, 0
    %v2899 = vsel %vm2066, %v2043, 0
    %v2902 = vsel %vm2066, %v2044, 0
    %v2905 = vsel %vm2066, %v2045, 0
    %v2908 = vsel %vm2066, %v2046, 0
    %v2911 = vsel %vm2066, %v2047, 0
    %v2914 = vsel %vm2066, %v2048, 0
    %v2917 = vsel %vm2066, %v2049, 0
    %v2920 = vsel %vm2066, %v2050, 0
    %v2923 = vsel %vm2066, %v2051, 0
    %v2926 = vsel %vm2066, %v2052, 0
    %v2929 = vsel %vm2066, %v2053, 0
    %2931 = vmatpush.bf16.msra.mxu0 0
    %2932 = vmatpush.bf16.msra.mxu0 0
    %2933 = vmatpush.bf16.msra.mxu0 0
    %2934 = vmatpush.bf16.msra.mxu0 0
    %2935 = vmatpush.bf16.msra.mxu0 0
    %2936 = vmatpush.bf16.msra.mxu0 0
    %2937 = vmatpush.bf16.msra.mxu0 %v2063
    %2938 = vmatpush.bf16.msra.mxu0 %v2062
    %2939 = vmatmul.bf16.gmra.mxu0 %v2068
    %v2940 = vpop.f32.mrf.mxu0
    %v2941 = vadd.f32 0.0, %v2940
    %v2942 = vpop.f32.mrf.mxu0
    %v2943 = vadd.f32 0.0, %v2942
    %2944 = vmatmul.bf16.gmra.mxu0 %v2071
    %v2945 = vpop.f32.mrf.mxu0
    %v2946 = vadd.f32 0.0, %v2945
    %v2947 = vpop.f32.mrf.mxu0
    %v2948 = vadd.f32 0.0, %v2947
    %2949 = vmatmul.bf16.gmra.mxu0 %v2074
    %v2950 = vpop.f32.mrf.mxu0
    %v2951 = vadd.f32 0.0, %v2950
    %v2952 = vpop.f32.mrf.mxu0
    %v2953 = vadd.f32 0.0, %v2952
    %2954 = vmatmul.bf16.gmra.mxu0 %v2077
    %v2955 = vpop.f32.mrf.mxu0
    %v2956 = vadd.f32 0.0, %v2955
    %v2957 = vpop.f32.mrf.mxu0
    %v2958 = vadd.f32 0.0, %v2957
    %2959 = vmatmul.bf16.gmra.mxu0 %v2080
    %v2960 = vpop.f32.mrf.mxu0
    %v2961 = vadd.f32 0.0, %v2960
    %v2962 = vpop.f32.mrf.mxu0
    %v2963 = vadd.f32 0.0, %v2962
    %2964 = vmatmul.bf16.gmra.mxu0 %v2083
    %v2965 = vpop.f32.mrf.mxu0
    %v2966 = vadd.f32 0.0, %v2965
    %v2967 = vpop.f32.mrf.mxu0
    %v2968 = vadd.f32 0.0, %v2967
    %2969 = vmatmul.bf16.gmra.mxu0 %v2086
    %v2970 = vpop.f32.mrf.mxu0
    %v2971 = vadd.f32 0.0, %v2970
    %v2972 = vpop.f32.mrf.mxu0
    %v2973 = vadd.f32 0.0, %v2972
    %2974 = vmatmul.bf16.gmra.mxu0 %v2089
    %v2975 = vpop.f32.mrf.mxu0
    %v2976 = vadd.f32 0.0, %v2975
    %v2977 = vpop.f32.mrf.mxu0
    %v2978 = vadd.f32 0.0, %v2977
    %2979 = vmatmul.bf16.gmra.mxu0 %v2092
    %v2980 = vpop.f32.mrf.mxu0
    %v2981 = vadd.f32 0.0, %v2980
    %v2982 = vpop.f32.mrf.mxu0
    %v2983 = vadd.f32 0.0, %v2982
    %2984 = vmatmul.bf16.gmra.mxu0 %v2095
    %v2985 = vpop.f32.mrf.mxu0
    %v2986 = vadd.f32 0.0, %v2985
    %v2987 = vpop.f32.mrf.mxu0
    %v2988 = vadd.f32 0.0, %v2987
    %2989 = vmatmul.bf16.gmra.mxu0 %v2098
    %v2990 = vpop.f32.mrf.mxu0
    %v2991 = vadd.f32 0.0, %v2990
    %v2992 = vpop.f32.mrf.mxu0
    %v2993 = vadd.f32 0.0, %v2992
    %2994 = vmatmul.bf16.gmra.mxu0 %v2101
    %v2995 = vpop.f32.mrf.mxu0
    %v2996 = vadd.f32 0.0, %v2995
    %v2997 = vpop.f32.mrf.mxu0
    %v2998 = vadd.f32 0.0, %v2997
    %2999 = vmatmul.bf16.gmra.mxu0 %v2104
    %v3000 = vpop.f32.mrf.mxu0
    %v3001 = vadd.f32 0.0, %v3000
    %v3002 = vpop.f32.mrf.mxu0
    %v3003 = vadd.f32 0.0, %v3002
    %3004 = vmatmul.bf16.gmra.mxu0 %v2107
    %v3005 = vpop.f32.mrf.mxu0
    %v3006 = vadd.f32 0.0, %v3005
    %v3007 = vpop.f32.mrf.mxu0
    %v3008 = vadd.f32 0.0, %v3007
    %3009 = vmatmul.bf16.gmra.mxu0 %v2110
    %v3010 = vpop.f32.mrf.mxu0
    %v3011 = vadd.f32 0.0, %v3010
    %v3012 = vpop.f32.mrf.mxu0
    %v3013 = vadd.f32 0.0, %v3012
    %3014 = vmatmul.bf16.gmra.mxu0 %v2113
    %v3015 = vpop.f32.mrf.mxu0
    %v3016 = vadd.f32 0.0, %v3015
    %v3017 = vpop.f32.mrf.mxu0
    %v3018 = vadd.f32 0.0, %v3017
    %3019 = vmatmul.bf16.gmra.mxu0 %v2116
    %v3020 = vpop.f32.mrf.mxu0
    %v3021 = vadd.f32 0.0, %v3020
    %v3022 = vpop.f32.mrf.mxu0
    %v3023 = vadd.f32 0.0, %v3022
    %3024 = vmatmul.bf16.gmra.mxu0 %v2119
    %v3025 = vpop.f32.mrf.mxu0
    %v3026 = vadd.f32 0.0, %v3025
    %v3027 = vpop.f32.mrf.mxu0
    %v3028 = vadd.f32 0.0, %v3027
    %3029 = vmatmul.bf16.gmra.mxu0 %v2122
    %v3030 = vpop.f32.mrf.mxu0
    %v3031 = vadd.f32 0.0, %v3030
    %v3032 = vpop.f32.mrf.mxu0
    %v3033 = vadd.f32 0.0, %v3032
    %3034 = vmatmul.bf16.gmra.mxu0 %v2125
    %v3035 = vpop.f32.mrf.mxu0
    %v3036 = vadd.f32 0.0, %v3035
    %v3037 = vpop.f32.mrf.mxu0
    %v3038 = vadd.f32 0.0, %v3037
    %3039 = vmatmul.bf16.gmra.mxu0 %v2128
    %v3040 = vpop.f32.mrf.mxu0
    %v3041 = vadd.f32 0.0, %v3040
    %v3042 = vpop.f32.mrf.mxu0
    %v3043 = vadd.f32 0.0, %v3042
    %3044 = vmatmul.bf16.gmra.mxu0 %v2131
    %v3045 = vpop.f32.mrf.mxu0
    %v3046 = vadd.f32 0.0, %v3045
    %v3047 = vpop.f32.mrf.mxu0
    %v3048 = vadd.f32 0.0, %v3047
    %3049 = vmatmul.bf16.gmra.mxu0 %v2134
    %v3050 = vpop.f32.mrf.mxu0
    %v3051 = vadd.f32 0.0, %v3050
    %v3052 = vpop.f32.mrf.mxu0
    %v3053 = vadd.f32 0.0, %v3052
    %3054 = vmatmul.bf16.gmra.mxu0 %v2137
    %v3055 = vpop.f32.mrf.mxu0
    %v3056 = vadd.f32 0.0, %v3055
    %v3057 = vpop.f32.mrf.mxu0
    %v3058 = vadd.f32 0.0, %v3057
    %3059 = vmatmul.bf16.gmra.mxu0 %v2140
    %v3060 = vpop.f32.mrf.mxu0
    %v3061 = vadd.f32 0.0, %v3060
    %v3062 = vpop.f32.mrf.mxu0
    %v3063 = vadd.f32 0.0, %v3062
    %3064 = vmatmul.bf16.gmra.mxu0 %v2143
    %v3065 = vpop.f32.mrf.mxu0
    %v3066 = vadd.f32 0.0, %v3065
    %v3067 = vpop.f32.mrf.mxu0
    %v3068 = vadd.f32 0.0, %v3067
    %3069 = vmatmul.bf16.gmra.mxu0 %v2146
    %v3070 = vpop.f32.mrf.mxu0
    %v3071 = vadd.f32 0.0, %v3070
    %v3072 = vpop.f32.mrf.mxu0
    %v3073 = vadd.f32 0.0, %v3072
    %3074 = vmatmul.bf16.gmra.mxu0 %v2149
    %v3075 = vpop.f32.mrf.mxu0
    %v3076 = vadd.f32 0.0, %v3075
    %v3077 = vpop.f32.mrf.mxu0
    %v3078 = vadd.f32 0.0, %v3077
    %3079 = vmatmul.bf16.gmra.mxu0 %v2152
    %v3080 = vpop.f32.mrf.mxu0
    %v3081 = vadd.f32 0.0, %v3080
    %v3082 = vpop.f32.mrf.mxu0
    %v3083 = vadd.f32 0.0, %v3082
    %3084 = vmatmul.bf16.gmra.mxu0 %v2155
    %v3085 = vpop.f32.mrf.mxu0
    %v3086 = vadd.f32 0.0, %v3085
    %v3087 = vpop.f32.mrf.mxu0
    %v3088 = vadd.f32 0.0, %v3087
    %3089 = vmatmul.bf16.gmra.mxu0 %v2158
    %v3090 = vpop.f32.mrf.mxu0
    %v3091 = vadd.f32 0.0, %v3090
    %v3092 = vpop.f32.mrf.mxu0
    %v3093 = vadd.f32 0.0, %v3092
    %3094 = vmatmul.bf16.gmra.mxu0 %v2161
    %v3095 = vpop.f32.mrf.mxu0
    %v3096 = vadd.f32 0.0, %v3095
    %v3097 = vpop.f32.mrf.mxu0
    %v3098 = vadd.f32 0.0, %v3097
    %3099 = vmatmul.bf16.gmra.mxu0 %v2164
    %v3100 = vpop.f32.mrf.mxu0
    %v3101 = vadd.f32 0.0, %v3100
    %v3102 = vpop.f32.mrf.mxu0
    %v3103 = vadd.f32 0.0, %v3102
    %3104 = vmatmul.bf16.gmra.mxu0 %v2167
    %v3105 = vpop.f32.mrf.mxu0
    %v3106 = vadd.f32 0.0, %v3105
    %v3107 = vpop.f32.mrf.mxu0
    %v3108 = vadd.f32 0.0, %v3107
    %3109 = vmatmul.bf16.gmra.mxu0 %v2170
    %v3110 = vpop.f32.mrf.mxu0
    %v3111 = vadd.f32 0.0, %v3110
    %v3112 = vpop.f32.mrf.mxu0
    %v3113 = vadd.f32 0.0, %v3112
    %3114 = vmatmul.bf16.gmra.mxu0 %v2173
    %v3115 = vpop.f32.mrf.mxu0
    %v3116 = vadd.f32 0.0, %v3115
    %v3117 = vpop.f32.mrf.mxu0
    %v3118 = vadd.f32 0.0, %v3117
    %3119 = vmatmul.bf16.gmra.mxu0 %v2176
    %v3120 = vpop.f32.mrf.mxu0
    %v3121 = vadd.f32 0.0, %v3120
    %v3122 = vpop.f32.mrf.mxu0
    %v3123 = vadd.f32 0.0, %v3122
    %3124 = vmatmul.bf16.gmra.mxu0 %v2179
    %v3125 = vpop.f32.mrf.mxu0
    %v3126 = vadd.f32 0.0, %v3125
    %v3127 = vpop.f32.mrf.mxu0
    %v3128 = vadd.f32 0.0, %v3127
    %3129 = vmatmul.bf16.gmra.mxu0 %v2182
    %v3130 = vpop.f32.mrf.mxu0
    %v3131 = vadd.f32 0.0, %v3130
    %v3132 = vpop.f32.mrf.mxu0
    %v3133 = vadd.f32 0.0, %v3132
    %3134 = vmatmul.bf16.gmra.mxu0 %v2185
    %v3135 = vpop.f32.mrf.mxu0
    %v3136 = vadd.f32 0.0, %v3135
    %v3137 = vpop.f32.mrf.mxu0
    %v3138 = vadd.f32 0.0, %v3137
    %3139 = vmatmul.bf16.gmra.mxu0 %v2188
    %v3140 = vpop.f32.mrf.mxu0
    %v3141 = vadd.f32 0.0, %v3140
    %v3142 = vpop.f32.mrf.mxu0
    %v3143 = vadd.f32 0.0, %v3142
    %3144 = vmatmul.bf16.gmra.mxu0 %v2191
    %v3145 = vpop.f32.mrf.mxu0
    %v3146 = vadd.f32 0.0, %v3145
    %v3147 = vpop.f32.mrf.mxu0
    %v3148 = vadd.f32 0.0, %v3147
    %3149 = vmatmul.bf16.gmra.mxu0 %v2194
    %v3150 = vpop.f32.mrf.mxu0
    %v3151 = vadd.f32 0.0, %v3150
    %v3152 = vpop.f32.mrf.mxu0
    %v3153 = vadd.f32 0.0, %v3152
    %3154 = vmatmul.bf16.gmra.mxu0 %v2197
    %v3155 = vpop.f32.mrf.mxu0
    %v3156 = vadd.f32 0.0, %v3155
    %v3157 = vpop.f32.mrf.mxu0
    %v3158 = vadd.f32 0.0, %v3157
    %3159 = vmatmul.bf16.gmra.mxu0 %v2200
    %v3160 = vpop.f32.mrf.mxu0
    %v3161 = vadd.f32 0.0, %v3160
    %v3162 = vpop.f32.mrf.mxu0
    %v3163 = vadd.f32 0.0, %v3162
    %3164 = vmatmul.bf16.gmra.mxu0 %v2203
    %v3165 = vpop.f32.mrf.mxu0
    %v3166 = vadd.f32 0.0, %v3165
    %v3167 = vpop.f32.mrf.mxu0
    %v3168 = vadd.f32 0.0, %v3167
    %3169 = vmatmul.bf16.gmra.mxu0 %v2206
    %v3170 = vpop.f32.mrf.mxu0
    %v3171 = vadd.f32 0.0, %v3170
    %v3172 = vpop.f32.mrf.mxu0
    %v3173 = vadd.f32 0.0, %v3172
    %3174 = vmatmul.bf16.gmra.mxu0 %v2209
    %v3175 = vpop.f32.mrf.mxu0
    %v3176 = vadd.f32 0.0, %v3175
    %v3177 = vpop.f32.mrf.mxu0
    %v3178 = vadd.f32 0.0, %v3177
    %3179 = vmatmul.bf16.gmra.mxu0 %v2212
    %v3180 = vpop.f32.mrf.mxu0
    %v3181 = vadd.f32 0.0, %v3180
    %v3182 = vpop.f32.mrf.mxu0
    %v3183 = vadd.f32 0.0, %v3182
    %3184 = vmatmul.bf16.gmra.mxu0 %v2215
    %v3185 = vpop.f32.mrf.mxu0
    %v3186 = vadd.f32 0.0, %v3185
    %v3187 = vpop.f32.mrf.mxu0
    %v3188 = vadd.f32 0.0, %v3187
    %3189 = vmatmul.bf16.gmra.mxu0 %v2218
    %v3190 = vpop.f32.mrf.mxu0
    %v3191 = vadd.f32 0.0, %v3190
    %v3192 = vpop.f32.mrf.mxu0
    %v3193 = vadd.f32 0.0, %v3192
    %3194 = vmatmul.bf16.gmra.mxu0 %v2221
    %v3195 = vpop.f32.mrf.mxu0
    %v3196 = vadd.f32 0.0, %v3195
    %v3197 = vpop.f32.mrf.mxu0
    %v3198 = vadd.f32 0.0, %v3197
    %3199 = vmatmul.bf16.gmra.mxu0 %v2224
    %v3200 = vpop.f32.mrf.mxu0
    %v3201 = vadd.f32 0.0, %v3200
    %v3202 = vpop.f32.mrf.mxu0
    %v3203 = vadd.f32 0.0, %v3202
    %3204 = vmatmul.bf16.gmra.mxu0 %v2227
    %v3205 = vpop.f32.mrf.mxu0
    %v3206 = vadd.f32 0.0, %v3205
    %v3207 = vpop.f32.mrf.mxu0
    %v3208 = vadd.f32 0.0, %v3207
    %3209 = vmatmul.bf16.gmra.mxu0 %v2230
    %v3210 = vpop.f32.mrf.mxu0
    %v3211 = vadd.f32 0.0, %v3210
    %v3212 = vpop.f32.mrf.mxu0
    %v3213 = vadd.f32 0.0, %v3212
    %3214 = vmatmul.bf16.gmra.mxu0 %v2233
    %v3215 = vpop.f32.mrf.mxu0
    %v3216 = vadd.f32 0.0, %v3215
    %v3217 = vpop.f32.mrf.mxu0
    %v3218 = vadd.f32 0.0, %v3217
    %3219 = vmatmul.bf16.gmra.mxu0 %v2236
    %v3220 = vpop.f32.mrf.mxu0
    %v3221 = vadd.f32 0.0, %v3220
    %v3222 = vpop.f32.mrf.mxu0
    %v3223 = vadd.f32 0.0, %v3222
    %3224 = vmatmul.bf16.gmra.mxu0 %v2239
    %v3225 = vpop.f32.mrf.mxu0
    %v3226 = vadd.f32 0.0, %v3225
    %v3227 = vpop.f32.mrf.mxu0
    %v3228 = vadd.f32 0.0, %v3227
    %3229 = vmatmul.bf16.gmra.mxu0 %v2242
    %v3230 = vpop.f32.mrf.mxu0
    %v3231 = vadd.f32 0.0, %v3230
    %v3232 = vpop.f32.mrf.mxu0
    %v3233 = vadd.f32 0.0, %v3232
    %3234 = vmatmul.bf16.gmra.mxu0 %v2245
    %v3235 = vpop.f32.mrf.mxu0
    %v3236 = vadd.f32 0.0, %v3235
    %v3237 = vpop.f32.mrf.mxu0
    %v3238 = vadd.f32 0.0, %v3237
    %3239 = vmatmul.bf16.gmra.mxu0 %v2248
    %v3240 = vpop.f32.mrf.mxu0
    %v3241 = vadd.f32 0.0, %v3240
    %v3242 = vpop.f32.mrf.mxu0
    %v3243 = vadd.f32 0.0, %v3242
    %3244 = vmatmul.bf16.gmra.mxu0 %v2251
    %v3245 = vpop.f32.mrf.mxu0
    %v3246 = vadd.f32 0.0, %v3245
    %v3247 = vpop.f32.mrf.mxu0
    %v3248 = vadd.f32 0.0, %v3247
    %3249 = vmatmul.bf16.gmra.mxu0 %v2254
    %v3250 = vpop.f32.mrf.mxu0
    %v3251 = vadd.f32 0.0, %v3250
    %v3252 = vpop.f32.mrf.mxu0
    %v3253 = vadd.f32 0.0, %v3252
    %3254 = vmatmul.bf16.gmra.mxu0 %v2257
    %v3255 = vpop.f32.mrf.mxu0
    %v3256 = vadd.f32 0.0, %v3255
    %v3257 = vpop.f32.mrf.mxu0
    %v3258 = vadd.f32 0.0, %v3257
    %3259 = vmatmul.bf16.gmra.mxu0 %v2260
    %v3260 = vpop.f32.mrf.mxu0
    %v3261 = vadd.f32 0.0, %v3260
    %v3262 = vpop.f32.mrf.mxu0
    %v3263 = vadd.f32 0.0, %v3262
    %3264 = vmatmul.bf16.gmra.mxu0 %v2263
    %v3265 = vpop.f32.mrf.mxu0
    %v3266 = vadd.f32 0.0, %v3265
    %v3267 = vpop.f32.mrf.mxu0
    %v3268 = vadd.f32 0.0, %v3267
    %3269 = vmatmul.bf16.gmra.mxu0 %v2266
    %v3270 = vpop.f32.mrf.mxu0
    %v3271 = vadd.f32 0.0, %v3270
    %v3272 = vpop.f32.mrf.mxu0
    %v3273 = vadd.f32 0.0, %v3272
    %3274 = vmatmul.bf16.gmra.mxu0 %v2269
    %v3275 = vpop.f32.mrf.mxu0
    %v3276 = vadd.f32 0.0, %v3275
    %v3277 = vpop.f32.mrf.mxu0
    %v3278 = vadd.f32 0.0, %v3277
    %3279 = vmatmul.bf16.gmra.mxu0 %v2272
    %v3280 = vpop.f32.mrf.mxu0
    %v3281 = vadd.f32 0.0, %v3280
    %v3282 = vpop.f32.mrf.mxu0
    %v3283 = vadd.f32 0.0, %v3282
    %3284 = vmatmul.bf16.gmra.mxu0 %v2275
    %v3285 = vpop.f32.mrf.mxu0
    %v3286 = vadd.f32 0.0, %v3285
    %v3287 = vpop.f32.mrf.mxu0
    %v3288 = vadd.f32 0.0, %v3287
    %3289 = vmatmul.bf16.gmra.mxu0 %v2278
    %v3290 = vpop.f32.mrf.mxu0
    %v3291 = vadd.f32 0.0, %v3290
    %v3292 = vpop.f32.mrf.mxu0
    %v3293 = vadd.f32 0.0, %v3292
    %3294 = vmatmul.bf16.gmra.mxu0 %v2281
    %v3295 = vpop.f32.mrf.mxu0
    %v3296 = vadd.f32 0.0, %v3295
    %v3297 = vpop.f32.mrf.mxu0
    %v3298 = vadd.f32 0.0, %v3297
    %3299 = vmatmul.bf16.gmra.mxu0 %v2284
    %v3300 = vpop.f32.mrf.mxu0
    %v3301 = vadd.f32 0.0, %v3300
    %v3302 = vpop.f32.mrf.mxu0
    %v3303 = vadd.f32 0.0, %v3302
    %3304 = vmatmul.bf16.gmra.mxu0 %v2287
    %v3305 = vpop.f32.mrf.mxu0
    %v3306 = vadd.f32 0.0, %v3305
    %v3307 = vpop.f32.mrf.mxu0
    %v3308 = vadd.f32 0.0, %v3307
    %3309 = vmatmul.bf16.gmra.mxu0 %v2290
    %v3310 = vpop.f32.mrf.mxu0
    %v3311 = vadd.f32 0.0, %v3310
    %v3312 = vpop.f32.mrf.mxu0
    %v3313 = vadd.f32 0.0, %v3312
    %3314 = vmatmul.bf16.gmra.mxu0 %v2293
    %v3315 = vpop.f32.mrf.mxu0
    %v3316 = vadd.f32 0.0, %v3315
    %v3317 = vpop.f32.mrf.mxu0
    %v3318 = vadd.f32 0.0, %v3317
    %3319 = vmatmul.bf16.gmra.mxu0 %v2296
    %v3320 = vpop.f32.mrf.mxu0
    %v3321 = vadd.f32 0.0, %v3320
    %v3322 = vpop.f32.mrf.mxu0
    %v3323 = vadd.f32 0.0, %v3322
    %3324 = vmatmul.bf16.gmra.mxu0 %v2299
    %v3325 = vpop.f32.mrf.mxu0
    %v3326 = vadd.f32 0.0, %v3325
    %v3327 = vpop.f32.mrf.mxu0
    %v3328 = vadd.f32 0.0, %v3327
    %3329 = vmatmul.bf16.gmra.mxu0 %v2302
    %v3330 = vpop.f32.mrf.mxu0
    %v3331 = vadd.f32 0.0, %v3330
    %v3332 = vpop.f32.mrf.mxu0
    %v3333 = vadd.f32 0.0, %v3332
    %3334 = vmatmul.bf16.gmra.mxu0 %v2305
    %v3335 = vpop.f32.mrf.mxu0
    %v3336 = vadd.f32 0.0, %v3335
    %v3337 = vpop.f32.mrf.mxu0
    %v3338 = vadd.f32 0.0, %v3337
    %3339 = vmatmul.bf16.gmra.mxu0 %v2308
    %v3340 = vpop.f32.mrf.mxu0
    %v3341 = vadd.f32 0.0, %v3340
    %v3342 = vpop.f32.mrf.mxu0
    %v3343 = vadd.f32 0.0, %v3342
    %3344 = vmatmul.bf16.gmra.mxu0 %v2311
    %v3345 = vpop.f32.mrf.mxu0
    %v3346 = vadd.f32 0.0, %v3345
    %v3347 = vpop.f32.mrf.mxu0
    %v3348 = vadd.f32 0.0, %v3347
    %3349 = vmatmul.bf16.gmra.mxu0 %v2314
    %v3350 = vpop.f32.mrf.mxu0
    %v3351 = vadd.f32 0.0, %v3350
    %v3352 = vpop.f32.mrf.mxu0
    %v3353 = vadd.f32 0.0, %v3352
    %3354 = vmatmul.bf16.gmra.mxu0 %v2317
    %v3355 = vpop.f32.mrf.mxu0
    %v3356 = vadd.f32 0.0, %v3355
    %v3357 = vpop.f32.mrf.mxu0
    %v3358 = vadd.f32 0.0, %v3357
    %3359 = vmatmul.bf16.gmra.mxu0 %v2320
    %v3360 = vpop.f32.mrf.mxu0
    %v3361 = vadd.f32 0.0, %v3360
    %v3362 = vpop.f32.mrf.mxu0
    %v3363 = vadd.f32 0.0, %v3362
    %3364 = vmatmul.bf16.gmra.mxu0 %v2323
    %v3365 = vpop.f32.mrf.mxu0
    %v3366 = vadd.f32 0.0, %v3365
    %v3367 = vpop.f32.mrf.mxu0
    %v3368 = vadd.f32 0.0, %v3367
    %3369 = vmatmul.bf16.gmra.mxu0 %v2326
    %v3370 = vpop.f32.mrf.mxu0
    %v3371 = vadd.f32 0.0, %v3370
    %v3372 = vpop.f32.mrf.mxu0
    %v3373 = vadd.f32 0.0, %v3372
    %3374 = vmatmul.bf16.gmra.mxu0 %v2329
    %v3375 = vpop.f32.mrf.mxu0
    %v3376 = vadd.f32 0.0, %v3375
    %v3377 = vpop.f32.mrf.mxu0
    %v3378 = vadd.f32 0.0, %v3377
    %3379 = vmatmul.bf16.gmra.mxu0 %v2332
    %v3380 = vpop.f32.mrf.mxu0
    %v3381 = vadd.f32 0.0, %v3380
    %v3382 = vpop.f32.mrf.mxu0
    %v3383 = vadd.f32 0.0, %v3382
    %3384 = vmatmul.bf16.gmra.mxu0 %v2335
    %v3385 = vpop.f32.mrf.mxu0
    %v3386 = vadd.f32 0.0, %v3385
    %v3387 = vpop.f32.mrf.mxu0
    %v3388 = vadd.f32 0.0, %v3387
    %3389 = vmatmul.bf16.gmra.mxu0 %v2338
    %v3390 = vpop.f32.mrf.mxu0
    %v3391 = vadd.f32 0.0, %v3390
    %v3392 = vpop.f32.mrf.mxu0
    %v3393 = vadd.f32 0.0, %v3392
    %3394 = vmatmul.bf16.gmra.mxu0 %v2341
    %v3395 = vpop.f32.mrf.mxu0
    %v3396 = vadd.f32 0.0, %v3395
    %v3397 = vpop.f32.mrf.mxu0
    %v3398 = vadd.f32 0.0, %v3397
    %3399 = vmatmul.bf16.gmra.mxu0 %v2344
    %v3400 = vpop.f32.mrf.mxu0
    %v3401 = vadd.f32 0.0, %v3400
    %v3402 = vpop.f32.mrf.mxu0
    %v3403 = vadd.f32 0.0, %v3402
    %3404 = vmatmul.bf16.gmra.mxu0 %v2347
    %v3405 = vpop.f32.mrf.mxu0
    %v3406 = vadd.f32 0.0, %v3405
    %v3407 = vpop.f32.mrf.mxu0
    %v3408 = vadd.f32 0.0, %v3407
    %3409 = vmatmul.bf16.gmra.mxu0 %v2350
    %v3410 = vpop.f32.mrf.mxu0
    %v3411 = vadd.f32 0.0, %v3410
    %v3412 = vpop.f32.mrf.mxu0
    %v3413 = vadd.f32 0.0, %v3412
    %3414 = vmatmul.bf16.gmra.mxu0 %v2353
    %v3415 = vpop.f32.mrf.mxu0
    %v3416 = vadd.f32 0.0, %v3415
    %v3417 = vpop.f32.mrf.mxu0
    %v3418 = vadd.f32 0.0, %v3417
    %3419 = vmatmul.bf16.gmra.mxu0 %v2356
    %v3420 = vpop.f32.mrf.mxu0
    %v3421 = vadd.f32 0.0, %v3420
    %v3422 = vpop.f32.mrf.mxu0
    %v3423 = vadd.f32 0.0, %v3422
    %3424 = vmatmul.bf16.gmra.mxu0 %v2359
    %v3425 = vpop.f32.mrf.mxu0
    %v3426 = vadd.f32 0.0, %v3425
    %v3427 = vpop.f32.mrf.mxu0
    %v3428 = vadd.f32 0.0, %v3427
    %3429 = vmatmul.bf16.gmra.mxu0 %v2362
    %v3430 = vpop.f32.mrf.mxu0
    %v3431 = vadd.f32 0.0, %v3430
    %v3432 = vpop.f32.mrf.mxu0
    %v3433 = vadd.f32 0.0, %v3432
    %3434 = vmatmul.bf16.gmra.mxu0 %v2365
    %v3435 = vpop.f32.mrf.mxu0
    %v3436 = vadd.f32 0.0, %v3435
    %v3437 = vpop.f32.mrf.mxu0
    %v3438 = vadd.f32 0.0, %v3437
    %3439 = vmatmul.bf16.gmra.mxu0 %v2368
    %v3440 = vpop.f32.mrf.mxu0
    %v3441 = vadd.f32 0.0, %v3440
    %v3442 = vpop.f32.mrf.mxu0
    %v3443 = vadd.f32 0.0, %v3442
    %3444 = vmatmul.bf16.gmra.mxu0 %v2371
    %v3445 = vpop.f32.mrf.mxu0
    %v3446 = vadd.f32 0.0, %v3445
    %v3447 = vpop.f32.mrf.mxu0
    %v3448 = vadd.f32 0.0, %v3447
    %3449 = vmatmul.bf16.gmra.mxu0 %v2374
    %v3450 = vpop.f32.mrf.mxu0
    %v3451 = vadd.f32 0.0, %v3450
    %v3452 = vpop.f32.mrf.mxu0
    %v3453 = vadd.f32 0.0, %v3452
    %3454 = vmatmul.bf16.gmra.mxu0 %v2377
    %v3455 = vpop.f32.mrf.mxu0
    %v3456 = vadd.f32 0.0, %v3455
    %v3457 = vpop.f32.mrf.mxu0
    %v3458 = vadd.f32 0.0, %v3457
    %3459 = vmatmul.bf16.gmra.mxu0 %v2380
    %v3460 = vpop.f32.mrf.mxu0
    %v3461 = vadd.f32 0.0, %v3460
    %v3462 = vpop.f32.mrf.mxu0
    %v3463 = vadd.f32 0.0, %v3462
    %3464 = vmatmul.bf16.gmra.mxu0 %v2383
    %v3465 = vpop.f32.mrf.mxu0
    %v3466 = vadd.f32 0.0, %v3465
    %v3467 = vpop.f32.mrf.mxu0
    %v3468 = vadd.f32 0.0, %v3467
    %3469 = vmatmul.bf16.gmra.mxu0 %v2386
    %v3470 = vpop.f32.mrf.mxu0
    %v3471 = vadd.f32 0.0, %v3470
    %v3472 = vpop.f32.mrf.mxu0
    %v3473 = vadd.f32 0.0, %v3472
    %3474 = vmatmul.bf16.gmra.mxu0 %v2389
    %v3475 = vpop.f32.mrf.mxu0
    %v3476 = vadd.f32 0.0, %v3475
    %v3477 = vpop.f32.mrf.mxu0
    %v3478 = vadd.f32 0.0, %v3477
    %3479 = vmatmul.bf16.gmra.mxu0 %v2392
    %v3480 = vpop.f32.mrf.mxu0
    %v3481 = vadd.f32 0.0, %v3480
    %v3482 = vpop.f32.mrf.mxu0
    %v3483 = vadd.f32 0.0, %v3482
    %3484 = vmatmul.bf16.gmra.mxu0 %v2395
    %v3485 = vpop.f32.mrf.mxu0
    %v3486 = vadd.f32 0.0, %v3485
    %v3487 = vpop.f32.mrf.mxu0
    %v3488 = vadd.f32 0.0, %v3487
    %3489 = vmatmul.bf16.gmra.mxu0 %v2398
    %v3490 = vpop.f32.mrf.mxu0
    %v3491 = vadd.f32 0.0, %v3490
    %v3492 = vpop.f32.mrf.mxu0
    %v3493 = vadd.f32 0.0, %v3492
    %3494 = vmatmul.bf16.gmra.mxu0 %v2401
    %v3495 = vpop.f32.mrf.mxu0
    %v3496 = vadd.f32 0.0, %v3495
    %v3497 = vpop.f32.mrf.mxu0
    %v3498 = vadd.f32 0.0, %v3497
    %3499 = vmatmul.bf16.gmra.mxu0 %v2404
    %v3500 = vpop.f32.mrf.mxu0
    %v3501 = vadd.f32 0.0, %v3500
    %v3502 = vpop.f32.mrf.mxu0
    %v3503 = vadd.f32 0.0, %v3502
    %3504 = vmatmul.bf16.gmra.mxu0 %v2407
    %v3505 = vpop.f32.mrf.mxu0
    %v3506 = vadd.f32 0.0, %v3505
    %v3507 = vpop.f32.mrf.mxu0
    %v3508 = vadd.f32 0.0, %v3507
    %3509 = vmatmul.bf16.gmra.mxu0 %v2410
    %v3510 = vpop.f32.mrf.mxu0
    %v3511 = vadd.f32 0.0, %v3510
    %v3512 = vpop.f32.mrf.mxu0
    %v3513 = vadd.f32 0.0, %v3512
    %3514 = vmatmul.bf16.gmra.mxu0 %v2413
    %v3515 = vpop.f32.mrf.mxu0
    %v3516 = vadd.f32 0.0, %v3515
    %v3517 = vpop.f32.mrf.mxu0
    %v3518 = vadd.f32 0.0, %v3517
    %3519 = vmatmul.bf16.gmra.mxu0 %v2416
    %v3520 = vpop.f32.mrf.mxu0
    %v3521 = vadd.f32 0.0, %v3520
    %v3522 = vpop.f32.mrf.mxu0
    %v3523 = vadd.f32 0.0, %v3522
    %3524 = vmatmul.bf16.gmra.mxu0 %v2419
    %v3525 = vpop.f32.mrf.mxu0
    %v3526 = vadd.f32 0.0, %v3525
    %v3527 = vpop.f32.mrf.mxu0
    %v3528 = vadd.f32 0.0, %v3527
    %3529 = vmatmul.bf16.gmra.mxu0 %v2422
    %v3530 = vpop.f32.mrf.mxu0
    %v3531 = vadd.f32 0.0, %v3530
    %v3532 = vpop.f32.mrf.mxu0
    %v3533 = vadd.f32 0.0, %v3532
    %3534 = vmatmul.bf16.gmra.mxu0 %v2425
    %v3535 = vpop.f32.mrf.mxu0
    %v3536 = vadd.f32 0.0, %v3535
    %v3537 = vpop.f32.mrf.mxu0
    %v3538 = vadd.f32 0.0, %v3537
    %3539 = vmatmul.bf16.gmra.mxu0 %v2428
    %v3540 = vpop.f32.mrf.mxu0
    %v3541 = vadd.f32 0.0, %v3540
    %v3542 = vpop.f32.mrf.mxu0
    %v3543 = vadd.f32 0.0, %v3542
    %3544 = vmatmul.bf16.gmra.mxu0 %v2431
    %v3545 = vpop.f32.mrf.mxu0
    %v3546 = vadd.f32 0.0, %v3545
    %v3547 = vpop.f32.mrf.mxu0
    %v3548 = vadd.f32 0.0, %v3547
    %3549 = vmatmul.bf16.gmra.mxu0 %v2434
    %v3550 = vpop.f32.mrf.mxu0
    %v3551 = vadd.f32 0.0, %v3550
    %v3552 = vpop.f32.mrf.mxu0
    %v3553 = vadd.f32 0.0, %v3552
    %3554 = vmatmul.bf16.gmra.mxu0 %v2437
    %v3555 = vpop.f32.mrf.mxu0
    %v3556 = vadd.f32 0.0, %v3555
    %v3557 = vpop.f32.mrf.mxu0
    %v3558 = vadd.f32 0.0, %v3557
    %3559 = vmatmul.bf16.gmra.mxu0 %v2440
    %v3560 = vpop.f32.mrf.mxu0
    %v3561 = vadd.f32 0.0, %v3560
    %v3562 = vpop.f32.mrf.mxu0
    %v3563 = vadd.f32 0.0, %v3562
    %3564 = vmatmul.bf16.gmra.mxu0 %v2443
    %v3565 = vpop.f32.mrf.mxu0
    %v3566 = vadd.f32 0.0, %v3565
    %v3567 = vpop.f32.mrf.mxu0
    %v3568 = vadd.f32 0.0, %v3567
    %3569 = vmatmul.bf16.gmra.mxu0 %v2446
    %v3570 = vpop.f32.mrf.mxu0
    %v3571 = vadd.f32 0.0, %v3570
    %v3572 = vpop.f32.mrf.mxu0
    %v3573 = vadd.f32 0.0, %v3572
    %3574 = vmatmul.bf16.gmra.mxu0 %v2449
    %v3575 = vpop.f32.mrf.mxu0
    %v3576 = vadd.f32 0.0, %v3575
    %v3577 = vpop.f32.mrf.mxu0
    %v3578 = vadd.f32 0.0, %v3577
    %3579 = vmatmul.bf16.gmra.mxu0 %v2452
    %v3580 = vpop.f32.mrf.mxu0
    %v3581 = vadd.f32 0.0, %v3580
    %v3582 = vpop.f32.mrf.mxu0
    %v3583 = vadd.f32 0.0, %v3582
    %3584 = vmatmul.bf16.gmra.mxu0 %v2455
    %v3585 = vpop.f32.mrf.mxu0
    %v3586 = vadd.f32 0.0, %v3585
    %v3587 = vpop.f32.mrf.mxu0
    %v3588 = vadd.f32 0.0, %v3587
    %3589 = vmatmul.bf16.gmra.mxu0 %v2458
    %v3590 = vpop.f32.mrf.mxu0
    %v3591 = vadd.f32 0.0, %v3590
    %v3592 = vpop.f32.mrf.mxu0
    %v3593 = vadd.f32 0.0, %v3592
    %3594 = vmatmul.bf16.gmra.mxu0 %v2461
    %v3595 = vpop.f32.mrf.mxu0
    %v3596 = vadd.f32 0.0, %v3595
    %v3597 = vpop.f32.mrf.mxu0
    %v3598 = vadd.f32 0.0, %v3597
    %3599 = vmatmul.bf16.gmra.mxu0 %v2464
    %v3600 = vpop.f32.mrf.mxu0
    %v3601 = vadd.f32 0.0, %v3600
    %v3602 = vpop.f32.mrf.mxu0
    %v3603 = vadd.f32 0.0, %v3602
    %3604 = vmatmul.bf16.gmra.mxu0 %v2467
    %v3605 = vpop.f32.mrf.mxu0
    %v3606 = vadd.f32 0.0, %v3605
    %v3607 = vpop.f32.mrf.mxu0
    %v3608 = vadd.f32 0.0, %v3607
    %3609 = vmatmul.bf16.gmra.mxu0 %v2470
    %v3610 = vpop.f32.mrf.mxu0
    %v3611 = vadd.f32 0.0, %v3610
    %v3612 = vpop.f32.mrf.mxu0
    %v3613 = vadd.f32 0.0, %v3612
    %3614 = vmatmul.bf16.gmra.mxu0 %v2473
    %v3615 = vpop.f32.mrf.mxu0
    %v3616 = vadd.f32 0.0, %v3615
    %v3617 = vpop.f32.mrf.mxu0
    %v3618 = vadd.f32 0.0, %v3617
    %3619 = vmatmul.bf16.gmra.mxu0 %v2476
    %v3620 = vpop.f32.mrf.mxu0
    %v3621 = vadd.f32 0.0, %v3620
    %v3622 = vpop.f32.mrf.mxu0
    %v3623 = vadd.f32 0.0, %v3622
    %3624 = vmatmul.bf16.gmra.mxu0 %v2479
    %v3625 = vpop.f32.mrf.mxu0
    %v3626 = vadd.f32 0.0, %v3625
    %v3627 = vpop.f32.mrf.mxu0
    %v3628 = vadd.f32 0.0, %v3627
    %3629 = vmatmul.bf16.gmra.mxu0 %v2482
    %v3630 = vpop.f32.mrf.mxu0
    %v3631 = vadd.f32 0.0, %v3630
    %v3632 = vpop.f32.mrf.mxu0
    %v3633 = vadd.f32 0.0, %v3632
    %3634 = vmatmul.bf16.gmra.mxu0 %v2485
    %v3635 = vpop.f32.mrf.mxu0
    %v3636 = vadd.f32 0.0, %v3635
    %v3637 = vpop.f32.mrf.mxu0
    %v3638 = vadd.f32 0.0, %v3637
    %3639 = vmatmul.bf16.gmra.mxu0 %v2488
    %v3640 = vpop.f32.mrf.mxu0
    %v3641 = vadd.f32 0.0, %v3640
    %v3642 = vpop.f32.mrf.mxu0
    %v3643 = vadd.f32 0.0, %v3642
    %3644 = vmatmul.bf16.gmra.mxu0 %v2491
    %v3645 = vpop.f32.mrf.mxu0
    %v3646 = vadd.f32 0.0, %v3645
    %v3647 = vpop.f32.mrf.mxu0
    %v3648 = vadd.f32 0.0, %v3647
    %3649 = vmatmul.bf16.gmra.mxu0 %v2494
    %v3650 = vpop.f32.mrf.mxu0
    %v3651 = vadd.f32 0.0, %v3650
    %v3652 = vpop.f32.mrf.mxu0
    %v3653 = vadd.f32 0.0, %v3652
    %3654 = vmatmul.bf16.gmra.mxu0 %v2497
    %v3655 = vpop.f32.mrf.mxu0
    %v3656 = vadd.f32 0.0, %v3655
    %v3657 = vpop.f32.mrf.mxu0
    %v3658 = vadd.f32 0.0, %v3657
    %3659 = vmatmul.bf16.gmra.mxu0 %v2500
    %v3660 = vpop.f32.mrf.mxu0
    %v3661 = vadd.f32 0.0, %v3660
    %v3662 = vpop.f32.mrf.mxu0
    %v3663 = vadd.f32 0.0, %v3662
    %3664 = vmatmul.bf16.gmra.mxu0 %v2503
    %v3665 = vpop.f32.mrf.mxu0
    %v3666 = vadd.f32 0.0, %v3665
    %v3667 = vpop.f32.mrf.mxu0
    %v3668 = vadd.f32 0.0, %v3667
    %3669 = vmatmul.bf16.gmra.mxu0 %v2506
    %v3670 = vpop.f32.mrf.mxu0
    %v3671 = vadd.f32 0.0, %v3670
    %v3672 = vpop.f32.mrf.mxu0
    %v3673 = vadd.f32 0.0, %v3672
    %3674 = vmatmul.bf16.gmra.mxu0 %v2509
    %v3675 = vpop.f32.mrf.mxu0
    %v3676 = vadd.f32 0.0, %v3675
    %v3677 = vpop.f32.mrf.mxu0
    %v3678 = vadd.f32 0.0, %v3677
    %3679 = vmatmul.bf16.gmra.mxu0 %v2512
    %v3680 = vpop.f32.mrf.mxu0
    %v3681 = vadd.f32 0.0, %v3680
    %v3682 = vpop.f32.mrf.mxu0
    %v3683 = vadd.f32 0.0, %v3682
    %3684 = vmatmul.bf16.gmra.mxu0 %v2515
    %v3685 = vpop.f32.mrf.mxu0
    %v3686 = vadd.f32 0.0, %v3685
    %v3687 = vpop.f32.mrf.mxu0
    %v3688 = vadd.f32 0.0, %v3687
    %3689 = vmatmul.bf16.gmra.mxu0 %v2518
    %v3690 = vpop.f32.mrf.mxu0
    %v3691 = vadd.f32 0.0, %v3690
    %v3692 = vpop.f32.mrf.mxu0
    %v3693 = vadd.f32 0.0, %v3692
    %3694 = vmatmul.bf16.gmra.mxu0 %v2521
    %v3695 = vpop.f32.mrf.mxu0
    %v3696 = vadd.f32 0.0, %v3695
    %v3697 = vpop.f32.mrf.mxu0
    %v3698 = vadd.f32 0.0, %v3697
    %3699 = vmatmul.bf16.gmra.mxu0 %v2524
    %v3700 = vpop.f32.mrf.mxu0
    %v3701 = vadd.f32 0.0, %v3700
    %v3702 = vpop.f32.mrf.mxu0
    %v3703 = vadd.f32 0.0, %v3702
    %3704 = vmatmul.bf16.gmra.mxu0 %v2527
    %v3705 = vpop.f32.mrf.mxu0
    %v3706 = vadd.f32 0.0, %v3705
    %v3707 = vpop.f32.mrf.mxu0
    %v3708 = vadd.f32 0.0, %v3707
    %3709 = vmatmul.bf16.gmra.mxu0 %v2530
    %v3710 = vpop.f32.mrf.mxu0
    %v3711 = vadd.f32 0.0, %v3710
    %v3712 = vpop.f32.mrf.mxu0
    %v3713 = vadd.f32 0.0, %v3712
    %3714 = vmatmul.bf16.gmra.mxu0 %v2533
    %v3715 = vpop.f32.mrf.mxu0
    %v3716 = vadd.f32 0.0, %v3715
    %v3717 = vpop.f32.mrf.mxu0
    %v3718 = vadd.f32 0.0, %v3717
    %3719 = vmatmul.bf16.gmra.mxu0 %v2536
    %v3720 = vpop.f32.mrf.mxu0
    %v3721 = vadd.f32 0.0, %v3720
    %v3722 = vpop.f32.mrf.mxu0
    %v3723 = vadd.f32 0.0, %v3722
    %3724 = vmatmul.bf16.gmra.mxu0 %v2539
    %v3725 = vpop.f32.mrf.mxu0
    %v3726 = vadd.f32 0.0, %v3725
    %v3727 = vpop.f32.mrf.mxu0
    %v3728 = vadd.f32 0.0, %v3727
    %3729 = vmatmul.bf16.gmra.mxu0 %v2542
    %v3730 = vpop.f32.mrf.mxu0
    %v3731 = vadd.f32 0.0, %v3730
    %v3732 = vpop.f32.mrf.mxu0
    %v3733 = vadd.f32 0.0, %v3732
    %3734 = vmatmul.bf16.gmra.mxu0 %v2545
    %v3735 = vpop.f32.mrf.mxu0
    %v3736 = vadd.f32 0.0, %v3735
    %v3737 = vpop.f32.mrf.mxu0
    %v3738 = vadd.f32 0.0, %v3737
    %3739 = vmatmul.bf16.gmra.mxu0 %v2548
    %v3740 = vpop.f32.mrf.mxu0
    %v3741 = vadd.f32 0.0, %v3740
    %v3742 = vpop.f32.mrf.mxu0
    %v3743 = vadd.f32 0.0, %v3742
    %3744 = vmatmul.bf16.gmra.mxu0 %v2551
    %v3745 = vpop.f32.mrf.mxu0
    %v3746 = vadd.f32 0.0, %v3745
    %v3747 = vpop.f32.mrf.mxu0
    %v3748 = vadd.f32 0.0, %v3747
    %3749 = vmatmul.bf16.gmra.mxu0 %v2554
    %v3750 = vpop.f32.mrf.mxu0
    %v3751 = vadd.f32 0.0, %v3750
    %v3752 = vpop.f32.mrf.mxu0
    %v3753 = vadd.f32 0.0, %v3752
    %3754 = vmatmul.bf16.gmra.mxu0 %v2557
    %v3755 = vpop.f32.mrf.mxu0
    %v3756 = vadd.f32 0.0, %v3755
    %v3757 = vpop.f32.mrf.mxu0
    %v3758 = vadd.f32 0.0, %v3757
    %3759 = vmatmul.bf16.gmra.mxu0 %v2560
    %v3760 = vpop.f32.mrf.mxu0
    %v3761 = vadd.f32 0.0, %v3760
    %v3762 = vpop.f32.mrf.mxu0
    %v3763 = vadd.f32 0.0, %v3762
    %3764 = vmatmul.bf16.gmra.mxu0 %v2563
    %v3765 = vpop.f32.mrf.mxu0
    %v3766 = vadd.f32 0.0, %v3765
    %v3767 = vpop.f32.mrf.mxu0
    %v3768 = vadd.f32 0.0, %v3767
    %3769 = vmatmul.bf16.gmra.mxu0 %v2566
    %v3770 = vpop.f32.mrf.mxu0
    %v3771 = vadd.f32 0.0, %v3770
    %v3772 = vpop.f32.mrf.mxu0
    %v3773 = vadd.f32 0.0, %v3772
    %3774 = vmatmul.bf16.gmra.mxu0 %v2569
    %v3775 = vpop.f32.mrf.mxu0
    %v3776 = vadd.f32 0.0, %v3775
    %v3777 = vpop.f32.mrf.mxu0
    %v3778 = vadd.f32 0.0, %v3777
    %3779 = vmatmul.bf16.gmra.mxu0 %v2572
    %v3780 = vpop.f32.mrf.mxu0
    %v3781 = vadd.f32 0.0, %v3780
    %v3782 = vpop.f32.mrf.mxu0
    %v3783 = vadd.f32 0.0, %v3782
    %3784 = vmatmul.bf16.gmra.mxu0 %v2575
    %v3785 = vpop.f32.mrf.mxu0
    %v3786 = vadd.f32 0.0, %v3785
    %v3787 = vpop.f32.mrf.mxu0
    %v3788 = vadd.f32 0.0, %v3787
    %3789 = vmatmul.bf16.gmra.mxu0 %v2578
    %v3790 = vpop.f32.mrf.mxu0
    %v3791 = vadd.f32 0.0, %v3790
    %v3792 = vpop.f32.mrf.mxu0
    %v3793 = vadd.f32 0.0, %v3792
    %3794 = vmatmul.bf16.gmra.mxu0 %v2581
    %v3795 = vpop.f32.mrf.mxu0
    %v3796 = vadd.f32 0.0, %v3795
    %v3797 = vpop.f32.mrf.mxu0
    %v3798 = vadd.f32 0.0, %v3797
    %3799 = vmatmul.bf16.gmra.mxu0 %v2584
    %v3800 = vpop.f32.mrf.mxu0
    %v3801 = vadd.f32 0.0, %v3800
    %v3802 = vpop.f32.mrf.mxu0
    %v3803 = vadd.f32 0.0, %v3802
    %3804 = vmatmul.bf16.gmra.mxu0 %v2587
    %v3805 = vpop.f32.mrf.mxu0
    %v3806 = vadd.f32 0.0, %v3805
    %v3807 = vpop.f32.mrf.mxu0
    %v3808 = vadd.f32 0.0, %v3807
    %3809 = vmatmul.bf16.gmra.mxu0 %v2590
    %v3810 = vpop.f32.mrf.mxu0
    %v3811 = vadd.f32 0.0, %v3810
    %v3812 = vpop.f32.mrf.mxu0
    %v3813 = vadd.f32 0.0, %v3812
    %3814 = vmatmul.bf16.gmra.mxu0 %v2593
    %v3815 = vpop.f32.mrf.mxu0
    %v3816 = vadd.f32 0.0, %v3815
    %v3817 = vpop.f32.mrf.mxu0
    %v3818 = vadd.f32 0.0, %v3817
    %3819 = vmatmul.bf16.gmra.mxu0 %v2596
    %v3820 = vpop.f32.mrf.mxu0
    %v3821 = vadd.f32 0.0, %v3820
    %v3822 = vpop.f32.mrf.mxu0
    %v3823 = vadd.f32 0.0, %v3822
    %3824 = vmatmul.bf16.gmra.mxu0 %v2599
    %v3825 = vpop.f32.mrf.mxu0
    %v3826 = vadd.f32 0.0, %v3825
    %v3827 = vpop.f32.mrf.mxu0
    %v3828 = vadd.f32 0.0, %v3827
    %3829 = vmatmul.bf16.gmra.mxu0 %v2602
    %v3830 = vpop.f32.mrf.mxu0
    %v3831 = vadd.f32 0.0, %v3830
    %v3832 = vpop.f32.mrf.mxu0
    %v3833 = vadd.f32 0.0, %v3832
    %3834 = vmatmul.bf16.gmra.mxu0 %v2605
    %v3835 = vpop.f32.mrf.mxu0
    %v3836 = vadd.f32 0.0, %v3835
    %v3837 = vpop.f32.mrf.mxu0
    %v3838 = vadd.f32 0.0, %v3837
    %3839 = vmatmul.bf16.gmra.mxu0 %v2608
    %v3840 = vpop.f32.mrf.mxu0
    %v3841 = vadd.f32 0.0, %v3840
    %v3842 = vpop.f32.mrf.mxu0
    %v3843 = vadd.f32 0.0, %v3842
    %3844 = vmatmul.bf16.gmra.mxu0 %v2611
    %v3845 = vpop.f32.mrf.mxu0
    %v3846 = vadd.f32 0.0, %v3845
    %v3847 = vpop.f32.mrf.mxu0
    %v3848 = vadd.f32 0.0, %v3847
    %3849 = vmatmul.bf16.gmra.mxu0 %v2614
    %v3850 = vpop.f32.mrf.mxu0
    %v3851 = vadd.f32 0.0, %v3850
    %v3852 = vpop.f32.mrf.mxu0
    %v3853 = vadd.f32 0.0, %v3852
    %3854 = vmatmul.bf16.gmra.mxu0 %v2617
    %v3855 = vpop.f32.mrf.mxu0
    %v3856 = vadd.f32 0.0, %v3855
    %v3857 = vpop.f32.mrf.mxu0
    %v3858 = vadd.f32 0.0, %v3857
    %3859 = vmatmul.bf16.gmra.mxu0 %v2620
    %v3860 = vpop.f32.mrf.mxu0
    %v3861 = vadd.f32 0.0, %v3860
    %v3862 = vpop.f32.mrf.mxu0
    %v3863 = vadd.f32 0.0, %v3862
    %3864 = vmatmul.bf16.gmra.mxu0 %v2623
    %v3865 = vpop.f32.mrf.mxu0
    %v3866 = vadd.f32 0.0, %v3865
    %v3867 = vpop.f32.mrf.mxu0
    %v3868 = vadd.f32 0.0, %v3867
    %3869 = vmatmul.bf16.gmra.mxu0 %v2626
    %v3870 = vpop.f32.mrf.mxu0
    %v3871 = vadd.f32 0.0, %v3870
    %v3872 = vpop.f32.mrf.mxu0
    %v3873 = vadd.f32 0.0, %v3872
    %3874 = vmatmul.bf16.gmra.mxu0 %v2629
    %v3875 = vpop.f32.mrf.mxu0
    %v3876 = vadd.f32 0.0, %v3875
    %v3877 = vpop.f32.mrf.mxu0
    %v3878 = vadd.f32 0.0, %v3877
    %3879 = vmatmul.bf16.gmra.mxu0 %v2632
    %v3880 = vpop.f32.mrf.mxu0
    %v3881 = vadd.f32 0.0, %v3880
    %v3882 = vpop.f32.mrf.mxu0
    %v3883 = vadd.f32 0.0, %v3882
    %3884 = vmatmul.bf16.gmra.mxu0 %v2635
    %v3885 = vpop.f32.mrf.mxu0
    %v3886 = vadd.f32 0.0, %v3885
    %v3887 = vpop.f32.mrf.mxu0
    %v3888 = vadd.f32 0.0, %v3887
    %3889 = vmatmul.bf16.gmra.mxu0 %v2638
    %v3890 = vpop.f32.mrf.mxu0
    %v3891 = vadd.f32 0.0, %v3890
    %v3892 = vpop.f32.mrf.mxu0
    %v3893 = vadd.f32 0.0, %v3892
    %3894 = vmatmul.bf16.gmra.mxu0 %v2641
    %v3895 = vpop.f32.mrf.mxu0
    %v3896 = vadd.f32 0.0, %v3895
    %v3897 = vpop.f32.mrf.mxu0
    %v3898 = vadd.f32 0.0, %v3897
    %3899 = vmatmul.bf16.gmra.mxu0 %v2644
    %v3900 = vpop.f32.mrf.mxu0
    %v3901 = vadd.f32 0.0, %v3900
    %v3902 = vpop.f32.mrf.mxu0
    %v3903 = vadd.f32 0.0, %v3902
    %3904 = vmatmul.bf16.gmra.mxu0 %v2647
    %v3905 = vpop.f32.mrf.mxu0
    %v3906 = vadd.f32 0.0, %v3905
    %v3907 = vpop.f32.mrf.mxu0
    %v3908 = vadd.f32 0.0, %v3907
    %3909 = vmatmul.bf16.gmra.mxu0 %v2650
    %v3910 = vpop.f32.mrf.mxu0
    %v3911 = vadd.f32 0.0, %v3910
    %v3912 = vpop.f32.mrf.mxu0
    %v3913 = vadd.f32 0.0, %v3912
    %3914 = vmatmul.bf16.gmra.mxu0 %v2653
    %v3915 = vpop.f32.mrf.mxu0
    %v3916 = vadd.f32 0.0, %v3915
    %v3917 = vpop.f32.mrf.mxu0
    %v3918 = vadd.f32 0.0, %v3917
    %3919 = vmatmul.bf16.gmra.mxu0 %v2656
    %v3920 = vpop.f32.mrf.mxu0
    %v3921 = vadd.f32 0.0, %v3920
    %v3922 = vpop.f32.mrf.mxu0
    %v3923 = vadd.f32 0.0, %v3922
    %3924 = vmatmul.bf16.gmra.mxu0 %v2659
    %v3925 = vpop.f32.mrf.mxu0
    %v3926 = vadd.f32 0.0, %v3925
    %v3927 = vpop.f32.mrf.mxu0
    %v3928 = vadd.f32 0.0, %v3927
    %3929 = vmatmul.bf16.gmra.mxu0 %v2662
    %v3930 = vpop.f32.mrf.mxu0
    %v3931 = vadd.f32 0.0, %v3930
    %v3932 = vpop.f32.mrf.mxu0
    %v3933 = vadd.f32 0.0, %v3932
    %3934 = vmatmul.bf16.gmra.mxu0 %v2665
    %v3935 = vpop.f32.mrf.mxu0
    %v3936 = vadd.f32 0.0, %v3935
    %v3937 = vpop.f32.mrf.mxu0
    %v3938 = vadd.f32 0.0, %v3937
    %3939 = vmatmul.bf16.gmra.mxu0 %v2668
    %v3940 = vpop.f32.mrf.mxu0
    %v3941 = vadd.f32 0.0, %v3940
    %v3942 = vpop.f32.mrf.mxu0
    %v3943 = vadd.f32 0.0, %v3942
    %3944 = vmatmul.bf16.gmra.mxu0 %v2671
    %v3945 = vpop.f32.mrf.mxu0
    %v3946 = vadd.f32 0.0, %v3945
    %v3947 = vpop.f32.mrf.mxu0
    %v3948 = vadd.f32 0.0, %v3947
    %3949 = vmatmul.bf16.gmra.mxu0 %v2674
    %v3950 = vpop.f32.mrf.mxu0
    %v3951 = vadd.f32 0.0, %v3950
    %v3952 = vpop.f32.mrf.mxu0
    %v3953 = vadd.f32 0.0, %v3952
    %3954 = vmatmul.bf16.gmra.mxu0 %v2677
    %v3955 = vpop.f32.mrf.mxu0
    %v3956 = vadd.f32 0.0, %v3955
    %v3957 = vpop.f32.mrf.mxu0
    %v3958 = vadd.f32 0.0, %v3957
    %3959 = vmatmul.bf16.gmra.mxu0 %v2680
    %v3960 = vpop.f32.mrf.mxu0
    %v3961 = vadd.f32 0.0, %v3960
    %v3962 = vpop.f32.mrf.mxu0
    %v3963 = vadd.f32 0.0, %v3962
    %3964 = vmatmul.bf16.gmra.mxu0 %v2683
    %v3965 = vpop.f32.mrf.mxu0
    %v3966 = vadd.f32 0.0, %v3965
    %v3967 = vpop.f32.mrf.mxu0
    %v3968 = vadd.f32 0.0, %v3967
    %3969 = vmatmul.bf16.gmra.mxu0 %v2686
    %v3970 = vpop.f32.mrf.mxu0
    %v3971 = vadd.f32 0.0, %v3970
    %v3972 = vpop.f32.mrf.mxu0
    %v3973 = vadd.f32 0.0, %v3972
    %3974 = vmatmul.bf16.gmra.mxu0 %v2689
    %v3975 = vpop.f32.mrf.mxu0
    %v3976 = vadd.f32 0.0, %v3975
    %v3977 = vpop.f32.mrf.mxu0
    %v3978 = vadd.f32 0.0, %v3977
    %3979 = vmatmul.bf16.gmra.mxu0 %v2692
    %v3980 = vpop.f32.mrf.mxu0
    %v3981 = vadd.f32 0.0, %v3980
    %v3982 = vpop.f32.mrf.mxu0
    %v3983 = vadd.f32 0.0, %v3982
    %3984 = vmatmul.bf16.gmra.mxu0 %v2695
    %v3985 = vpop.f32.mrf.mxu0
    %v3986 = vadd.f32 0.0, %v3985
    %v3987 = vpop.f32.mrf.mxu0
    %v3988 = vadd.f32 0.0, %v3987
    %3989 = vmatmul.bf16.gmra.mxu0 %v2698
    %v3990 = vpop.f32.mrf.mxu0
    %v3991 = vadd.f32 0.0, %v3990
    %v3992 = vpop.f32.mrf.mxu0
    %v3993 = vadd.f32 0.0, %v3992
    %3994 = vmatmul.bf16.gmra.mxu0 %v2701
    %v3995 = vpop.f32.mrf.mxu0
    %v3996 = vadd.f32 0.0, %v3995
    %v3997 = vpop.f32.mrf.mxu0
    %v3998 = vadd.f32 0.0, %v3997
    %3999 = vmatmul.bf16.gmra.mxu0 %v2704
    %v4000 = vpop.f32.mrf.mxu0
    %v4001 = vadd.f32 0.0, %v4000
    %v4002 = vpop.f32.mrf.mxu0
    %v4003 = vadd.f32 0.0, %v4002
    %4004 = vmatmul.bf16.gmra.mxu0 %v2707
    %v4005 = vpop.f32.mrf.mxu0
    %v4006 = vadd.f32 0.0, %v4005
    %v4007 = vpop.f32.mrf.mxu0
    %v4008 = vadd.f32 0.0, %v4007
    %4009 = vmatmul.bf16.gmra.mxu0 %v2710
    %v4010 = vpop.f32.mrf.mxu0
    %v4011 = vadd.f32 0.0, %v4010
    %v4012 = vpop.f32.mrf.mxu0
    %v4013 = vadd.f32 0.0, %v4012
    %4014 = vmatmul.bf16.gmra.mxu0 %v2713
    %v4015 = vpop.f32.mrf.mxu0
    %v4016 = vadd.f32 0.0, %v4015
    %v4017 = vpop.f32.mrf.mxu0
    %v4018 = vadd.f32 0.0, %v4017
    %4019 = vmatmul.bf16.gmra.mxu0 %v2716
    %v4020 = vpop.f32.mrf.mxu0
    %v4021 = vadd.f32 0.0, %v4020
    %v4022 = vpop.f32.mrf.mxu0
    %v4023 = vadd.f32 0.0, %v4022
    %4024 = vmatmul.bf16.gmra.mxu0 %v2719
    %v4025 = vpop.f32.mrf.mxu0
    %v4026 = vadd.f32 0.0, %v4025
    %v4027 = vpop.f32.mrf.mxu0
    %v4028 = vadd.f32 0.0, %v4027
    %4029 = vmatmul.bf16.gmra.mxu0 %v2722
    %v4030 = vpop.f32.mrf.mxu0
    %v4031 = vadd.f32 0.0, %v4030
    %v4032 = vpop.f32.mrf.mxu0
    %v4033 = vadd.f32 0.0, %v4032
    %4034 = vmatmul.bf16.gmra.mxu0 %v2725
    %v4035 = vpop.f32.mrf.mxu0
    %v4036 = vadd.f32 0.0, %v4035
    %v4037 = vpop.f32.mrf.mxu0
    %v4038 = vadd.f32 0.0, %v4037
    %4039 = vmatmul.bf16.gmra.mxu0 %v2728
    %v4040 = vpop.f32.mrf.mxu0
    %v4041 = vadd.f32 0.0, %v4040
    %v4042 = vpop.f32.mrf.mxu0
    %v4043 = vadd.f32 0.0, %v4042
    %4044 = vmatmul.bf16.gmra.mxu0 %v2731
    %v4045 = vpop.f32.mrf.mxu0
    %v4046 = vadd.f32 0.0, %v4045
    %v4047 = vpop.f32.mrf.mxu0
    %v4048 = vadd.f32 0.0, %v4047
    %4049 = vmatmul.bf16.gmra.mxu0 %v2734
    %v4050 = vpop.f32.mrf.mxu0
    %v4051 = vadd.f32 0.0, %v4050
    %v4052 = vpop.f32.mrf.mxu0
    %v4053 = vadd.f32 0.0, %v4052
    %4054 = vmatmul.bf16.gmra.mxu0 %v2737
    %v4055 = vpop.f32.mrf.mxu0
    %v4056 = vadd.f32 0.0, %v4055
    %v4057 = vpop.f32.mrf.mxu0
    %v4058 = vadd.f32 0.0, %v4057
    %4059 = vmatmul.bf16.gmra.mxu0 %v2740
    %v4060 = vpop.f32.mrf.mxu0
    %v4061 = vadd.f32 0.0, %v4060
    %v4062 = vpop.f32.mrf.mxu0
    %v4063 = vadd.f32 0.0, %v4062
    %4064 = vmatmul.bf16.gmra.mxu0 %v2743
    %v4065 = vpop.f32.mrf.mxu0
    %v4066 = vadd.f32 0.0, %v4065
    %v4067 = vpop.f32.mrf.mxu0
    %v4068 = vadd.f32 0.0, %v4067
    %4069 = vmatmul.bf16.gmra.mxu0 %v2746
    %v4070 = vpop.f32.mrf.mxu0
    %v4071 = vadd.f32 0.0, %v4070
    %v4072 = vpop.f32.mrf.mxu0
    %v4073 = vadd.f32 0.0, %v4072
    %4074 = vmatmul.bf16.gmra.mxu0 %v2749
    %v4075 = vpop.f32.mrf.mxu0
    %v4076 = vadd.f32 0.0, %v4075
    %v4077 = vpop.f32.mrf.mxu0
    %v4078 = vadd.f32 0.0, %v4077
    %4079 = vmatmul.bf16.gmra.mxu0 %v2752
    %v4080 = vpop.f32.mrf.mxu0
    %v4081 = vadd.f32 0.0, %v4080
    %v4082 = vpop.f32.mrf.mxu0
    %v4083 = vadd.f32 0.0, %v4082
    %4084 = vmatmul.bf16.gmra.mxu0 %v2755
    %v4085 = vpop.f32.mrf.mxu0
    %v4086 = vadd.f32 0.0, %v4085
    %v4087 = vpop.f32.mrf.mxu0
    %v4088 = vadd.f32 0.0, %v4087
    %4089 = vmatmul.bf16.gmra.mxu0 %v2758
    %v4090 = vpop.f32.mrf.mxu0
    %v4091 = vadd.f32 0.0, %v4090
    %v4092 = vpop.f32.mrf.mxu0
    %v4093 = vadd.f32 0.0, %v4092
    %4094 = vmatmul.bf16.gmra.mxu0 %v2761
    %v4095 = vpop.f32.mrf.mxu0
    %v4096 = vadd.f32 0.0, %v4095
    %v4097 = vpop.f32.mrf.mxu0
    %v4098 = vadd.f32 0.0, %v4097
    %4099 = vmatmul.bf16.gmra.mxu0 %v2764
    %v4100 = vpop.f32.mrf.mxu0
    %v4101 = vadd.f32 0.0, %v4100
    %v4102 = vpop.f32.mrf.mxu0
    %v4103 = vadd.f32 0.0, %v4102
    %4104 = vmatmul.bf16.gmra.mxu0 %v2767
    %v4105 = vpop.f32.mrf.mxu0
    %v4106 = vadd.f32 0.0, %v4105
    %v4107 = vpop.f32.mrf.mxu0
    %v4108 = vadd.f32 0.0, %v4107
    %4109 = vmatmul.bf16.gmra.mxu0 %v2770
    %v4110 = vpop.f32.mrf.mxu0
    %v4111 = vadd.f32 0.0, %v4110
    %v4112 = vpop.f32.mrf.mxu0
    %v4113 = vadd.f32 0.0, %v4112
    %4114 = vmatmul.bf16.gmra.mxu0 %v2773
    %v4115 = vpop.f32.mrf.mxu0
    %v4116 = vadd.f32 0.0, %v4115
    %v4117 = vpop.f32.mrf.mxu0
    %v4118 = vadd.f32 0.0, %v4117
    %4119 = vmatmul.bf16.gmra.mxu0 %v2776
    %v4120 = vpop.f32.mrf.mxu0
    %v4121 = vadd.f32 0.0, %v4120
    %v4122 = vpop.f32.mrf.mxu0
    %v4123 = vadd.f32 0.0, %v4122
    %4124 = vmatmul.bf16.gmra.mxu0 %v2779
    %v4125 = vpop.f32.mrf.mxu0
    %v4126 = vadd.f32 0.0, %v4125
    %v4127 = vpop.f32.mrf.mxu0
    %v4128 = vadd.f32 0.0, %v4127
    %4129 = vmatmul.bf16.gmra.mxu0 %v2782
    %v4130 = vpop.f32.mrf.mxu0
    %v4131 = vadd.f32 0.0, %v4130
    %v4132 = vpop.f32.mrf.mxu0
    %v4133 = vadd.f32 0.0, %v4132
    %4134 = vmatmul.bf16.gmra.mxu0 %v2785
    %v4135 = vpop.f32.mrf.mxu0
    %v4136 = vadd.f32 0.0, %v4135
    %v4137 = vpop.f32.mrf.mxu0
    %v4138 = vadd.f32 0.0, %v4137
    %4139 = vmatmul.bf16.gmra.mxu0 %v2788
    %v4140 = vpop.f32.mrf.mxu0
    %v4141 = vadd.f32 0.0, %v4140
    %v4142 = vpop.f32.mrf.mxu0
    %v4143 = vadd.f32 0.0, %v4142
    %4144 = vmatmul.bf16.gmra.mxu0 %v2791
    %v4145 = vpop.f32.mrf.mxu0
    %v4146 = vadd.f32 0.0, %v4145
    %v4147 = vpop.f32.mrf.mxu0
    %v4148 = vadd.f32 0.0, %v4147
    %4149 = vmatmul.bf16.gmra.mxu0 %v2794
    %v4150 = vpop.f32.mrf.mxu0
    %v4151 = vadd.f32 0.0, %v4150
    %v4152 = vpop.f32.mrf.mxu0
    %v4153 = vadd.f32 0.0, %v4152
    %4154 = vmatmul.bf16.gmra.mxu0 %v2797
    %v4155 = vpop.f32.mrf.mxu0
    %v4156 = vadd.f32 0.0, %v4155
    %v4157 = vpop.f32.mrf.mxu0
    %v4158 = vadd.f32 0.0, %v4157
    %4159 = vmatmul.bf16.gmra.mxu0 %v2800
    %v4160 = vpop.f32.mrf.mxu0
    %v4161 = vadd.f32 0.0, %v4160
    %v4162 = vpop.f32.mrf.mxu0
    %v4163 = vadd.f32 0.0, %v4162
    %4164 = vmatmul.bf16.gmra.mxu0 %v2803
    %v4165 = vpop.f32.mrf.mxu0
    %v4166 = vadd.f32 0.0, %v4165
    %v4167 = vpop.f32.mrf.mxu0
    %v4168 = vadd.f32 0.0, %v4167
    %4169 = vmatmul.bf16.gmra.mxu0 %v2806
    %v4170 = vpop.f32.mrf.mxu0
    %v4171 = vadd.f32 0.0, %v4170
    %v4172 = vpop.f32.mrf.mxu0
    %v4173 = vadd.f32 0.0, %v4172
    %4174 = vmatmul.bf16.gmra.mxu0 %v2809
    %v4175 = vpop.f32.mrf.mxu0
    %v4176 = vadd.f32 0.0, %v4175
    %v4177 = vpop.f32.mrf.mxu0
    %v4178 = vadd.f32 0.0, %v4177
    %4179 = vmatmul.bf16.gmra.mxu0 %v2812
    %v4180 = vpop.f32.mrf.mxu0
    %v4181 = vadd.f32 0.0, %v4180
    %v4182 = vpop.f32.mrf.mxu0
    %v4183 = vadd.f32 0.0, %v4182
    %4184 = vmatmul.bf16.gmra.mxu0 %v2815
    %v4185 = vpop.f32.mrf.mxu0
    %v4186 = vadd.f32 0.0, %v4185
    %v4187 = vpop.f32.mrf.mxu0
    %v4188 = vadd.f32 0.0, %v4187
    %4189 = vmatmul.bf16.gmra.mxu0 %v2818
    %v4190 = vpop.f32.mrf.mxu0
    %v4191 = vadd.f32 0.0, %v4190
    %v4192 = vpop.f32.mrf.mxu0
    %v4193 = vadd.f32 0.0, %v4192
    %4194 = vmatmul.bf16.gmra.mxu0 %v2821
    %v4195 = vpop.f32.mrf.mxu0
    %v4196 = vadd.f32 0.0, %v4195
    %v4197 = vpop.f32.mrf.mxu0
    %v4198 = vadd.f32 0.0, %v4197
    %4199 = vmatmul.bf16.gmra.mxu0 %v2824
    %v4200 = vpop.f32.mrf.mxu0
    %v4201 = vadd.f32 0.0, %v4200
    %v4202 = vpop.f32.mrf.mxu0
    %v4203 = vadd.f32 0.0, %v4202
    %4204 = vmatmul.bf16.gmra.mxu0 %v2827
    %v4205 = vpop.f32.mrf.mxu0
    %v4206 = vadd.f32 0.0, %v4205
    %v4207 = vpop.f32.mrf.mxu0
    %v4208 = vadd.f32 0.0, %v4207
    %4209 = vmatmul.bf16.gmra.mxu0 %v2830
    %v4210 = vpop.f32.mrf.mxu0
    %v4211 = vadd.f32 0.0, %v4210
    %v4212 = vpop.f32.mrf.mxu0
    %v4213 = vadd.f32 0.0, %v4212
    %4214 = vmatmul.bf16.gmra.mxu0 %v2833
    %v4215 = vpop.f32.mrf.mxu0
    %v4216 = vadd.f32 0.0, %v4215
    %v4217 = vpop.f32.mrf.mxu0
    %v4218 = vadd.f32 0.0, %v4217
    %4219 = vmatmul.bf16.gmra.mxu0 %v2836
    %v4220 = vpop.f32.mrf.mxu0
    %v4221 = vadd.f32 0.0, %v4220
    %v4222 = vpop.f32.mrf.mxu0
    %v4223 = vadd.f32 0.0, %v4222
    %4224 = vmatmul.bf16.gmra.mxu0 %v2839
    %v4225 = vpop.f32.mrf.mxu0
    %v4226 = vadd.f32 0.0, %v4225
    %v4227 = vpop.f32.mrf.mxu0
    %v4228 = vadd.f32 0.0, %v4227
    %4229 = vmatmul.bf16.gmra.mxu0 %v2842
    %v4230 = vpop.f32.mrf.mxu0
    %v4231 = vadd.f32 0.0, %v4230
    %v4232 = vpop.f32.mrf.mxu0
    %v4233 = vadd.f32 0.0, %v4232
    %4234 = vmatmul.bf16.gmra.mxu0 %v2845
    %v4235 = vpop.f32.mrf.mxu0
    %v4236 = vadd.f32 0.0, %v4235
    %v4237 = vpop.f32.mrf.mxu0
    %v4238 = vadd.f32 0.0, %v4237
    %4239 = vmatmul.bf16.gmra.mxu0 %v2848
    %v4240 = vpop.f32.mrf.mxu0
    %v4241 = vadd.f32 0.0, %v4240
    %v4242 = vpop.f32.mrf.mxu0
    %v4243 = vadd.f32 0.0, %v4242
    %4244 = vmatmul.bf16.gmra.mxu0 %v2851
    %v4245 = vpop.f32.mrf.mxu0
    %v4246 = vadd.f32 0.0, %v4245
    %v4247 = vpop.f32.mrf.mxu0
    %v4248 = vadd.f32 0.0, %v4247
    %4249 = vmatmul.bf16.gmra.mxu0 %v2854
    %v4250 = vpop.f32.mrf.mxu0
    %v4251 = vadd.f32 0.0, %v4250
    %v4252 = vpop.f32.mrf.mxu0
    %v4253 = vadd.f32 0.0, %v4252
    %4254 = vmatmul.bf16.gmra.mxu0 %v2857
    %v4255 = vpop.f32.mrf.mxu0
    %v4256 = vadd.f32 0.0, %v4255
    %v4257 = vpop.f32.mrf.mxu0
    %v4258 = vadd.f32 0.0, %v4257
    %4259 = vmatmul.bf16.gmra.mxu0 %v2860
    %v4260 = vpop.f32.mrf.mxu0
    %v4261 = vadd.f32 0.0, %v4260
    %v4262 = vpop.f32.mrf.mxu0
    %v4263 = vadd.f32 0.0, %v4262
    %4264 = vmatmul.bf16.gmra.mxu0 %v2863
    %v4265 = vpop.f32.mrf.mxu0
    %v4266 = vadd.f32 0.0, %v4265
    %v4267 = vpop.f32.mrf.mxu0
    %v4268 = vadd.f32 0.0, %v4267
    %4269 = vmatmul.bf16.gmra.mxu0 %v2866
    %v4270 = vpop.f32.mrf.mxu0
    %v4271 = vadd.f32 0.0, %v4270
    %v4272 = vpop.f32.mrf.mxu0
    %v4273 = vadd.f32 0.0, %v4272
    %4274 = vmatmul.bf16.gmra.mxu0 %v2869
    %v4275 = vpop.f32.mrf.mxu0
    %v4276 = vadd.f32 0.0, %v4275
    %v4277 = vpop.f32.mrf.mxu0
    %v4278 = vadd.f32 0.0, %v4277
    %4279 = vmatmul.bf16.gmra.mxu0 %v2872
    %v4280 = vpop.f32.mrf.mxu0
    %v4281 = vadd.f32 0.0, %v4280
    %v4282 = vpop.f32.mrf.mxu0
    %v4283 = vadd.f32 0.0, %v4282
    %4284 = vmatmul.bf16.gmra.mxu0 %v2875
    %v4285 = vpop.f32.mrf.mxu0
    %v4286 = vadd.f32 0.0, %v4285
    %v4287 = vpop.f32.mrf.mxu0
    %v4288 = vadd.f32 0.0, %v4287
    %4289 = vmatmul.bf16.gmra.mxu0 %v2878
    %v4290 = vpop.f32.mrf.mxu0
    %v4291 = vadd.f32 0.0, %v4290
    %v4292 = vpop.f32.mrf.mxu0
    %v4293 = vadd.f32 0.0, %v4292
    %4294 = vmatmul.bf16.gmra.mxu0 %v2881
    %v4295 = vpop.f32.mrf.mxu0
    %v4296 = vadd.f32 0.0, %v4295
    %v4297 = vpop.f32.mrf.mxu0
    %v4298 = vadd.f32 0.0, %v4297
    %4299 = vmatmul.bf16.gmra.mxu0 %v2884
    %v4300 = vpop.f32.mrf.mxu0
    %v4301 = vadd.f32 0.0, %v4300
    %v4302 = vpop.f32.mrf.mxu0
    %v4303 = vadd.f32 0.0, %v4302
    %4304 = vmatmul.bf16.gmra.mxu0 %v2887
    %v4305 = vpop.f32.mrf.mxu0
    %v4306 = vadd.f32 0.0, %v4305
    %v4307 = vpop.f32.mrf.mxu0
    %v4308 = vadd.f32 0.0, %v4307
    %4309 = vmatmul.bf16.gmra.mxu0 %v2890
    %v4310 = vpop.f32.mrf.mxu0
    %v4311 = vadd.f32 0.0, %v4310
    %v4312 = vpop.f32.mrf.mxu0
    %v4313 = vadd.f32 0.0, %v4312
    %4314 = vmatmul.bf16.gmra.mxu0 %v2893
    %v4315 = vpop.f32.mrf.mxu0
    %v4316 = vadd.f32 0.0, %v4315
    %v4317 = vpop.f32.mrf.mxu0
    %v4318 = vadd.f32 0.0, %v4317
    %4319 = vmatmul.bf16.gmra.mxu0 %v2896
    %v4320 = vpop.f32.mrf.mxu0
    %v4321 = vadd.f32 0.0, %v4320
    %v4322 = vpop.f32.mrf.mxu0
    %v4323 = vadd.f32 0.0, %v4322
    %4324 = vmatmul.bf16.gmra.mxu0 %v2899
    %v4325 = vpop.f32.mrf.mxu0
    %v4326 = vadd.f32 0.0, %v4325
    %v4327 = vpop.f32.mrf.mxu0
    %v4328 = vadd.f32 0.0, %v4327
    %4329 = vmatmul.bf16.gmra.mxu0 %v2902
    %v4330 = vpop.f32.mrf.mxu0
    %v4331 = vadd.f32 0.0, %v4330
    %v4332 = vpop.f32.mrf.mxu0
    %v4333 = vadd.f32 0.0, %v4332
    %4334 = vmatmul.bf16.gmra.mxu0 %v2905
    %v4335 = vpop.f32.mrf.mxu0
    %v4336 = vadd.f32 0.0, %v4335
    %v4337 = vpop.f32.mrf.mxu0
    %v4338 = vadd.f32 0.0, %v4337
    %4339 = vmatmul.bf16.gmra.mxu0 %v2908
    %v4340 = vpop.f32.mrf.mxu0
    %v4341 = vadd.f32 0.0, %v4340
    %v4342 = vpop.f32.mrf.mxu0
    %v4343 = vadd.f32 0.0, %v4342
    %4344 = vmatmul.bf16.gmra.mxu0 %v2911
    %v4345 = vpop.f32.mrf.mxu0
    %v4346 = vadd.f32 0.0, %v4345
    %v4347 = vpop.f32.mrf.mxu0
    %v4348 = vadd.f32 0.0, %v4347
    %4349 = vmatmul.bf16.gmra.mxu0 %v2914
    %v4350 = vpop.f32.mrf.mxu0
    %v4351 = vadd.f32 0.0, %v4350
    %v4352 = vpop.f32.mrf.mxu0
    %v4353 = vadd.f32 0.0, %v4352
    %4354 = vmatmul.bf16.gmra.mxu0 %v2917
    %v4355 = vpop.f32.mrf.mxu0
    %v4356 = vadd.f32 0.0, %v4355
    %v4357 = vpop.f32.mrf.mxu0
    %v4358 = vadd.f32 0.0, %v4357
    %4359 = vmatmul.bf16.gmra.mxu0 %v2920
    %v4360 = vpop.f32.mrf.mxu0
    %v4361 = vadd.f32 0.0, %v4360
    %v4362 = vpop.f32.mrf.mxu0
    %v4363 = vadd.f32 0.0, %v4362
    %4364 = vmatmul.bf16.gmra.mxu0 %v2923
    %v4365 = vpop.f32.mrf.mxu0
    %v4366 = vadd.f32 0.0, %v4365
    %v4367 = vpop.f32.mrf.mxu0
    %v4368 = vadd.f32 0.0, %v4367
    %4369 = vmatmul.bf16.gmra.mxu0 %v2926
    %v4370 = vpop.f32.mrf.mxu0
    %v4371 = vadd.f32 0.0, %v4370
    %v4372 = vpop.f32.mrf.mxu0
    %v4373 = vadd.f32 0.0, %v4372
    %4374 = vmatmul.bf16.gmra.mxu0 %v2929
    %v4375 = vpop.f32.mrf.mxu0
    %v4376 = vadd.f32 0.0, %v4375
    %v4377 = vpop.f32.mrf.mxu0
    %v4378 = vadd.f32 0.0, %v4377
    %4379 = vdwg.mxu0
    %v4380 = vmax.f32 %v2941, %v3301
    %v4381 = vmax.f32 %v2943, %v3303
    %v4382 = vmax.f32 %v2946, %v3306
    %v4383 = vmax.f32 %v2948, %v3308
    %v4384 = vmax.f32 %v2951, %v3311
    %v4385 = vmax.f32 %v2953, %v3313
    %v4386 = vmax.f32 %v2956, %v3316
    %v4387 = vmax.f32 %v2958, %v3318
    %v4388 = vmax.f32 %v2961, %v3321
    %v4389 = vmax.f32 %v2963, %v3323
    %v4390 = vmax.f32 %v2966, %v3326
    %v4391 = vmax.f32 %v2968, %v3328
    %v4392 = vmax.f32 %v2971, %v3331
    %v4393 = vmax.f32 %v2973, %v3333
    %v4394 = vmax.f32 %v2976, %v3336
    %v4395 = vmax.f32 %v2978, %v3338
    %v4396 = vmax.f32 %v2981, %v3341
    %v4397 = vmax.f32 %v2983, %v3343
    %v4398 = vmax.f32 %v2986, %v3346
    %v4399 = vmax.f32 %v2988, %v3348
    %v4400 = vmax.f32 %v2991, %v3351
    %v4401 = vmax.f32 %v2993, %v3353
    %v4402 = vmax.f32 %v2996, %v3356
    %v4403 = vmax.f32 %v2998, %v3358
    %v4404 = vmax.f32 %v3001, %v3361
    %v4405 = vmax.f32 %v3003, %v3363
    %v4406 = vmax.f32 %v3006, %v3366
    %v4407 = vmax.f32 %v3008, %v3368
    %v4408 = vmax.f32 %v3011, %v3371
    %v4409 = vmax.f32 %v3013, %v3373
    %v4410 = vmax.f32 %v3016, %v3376
    %v4411 = vmax.f32 %v3018, %v3378
    %v4412 = vmax.f32 %v3021, %v3381
    %v4413 = vmax.f32 %v3023, %v3383
    %v4414 = vmax.f32 %v3026, %v3386
    %v4415 = vmax.f32 %v3028, %v3388
    %v4416 = vmax.f32 %v3031, %v3391
    %v4417 = vmax.f32 %v3033, %v3393
    %v4418 = vmax.f32 %v3036, %v3396
    %v4419 = vmax.f32 %v3038, %v3398
    %v4420 = vmax.f32 %v3041, %v3401
    %v4421 = vmax.f32 %v3043, %v3403
    %v4422 = vmax.f32 %v3046, %v3406
    %v4423 = vmax.f32 %v3048, %v3408
    %v4424 = vmax.f32 %v3051, %v3411
    %v4425 = vmax.f32 %v3053, %v3413
    %v4426 = vmax.f32 %v3056, %v3416
    %v4427 = vmax.f32 %v3058, %v3418
    %v4428 = vmax.f32 %v3061, %v3421
    %v4429 = vmax.f32 %v3063, %v3423
    %v4430 = vmax.f32 %v3066, %v3426
    %v4431 = vmax.f32 %v3068, %v3428
    %v4432 = vmax.f32 %v3071, %v3431
    %v4433 = vmax.f32 %v3073, %v3433
    %v4434 = vmax.f32 %v3076, %v3436
    %v4435 = vmax.f32 %v3078, %v3438
    %v4436 = vmax.f32 %v3081, %v3441
    %v4437 = vmax.f32 %v3083, %v3443
    %v4438 = vmax.f32 %v3086, %v3446
    %v4439 = vmax.f32 %v3088, %v3448
    %v4440 = vmax.f32 %v3091, %v3451
    %v4441 = vmax.f32 %v3093, %v3453
    %v4442 = vmax.f32 %v3096, %v3456
    %v4443 = vmax.f32 %v3098, %v3458
    %v4444 = vmax.f32 %v3101, %v3461
    %v4445 = vmax.f32 %v3103, %v3463
    %v4446 = vmax.f32 %v3106, %v3466
    %v4447 = vmax.f32 %v3108, %v3468
    %v4448 = vmax.f32 %v3111, %v3471
    %v4449 = vmax.f32 %v3113, %v3473
    %v4450 = vmax.f32 %v3116, %v3476
    %v4451 = vmax.f32 %v3118, %v3478
    %v4452 = vmax.f32 %v3121, %v3481
    %v4453 = vmax.f32 %v3123, %v3483
    %v4454 = vmax.f32 %v3126, %v3486
    %v4455 = vmax.f32 %v3128, %v3488
    %v4456 = vmax.f32 %v3131, %v3491
    %v4457 = vmax.f32 %v3133, %v3493
    %v4458 = vmax.f32 %v3136, %v3496
    %v4459 = vmax.f32 %v3138, %v3498
    %v4460 = vmax.f32 %v3141, %v3501
    %v4461 = vmax.f32 %v3143, %v3503
    %v4462 = vmax.f32 %v3146, %v3506
    %v4463 = vmax.f32 %v3148, %v3508
    %v4464 = vmax.f32 %v3151, %v3511
    %v4465 = vmax.f32 %v3153, %v3513
    %v4466 = vmax.f32 %v3156, %v3516
    %v4467 = vmax.f32 %v3158, %v3518
    %v4468 = vmax.f32 %v3161, %v3521
    %v4469 = vmax.f32 %v3163, %v3523
    %v4470 = vmax.f32 %v3166, %v3526
    %v4471 = vmax.f32 %v3168, %v3528
    %v4472 = vmax.f32 %v3171, %v3531
    %v4473 = vmax.f32 %v3173, %v3533
    %v4474 = vmax.f32 %v3176, %v3536
    %v4475 = vmax.f32 %v3178, %v3538
    %v4476 = vmax.f32 %v3181, %v3541
    %v4477 = vmax.f32 %v3183, %v3543
    %v4478 = vmax.f32 %v3186, %v3546
    %v4479 = vmax.f32 %v3188, %v3548
    %v4480 = vmax.f32 %v3191, %v3551
    %v4481 = vmax.f32 %v3193, %v3553
    %v4482 = vmax.f32 %v3196, %v3556
    %v4483 = vmax.f32 %v3198, %v3558
    %v4484 = vmax.f32 %v3201, %v3561
    %v4485 = vmax.f32 %v3203, %v3563
    %v4486 = vmax.f32 %v3206, %v3566
    %v4487 = vmax.f32 %v3208, %v3568
    %v4488 = vmax.f32 %v3211, %v3571
    %v4489 = vmax.f32 %v3213, %v3573
    %v4490 = vmax.f32 %v3216, %v3576
    %v4491 = vmax.f32 %v3218, %v3578
    %v4492 = vmax.f32 %v3221, %v3581
    %v4493 = vmax.f32 %v3223, %v3583
    %v4494 = vmax.f32 %v3226, %v3586
    %v4495 = vmax.f32 %v3228, %v3588
    %v4496 = vmax.f32 %v3231, %v3591
    %v4497 = vmax.f32 %v3233, %v3593
    %v4498 = vmax.f32 %v3236, %v3596
    %v4499 = vmax.f32 %v3238, %v3598
    %v4500 = vmax.f32 %v3241, %v3601
    %v4501 = vmax.f32 %v3243, %v3603
    %v4502 = vmax.f32 %v3246, %v3606
    %v4503 = vmax.f32 %v3248, %v3608
    %v4504 = vmax.f32 %v3251, %v3611
    %v4505 = vmax.f32 %v3253, %v3613
    %v4506 = vmax.f32 %v3256, %v3616
    %v4507 = vmax.f32 %v3258, %v3618
    %v4508 = vmax.f32 %v3261, %v3621
    %v4509 = vmax.f32 %v3263, %v3623
    %v4510 = vmax.f32 %v3266, %v3626
    %v4511 = vmax.f32 %v3268, %v3628
    %v4512 = vmax.f32 %v3271, %v3631
    %v4513 = vmax.f32 %v3273, %v3633
    %v4514 = vmax.f32 %v3276, %v3636
    %v4515 = vmax.f32 %v3278, %v3638
    %v4516 = vmax.f32 %v3281, %v3641
    %v4517 = vmax.f32 %v3283, %v3643
    %v4518 = vmax.f32 %v3286, %v3646
    %v4519 = vmax.f32 %v3288, %v3648
    %v4520 = vmax.f32 %v3291, %v3651
    %v4521 = vmax.f32 %v3293, %v3653
    %v4522 = vmax.f32 %v3296, %v3656
    %v4523 = vmax.f32 %v3298, %v3658
    %v4524 = vmax.f32 %v3661, %v4021
    %v4525 = vmax.f32 %v3663, %v4023
    %v4526 = vmax.f32 %v3666, %v4026
    %v4527 = vmax.f32 %v3668, %v4028
    %v4528 = vmax.f32 %v3671, %v4031
    %v4529 = vmax.f32 %v3673, %v4033
    %v4530 = vmax.f32 %v3676, %v4036
    %v4531 = vmax.f32 %v3678, %v4038
    %v4532 = vmax.f32 %v3681, %v4041
    %v4533 = vmax.f32 %v3683, %v4043
    %v4534 = vmax.f32 %v3686, %v4046
    %v4535 = vmax.f32 %v3688, %v4048
    %v4536 = vmax.f32 %v3691, %v4051
    %v4537 = vmax.f32 %v3693, %v4053
    %v4538 = vmax.f32 %v3696, %v4056
    %v4539 = vmax.f32 %v3698, %v4058
    %v4540 = vmax.f32 %v3701, %v4061
    %v4541 = vmax.f32 %v3703, %v4063
    %v4542 = vmax.f32 %v3706, %v4066
    %v4543 = vmax.f32 %v3708, %v4068
    %v4544 = vmax.f32 %v3711, %v4071
    %v4545 = vmax.f32 %v3713, %v4073
    %v4546 = vmax.f32 %v3716, %v4076
    %v4547 = vmax.f32 %v3718, %v4078
    %v4548 = vmax.f32 %v3721, %v4081
    %v4549 = vmax.f32 %v3723, %v4083
    %v4550 = vmax.f32 %v3726, %v4086
    %v4551 = vmax.f32 %v3728, %v4088
    %v4552 = vmax.f32 %v3731, %v4091
    %v4553 = vmax.f32 %v3733, %v4093
    %v4554 = vmax.f32 %v3736, %v4096
    %v4555 = vmax.f32 %v3738, %v4098
    %v4556 = vmax.f32 %v3741, %v4101
    %v4557 = vmax.f32 %v3743, %v4103
    %v4558 = vmax.f32 %v3746, %v4106
    %v4559 = vmax.f32 %v3748, %v4108
    %v4560 = vmax.f32 %v3751, %v4111
    %v4561 = vmax.f32 %v3753, %v4113
    %v4562 = vmax.f32 %v3756, %v4116
    %v4563 = vmax.f32 %v3758, %v4118
    %v4564 = vmax.f32 %v3761, %v4121
    %v4565 = vmax.f32 %v3763, %v4123
    %v4566 = vmax.f32 %v3766, %v4126
    %v4567 = vmax.f32 %v3768, %v4128
    %v4568 = vmax.f32 %v3771, %v4131
    %v4569 = vmax.f32 %v3773, %v4133
    %v4570 = vmax.f32 %v3776, %v4136
    %v4571 = vmax.f32 %v3778, %v4138
    %v4572 = vmax.f32 %v3781, %v4141
    %v4573 = vmax.f32 %v3783, %v4143
    %v4574 = vmax.f32 %v3786, %v4146
    %v4575 = vmax.f32 %v3788, %v4148
    %v4576 = vmax.f32 %v3791, %v4151
    %v4577 = vmax.f32 %v3793, %v4153
    %v4578 = vmax.f32 %v3796, %v4156
    %v4579 = vmax.f32 %v3798, %v4158
    %v4580 = vmax.f32 %v3801, %v4161
    %v4581 = vmax.f32 %v3803, %v4163
    %v4582 = vmax.f32 %v3806, %v4166
    %v4583 = vmax.f32 %v3808, %v4168
    %v4584 = vmax.f32 %v3811, %v4171
    %v4585 = vmax.f32 %v3813, %v4173
    %v4586 = vmax.f32 %v3816, %v4176
    %v4587 = vmax.f32 %v3818, %v4178
    %v4588 = vmax.f32 %v3821, %v4181
    %v4589 = vmax.f32 %v3823, %v4183
    %v4590 = vmax.f32 %v3826, %v4186
    %v4591 = vmax.f32 %v3828, %v4188
    %v4592 = vmax.f32 %v3831, %v4191
    %v4593 = vmax.f32 %v3833, %v4193
    %v4594 = vmax.f32 %v3836, %v4196
    %v4595 = vmax.f32 %v3838, %v4198
    %v4596 = vmax.f32 %v3841, %v4201
    %v4597 = vmax.f32 %v3843, %v4203
    %v4598 = vmax.f32 %v3846, %v4206
    %v4599 = vmax.f32 %v3848, %v4208
    %v4600 = vmax.f32 %v3851, %v4211
    %v4601 = vmax.f32 %v3853, %v4213
    %v4602 = vmax.f32 %v3856, %v4216
    %v4603 = vmax.f32 %v3858, %v4218
    %v4604 = vmax.f32 %v3861, %v4221
    %v4605 = vmax.f32 %v3863, %v4223
    %v4606 = vmax.f32 %v3866, %v4226
    %v4607 = vmax.f32 %v3868, %v4228
    %v4608 = vmax.f32 %v3871, %v4231
    %v4609 = vmax.f32 %v3873, %v4233
    %v4610 = vmax.f32 %v3876, %v4236
    %v4611 = vmax.f32 %v3878, %v4238
    %v4612 = vmax.f32 %v3881, %v4241
    %v4613 = vmax.f32 %v3883, %v4243
    %v4614 = vmax.f32 %v3886, %v4246
    %v4615 = vmax.f32 %v3888, %v4248
    %v4616 = vmax.f32 %v3891, %v4251
    %v4617 = vmax.f32 %v3893, %v4253
    %v4618 = vmax.f32 %v3896, %v4256
    %v4619 = vmax.f32 %v3898, %v4258
    %v4620 = vmax.f32 %v3901, %v4261
    %v4621 = vmax.f32 %v3903, %v4263
    %v4622 = vmax.f32 %v3906, %v4266
    %v4623 = vmax.f32 %v3908, %v4268
    %v4624 = vmax.f32 %v3911, %v4271
    %v4625 = vmax.f32 %v3913, %v4273
    %v4626 = vmax.f32 %v3916, %v4276
    %v4627 = vmax.f32 %v3918, %v4278
    %v4628 = vmax.f32 %v3921, %v4281
    %v4629 = vmax.f32 %v3923, %v4283
    %v4630 = vmax.f32 %v3926, %v4286
    %v4631 = vmax.f32 %v3928, %v4288
    %v4632 = vmax.f32 %v3931, %v4291
    %v4633 = vmax.f32 %v3933, %v4293
    %v4634 = vmax.f32 %v3936, %v4296
    %v4635 = vmax.f32 %v3938, %v4298
    %v4636 = vmax.f32 %v3941, %v4301
    %v4637 = vmax.f32 %v3943, %v4303
    %v4638 = vmax.f32 %v3946, %v4306
    %v4639 = vmax.f32 %v3948, %v4308
    %v4640 = vmax.f32 %v3951, %v4311
    %v4641 = vmax.f32 %v3953, %v4313
    %v4642 = vmax.f32 %v3956, %v4316
    %v4643 = vmax.f32 %v3958, %v4318
    %v4644 = vmax.f32 %v3961, %v4321
    %v4645 = vmax.f32 %v3963, %v4323
    %v4646 = vmax.f32 %v3966, %v4326
    %v4647 = vmax.f32 %v3968, %v4328
    %v4648 = vmax.f32 %v3971, %v4331
    %v4649 = vmax.f32 %v3973, %v4333
    %v4650 = vmax.f32 %v3976, %v4336
    %v4651 = vmax.f32 %v3978, %v4338
    %v4652 = vmax.f32 %v3981, %v4341
    %v4653 = vmax.f32 %v3983, %v4343
    %v4654 = vmax.f32 %v3986, %v4346
    %v4655 = vmax.f32 %v3988, %v4348
    %v4656 = vmax.f32 %v3991, %v4351
    %v4657 = vmax.f32 %v3993, %v4353
    %v4658 = vmax.f32 %v3996, %v4356
    %v4659 = vmax.f32 %v3998, %v4358
    %v4660 = vmax.f32 %v4001, %v4361
    %v4661 = vmax.f32 %v4003, %v4363
    %v4662 = vmax.f32 %v4006, %v4366
    %v4663 = vmax.f32 %v4008, %v4368
    %v4664 = vmax.f32 %v4011, %v4371
    %v4665 = vmax.f32 %v4013, %v4373
    %v4666 = vmax.f32 %v4016, %v4376
    %v4667 = vmax.f32 %v4018, %v4378
    %v4668 = vmax.f32 %v4380, %v4524
    %v4669 = vmax.f32 %v4381, %v4525
    %v4670 = vmax.f32 %v4382, %v4526
    %v4671 = vmax.f32 %v4383, %v4527
    %v4672 = vmax.f32 %v4384, %v4528
    %v4673 = vmax.f32 %v4385, %v4529
    %v4674 = vmax.f32 %v4386, %v4530
    %v4675 = vmax.f32 %v4387, %v4531
    %v4676 = vmax.f32 %v4388, %v4532
    %v4677 = vmax.f32 %v4389, %v4533
    %v4678 = vmax.f32 %v4390, %v4534
    %v4679 = vmax.f32 %v4391, %v4535
    %v4680 = vmax.f32 %v4392, %v4536
    %v4681 = vmax.f32 %v4393, %v4537
    %v4682 = vmax.f32 %v4394, %v4538
    %v4683 = vmax.f32 %v4395, %v4539
    %v4684 = vmax.f32 %v4396, %v4540
    %v4685 = vmax.f32 %v4397, %v4541
    %v4686 = vmax.f32 %v4398, %v4542
    %v4687 = vmax.f32 %v4399, %v4543
    %v4688 = vmax.f32 %v4400, %v4544
    %v4689 = vmax.f32 %v4401, %v4545
    %v4690 = vmax.f32 %v4402, %v4546
    %v4691 = vmax.f32 %v4403, %v4547
    %v4692 = vmax.f32 %v4404, %v4548
    %v4693 = vmax.f32 %v4405, %v4549
    %v4694 = vmax.f32 %v4406, %v4550
    %v4695 = vmax.f32 %v4407, %v4551
    %v4696 = vmax.f32 %v4408, %v4552
    %v4697 = vmax.f32 %v4409, %v4553
    %v4698 = vmax.f32 %v4410, %v4554
    %v4699 = vmax.f32 %v4411, %v4555
    %v4700 = vmax.f32 %v4412, %v4556
    %v4701 = vmax.f32 %v4413, %v4557
    %v4702 = vmax.f32 %v4414, %v4558
    %v4703 = vmax.f32 %v4415, %v4559
    %v4704 = vmax.f32 %v4416, %v4560
    %v4705 = vmax.f32 %v4417, %v4561
    %v4706 = vmax.f32 %v4418, %v4562
    %v4707 = vmax.f32 %v4419, %v4563
    %v4708 = vmax.f32 %v4420, %v4564
    %v4709 = vmax.f32 %v4421, %v4565
    %v4710 = vmax.f32 %v4422, %v4566
    %v4711 = vmax.f32 %v4423, %v4567
    %v4712 = vmax.f32 %v4424, %v4568
    %v4713 = vmax.f32 %v4425, %v4569
    %v4714 = vmax.f32 %v4426, %v4570
    %v4715 = vmax.f32 %v4427, %v4571
    %v4716 = vmax.f32 %v4428, %v4572
    %v4717 = vmax.f32 %v4429, %v4573
    %v4718 = vmax.f32 %v4430, %v4574
    %v4719 = vmax.f32 %v4431, %v4575
    %v4720 = vmax.f32 %v4432, %v4576
    %v4721 = vmax.f32 %v4433, %v4577
    %v4722 = vmax.f32 %v4434, %v4578
    %v4723 = vmax.f32 %v4435, %v4579
    %v4724 = vmax.f32 %v4436, %v4580
    %v4725 = vmax.f32 %v4437, %v4581
    %v4726 = vmax.f32 %v4438, %v4582
    %v4727 = vmax.f32 %v4439, %v4583
    %v4728 = vmax.f32 %v4440, %v4584
    %v4729 = vmax.f32 %v4441, %v4585
    %v4730 = vmax.f32 %v4442, %v4586
    %v4731 = vmax.f32 %v4443, %v4587
    %v4732 = vmax.f32 %v4444, %v4588
    %v4733 = vmax.f32 %v4445, %v4589
    %v4734 = vmax.f32 %v4446, %v4590
    %v4735 = vmax.f32 %v4447, %v4591
    %v4736 = vmax.f32 %v4448, %v4592
    %v4737 = vmax.f32 %v4449, %v4593
    %v4738 = vmax.f32 %v4450, %v4594
    %v4739 = vmax.f32 %v4451, %v4595
    %v4740 = vmax.f32 %v4452, %v4596
    %v4741 = vmax.f32 %v4453, %v4597
    %v4742 = vmax.f32 %v4454, %v4598
    %v4743 = vmax.f32 %v4455, %v4599
    %v4744 = vmax.f32 %v4456, %v4600
    %v4745 = vmax.f32 %v4457, %v4601
    %v4746 = vmax.f32 %v4458, %v4602
    %v4747 = vmax.f32 %v4459, %v4603
    %v4748 = vmax.f32 %v4460, %v4604
    %v4749 = vmax.f32 %v4461, %v4605
    %v4750 = vmax.f32 %v4462, %v4606
    %v4751 = vmax.f32 %v4463, %v4607
    %v4752 = vmax.f32 %v4464, %v4608
    %v4753 = vmax.f32 %v4465, %v4609
    %v4754 = vmax.f32 %v4466, %v4610
    %v4755 = vmax.f32 %v4467, %v4611
    %v4756 = vmax.f32 %v4468, %v4612
    %v4757 = vmax.f32 %v4469, %v4613
    %v4758 = vmax.f32 %v4470, %v4614
    %v4759 = vmax.f32 %v4471, %v4615
    %v4760 = vmax.f32 %v4472, %v4616
    %v4761 = vmax.f32 %v4473, %v4617
    %v4762 = vmax.f32 %v4474, %v4618
    %v4763 = vmax.f32 %v4475, %v4619
    %v4764 = vmax.f32 %v4476, %v4620
    %v4765 = vmax.f32 %v4477, %v4621
    %v4766 = vmax.f32 %v4478, %v4622
    %v4767 = vmax.f32 %v4479, %v4623
    %v4768 = vmax.f32 %v4480, %v4624
    %v4769 = vmax.f32 %v4481, %v4625
    %v4770 = vmax.f32 %v4482, %v4626
    %v4771 = vmax.f32 %v4483, %v4627
    %v4772 = vmax.f32 %v4484, %v4628
    %v4773 = vmax.f32 %v4485, %v4629
    %v4774 = vmax.f32 %v4486, %v4630
    %v4775 = vmax.f32 %v4487, %v4631
    %v4776 = vmax.f32 %v4488, %v4632
    %v4777 = vmax.f32 %v4489, %v4633
    %v4778 = vmax.f32 %v4490, %v4634
    %v4779 = vmax.f32 %v4491, %v4635
    %v4780 = vmax.f32 %v4492, %v4636
    %v4781 = vmax.f32 %v4493, %v4637
    %v4782 = vmax.f32 %v4494, %v4638
    %v4783 = vmax.f32 %v4495, %v4639
    %v4784 = vmax.f32 %v4496, %v4640
    %v4785 = vmax.f32 %v4497, %v4641
    %v4786 = vmax.f32 %v4498, %v4642
    %v4787 = vmax.f32 %v4499, %v4643
    %v4788 = vmax.f32 %v4500, %v4644
    %v4789 = vmax.f32 %v4501, %v4645
    %v4790 = vmax.f32 %v4502, %v4646
    %v4791 = vmax.f32 %v4503, %v4647
    %v4792 = vmax.f32 %v4504, %v4648
    %v4793 = vmax.f32 %v4505, %v4649
    %v4794 = vmax.f32 %v4506, %v4650
    %v4795 = vmax.f32 %v4507, %v4651
    %v4796 = vmax.f32 %v4508, %v4652
    %v4797 = vmax.f32 %v4509, %v4653
    %v4798 = vmax.f32 %v4510, %v4654
    %v4799 = vmax.f32 %v4511, %v4655
    %v4800 = vmax.f32 %v4512, %v4656
    %v4801 = vmax.f32 %v4513, %v4657
    %v4802 = vmax.f32 %v4514, %v4658
    %v4803 = vmax.f32 %v4515, %v4659
    %v4804 = vmax.f32 %v4516, %v4660
    %v4805 = vmax.f32 %v4517, %v4661
    %v4806 = vmax.f32 %v4518, %v4662
    %v4807 = vmax.f32 %v4519, %v4663
    %v4808 = vmax.f32 %v4520, %v4664
    %v4809 = vmax.f32 %v4521, %v4665
    %v4810 = vmax.f32 %v4522, %v4666
    %v4811 = vmax.f32 %v4523, %v4667
    %v4812 = vld [vmem:[%s2] sm:$0x1]
    %v4814 = vperm.slane %v4812, 0
    %v4816 = vadd.f32 %v4668, %v4814
    %v4817 = vadd.f32 %v4669, %v4814
    %v4818 = vadd.f32 %v4670, %v4814
    %v4819 = vadd.f32 %v4671, %v4814
    %v4820 = vadd.f32 %v4672, %v4814
    %v4821 = vadd.f32 %v4673, %v4814
    %v4822 = vadd.f32 %v4674, %v4814
    %v4823 = vadd.f32 %v4675, %v4814
    %v4824 = vadd.f32 %v4676, %v4814
    %v4825 = vadd.f32 %v4677, %v4814
    %v4826 = vadd.f32 %v4678, %v4814
    %v4827 = vadd.f32 %v4679, %v4814
    %v4828 = vadd.f32 %v4680, %v4814
    %v4829 = vadd.f32 %v4681, %v4814
    %v4830 = vadd.f32 %v4682, %v4814
    %v4831 = vadd.f32 %v4683, %v4814
    %v4832 = vadd.f32 %v4684, %v4814
    %v4833 = vadd.f32 %v4685, %v4814
    %v4834 = vadd.f32 %v4686, %v4814
    %v4835 = vadd.f32 %v4687, %v4814
    %v4836 = vadd.f32 %v4688, %v4814
    %v4837 = vadd.f32 %v4689, %v4814
    %v4838 = vadd.f32 %v4690, %v4814
    %v4839 = vadd.f32 %v4691, %v4814
    %v4840 = vadd.f32 %v4692, %v4814
    %v4841 = vadd.f32 %v4693, %v4814
    %v4842 = vadd.f32 %v4694, %v4814
    %v4843 = vadd.f32 %v4695, %v4814
    %v4844 = vadd.f32 %v4696, %v4814
    %v4845 = vadd.f32 %v4697, %v4814
    %v4846 = vadd.f32 %v4698, %v4814
    %v4847 = vadd.f32 %v4699, %v4814
    %v4848 = vadd.f32 %v4700, %v4814
    %v4849 = vadd.f32 %v4701, %v4814
    %v4850 = vadd.f32 %v4702, %v4814
    %v4851 = vadd.f32 %v4703, %v4814
    %v4852 = vadd.f32 %v4704, %v4814
    %v4853 = vadd.f32 %v4705, %v4814
    %v4854 = vadd.f32 %v4706, %v4814
    %v4855 = vadd.f32 %v4707, %v4814
    %v4856 = vadd.f32 %v4708, %v4814
    %v4857 = vadd.f32 %v4709, %v4814
    %v4858 = vadd.f32 %v4710, %v4814
    %v4859 = vadd.f32 %v4711, %v4814
    %v4860 = vadd.f32 %v4712, %v4814
    %v4861 = vadd.f32 %v4713, %v4814
    %v4862 = vadd.f32 %v4714, %v4814
    %v4863 = vadd.f32 %v4715, %v4814
    %v4864 = vadd.f32 %v4716, %v4814
    %v4865 = vadd.f32 %v4717, %v4814
    %v4866 = vadd.f32 %v4718, %v4814
    %v4867 = vadd.f32 %v4719, %v4814
    %v4868 = vadd.f32 %v4720, %v4814
    %v4869 = vadd.f32 %v4721, %v4814
    %v4870 = vadd.f32 %v4722, %v4814
    %v4871 = vadd.f32 %v4723, %v4814
    %v4872 = vadd.f32 %v4724, %v4814
    %v4873 = vadd.f32 %v4725, %v4814
    %v4874 = vadd.f32 %v4726, %v4814
    %v4875 = vadd.f32 %v4727, %v4814
    %v4876 = vadd.f32 %v4728, %v4814
    %v4877 = vadd.f32 %v4729, %v4814
    %v4878 = vadd.f32 %v4730, %v4814
    %v4879 = vadd.f32 %v4731, %v4814
    %v4880 = vadd.f32 %v4732, %v4814
    %v4881 = vadd.f32 %v4733, %v4814
    %v4882 = vadd.f32 %v4734, %v4814
    %v4883 = vadd.f32 %v4735, %v4814
    %v4884 = vadd.f32 %v4736, %v4814
    %v4885 = vadd.f32 %v4737, %v4814
    %v4886 = vadd.f32 %v4738, %v4814
    %v4887 = vadd.f32 %v4739, %v4814
    %v4888 = vadd.f32 %v4740, %v4814
    %v4889 = vadd.f32 %v4741, %v4814
    %v4890 = vadd.f32 %v4742, %v4814
    %v4891 = vadd.f32 %v4743, %v4814
    %v4892 = vadd.f32 %v4744, %v4814
    %v4893 = vadd.f32 %v4745, %v4814
    %v4894 = vadd.f32 %v4746, %v4814
    %v4895 = vadd.f32 %v4747, %v4814
    %v4896 = vadd.f32 %v4748, %v4814
    %v4897 = vadd.f32 %v4749, %v4814
    %v4898 = vadd.f32 %v4750, %v4814
    %v4899 = vadd.f32 %v4751, %v4814
    %v4900 = vadd.f32 %v4752, %v4814
    %v4901 = vadd.f32 %v4753, %v4814
    %v4902 = vadd.f32 %v4754, %v4814
    %v4903 = vadd.f32 %v4755, %v4814
    %v4904 = vadd.f32 %v4756, %v4814
    %v4905 = vadd.f32 %v4757, %v4814
    %v4906 = vadd.f32 %v4758, %v4814
    %v4907 = vadd.f32 %v4759, %v4814
    %v4908 = vadd.f32 %v4760, %v4814
    %v4909 = vadd.f32 %v4761, %v4814
    %v4910 = vadd.f32 %v4762, %v4814
    %v4911 = vadd.f32 %v4763, %v4814
    %v4912 = vadd.f32 %v4764, %v4814
    %v4913 = vadd.f32 %v4765, %v4814
    %v4914 = vadd.f32 %v4766, %v4814
    %v4915 = vadd.f32 %v4767, %v4814
    %v4916 = vadd.f32 %v4768, %v4814
    %v4917 = vadd.f32 %v4769, %v4814
    %v4918 = vadd.f32 %v4770, %v4814
    %v4919 = vadd.f32 %v4771, %v4814
    %v4920 = vadd.f32 %v4772, %v4814
    %v4921 = vadd.f32 %v4773, %v4814
    %v4922 = vadd.f32 %v4774, %v4814
    %v4923 = vadd.f32 %v4775, %v4814
    %v4924 = vadd.f32 %v4776, %v4814
    %v4925 = vadd.f32 %v4777, %v4814
    %v4926 = vadd.f32 %v4778, %v4814
    %v4927 = vadd.f32 %v4779, %v4814
    %v4928 = vadd.f32 %v4780, %v4814
    %v4929 = vadd.f32 %v4781, %v4814
    %v4930 = vadd.f32 %v4782, %v4814
    %v4931 = vadd.f32 %v4783, %v4814
    %v4932 = vadd.f32 %v4784, %v4814
    %v4933 = vadd.f32 %v4785, %v4814
    %v4934 = vadd.f32 %v4786, %v4814
    %v4935 = vadd.f32 %v4787, %v4814
    %v4936 = vadd.f32 %v4788, %v4814
    %v4937 = vadd.f32 %v4789, %v4814
    %v4938 = vadd.f32 %v4790, %v4814
    %v4939 = vadd.f32 %v4791, %v4814
    %v4940 = vadd.f32 %v4792, %v4814
    %v4941 = vadd.f32 %v4793, %v4814
    %v4942 = vadd.f32 %v4794, %v4814
    %v4943 = vadd.f32 %v4795, %v4814
    %v4944 = vadd.f32 %v4796, %v4814
    %v4945 = vadd.f32 %v4797, %v4814
    %v4946 = vadd.f32 %v4798, %v4814
    %v4947 = vadd.f32 %v4799, %v4814
    %v4948 = vadd.f32 %v4800, %v4814
    %v4949 = vadd.f32 %v4801, %v4814
    %v4950 = vadd.f32 %v4802, %v4814
    %v4951 = vadd.f32 %v4803, %v4814
    %v4952 = vadd.f32 %v4804, %v4814
    %v4953 = vadd.f32 %v4805, %v4814
    %v4954 = vadd.f32 %v4806, %v4814
    %v4955 = vadd.f32 %v4807, %v4814
    %v4956 = vadd.f32 %v4808, %v4814
    %v4957 = vadd.f32 %v4809, %v4814
    %v4958 = vadd.f32 %v4810, %v4814
    %v4959 = vadd.f32 %v4811, %v4814
    %v4960 = vmax.f32 %v4816, 0.0
    %v4961 = vmax.f32 %v4817, 0.0
    %v4962 = vmax.f32 %v4818, 0.0
    %v4963 = vmax.f32 %v4819, 0.0
    %v4964 = vmax.f32 %v4820, 0.0
    %v4965 = vmax.f32 %v4821, 0.0
    %v4966 = vmax.f32 %v4822, 0.0
    %v4967 = vmax.f32 %v4823, 0.0
    %v4968 = vmax.f32 %v4824, 0.0
    %v4969 = vmax.f32 %v4825, 0.0
    %v4970 = vmax.f32 %v4826, 0.0
    %v4971 = vmax.f32 %v4827, 0.0
    %v4972 = vmax.f32 %v4828, 0.0
    %v4973 = vmax.f32 %v4829, 0.0
    %v4974 = vmax.f32 %v4830, 0.0
    %v4975 = vmax.f32 %v4831, 0.0
    %v4976 = vmax.f32 %v4832, 0.0
    %v4977 = vmax.f32 %v4833, 0.0
    %v4978 = vmax.f32 %v4834, 0.0
    %v4979 = vmax.f32 %v4835, 0.0
    %v4980 = vmax.f32 %v4836, 0.0
    %v4981 = vmax.f32 %v4837, 0.0
    %v4982 = vmax.f32 %v4838, 0.0
    %v4983 = vmax.f32 %v4839, 0.0
    %v4984 = vmax.f32 %v4840, 0.0
    %v4985 = vmax.f32 %v4841, 0.0
    %v4986 = vmax.f32 %v4842, 0.0
    %v4987 = vmax.f32 %v4843, 0.0
    %v4988 = vmax.f32 %v4844, 0.0
    %v4989 = vmax.f32 %v4845, 0.0
    %v4990 = vmax.f32 %v4846, 0.0
    %v4991 = vmax.f32 %v4847, 0.0
    %v4992 = vmax.f32 %v4848, 0.0
    %v4993 = vmax.f32 %v4849, 0.0
    %v4994 = vmax.f32 %v4850, 0.0
    %v4995 = vmax.f32 %v4851, 0.0
    %v4996 = vmax.f32 %v4852, 0.0
    %v4997 = vmax.f32 %v4853, 0.0
    %v4998 = vmax.f32 %v4854, 0.0
    %v4999 = vmax.f32 %v4855, 0.0
    %v5000 = vmax.f32 %v4856, 0.0
    %v5001 = vmax.f32 %v4857, 0.0
    %v5002 = vmax.f32 %v4858, 0.0
    %v5003 = vmax.f32 %v4859, 0.0
    %v5004 = vmax.f32 %v4860, 0.0
    %v5005 = vmax.f32 %v4861, 0.0
    %v5006 = vmax.f32 %v4862, 0.0
    %v5007 = vmax.f32 %v4863, 0.0
    %v5008 = vmax.f32 %v4864, 0.0
    %v5009 = vmax.f32 %v4865, 0.0
    %v5010 = vmax.f32 %v4866, 0.0
    %v5011 = vmax.f32 %v4867, 0.0
    %v5012 = vmax.f32 %v4868, 0.0
    %v5013 = vmax.f32 %v4869, 0.0
    %v5014 = vmax.f32 %v4870, 0.0
    %v5015 = vmax.f32 %v4871, 0.0
    %v5016 = vmax.f32 %v4872, 0.0
    %v5017 = vmax.f32 %v4873, 0.0
    %v5018 = vmax.f32 %v4874, 0.0
    %v5019 = vmax.f32 %v4875, 0.0
    %v5020 = vmax.f32 %v4876, 0.0
    %v5021 = vmax.f32 %v4877, 0.0
    %v5022 = vmax.f32 %v4878, 0.0
    %v5023 = vmax.f32 %v4879, 0.0
    %v5024 = vmax.f32 %v4880, 0.0
    %v5025 = vmax.f32 %v4881, 0.0
    %v5026 = vmax.f32 %v4882, 0.0
    %v5027 = vmax.f32 %v4883, 0.0
    %v5028 = vmax.f32 %v4884, 0.0
    %v5029 = vmax.f32 %v4885, 0.0
    %v5030 = vmax.f32 %v4886, 0.0
    %v5031 = vmax.f32 %v4887, 0.0
    %v5032 = vmax.f32 %v4888, 0.0
    %v5033 = vmax.f32 %v4889, 0.0
    %v5034 = vmax.f32 %v4890, 0.0
    %v5035 = vmax.f32 %v4891, 0.0
    %v5036 = vmax.f32 %v4892, 0.0
    %v5037 = vmax.f32 %v4893, 0.0
    %v5038 = vmax.f32 %v4894, 0.0
    %v5039 = vmax.f32 %v4895, 0.0
    %v5040 = vmax.f32 %v4896, 0.0
    %v5041 = vmax.f32 %v4897, 0.0
    %v5042 = vmax.f32 %v4898, 0.0
    %v5043 = vmax.f32 %v4899, 0.0
    %v5044 = vmax.f32 %v4900, 0.0
    %v5045 = vmax.f32 %v4901, 0.0
    %v5046 = vmax.f32 %v4902, 0.0
    %v5047 = vmax.f32 %v4903, 0.0
    %v5048 = vmax.f32 %v4904, 0.0
    %v5049 = vmax.f32 %v4905, 0.0
    %v5050 = vmax.f32 %v4906, 0.0
    %v5051 = vmax.f32 %v4907, 0.0
    %v5052 = vmax.f32 %v4908, 0.0
    %v5053 = vmax.f32 %v4909, 0.0
    %v5054 = vmax.f32 %v4910, 0.0
    %v5055 = vmax.f32 %v4911, 0.0
    %v5056 = vmax.f32 %v4912, 0.0
    %v5057 = vmax.f32 %v4913, 0.0
    %v5058 = vmax.f32 %v4914, 0.0
    %v5059 = vmax.f32 %v4915, 0.0
    %v5060 = vmax.f32 %v4916, 0.0
    %v5061 = vmax.f32 %v4917, 0.0
    %v5062 = vmax.f32 %v4918, 0.0
    %v5063 = vmax.f32 %v4919, 0.0
    %v5064 = vmax.f32 %v4920, 0.0
    %v5065 = vmax.f32 %v4921, 0.0
    %v5066 = vmax.f32 %v4922, 0.0
    %v5067 = vmax.f32 %v4923, 0.0
    %v5068 = vmax.f32 %v4924, 0.0
    %v5069 = vmax.f32 %v4925, 0.0
    %v5070 = vmax.f32 %v4926, 0.0
    %v5071 = vmax.f32 %v4927, 0.0
    %v5072 = vmax.f32 %v4928, 0.0
    %v5073 = vmax.f32 %v4929, 0.0
    %v5074 = vmax.f32 %v4930, 0.0
    %v5075 = vmax.f32 %v4931, 0.0
    %v5076 = vmax.f32 %v4932, 0.0
    %v5077 = vmax.f32 %v4933, 0.0
    %v5078 = vmax.f32 %v4934, 0.0
    %v5079 = vmax.f32 %v4935, 0.0
    %v5080 = vmax.f32 %v4936, 0.0
    %v5081 = vmax.f32 %v4937, 0.0
    %v5082 = vmax.f32 %v4938, 0.0
    %v5083 = vmax.f32 %v4939, 0.0
    %v5084 = vmax.f32 %v4940, 0.0
    %v5085 = vmax.f32 %v4941, 0.0
    %v5086 = vmax.f32 %v4942, 0.0
    %v5087 = vmax.f32 %v4943, 0.0
    %v5088 = vmax.f32 %v4944, 0.0
    %v5089 = vmax.f32 %v4945, 0.0
    %v5090 = vmax.f32 %v4946, 0.0
    %v5091 = vmax.f32 %v4947, 0.0
    %v5092 = vmax.f32 %v4948, 0.0
    %v5093 = vmax.f32 %v4949, 0.0
    %v5094 = vmax.f32 %v4950, 0.0
    %v5095 = vmax.f32 %v4951, 0.0
    %v5096 = vmax.f32 %v4952, 0.0
    %v5097 = vmax.f32 %v4953, 0.0
    %v5098 = vmax.f32 %v4954, 0.0
    %v5099 = vmax.f32 %v4955, 0.0
    %v5100 = vmax.f32 %v4956, 0.0
    %v5101 = vmax.f32 %v4957, 0.0
    %v5102 = vmax.f32 %v4958, 0.0
    %v5103 = vmax.f32 %v4959, 0.0
    %5104 = vst.msk [vmem:[#allocation2] sm:$0xff] %vm2066, %v4960
    %5105 = vst.msk [vmem:[#allocation2 + $0x8] sm:$0xff] %vm2066, %v4961
    %5106 = vst.msk [vmem:[#allocation2 + $0x10] sm:$0xff] %vm2066, %v4962
    %5107 = vst.msk [vmem:[#allocation2 + $0x18] sm:$0xff] %vm2066, %v4963
    %5108 = vst.msk [vmem:[#allocation2 + $0x20] sm:$0xff] %vm2066, %v4964
    %5109 = vst.msk [vmem:[#allocation2 + $0x28] sm:$0xff] %vm2066, %v4965
    %5110 = vst.msk [vmem:[#allocation2 + $0x30] sm:$0xff] %vm2066, %v4966
    %5111 = vst.msk [vmem:[#allocation2 + $0x38] sm:$0xff] %vm2066, %v4967
    %5112 = vst.msk [vmem:[#allocation2 + $0x40] sm:$0xff] %vm2066, %v4968
    %5113 = vst.msk [vmem:[#allocation2 + $0x48] sm:$0xff] %vm2066, %v4969
    %5114 = vst.msk [vmem:[#allocation2 + $0x50] sm:$0xff] %vm2066, %v4970
    %5115 = vst.msk [vmem:[#allocation2 + $0x58] sm:$0xff] %vm2066, %v4971
    %5116 = vst.msk [vmem:[#allocation2 + $0x60] sm:$0xff] %vm2066, %v4972
    %5117 = vst.msk [vmem:[#allocation2 + $0x68] sm:$0xff] %vm2066, %v4973
    %5118 = vst.msk [vmem:[#allocation2 + $0x70] sm:$0xff] %vm2066, %v4974
    %5119 = vst.msk [vmem:[#allocation2 + $0x78] sm:$0xff] %vm2066, %v4975
    %5120 = vst.msk [vmem:[#allocation2 + $0x80] sm:$0xff] %vm2066, %v4976
    %5121 = vst.msk [vmem:[#allocation2 + $0x88] sm:$0xff] %vm2066, %v4977
    %5122 = vst.msk [vmem:[#allocation2 + $0x90] sm:$0xff] %vm2066, %v4978
    %5123 = vst.msk [vmem:[#allocation2 + $0x98] sm:$0xff] %vm2066, %v4979
    %5124 = vst.msk [vmem:[#allocation2 + $0xa0] sm:$0xff] %vm2066, %v4980
    %5125 = vst.msk [vmem:[#allocation2 + $0xa8] sm:$0xff] %vm2066, %v4981
    %5126 = vst.msk [vmem:[#allocation2 + $0xb0] sm:$0xff] %vm2066, %v4982
    %5127 = vst.msk [vmem:[#allocation2 + $0xb8] sm:$0xff] %vm2066, %v4983
    %5128 = vst.msk [vmem:[#allocation2 + $0xc0] sm:$0xff] %vm2066, %v4984
    %5129 = vst.msk [vmem:[#allocation2 + $0xc8] sm:$0xff] %vm2066, %v4985
    %5130 = vst.msk [vmem:[#allocation2 + $0xd0] sm:$0xff] %vm2066, %v4986
    %5131 = vst.msk [vmem:[#allocation2 + $0xd8] sm:$0xff] %vm2066, %v4987
    %5132 = vst.msk [vmem:[#allocation2 + $0xe0] sm:$0xff] %vm2066, %v4988
    %5133 = vst.msk [vmem:[#allocation2 + $0xe8] sm:$0xff] %vm2066, %v4989
    %5134 = vst.msk [vmem:[#allocation2 + $0xf0] sm:$0xff] %vm2066, %v4990
    %5135 = vst.msk [vmem:[#allocation2 + $0xf8] sm:$0xff] %vm2066, %v4991
    %5136 = vst.msk [vmem:[#allocation2 + $0x100] sm:$0xff] %vm2066, %v4992
    %5137 = vst.msk [vmem:[#allocation2 + $0x108] sm:$0xff] %vm2066, %v4993
    %5138 = vst.msk [vmem:[#allocation2 + $0x110] sm:$0xff] %vm2066, %v4994
    %5139 = vst.msk [vmem:[#allocation2 + $0x118] sm:$0xff] %vm2066, %v4995
    %5140 = vst.msk [vmem:[#allocation2 + $0x120] sm:$0xff] %vm2066, %v4996
    %5141 = vst.msk [vmem:[#allocation2 + $0x128] sm:$0xff] %vm2066, %v4997
    %5142 = vst.msk [vmem:[#allocation2 + $0x130] sm:$0xff] %vm2066, %v4998
    %5143 = vst.msk [vmem:[#allocation2 + $0x138] sm:$0xff] %vm2066, %v4999
    %5144 = vst.msk [vmem:[#allocation2 + $0x140] sm:$0xff] %vm2066, %v5000
    %5145 = vst.msk [vmem:[#allocation2 + $0x148] sm:$0xff] %vm2066, %v5001
    %5146 = vst.msk [vmem:[#allocation2 + $0x150] sm:$0xff] %vm2066, %v5002
    %5147 = vst.msk [vmem:[#allocation2 + $0x158] sm:$0xff] %vm2066, %v5003
    %5148 = vst.msk [vmem:[#allocation2 + $0x160] sm:$0xff] %vm2066, %v5004
    %5149 = vst.msk [vmem:[#allocation2 + $0x168] sm:$0xff] %vm2066, %v5005
    %5150 = vst.msk [vmem:[#allocation2 + $0x170] sm:$0xff] %vm2066, %v5006
    %5151 = vst.msk [vmem:[#allocation2 + $0x178] sm:$0xff] %vm2066, %v5007
    %5152 = vst.msk [vmem:[#allocation2 + $0x180] sm:$0xff] %vm2066, %v5008
    %5153 = vst.msk [vmem:[#allocation2 + $0x188] sm:$0xff] %vm2066, %v5009
    %5154 = vst.msk [vmem:[#allocation2 + $0x190] sm:$0xff] %vm2066, %v5010
    %5155 = vst.msk [vmem:[#allocation2 + $0x198] sm:$0xff] %vm2066, %v5011
    %5156 = vst.msk [vmem:[#allocation2 + $0x1a0] sm:$0xff] %vm2066, %v5012
    %5157 = vst.msk [vmem:[#allocation2 + $0x1a8] sm:$0xff] %vm2066, %v5013
    %5158 = vst.msk [vmem:[#allocation2 + $0x1b0] sm:$0xff] %vm2066, %v5014
    %5159 = vst.msk [vmem:[#allocation2 + $0x1b8] sm:$0xff] %vm2066, %v5015
    %5160 = vst.msk [vmem:[#allocation2 + $0x1c0] sm:$0xff] %vm2066, %v5016
    %5161 = vst.msk [vmem:[#allocation2 + $0x1c8] sm:$0xff] %vm2066, %v5017
    %5162 = vst.msk [vmem:[#allocation2 + $0x1d0] sm:$0xff] %vm2066, %v5018
    %5163 = vst.msk [vmem:[#allocation2 + $0x1d8] sm:$0xff] %vm2066, %v5019
    %5164 = vst.msk [vmem:[#allocation2 + $0x1e0] sm:$0xff] %vm2066, %v5020
    %5165 = vst.msk [vmem:[#allocation2 + $0x1e8] sm:$0xff] %vm2066, %v5021
    %5166 = vst.msk [vmem:[#allocation2 + $0x1f0] sm:$0xff] %vm2066, %v5022
    %5167 = vst.msk [vmem:[#allocation2 + $0x1f8] sm:$0xff] %vm2066, %v5023
    %5168 = vst.msk [vmem:[#allocation2 + $0x200] sm:$0xff] %vm2066, %v5024
    %5169 = vst.msk [vmem:[#allocation2 + $0x208] sm:$0xff] %vm2066, %v5025
    %5170 = vst.msk [vmem:[#allocation2 + $0x210] sm:$0xff] %vm2066, %v5026
    %5171 = vst.msk [vmem:[#allocation2 + $0x218] sm:$0xff] %vm2066, %v5027
    %5172 = vst.msk [vmem:[#allocation2 + $0x220] sm:$0xff] %vm2066, %v5028
    %5173 = vst.msk [vmem:[#allocation2 + $0x228] sm:$0xff] %vm2066, %v5029
    %5174 = vst.msk [vmem:[#allocation2 + $0x230] sm:$0xff] %vm2066, %v5030
    %5175 = vst.msk [vmem:[#allocation2 + $0x238] sm:$0xff] %vm2066, %v5031
    %5176 = vst.msk [vmem:[#allocation2 + $0x240] sm:$0xff] %vm2066, %v5032
    %5177 = vst.msk [vmem:[#allocation2 + $0x248] sm:$0xff] %vm2066, %v5033
    %5178 = vst.msk [vmem:[#allocation2 + $0x250] sm:$0xff] %vm2066, %v5034
    %5179 = vst.msk [vmem:[#allocation2 + $0x258] sm:$0xff] %vm2066, %v5035
    %5180 = vst.msk [vmem:[#allocation2 + $0x260] sm:$0xff] %vm2066, %v5036
    %5181 = vst.msk [vmem:[#allocation2 + $0x268] sm:$0xff] %vm2066, %v5037
    %5182 = vst.msk [vmem:[#allocation2 + $0x270] sm:$0xff] %vm2066, %v5038
    %5183 = vst.msk [vmem:[#allocation2 + $0x278] sm:$0xff] %vm2066, %v5039
    %5184 = vst.msk [vmem:[#allocation2 + $0x280] sm:$0xff] %vm2066, %v5040
    %5185 = vst.msk [vmem:[#allocation2 + $0x288] sm:$0xff] %vm2066, %v5041
    %5186 = vst.msk [vmem:[#allocation2 + $0x290] sm:$0xff] %vm2066, %v5042
    %5187 = vst.msk [vmem:[#allocation2 + $0x298] sm:$0xff] %vm2066, %v5043
    %5188 = vst.msk [vmem:[#allocation2 + $0x2a0] sm:$0xff] %vm2066, %v5044
    %5189 = vst.msk [vmem:[#allocation2 + $0x2a8] sm:$0xff] %vm2066, %v5045
    %5190 = vst.msk [vmem:[#allocation2 + $0x2b0] sm:$0xff] %vm2066, %v5046
    %5191 = vst.msk [vmem:[#allocation2 + $0x2b8] sm:$0xff] %vm2066, %v5047
    %5192 = vst.msk [vmem:[#allocation2 + $0x2c0] sm:$0xff] %vm2066, %v5048
    %5193 = vst.msk [vmem:[#allocation2 + $0x2c8] sm:$0xff] %vm2066, %v5049
    %5194 = vst.msk [vmem:[#allocation2 + $0x2d0] sm:$0xff] %vm2066, %v5050
    %5195 = vst.msk [vmem:[#allocation2 + $0x2d8] sm:$0xff] %vm2066, %v5051
    %5196 = vst.msk [vmem:[#allocation2 + $0x2e0] sm:$0xff] %vm2066, %v5052
    %5197 = vst.msk [vmem:[#allocation2 + $0x2e8] sm:$0xff] %vm2066, %v5053
    %5198 = vst.msk [vmem:[#allocation2 + $0x2f0] sm:$0xff] %vm2066, %v5054
    %5199 = vst.msk [vmem:[#allocation2 + $0x2f8] sm:$0xff] %vm2066, %v5055
    %5200 = vst.msk [vmem:[#allocation2 + $0x300] sm:$0xff] %vm2066, %v5056
    %5201 = vst.msk [vmem:[#allocation2 + $0x308] sm:$0xff] %vm2066, %v5057
    %5202 = vst.msk [vmem:[#allocation2 + $0x310] sm:$0xff] %vm2066, %v5058
    %5203 = vst.msk [vmem:[#allocation2 + $0x318] sm:$0xff] %vm2066, %v5059
    %5204 = vst.msk [vmem:[#allocation2 + $0x320] sm:$0xff] %vm2066, %v5060
    %5205 = vst.msk [vmem:[#allocation2 + $0x328] sm:$0xff] %vm2066, %v5061
    %5206 = vst.msk [vmem:[#allocation2 + $0x330] sm:$0xff] %vm2066, %v5062
    %5207 = vst.msk [vmem:[#allocation2 + $0x338] sm:$0xff] %vm2066, %v5063
    %5208 = vst.msk [vmem:[#allocation2 + $0x340] sm:$0xff] %vm2066, %v5064
    %5209 = vst.msk [vmem:[#allocation2 + $0x348] sm:$0xff] %vm2066, %v5065
    %5210 = vst.msk [vmem:[#allocation2 + $0x350] sm:$0xff] %vm2066, %v5066
    %5211 = vst.msk [vmem:[#allocation2 + $0x358] sm:$0xff] %vm2066, %v5067
    %5212 = vst.msk [vmem:[#allocation2 + $0x360] sm:$0xff] %vm2066, %v5068
    %5213 = vst.msk [vmem:[#allocation2 + $0x368] sm:$0xff] %vm2066, %v5069
    %5214 = vst.msk [vmem:[#allocation2 + $0x370] sm:$0xff] %vm2066, %v5070
    %5215 = vst.msk [vmem:[#allocation2 + $0x378] sm:$0xff] %vm2066, %v5071
    %5216 = vst.msk [vmem:[#allocation2 + $0x380] sm:$0xff] %vm2066, %v5072
    %5217 = vst.msk [vmem:[#allocation2 + $0x388] sm:$0xff] %vm2066, %v5073
    %5218 = vst.msk [vmem:[#allocation2 + $0x390] sm:$0xff] %vm2066, %v5074
    %5219 = vst.msk [vmem:[#allocation2 + $0x398] sm:$0xff] %vm2066, %v5075
    %5220 = vst.msk [vmem:[#allocation2 + $0x3a0] sm:$0xff] %vm2066, %v5076
    %5221 = vst.msk [vmem:[#allocation2 + $0x3a8] sm:$0xff] %vm2066, %v5077
    %5222 = vst.msk [vmem:[#allocation2 + $0x3b0] sm:$0xff] %vm2066, %v5078
    %5223 = vst.msk [vmem:[#allocation2 + $0x3b8] sm:$0xff] %vm2066, %v5079
    %5224 = vst.msk [vmem:[#allocation2 + $0x3c0] sm:$0xff] %vm2066, %v5080
    %5225 = vst.msk [vmem:[#allocation2 + $0x3c8] sm:$0xff] %vm2066, %v5081
    %5226 = vst.msk [vmem:[#allocation2 + $0x3d0] sm:$0xff] %vm2066, %v5082
    %5227 = vst.msk [vmem:[#allocation2 + $0x3d8] sm:$0xff] %vm2066, %v5083
    %5228 = vst.msk [vmem:[#allocation2 + $0x3e0] sm:$0xff] %vm2066, %v5084
    %5229 = vst.msk [vmem:[#allocation2 + $0x3e8] sm:$0xff] %vm2066, %v5085
    %5230 = vst.msk [vmem:[#allocation2 + $0x3f0] sm:$0xff] %vm2066, %v5086
    %5231 = vst.msk [vmem:[#allocation2 + $0x3f8] sm:$0xff] %vm2066, %v5087
    %5232 = vst.msk [vmem:[#allocation2 + $0x400] sm:$0xff] %vm2066, %v5088
    %5233 = vst.msk [vmem:[#allocation2 + $0x408] sm:$0xff] %vm2066, %v5089
    %5234 = vst.msk [vmem:[#allocation2 + $0x410] sm:$0xff] %vm2066, %v5090
    %5235 = vst.msk [vmem:[#allocation2 + $0x418] sm:$0xff] %vm2066, %v5091
    %5236 = vst.msk [vmem:[#allocation2 + $0x420] sm:$0xff] %vm2066, %v5092
    %5237 = vst.msk [vmem:[#allocation2 + $0x428] sm:$0xff] %vm2066, %v5093
    %5238 = vst.msk [vmem:[#allocation2 + $0x430] sm:$0xff] %vm2066, %v5094
    %5239 = vst.msk [vmem:[#allocation2 + $0x438] sm:$0xff] %vm2066, %v5095
    %5240 = vst.msk [vmem:[#allocation2 + $0x440] sm:$0xff] %vm2066, %v5096
    %5241 = vst.msk [vmem:[#allocation2 + $0x448] sm:$0xff] %vm2066, %v5097
    %5242 = vst.msk [vmem:[#allocation2 + $0x450] sm:$0xff] %vm2066, %v5098
    %5243 = vst.msk [vmem:[#allocation2 + $0x458] sm:$0xff] %vm2066, %v5099
    %5244 = vst.msk [vmem:[#allocation2 + $0x460] sm:$0xff] %vm2066, %v5100
    %5245 = vst.msk [vmem:[#allocation2 + $0x468] sm:$0xff] %vm2066, %v5101
    %5246 = vst.msk [vmem:[#allocation2 + $0x470] sm:$0xff] %vm2066, %v5102
    %5247 = vst.msk [vmem:[#allocation2 + $0x478] sm:$0xff] %vm2066, %v5103
    %v5248 = vld [vmem:[#allocation2] sm:$0xff]
    %v5249 = vld [vmem:[#allocation2 + $0x8] sm:$0xff]
    %v5250 = vld [vmem:[#allocation2 + $0x10] sm:$0xff]
    %v5251 = vld [vmem:[#allocation2 + $0x18] sm:$0xff]
    %v5252 = vld [vmem:[#allocation2 + $0x20] sm:$0xff]
    %v5253 = vld [vmem:[#allocation2 + $0x28] sm:$0xff]
    %v5254 = vld [vmem:[#allocation2 + $0x30] sm:$0xff]
    %v5255 = vld [vmem:[#allocation2 + $0x38] sm:$0xff]
    %v5256 = vld [vmem:[#allocation2 + $0x40] sm:$0xff]
    %v5257 = vld [vmem:[#allocation2 + $0x48] sm:$0xff]
    %v5258 = vld [vmem:[#allocation2 + $0x50] sm:$0xff]
    %v5259 = vld [vmem:[#allocation2 + $0x58] sm:$0xff]
    %v5260 = vld [vmem:[#allocation2 + $0x60] sm:$0xff]
    %v5261 = vld [vmem:[#allocation2 + $0x68] sm:$0xff]
    %v5262 = vld [vmem:[#allocation2 + $0x70] sm:$0xff]
    %v5263 = vld [vmem:[#allocation2 + $0x78] sm:$0xff]
    %v5264 = vld [vmem:[#allocation2 + $0x80] sm:$0xff]
    %v5265 = vld [vmem:[#allocation2 + $0x88] sm:$0xff]
    %v5266 = vld [vmem:[#allocation2 + $0x90] sm:$0xff]
    %v5267 = vld [vmem:[#allocation2 + $0x98] sm:$0xff]
    %v5268 = vld [vmem:[#allocation2 + $0xa0] sm:$0xff]
    %v5269 = vld [vmem:[#allocation2 + $0xa8] sm:$0xff]
    %v5270 = vld [vmem:[#allocation2 + $0x120] sm:$0xff]
    %v5271 = vld [vmem:[#allocation2 + $0x128] sm:$0xff]
    %v5272 = vld [vmem:[#allocation2 + $0x130] sm:$0xff]
    %v5273 = vld [vmem:[#allocation2 + $0x138] sm:$0xff]
    %v5274 = vld [vmem:[#allocation2 + $0x140] sm:$0xff]
    %v5275 = vld [vmem:[#allocation2 + $0x148] sm:$0xff]
    %v5276 = vld [vmem:[#allocation2 + $0x150] sm:$0xff]
    %v5277 = vld [vmem:[#allocation2 + $0x158] sm:$0xff]
    %v5278 = vld [vmem:[#allocation2 + $0x160] sm:$0xff]
    %v5279 = vld [vmem:[#allocation2 + $0x168] sm:$0xff]
    %v5280 = vld [vmem:[#allocation2 + $0x170] sm:$0xff]
    %v5281 = vld [vmem:[#allocation2 + $0x178] sm:$0xff]
    %v5282 = vld [vmem:[#allocation2 + $0x180] sm:$0xff]
    %v5283 = vld [vmem:[#allocation2 + $0x188] sm:$0xff]
    %v5284 = vld [vmem:[#allocation2 + $0x190] sm:$0xff]
    %v5285 = vld [vmem:[#allocation2 + $0x198] sm:$0xff]
    %v5286 = vld [vmem:[#allocation2 + $0x1a0] sm:$0xff]
    %v5287 = vld [vmem:[#allocation2 + $0x1a8] sm:$0xff]
    %v5288 = vld [vmem:[#allocation2 + $0x1b0] sm:$0xff]
    %v5289 = vld [vmem:[#allocation2 + $0x1b8] sm:$0xff]
    %v5290 = vld [vmem:[#allocation2 + $0x1c0] sm:$0xff]
    %v5291 = vld [vmem:[#allocation2 + $0x1c8] sm:$0xff]
    %v5292 = vld [vmem:[#allocation2 + $0xb0] sm:$0xff]
    %v5293 = vld [vmem:[#allocation2 + $0x1d0] sm:$0xff]
    %v5294 = vld [vmem:[#allocation2 + $0xb8] sm:$0xff]
    %v5295 = vld [vmem:[#allocation2 + $0x240] sm:$0xff]
    %v5296 = vld [vmem:[#allocation2 + $0x248] sm:$0xff]
    %v5297 = vld [vmem:[#allocation2 + $0x250] sm:$0xff]
    %v5298 = vld [vmem:[#allocation2 + $0x258] sm:$0xff]
    %v5299 = vld [vmem:[#allocation2 + $0x260] sm:$0xff]
    %v5300 = vld [vmem:[#allocation2 + $0x268] sm:$0xff]
    %v5301 = vld [vmem:[#allocation2 + $0x270] sm:$0xff]
    %v5302 = vld [vmem:[#allocation2 + $0x278] sm:$0xff]
    %v5303 = vld [vmem:[#allocation2 + $0x280] sm:$0xff]
    %v5304 = vld [vmem:[#allocation2 + $0x288] sm:$0xff]
    %v5305 = vld [vmem:[#allocation2 + $0x290] sm:$0xff]
    %v5306 = vld [vmem:[#allocation2 + $0x298] sm:$0xff]
    %v5307 = vld [vmem:[#allocation2 + $0x2a0] sm:$0xff]
    %v5308 = vld [vmem:[#allocation2 + $0x2a8] sm:$0xff]
    %v5309 = vld [vmem:[#allocation2 + $0x2b0] sm:$0xff]
    %v5310 = vld [vmem:[#allocation2 + $0x2b8] sm:$0xff]
    %v5311 = vld [vmem:[#allocation2 + $0x2c0] sm:$0xff]
    %v5312 = vld [vmem:[#allocation2 + $0x2c8] sm:$0xff]
    %v5313 = vld [vmem:[#allocation2 + $0x2d0] sm:$0xff]
    %v5314 = vld [vmem:[#allocation2 + $0x2d8] sm:$0xff]
    %v5315 = vld [vmem:[#allocation2 + $0x2e0] sm:$0xff]
    %v5316 = vld [vmem:[#allocation2 + $0x2e8] sm:$0xff]
    %v5317 = vld [vmem:[#allocation2 + $0x360] sm:$0xff]
    %v5318 = vld [vmem:[#allocation2 + $0x368] sm:$0xff]
    %v5319 = vld [vmem:[#allocation2 + $0x370] sm:$0xff]
    %v5320 = vld [vmem:[#allocation2 + $0x378] sm:$0xff]
    %v5321 = vld [vmem:[#allocation2 + $0x380] sm:$0xff]
    %v5322 = vld [vmem:[#allocation2 + $0x388] sm:$0xff]
    %v5323 = vld [vmem:[#allocation2 + $0x390] sm:$0xff]
    %v5324 = vld [vmem:[#allocation2 + $0x398] sm:$0xff]
    %v5325 = vld [vmem:[#allocation2 + $0x3a0] sm:$0xff]
    %v5326 = vld [vmem:[#allocation2 + $0x3a8] sm:$0xff]
    %v5327 = vld [vmem:[#allocation2 + $0x3b0] sm:$0xff]
    %v5328 = vld [vmem:[#allocation2 + $0x3b8] sm:$0xff]
    %v5329 = vld [vmem:[#allocation2 + $0x3c0] sm:$0xff]
    %v5330 = vld [vmem:[#allocation2 + $0x3c8] sm:$0xff]
    %v5331 = vld [vmem:[#allocation2 + $0x3d0] sm:$0xff]
    %v5332 = vld [vmem:[#allocation2 + $0x3d8] sm:$0xff]
    %v5333 = vld [vmem:[#allocation2 + $0x3e0] sm:$0xff]
    %v5334 = vld [vmem:[#allocation2 + $0x3e8] sm:$0xff]
    %v5335 = vld [vmem:[#allocation2 + $0x3f0] sm:$0xff]
    %v5336 = vld [vmem:[#allocation2 + $0x3f8] sm:$0xff]
    %v5337 = vld [vmem:[#allocation2 + $0x400] sm:$0xff]
    %v5338 = vld [vmem:[#allocation2 + $0x408] sm:$0xff]
    %v5339 = vld [vmem:[#allocation2 + $0x2f0] sm:$0xff]
    %v5340 = vld [vmem:[#allocation2 + $0x410] sm:$0xff]
    %v5341 = vld [vmem:[#allocation2 + $0x2f8] sm:$0xff]
    %v5342 = vld [vmem:[#allocation2 + $0xc0] sm:$0xff]
    %v5343 = vld [vmem:[#allocation2 + $0xc8] sm:$0xff]
    %v5344 = vld [vmem:[#allocation2 + $0xd0] sm:$0xff]
    %v5345 = vld [vmem:[#allocation2 + $0xd8] sm:$0xff]
    %v5346 = vld [vmem:[#allocation2 + $0x1d8] sm:$0xff]
    %v5347 = vld [vmem:[#allocation2 + $0x1e0] sm:$0xff]
    %v5348 = vld [vmem:[#allocation2 + $0x1e8] sm:$0xff]
    %v5349 = vld [vmem:[#allocation2 + $0x1f0] sm:$0xff]
    %v5350 = vld [vmem:[#allocation2 + $0x1f8] sm:$0xff]
    %v5351 = vld [vmem:[#allocation2 + $0xe0] sm:$0xff]
    %v5352 = vld [vmem:[#allocation2 + $0x200] sm:$0xff]
    %v5353 = vld [vmem:[#allocation2 + $0xe8] sm:$0xff]
    %v5354 = vld [vmem:[#allocation2 + $0x300] sm:$0xff]
    %v5355 = vld [vmem:[#allocation2 + $0x308] sm:$0xff]
    %v5356 = vld [vmem:[#allocation2 + $0x310] sm:$0xff]
    %v5357 = vld [vmem:[#allocation2 + $0x318] sm:$0xff]
    %v5358 = vld [vmem:[#allocation2 + $0x418] sm:$0xff]
    %v5359 = vld [vmem:[#allocation2 + $0x420] sm:$0xff]
    %v5360 = vld [vmem:[#allocation2 + $0x428] sm:$0xff]
    %v5361 = vld [vmem:[#allocation2 + $0x430] sm:$0xff]
    %v5362 = vld [vmem:[#allocation2 + $0x438] sm:$0xff]
    %v5363 = vld [vmem:[#allocation2 + $0x320] sm:$0xff]
    %v5364 = vld [vmem:[#allocation2 + $0x440] sm:$0xff]
    %v5365 = vld [vmem:[#allocation2 + $0x328] sm:$0xff]
    %v5366 = vld [vmem:[#allocation2 + $0xf0] sm:$0xff]
    %v5367 = vld [vmem:[#allocation2 + $0xf8] sm:$0xff]
    %v5368 = vld [vmem:[#allocation2 + $0x100] sm:$0xff]
    %v5369 = vld [vmem:[#allocation2 + $0x108] sm:$0xff]
    %v5370 = vld [vmem:[#allocation2 + $0x208] sm:$0xff]
    %v5371 = vld [vmem:[#allocation2 + $0x210] sm:$0xff]
    %v5372 = vld [vmem:[#allocation2 + $0x218] sm:$0xff]
    %v5373 = vld [vmem:[#allocation2 + $0x220] sm:$0xff]
    %v5374 = vld [vmem:[#allocation2 + $0x228] sm:$0xff]
    %v5375 = vld [vmem:[#allocation2 + $0x110] sm:$0xff]
    %v5376 = vld [vmem:[#allocation2 + $0x230] sm:$0xff]
    %v5377 = vld [vmem:[#allocation2 + $0x118] sm:$0xff]
    %5400 = vrot.lane.b32.xlu0 %v5270, 32
    %v5401 = vpop.permute.xlu0 %5400
    %5402 = vrot.lane.b32.xlu0 %v5271, 32
    %v5403 = vpop.permute.xlu0 %5402
    %5404 = vrot.lane.b32.xlu0 %v5272, 32
    %v5405 = vpop.permute.xlu0 %5404
    %5406 = vrot.lane.b32.xlu0 %v5273, 32
    %v5407 = vpop.permute.xlu0 %5406
    %5408 = vrot.lane.b32.xlu0 %v5274, 32
    %v5409 = vpop.permute.xlu0 %5408
    %5410 = vrot.lane.b32.xlu0 %v5275, 32
    %v5411 = vpop.permute.xlu0 %5410
    %5412 = vrot.lane.b32.xlu0 %v5276, 32
    %v5413 = vpop.permute.xlu0 %5412
    %5414 = vrot.lane.b32.xlu0 %v5277, 32
    %v5415 = vpop.permute.xlu0 %5414
    %5416 = vrot.lane.b32.xlu0 %v5278, 32
    %v5417 = vpop.permute.xlu0 %5416
    %5418 = vrot.lane.b32.xlu0 %v5279, 32
    %v5419 = vpop.permute.xlu0 %5418
    %5420 = vrot.lane.b32.xlu0 %v5280, 32
    %v5421 = vpop.permute.xlu0 %5420
    %5422 = vrot.lane.b32.xlu0 %v5281, 32
    %v5423 = vpop.permute.xlu0 %5422
    %5424 = vrot.lane.b32.xlu0 %v5282, 32
    %v5425 = vpop.permute.xlu0 %5424
    %5426 = vrot.lane.b32.xlu0 %v5283, 32
    %v5427 = vpop.permute.xlu0 %5426
    %5428 = vrot.lane.b32.xlu0 %v5284, 32
    %v5429 = vpop.permute.xlu0 %5428
    %5430 = vrot.lane.b32.xlu0 %v5285, 32
    %v5431 = vpop.permute.xlu0 %5430
    %5432 = vrot.lane.b32.xlu0 %v5286, 32
    %v5433 = vpop.permute.xlu0 %5432
    %5434 = vrot.lane.b32.xlu0 %v5287, 32
    %v5435 = vpop.permute.xlu0 %5434
    %5436 = vrot.lane.b32.xlu0 %v5288, 32
    %v5437 = vpop.permute.xlu0 %5436
    %5438 = vrot.lane.b32.xlu0 %v5289, 32
    %v5439 = vpop.permute.xlu0 %5438
    %5440 = vrot.lane.b32.xlu0 %v5290, 32
    %v5441 = vpop.permute.xlu0 %5440
    %5442 = vrot.lane.b32.xlu0 %v5291, 32
    %v5443 = vpop.permute.xlu0 %5442
    %5488 = vrot.lane.b32.xlu0 %v5249, 64
    %v5489 = vpop.permute.xlu0 %5488
    %5490 = vrot.lane.b32.xlu0 %v5250, 64
    %v5491 = vpop.permute.xlu0 %5490
    %5492 = vrot.lane.b32.xlu0 %v5251, 64
    %v5493 = vpop.permute.xlu0 %5492
    %5494 = vrot.lane.b32.xlu0 %v5252, 64
    %v5495 = vpop.permute.xlu0 %5494
    %5496 = vrot.lane.b32.xlu0 %v5253, 64
    %v5497 = vpop.permute.xlu0 %5496
    %5498 = vrot.lane.b32.xlu0 %v5254, 64
    %v5499 = vpop.permute.xlu0 %5498
    %5500 = vrot.lane.b32.xlu0 %v5255, 64
    %v5501 = vpop.permute.xlu0 %5500
    %5502 = vrot.lane.b32.xlu0 %v5256, 64
    %v5503 = vpop.permute.xlu0 %5502
    %5504 = vrot.lane.b32.xlu0 %v5257, 64
    %v5505 = vpop.permute.xlu0 %5504
    %5506 = vrot.lane.b32.xlu0 %v5258, 64
    %v5507 = vpop.permute.xlu0 %5506
    %5508 = vrot.lane.b32.xlu0 %v5259, 64
    %v5509 = vpop.permute.xlu0 %5508
    %5510 = vrot.lane.b32.xlu0 %v5260, 64
    %v5511 = vpop.permute.xlu0 %5510
    %5512 = vrot.lane.b32.xlu0 %v5261, 64
    %v5513 = vpop.permute.xlu0 %5512
    %5514 = vrot.lane.b32.xlu0 %v5262, 64
    %v5515 = vpop.permute.xlu0 %5514
    %5516 = vrot.lane.b32.xlu0 %v5263, 64
    %v5517 = vpop.permute.xlu0 %5516
    %5518 = vrot.lane.b32.xlu0 %v5264, 64
    %v5519 = vpop.permute.xlu0 %5518
    %5520 = vrot.lane.b32.xlu0 %v5265, 64
    %v5521 = vpop.permute.xlu0 %5520
    %5522 = vrot.lane.b32.xlu0 %v5266, 64
    %v5523 = vpop.permute.xlu0 %5522
    %5524 = vrot.lane.b32.xlu0 %v5267, 64
    %v5525 = vpop.permute.xlu0 %5524
    %5526 = vrot.lane.b32.xlu0 %v5268, 64
    %v5527 = vpop.permute.xlu0 %5526
    %5528 = vrot.lane.b32.xlu0 %v5269, 64
    %v5529 = vpop.permute.xlu0 %5528
    %5530 = vrot.lane.b32.xlu0 %v5292, 64
    %v5531 = vpop.permute.xlu0 %5530
    %5555 = vrot.lane.b32.xlu0 %v5271, 96
    %v5556 = vpop.permute.xlu0 %5555
    %5557 = vrot.lane.b32.xlu0 %v5272, 96
    %v5558 = vpop.permute.xlu0 %5557
    %5559 = vrot.lane.b32.xlu0 %v5273, 96
    %v5560 = vpop.permute.xlu0 %5559
    %5561 = vrot.lane.b32.xlu0 %v5274, 96
    %v5562 = vpop.permute.xlu0 %5561
    %5563 = vrot.lane.b32.xlu0 %v5275, 96
    %v5564 = vpop.permute.xlu0 %5563
    %5565 = vrot.lane.b32.xlu0 %v5276, 96
    %v5566 = vpop.permute.xlu0 %5565
    %5567 = vrot.lane.b32.xlu0 %v5277, 96
    %v5568 = vpop.permute.xlu0 %5567
    %5569 = vrot.lane.b32.xlu0 %v5278, 96
    %v5570 = vpop.permute.xlu0 %5569
    %5571 = vrot.lane.b32.xlu0 %v5279, 96
    %v5572 = vpop.permute.xlu0 %5571
    %5573 = vrot.lane.b32.xlu0 %v5280, 96
    %v5574 = vpop.permute.xlu0 %5573
    %5575 = vrot.lane.b32.xlu0 %v5281, 96
    %v5576 = vpop.permute.xlu0 %5575
    %5577 = vrot.lane.b32.xlu0 %v5282, 96
    %v5578 = vpop.permute.xlu0 %5577
    %5579 = vrot.lane.b32.xlu0 %v5283, 96
    %v5580 = vpop.permute.xlu0 %5579
    %5581 = vrot.lane.b32.xlu0 %v5284, 96
    %v5582 = vpop.permute.xlu0 %5581
    %5583 = vrot.lane.b32.xlu0 %v5285, 96
    %v5584 = vpop.permute.xlu0 %5583
    %5585 = vrot.lane.b32.xlu0 %v5286, 96
    %v5586 = vpop.permute.xlu0 %5585
    %5587 = vrot.lane.b32.xlu0 %v5287, 96
    %v5588 = vpop.permute.xlu0 %5587
    %5589 = vrot.lane.b32.xlu0 %v5288, 96
    %v5590 = vpop.permute.xlu0 %5589
    %5591 = vrot.lane.b32.xlu0 %v5289, 96
    %v5592 = vpop.permute.xlu0 %5591
    %5593 = vrot.lane.b32.xlu0 %v5290, 96
    %v5594 = vpop.permute.xlu0 %5593
    %5595 = vrot.lane.b32.xlu0 %v5291, 96
    %v5596 = vpop.permute.xlu0 %5595
    %5597 = vrot.lane.b32.xlu0 %v5293, 96
    %v5598 = vpop.permute.xlu0 %5597
    %5643 = vrot.lane.b32.xlu0 %v5295, 32
    %v5644 = vpop.permute.xlu0 %5643
    %5645 = vrot.lane.b32.xlu0 %v5296, 32
    %v5646 = vpop.permute.xlu0 %5645
    %5647 = vrot.lane.b32.xlu0 %v5297, 32
    %v5648 = vpop.permute.xlu0 %5647
    %5649 = vrot.lane.b32.xlu0 %v5298, 32
    %v5650 = vpop.permute.xlu0 %5649
    %5651 = vrot.lane.b32.xlu0 %v5299, 32
    %v5652 = vpop.permute.xlu0 %5651
    %5653 = vrot.lane.b32.xlu0 %v5300, 32
    %v5654 = vpop.permute.xlu0 %5653
    %5655 = vrot.lane.b32.xlu0 %v5301, 32
    %v5656 = vpop.permute.xlu0 %5655
    %5657 = vrot.lane.b32.xlu0 %v5302, 32
    %v5658 = vpop.permute.xlu0 %5657
    %5659 = vrot.lane.b32.xlu0 %v5303, 32
    %v5660 = vpop.permute.xlu0 %5659
    %5661 = vrot.lane.b32.xlu0 %v5304, 32
    %v5662 = vpop.permute.xlu0 %5661
    %5663 = vrot.lane.b32.xlu0 %v5305, 32
    %v5664 = vpop.permute.xlu0 %5663
    %5665 = vrot.lane.b32.xlu0 %v5306, 32
    %v5666 = vpop.permute.xlu0 %5665
    %5667 = vrot.lane.b32.xlu0 %v5307, 32
    %v5668 = vpop.permute.xlu0 %5667
    %5669 = vrot.lane.b32.xlu0 %v5308, 32
    %v5670 = vpop.permute.xlu0 %5669
    %5671 = vrot.lane.b32.xlu0 %v5309, 32
    %v5672 = vpop.permute.xlu0 %5671
    %5673 = vrot.lane.b32.xlu0 %v5310, 32
    %v5674 = vpop.permute.xlu0 %5673
    %5675 = vrot.lane.b32.xlu0 %v5311, 32
    %v5676 = vpop.permute.xlu0 %5675
    %5677 = vrot.lane.b32.xlu0 %v5312, 32
    %v5678 = vpop.permute.xlu0 %5677
    %5679 = vrot.lane.b32.xlu0 %v5313, 32
    %v5680 = vpop.permute.xlu0 %5679
    %5681 = vrot.lane.b32.xlu0 %v5314, 32
    %v5682 = vpop.permute.xlu0 %5681
    %5683 = vrot.lane.b32.xlu0 %v5315, 32
    %v5684 = vpop.permute.xlu0 %5683
    %5685 = vrot.lane.b32.xlu0 %v5316, 32
    %v5686 = vpop.permute.xlu0 %5685
    %5731 = vrot.lane.b32.xlu0 %v5317, 64
    %v5732 = vpop.permute.xlu0 %5731
    %5733 = vrot.lane.b32.xlu0 %v5318, 64
    %v5734 = vpop.permute.xlu0 %5733
    %5735 = vrot.lane.b32.xlu0 %v5319, 64
    %v5736 = vpop.permute.xlu0 %5735
    %5737 = vrot.lane.b32.xlu0 %v5320, 64
    %v5738 = vpop.permute.xlu0 %5737
    %5739 = vrot.lane.b32.xlu0 %v5321, 64
    %v5740 = vpop.permute.xlu0 %5739
    %5741 = vrot.lane.b32.xlu0 %v5322, 64
    %v5742 = vpop.permute.xlu0 %5741
    %5743 = vrot.lane.b32.xlu0 %v5323, 64
    %v5744 = vpop.permute.xlu0 %5743
    %5745 = vrot.lane.b32.xlu0 %v5324, 64
    %v5746 = vpop.permute.xlu0 %5745
    %5747 = vrot.lane.b32.xlu0 %v5325, 64
    %v5748 = vpop.permute.xlu0 %5747
    %5749 = vrot.lane.b32.xlu0 %v5326, 64
    %v5750 = vpop.permute.xlu0 %5749
    %5751 = vrot.lane.b32.xlu0 %v5327, 64
    %v5752 = vpop.permute.xlu0 %5751
    %5753 = vrot.lane.b32.xlu0 %v5328, 64
    %v5754 = vpop.permute.xlu0 %5753
    %5755 = vrot.lane.b32.xlu0 %v5329, 64
    %v5756 = vpop.permute.xlu0 %5755
    %5757 = vrot.lane.b32.xlu0 %v5330, 64
    %v5758 = vpop.permute.xlu0 %5757
    %5759 = vrot.lane.b32.xlu0 %v5331, 64
    %v5760 = vpop.permute.xlu0 %5759
    %5761 = vrot.lane.b32.xlu0 %v5332, 64
    %v5762 = vpop.permute.xlu0 %5761
    %5763 = vrot.lane.b32.xlu0 %v5333, 64
    %v5764 = vpop.permute.xlu0 %5763
    %5765 = vrot.lane.b32.xlu0 %v5334, 64
    %v5766 = vpop.permute.xlu0 %5765
    %5767 = vrot.lane.b32.xlu0 %v5335, 64
    %v5768 = vpop.permute.xlu0 %5767
    %5769 = vrot.lane.b32.xlu0 %v5336, 64
    %v5770 = vpop.permute.xlu0 %5769
    %5771 = vrot.lane.b32.xlu0 %v5337, 64
    %v5772 = vpop.permute.xlu0 %5771
    %5773 = vrot.lane.b32.xlu0 %v5338, 64
    %v5774 = vpop.permute.xlu0 %5773
    %5798 = vrot.lane.b32.xlu0 %v5296, 96
    %v5799 = vpop.permute.xlu0 %5798
    %5800 = vrot.lane.b32.xlu0 %v5297, 96
    %v5801 = vpop.permute.xlu0 %5800
    %5802 = vrot.lane.b32.xlu0 %v5298, 96
    %v5803 = vpop.permute.xlu0 %5802
    %5804 = vrot.lane.b32.xlu0 %v5299, 96
    %v5805 = vpop.permute.xlu0 %5804
    %5806 = vrot.lane.b32.xlu0 %v5300, 96
    %v5807 = vpop.permute.xlu0 %5806
    %5808 = vrot.lane.b32.xlu0 %v5301, 96
    %v5809 = vpop.permute.xlu0 %5808
    %5810 = vrot.lane.b32.xlu0 %v5302, 96
    %v5811 = vpop.permute.xlu0 %5810
    %5812 = vrot.lane.b32.xlu0 %v5303, 96
    %v5813 = vpop.permute.xlu0 %5812
    %5814 = vrot.lane.b32.xlu0 %v5304, 96
    %v5815 = vpop.permute.xlu0 %5814
    %5816 = vrot.lane.b32.xlu0 %v5305, 96
    %v5817 = vpop.permute.xlu0 %5816
    %5818 = vrot.lane.b32.xlu0 %v5306, 96
    %v5819 = vpop.permute.xlu0 %5818
    %5820 = vrot.lane.b32.xlu0 %v5307, 96
    %v5821 = vpop.permute.xlu0 %5820
    %5822 = vrot.lane.b32.xlu0 %v5308, 96
    %v5823 = vpop.permute.xlu0 %5822
    %5824 = vrot.lane.b32.xlu0 %v5309, 96
    %v5825 = vpop.permute.xlu0 %5824
    %5826 = vrot.lane.b32.xlu0 %v5310, 96
    %v5827 = vpop.permute.xlu0 %5826
    %5828 = vrot.lane.b32.xlu0 %v5311, 96
    %v5829 = vpop.permute.xlu0 %5828
    %5830 = vrot.lane.b32.xlu0 %v5312, 96
    %v5831 = vpop.permute.xlu0 %5830
    %5832 = vrot.lane.b32.xlu0 %v5313, 96
    %v5833 = vpop.permute.xlu0 %5832
    %5834 = vrot.lane.b32.xlu0 %v5314, 96
    %v5835 = vpop.permute.xlu0 %5834
    %5836 = vrot.lane.b32.xlu0 %v5315, 96
    %v5837 = vpop.permute.xlu0 %5836
    %5838 = vrot.lane.b32.xlu0 %v5316, 96
    %v5839 = vpop.permute.xlu0 %5838
    %5840 = vrot.lane.b32.xlu0 %v5339, 96
    %v5841 = vpop.permute.xlu0 %5840
    %5865 = vrot.lane.b32.xlu0 %v5339, 32
    %v5866 = vpop.permute.xlu0 %5865
    %5867 = vrot.lane.b32.xlu0 %v5341, 32
    %v5868 = vpop.permute.xlu0 %5867
    %5876 = vrot.lane.b32.xlu0 %v5294, 64
    %v5877 = vpop.permute.xlu0 %5876
    %5878 = vrot.lane.b32.xlu0 %v5342, 64
    %v5879 = vpop.permute.xlu0 %5878
    %5880 = vrot.lane.b32.xlu0 %v5343, 64
    %v5881 = vpop.permute.xlu0 %5880
    %5882 = vrot.lane.b32.xlu0 %v5344, 64
    %v5883 = vpop.permute.xlu0 %5882
    %5884 = vrot.lane.b32.xlu0 %v5345, 64
    %v5885 = vpop.permute.xlu0 %5884
    %5896 = vrot.lane.b32.xlu0 %v5346, 96
    %v5897 = vpop.permute.xlu0 %5896
    %5898 = vrot.lane.b32.xlu0 %v5347, 96
    %v5899 = vpop.permute.xlu0 %5898
    %5900 = vrot.lane.b32.xlu0 %v5348, 96
    %v5901 = vpop.permute.xlu0 %5900
    %5902 = vrot.lane.b32.xlu0 %v5349, 96
    %v5903 = vpop.permute.xlu0 %5902
    %5904 = vrot.lane.b32.xlu0 %v5350, 96
    %v5905 = vpop.permute.xlu0 %5904
    %5912 = vrot.lane.b32.xlu0 %v5293, 32
    %v5913 = vpop.permute.xlu0 %5912
    %5914 = vrot.lane.b32.xlu0 %v5346, 32
    %v5915 = vpop.permute.xlu0 %5914
    %5916 = vrot.lane.b32.xlu0 %v5347, 32
    %v5917 = vpop.permute.xlu0 %5916
    %5918 = vrot.lane.b32.xlu0 %v5348, 32
    %v5919 = vpop.permute.xlu0 %5918
    %5920 = vrot.lane.b32.xlu0 %v5349, 32
    %v5921 = vpop.permute.xlu0 %5920
    %5922 = vrot.lane.b32.xlu0 %v5350, 32
    %v5923 = vpop.permute.xlu0 %5922
    %5924 = vrot.lane.b32.xlu0 %v5352, 32
    %v5925 = vpop.permute.xlu0 %5924
    %5935 = vrot.lane.b32.xlu0 %v5351, 64
    %v5936 = vpop.permute.xlu0 %5935
    %5937 = vrot.lane.b32.xlu0 %v5353, 64
    %v5938 = vpop.permute.xlu0 %5937
    %5945 = vrot.lane.b32.xlu0 %v5341, 96
    %v5946 = vpop.permute.xlu0 %5945
    %5947 = vrot.lane.b32.xlu0 %v5354, 96
    %v5948 = vpop.permute.xlu0 %5947
    %5949 = vrot.lane.b32.xlu0 %v5355, 96
    %v5950 = vpop.permute.xlu0 %5949
    %5951 = vrot.lane.b32.xlu0 %v5356, 96
    %v5952 = vpop.permute.xlu0 %5951
    %5953 = vrot.lane.b32.xlu0 %v5357, 96
    %v5954 = vpop.permute.xlu0 %5953
    %v5960 = vsel %vm2066, %v5248, %v5401
    %v5961 = vsel %vm2066, %v5249, %v5403
    %v5962 = vsel %vm2066, %v5250, %v5405
    %v5963 = vsel %vm2066, %v5251, %v5407
    %v5964 = vsel %vm2066, %v5252, %v5409
    %v5965 = vsel %vm2066, %v5253, %v5411
    %v5966 = vsel %vm2066, %v5254, %v5413
    %v5967 = vsel %vm2066, %v5255, %v5415
    %v5968 = vsel %vm2066, %v5256, %v5417
    %v5969 = vsel %vm2066, %v5257, %v5419
    %v5970 = vsel %vm2066, %v5258, %v5421
    %v5971 = vsel %vm2066, %v5259, %v5423
    %v5972 = vsel %vm2066, %v5260, %v5425
    %v5973 = vsel %vm2066, %v5261, %v5427
    %v5974 = vsel %vm2066, %v5262, %v5429
    %v5975 = vsel %vm2066, %v5263, %v5431
    %v5976 = vsel %vm2066, %v5264, %v5433
    %v5977 = vsel %vm2066, %v5265, %v5435
    %v5978 = vsel %vm2066, %v5266, %v5437
    %v5979 = vsel %vm2066, %v5267, %v5439
    %v5980 = vsel %vm2066, %v5268, %v5441
    %v5981 = vsel %vm2066, %v5269, %v5443
    %vm5982 = vcmask 523264
    %v5983 = vsel %vm5982, %v5960, %v5489
    %v5984 = vsel %vm5982, %v5961, %v5491
    %v5985 = vsel %vm5982, %v5962, %v5493
    %v5986 = vsel %vm5982, %v5963, %v5495
    %v5987 = vsel %vm5982, %v5964, %v5497
    %v5988 = vsel %vm5982, %v5965, %v5499
    %v5989 = vsel %vm5982, %v5966, %v5501
    %v5990 = vsel %vm5982, %v5967, %v5503
    %v5991 = vsel %vm5982, %v5968, %v5505
    %v5992 = vsel %vm5982, %v5969, %v5507
    %v5993 = vsel %vm5982, %v5970, %v5509
    %v5994 = vsel %vm5982, %v5971, %v5511
    %v5995 = vsel %vm5982, %v5972, %v5513
    %v5996 = vsel %vm5982, %v5973, %v5515
    %v5997 = vsel %vm5982, %v5974, %v5517
    %v5998 = vsel %vm5982, %v5975, %v5519
    %v5999 = vsel %vm5982, %v5976, %v5521
    %v6000 = vsel %vm5982, %v5977, %v5523
    %v6001 = vsel %vm5982, %v5978, %v5525
    %v6002 = vsel %vm5982, %v5979, %v5527
    %v6003 = vsel %vm5982, %v5980, %v5529
    %v6004 = vsel %vm5982, %v5981, %v5531
    %vm6005 = vcmask 785408
    %v6006 = vsel %vm6005, %v5983, %v5556
    %v6007 = vsel %vm6005, %v5984, %v5558
    %v6008 = vsel %vm6005, %v5985, %v5560
    %v6009 = vsel %vm6005, %v5986, %v5562
    %v6010 = vsel %vm6005, %v5987, %v5564
    %v6011 = vsel %vm6005, %v5988, %v5566
    %v6012 = vsel %vm6005, %v5989, %v5568
    %v6013 = vsel %vm6005, %v5990, %v5570
    %v6014 = vsel %vm6005, %v5991, %v5572
    %v6015 = vsel %vm6005, %v5992, %v5574
    %v6016 = vsel %vm6005, %v5993, %v5576
    %v6017 = vsel %vm6005, %v5994, %v5578
    %v6018 = vsel %vm6005, %v5995, %v5580
    %v6019 = vsel %vm6005, %v5996, %v5582
    %v6020 = vsel %vm6005, %v5997, %v5584
    %v6021 = vsel %vm6005, %v5998, %v5586
    %v6022 = vsel %vm6005, %v5999, %v5588
    %v6023 = vsel %vm6005, %v6000, %v5590
    %v6024 = vsel %vm6005, %v6001, %v5592
    %v6025 = vsel %vm6005, %v6002, %v5594
    %v6026 = vsel %vm6005, %v6003, %v5596
    %v6027 = vsel %vm6005, %v6004, %v5598
    %v6028 = vsel %vm2066, %v5250, %v5644
    %v6029 = vsel %vm2066, %v5251, %v5646
    %v6030 = vsel %vm2066, %v5252, %v5648
    %v6031 = vsel %vm2066, %v5253, %v5650
    %v6032 = vsel %vm2066, %v5254, %v5652
    %v6033 = vsel %vm2066, %v5255, %v5654
    %v6034 = vsel %vm2066, %v5256, %v5656
    %v6035 = vsel %vm2066, %v5257, %v5658
    %v6036 = vsel %vm2066, %v5258, %v5660
    %v6037 = vsel %vm2066, %v5259, %v5662
    %v6038 = vsel %vm2066, %v5260, %v5664
    %v6039 = vsel %vm2066, %v5261, %v5666
    %v6040 = vsel %vm2066, %v5262, %v5668
    %v6041 = vsel %vm2066, %v5263, %v5670
    %v6042 = vsel %vm2066, %v5264, %v5672
    %v6043 = vsel %vm2066, %v5265, %v5674
    %v6044 = vsel %vm2066, %v5266, %v5676
    %v6045 = vsel %vm2066, %v5267, %v5678
    %v6046 = vsel %vm2066, %v5268, %v5680
    %v6047 = vsel %vm2066, %v5269, %v5682
    %v6048 = vsel %vm2066, %v5292, %v5684
    %v6049 = vsel %vm2066, %v5294, %v5686
    %v6050 = vsel %vm5982, %v6028, %v5732
    %v6051 = vsel %vm5982, %v6029, %v5734
    %v6052 = vsel %vm5982, %v6030, %v5736
    %v6053 = vsel %vm5982, %v6031, %v5738
    %v6054 = vsel %vm5982, %v6032, %v5740
    %v6055 = vsel %vm5982, %v6033, %v5742
    %v6056 = vsel %vm5982, %v6034, %v5744
    %v6057 = vsel %vm5982, %v6035, %v5746
    %v6058 = vsel %vm5982, %v6036, %v5748
    %v6059 = vsel %vm5982, %v6037, %v5750
    %v6060 = vsel %vm5982, %v6038, %v5752
    %v6061 = vsel %vm5982, %v6039, %v5754
    %v6062 = vsel %vm5982, %v6040, %v5756
    %v6063 = vsel %vm5982, %v6041, %v5758
    %v6064 = vsel %vm5982, %v6042, %v5760
    %v6065 = vsel %vm5982, %v6043, %v5762
    %v6066 = vsel %vm5982, %v6044, %v5764
    %v6067 = vsel %vm5982, %v6045, %v5766
    %v6068 = vsel %vm5982, %v6046, %v5768
    %v6069 = vsel %vm5982, %v6047, %v5770
    %v6070 = vsel %vm5982, %v6048, %v5772
    %v6071 = vsel %vm5982, %v6049, %v5774
    %v6072 = vsel %vm6005, %v6050, %v5799
    %v6073 = vsel %vm6005, %v6051, %v5801
    %v6074 = vsel %vm6005, %v6052, %v5803
    %v6075 = vsel %vm6005, %v6053, %v5805
    %v6076 = vsel %vm6005, %v6054, %v5807
    %v6077 = vsel %vm6005, %v6055, %v5809
    %v6078 = vsel %vm6005, %v6056, %v5811
    %v6079 = vsel %vm6005, %v6057, %v5813
    %v6080 = vsel %vm6005, %v6058, %v5815
    %v6081 = vsel %vm6005, %v6059, %v5817
    %v6082 = vsel %vm6005, %v6060, %v5819
    %v6083 = vsel %vm6005, %v6061, %v5821
    %v6084 = vsel %vm6005, %v6062, %v5823
    %v6085 = vsel %vm6005, %v6063, %v5825
    %v6086 = vsel %vm6005, %v6064, %v5827
    %v6087 = vsel %vm6005, %v6065, %v5829
    %v6088 = vsel %vm6005, %v6066, %v5831
    %v6089 = vsel %vm6005, %v6067, %v5833
    %v6090 = vsel %vm6005, %v6068, %v5835
    %v6091 = vsel %vm6005, %v6069, %v5837
    %v6092 = vsel %vm6005, %v6070, %v5839
    %v6093 = vsel %vm6005, %v6071, %v5841
    %v6094 = vsel %vm2066, %v5318, %v5648
    %v6095 = vsel %vm2066, %v5319, %v5650
    %v6096 = vsel %vm2066, %v5320, %v5652
    %v6097 = vsel %vm2066, %v5321, %v5654
    %v6098 = vsel %vm2066, %v5322, %v5656
    %v6099 = vsel %vm2066, %v5323, %v5658
    %v6100 = vsel %vm2066, %v5324, %v5660
    %v6101 = vsel %vm2066, %v5325, %v5662
    %v6102 = vsel %vm2066, %v5326, %v5664
    %v6103 = vsel %vm2066, %v5327, %v5666
    %v6104 = vsel %vm2066, %v5328, %v5668
    %v6105 = vsel %vm2066, %v5329, %v5670
    %v6106 = vsel %vm2066, %v5330, %v5672
    %v6107 = vsel %vm2066, %v5331, %v5674
    %v6108 = vsel %vm2066, %v5332, %v5676
    %v6109 = vsel %vm2066, %v5333, %v5678
    %v6110 = vsel %vm2066, %v5334, %v5680
    %v6111 = vsel %vm2066, %v5335, %v5682
    %v6112 = vsel %vm2066, %v5336, %v5684
    %v6113 = vsel %vm2066, %v5337, %v5686
    %v6114 = vsel %vm2066, %v5338, %v5866
    %v6115 = vsel %vm2066, %v5340, %v5868
    %v6116 = vsel %vm5982, %v6094, %v5499
    %v6117 = vsel %vm5982, %v6095, %v5501
    %v6118 = vsel %vm5982, %v6096, %v5503
    %v6119 = vsel %vm5982, %v6097, %v5505
    %v6120 = vsel %vm5982, %v6098, %v5507
    %v6121 = vsel %vm5982, %v6099, %v5509
    %v6122 = vsel %vm5982, %v6100, %v5511
    %v6123 = vsel %vm5982, %v6101, %v5513
    %v6124 = vsel %vm5982, %v6102, %v5515
    %v6125 = vsel %vm5982, %v6103, %v5517
    %v6126 = vsel %vm5982, %v6104, %v5519
    %v6127 = vsel %vm5982, %v6105, %v5521
    %v6128 = vsel %vm5982, %v6106, %v5523
    %v6129 = vsel %vm5982, %v6107, %v5525
    %v6130 = vsel %vm5982, %v6108, %v5527
    %v6131 = vsel %vm5982, %v6109, %v5529
    %v6132 = vsel %vm5982, %v6110, %v5531
    %v6133 = vsel %vm5982, %v6111, %v5877
    %v6134 = vsel %vm5982, %v6112, %v5879
    %v6135 = vsel %vm5982, %v6113, %v5881
    %v6136 = vsel %vm5982, %v6114, %v5883
    %v6137 = vsel %vm5982, %v6115, %v5885
    %v6138 = vsel %vm6005, %v6116, %v5566
    %v6139 = vsel %vm6005, %v6117, %v5568
    %v6140 = vsel %vm6005, %v6118, %v5570
    %v6141 = vsel %vm6005, %v6119, %v5572
    %v6142 = vsel %vm6005, %v6120, %v5574
    %v6143 = vsel %vm6005, %v6121, %v5576
    %v6144 = vsel %vm6005, %v6122, %v5578
    %v6145 = vsel %vm6005, %v6123, %v5580
    %v6146 = vsel %vm6005, %v6124, %v5582
    %v6147 = vsel %vm6005, %v6125, %v5584
    %v6148 = vsel %vm6005, %v6126, %v5586
    %v6149 = vsel %vm6005, %v6127, %v5588
    %v6150 = vsel %vm6005, %v6128, %v5590
    %v6151 = vsel %vm6005, %v6129, %v5592
    %v6152 = vsel %vm6005, %v6130, %v5594
    %v6153 = vsel %vm6005, %v6131, %v5596
    %v6154 = vsel %vm6005, %v6132, %v5598
    %v6155 = vsel %vm6005, %v6133, %v5897
    %v6156 = vsel %vm6005, %v6134, %v5899
    %v6157 = vsel %vm6005, %v6135, %v5901
    %v6158 = vsel %vm6005, %v6136, %v5903
    %v6159 = vsel %vm6005, %v6137, %v5905
    %v6160 = vsel %vm2066, %v5292, %v5913
    %v6161 = vsel %vm2066, %v5294, %v5915
    %v6162 = vsel %vm2066, %v5342, %v5917
    %v6163 = vsel %vm2066, %v5343, %v5919
    %v6164 = vsel %vm2066, %v5344, %v5921
    %v6165 = vsel %vm2066, %v5345, %v5923
    %v6166 = vsel %vm2066, %v5351, %v5925
    %v6167 = vsel %vm5982, %v6160, %v5877
    %v6168 = vsel %vm5982, %v6161, %v5879
    %v6169 = vsel %vm5982, %v6162, %v5881
    %v6170 = vsel %vm5982, %v6163, %v5883
    %v6171 = vsel %vm5982, %v6164, %v5885
    %v6172 = vsel %vm5982, %v6165, %v5936
    %v6173 = vsel %vm5982, %v6166, %v5938
    %v6174 = vsel %vm6005, %v5990, %v5809
    %v6175 = vsel %vm6005, %v5991, %v5811
    %v6176 = vsel %vm6005, %v5992, %v5813
    %v6177 = vsel %vm6005, %v5993, %v5815
    %v6178 = vsel %vm6005, %v5994, %v5817
    %v6179 = vsel %vm6005, %v5995, %v5819
    %v6180 = vsel %vm6005, %v5996, %v5821
    %v6181 = vsel %vm6005, %v5997, %v5823
    %v6182 = vsel %vm6005, %v5998, %v5825
    %v6183 = vsel %vm6005, %v5999, %v5827
    %v6184 = vsel %vm6005, %v6000, %v5829
    %v6185 = vsel %vm6005, %v6001, %v5831
    %v6186 = vsel %vm6005, %v6002, %v5833
    %v6187 = vsel %vm6005, %v6003, %v5835
    %v6188 = vsel %vm6005, %v6004, %v5837
    %v6189 = vsel %vm6005, %v6167, %v5839
    %v6190 = vsel %vm6005, %v6168, %v5841
    %v6191 = vsel %vm6005, %v6169, %v5946
    %v6192 = vsel %vm6005, %v6170, %v5948
    %v6193 = vsel %vm6005, %v6171, %v5950
    %v6194 = vsel %vm6005, %v6172, %v5952
    %v6195 = vsel %vm6005, %v6173, %v5954
    %6197 = vrot.lane.b32.xlu0 %v5354, 32
    %v6198 = vpop.permute.xlu0 %6197
    %6199 = vrot.lane.b32.xlu0 %v5355, 32
    %v6200 = vpop.permute.xlu0 %6199
    %6201 = vrot.lane.b32.xlu0 %v5356, 32
    %v6202 = vpop.permute.xlu0 %6201
    %6203 = vrot.lane.b32.xlu0 %v5357, 32
    %v6204 = vpop.permute.xlu0 %6203
    %6205 = vrot.lane.b32.xlu0 %v5363, 32
    %v6206 = vpop.permute.xlu0 %6205
    %6219 = vrot.lane.b32.xlu0 %v5340, 64
    %v6220 = vpop.permute.xlu0 %6219
    %6221 = vrot.lane.b32.xlu0 %v5358, 64
    %v6222 = vpop.permute.xlu0 %6221
    %6223 = vrot.lane.b32.xlu0 %v5359, 64
    %v6224 = vpop.permute.xlu0 %6223
    %6225 = vrot.lane.b32.xlu0 %v5360, 64
    %v6226 = vpop.permute.xlu0 %6225
    %6227 = vrot.lane.b32.xlu0 %v5361, 64
    %v6228 = vpop.permute.xlu0 %6227
    %6229 = vrot.lane.b32.xlu0 %v5362, 64
    %v6230 = vpop.permute.xlu0 %6229
    %6231 = vrot.lane.b32.xlu0 %v5364, 64
    %v6232 = vpop.permute.xlu0 %6231
    %6241 = vrot.lane.b32.xlu0 %v5363, 96
    %v6242 = vpop.permute.xlu0 %6241
    %6243 = vrot.lane.b32.xlu0 %v5365, 96
    %v6244 = vpop.permute.xlu0 %6243
    %6252 = vrot.lane.b32.xlu0 %v5370, 32
    %v6253 = vpop.permute.xlu0 %6252
    %6254 = vrot.lane.b32.xlu0 %v5371, 32
    %v6255 = vpop.permute.xlu0 %6254
    %6256 = vrot.lane.b32.xlu0 %v5372, 32
    %v6257 = vpop.permute.xlu0 %6256
    %6258 = vrot.lane.b32.xlu0 %v5373, 32
    %v6259 = vpop.permute.xlu0 %6258
    %6260 = vrot.lane.b32.xlu0 %v5374, 32
    %v6261 = vpop.permute.xlu0 %6260
    %6272 = vrot.lane.b32.xlu0 %v5366, 64
    %v6273 = vpop.permute.xlu0 %6272
    %6274 = vrot.lane.b32.xlu0 %v5367, 64
    %v6275 = vpop.permute.xlu0 %6274
    %6276 = vrot.lane.b32.xlu0 %v5368, 64
    %v6277 = vpop.permute.xlu0 %6276
    %6278 = vrot.lane.b32.xlu0 %v5369, 64
    %v6279 = vpop.permute.xlu0 %6278
    %6280 = vrot.lane.b32.xlu0 %v5375, 64
    %v6281 = vpop.permute.xlu0 %6280
    %6288 = vrot.lane.b32.xlu0 %v5352, 96
    %v6289 = vpop.permute.xlu0 %6288
    %6290 = vrot.lane.b32.xlu0 %v5370, 96
    %v6291 = vpop.permute.xlu0 %6290
    %6292 = vrot.lane.b32.xlu0 %v5371, 96
    %v6293 = vpop.permute.xlu0 %6292
    %6294 = vrot.lane.b32.xlu0 %v5372, 96
    %v6295 = vpop.permute.xlu0 %6294
    %6296 = vrot.lane.b32.xlu0 %v5373, 96
    %v6297 = vpop.permute.xlu0 %6296
    %6298 = vrot.lane.b32.xlu0 %v5374, 96
    %v6299 = vpop.permute.xlu0 %6298
    %6300 = vrot.lane.b32.xlu0 %v5376, 96
    %v6301 = vpop.permute.xlu0 %6300
    %v6309 = vsel %vm2066, %v5358, %v6198
    %v6310 = vsel %vm2066, %v5359, %v6200
    %v6311 = vsel %vm2066, %v5360, %v6202
    %v6312 = vsel %vm2066, %v5361, %v6204
    %v6313 = vsel %vm2066, %v5362, %v6206
    %v6314 = vsel %vm5982, %v6099, %v5746
    %v6315 = vsel %vm5982, %v6100, %v5748
    %v6316 = vsel %vm5982, %v6101, %v5750
    %v6317 = vsel %vm5982, %v6102, %v5752
    %v6318 = vsel %vm5982, %v6103, %v5754
    %v6319 = vsel %vm5982, %v6104, %v5756
    %v6320 = vsel %vm5982, %v6105, %v5758
    %v6321 = vsel %vm5982, %v6106, %v5760
    %v6322 = vsel %vm5982, %v6107, %v5762
    %v6323 = vsel %vm5982, %v6108, %v5764
    %v6324 = vsel %vm5982, %v6109, %v5766
    %v6325 = vsel %vm5982, %v6110, %v5768
    %v6326 = vsel %vm5982, %v6111, %v5770
    %v6327 = vsel %vm5982, %v6112, %v5772
    %v6328 = vsel %vm5982, %v6113, %v5774
    %v6329 = vsel %vm5982, %v6114, %v6220
    %v6330 = vsel %vm5982, %v6115, %v6222
    %v6331 = vsel %vm5982, %v6309, %v6224
    %v6332 = vsel %vm5982, %v6310, %v6226
    %v6333 = vsel %vm5982, %v6311, %v6228
    %v6334 = vsel %vm5982, %v6312, %v6230
    %v6335 = vsel %vm5982, %v6313, %v6232
    %v6336 = vsel %vm6005, %v6314, %v5813
    %v6337 = vsel %vm6005, %v6315, %v5815
    %v6338 = vsel %vm6005, %v6316, %v5817
    %v6339 = vsel %vm6005, %v6317, %v5819
    %v6340 = vsel %vm6005, %v6318, %v5821
    %v6341 = vsel %vm6005, %v6319, %v5823
    %v6342 = vsel %vm6005, %v6320, %v5825
    %v6343 = vsel %vm6005, %v6321, %v5827
    %v6344 = vsel %vm6005, %v6322, %v5829
    %v6345 = vsel %vm6005, %v6323, %v5831
    %v6346 = vsel %vm6005, %v6324, %v5833
    %v6347 = vsel %vm6005, %v6325, %v5835
    %v6348 = vsel %vm6005, %v6326, %v5837
    %v6349 = vsel %vm6005, %v6327, %v5839
    %v6350 = vsel %vm6005, %v6328, %v5841
    %v6351 = vsel %vm6005, %v6329, %v5946
    %v6352 = vsel %vm6005, %v6330, %v5948
    %v6353 = vsel %vm6005, %v6331, %v5950
    %v6354 = vsel %vm6005, %v6332, %v5952
    %v6355 = vsel %vm6005, %v6333, %v5954
    %v6356 = vsel %vm6005, %v6334, %v6242
    %v6357 = vsel %vm6005, %v6335, %v6244
    %v6358 = vsel %vm2066, %v5353, %v6253
    %v6359 = vsel %vm2066, %v5366, %v6255
    %v6360 = vsel %vm2066, %v5367, %v6257
    %v6361 = vsel %vm2066, %v5368, %v6259
    %v6362 = vsel %vm2066, %v5369, %v6261
    %v6363 = vsel %vm5982, %v6358, %v6273
    %v6364 = vsel %vm5982, %v6359, %v6275
    %v6365 = vsel %vm5982, %v6360, %v6277
    %v6366 = vsel %vm5982, %v6361, %v6279
    %v6367 = vsel %vm5982, %v6362, %v6281
    %v6368 = vsel %vm6005, %v6167, %v5897
    %v6369 = vsel %vm6005, %v6168, %v5899
    %v6370 = vsel %vm6005, %v6169, %v5901
    %v6371 = vsel %vm6005, %v6170, %v5903
    %v6372 = vsel %vm6005, %v6171, %v5905
    %v6373 = vsel %vm6005, %v6172, %v6289
    %v6374 = vsel %vm6005, %v6173, %v6291
    %v6375 = vsel %vm6005, %v6363, %v6293
    %v6376 = vsel %vm6005, %v6364, %v6295
    %v6377 = vsel %vm6005, %v6365, %v6297
    %v6378 = vsel %vm6005, %v6366, %v6299
    %v6379 = vsel %vm6005, %v6367, %v6301
    %v6380 = vld [vmem:[#allocation2 + $0x448] sm:$0xff]
    %v6381 = vld [vmem:[#allocation2 + $0x238] sm:$0xff]
    %6382 = vrot.lane.b32.xlu0 %v5249, 32
    %v6383 = vpop.permute.xlu0 %6382
    %6384 = vrot.lane.b32.xlu0 %v5250, 32
    %v6385 = vpop.permute.xlu0 %6384
    %6386 = vrot.lane.b32.xlu0 %v5251, 32
    %v6387 = vpop.permute.xlu0 %6386
    %6388 = vrot.lane.b32.xlu0 %v5252, 32
    %v6389 = vpop.permute.xlu0 %6388
    %6390 = vrot.lane.b32.xlu0 %v5253, 32
    %v6391 = vpop.permute.xlu0 %6390
    %6392 = vrot.lane.b32.xlu0 %v5254, 32
    %v6393 = vpop.permute.xlu0 %6392
    %6394 = vrot.lane.b32.xlu0 %v5255, 32
    %v6395 = vpop.permute.xlu0 %6394
    %6396 = vrot.lane.b32.xlu0 %v5256, 32
    %v6397 = vpop.permute.xlu0 %6396
    %6398 = vrot.lane.b32.xlu0 %v5257, 32
    %v6399 = vpop.permute.xlu0 %6398
    %6400 = vrot.lane.b32.xlu0 %v5258, 32
    %v6401 = vpop.permute.xlu0 %6400
    %6402 = vrot.lane.b32.xlu0 %v5259, 32
    %v6403 = vpop.permute.xlu0 %6402
    %6404 = vrot.lane.b32.xlu0 %v5260, 32
    %v6405 = vpop.permute.xlu0 %6404
    %6406 = vrot.lane.b32.xlu0 %v5261, 32
    %v6407 = vpop.permute.xlu0 %6406
    %6408 = vrot.lane.b32.xlu0 %v5262, 32
    %v6409 = vpop.permute.xlu0 %6408
    %6410 = vrot.lane.b32.xlu0 %v5263, 32
    %v6411 = vpop.permute.xlu0 %6410
    %6412 = vrot.lane.b32.xlu0 %v5264, 32
    %v6413 = vpop.permute.xlu0 %6412
    %6414 = vrot.lane.b32.xlu0 %v5265, 32
    %v6415 = vpop.permute.xlu0 %6414
    %6416 = vrot.lane.b32.xlu0 %v5266, 32
    %v6417 = vpop.permute.xlu0 %6416
    %6418 = vrot.lane.b32.xlu0 %v5267, 32
    %v6419 = vpop.permute.xlu0 %6418
    %6420 = vrot.lane.b32.xlu0 %v5268, 32
    %v6421 = vpop.permute.xlu0 %6420
    %6422 = vrot.lane.b32.xlu0 %v5269, 32
    %v6423 = vpop.permute.xlu0 %6422
    %6424 = vrot.lane.b32.xlu0 %v5292, 32
    %v6425 = vpop.permute.xlu0 %6424
    %6448 = vrot.lane.b32.xlu0 %v5271, 64
    %v6449 = vpop.permute.xlu0 %6448
    %6450 = vrot.lane.b32.xlu0 %v5272, 64
    %v6451 = vpop.permute.xlu0 %6450
    %6452 = vrot.lane.b32.xlu0 %v5273, 64
    %v6453 = vpop.permute.xlu0 %6452
    %6454 = vrot.lane.b32.xlu0 %v5274, 64
    %v6455 = vpop.permute.xlu0 %6454
    %6456 = vrot.lane.b32.xlu0 %v5275, 64
    %v6457 = vpop.permute.xlu0 %6456
    %6458 = vrot.lane.b32.xlu0 %v5276, 64
    %v6459 = vpop.permute.xlu0 %6458
    %6460 = vrot.lane.b32.xlu0 %v5277, 64
    %v6461 = vpop.permute.xlu0 %6460
    %6462 = vrot.lane.b32.xlu0 %v5278, 64
    %v6463 = vpop.permute.xlu0 %6462
    %6464 = vrot.lane.b32.xlu0 %v5279, 64
    %v6465 = vpop.permute.xlu0 %6464
    %6466 = vrot.lane.b32.xlu0 %v5280, 64
    %v6467 = vpop.permute.xlu0 %6466
    %6468 = vrot.lane.b32.xlu0 %v5281, 64
    %v6469 = vpop.permute.xlu0 %6468
    %6470 = vrot.lane.b32.xlu0 %v5282, 64
    %v6471 = vpop.permute.xlu0 %6470
    %6472 = vrot.lane.b32.xlu0 %v5283, 64
    %v6473 = vpop.permute.xlu0 %6472
    %6474 = vrot.lane.b32.xlu0 %v5284, 64
    %v6475 = vpop.permute.xlu0 %6474
    %6476 = vrot.lane.b32.xlu0 %v5285, 64
    %v6477 = vpop.permute.xlu0 %6476
    %6478 = vrot.lane.b32.xlu0 %v5286, 64
    %v6479 = vpop.permute.xlu0 %6478
    %6480 = vrot.lane.b32.xlu0 %v5287, 64
    %v6481 = vpop.permute.xlu0 %6480
    %6482 = vrot.lane.b32.xlu0 %v5288, 64
    %v6483 = vpop.permute.xlu0 %6482
    %6484 = vrot.lane.b32.xlu0 %v5289, 64
    %v6485 = vpop.permute.xlu0 %6484
    %6486 = vrot.lane.b32.xlu0 %v5290, 64
    %v6487 = vpop.permute.xlu0 %6486
    %6488 = vrot.lane.b32.xlu0 %v5291, 64
    %v6489 = vpop.permute.xlu0 %6488
    %6490 = vrot.lane.b32.xlu0 %v5293, 64
    %v6491 = vpop.permute.xlu0 %6490
    %6514 = vrot.lane.b32.xlu0 %v5250, 96
    %v6515 = vpop.permute.xlu0 %6514
    %6516 = vrot.lane.b32.xlu0 %v5251, 96
    %v6517 = vpop.permute.xlu0 %6516
    %6518 = vrot.lane.b32.xlu0 %v5252, 96
    %v6519 = vpop.permute.xlu0 %6518
    %6520 = vrot.lane.b32.xlu0 %v5253, 96
    %v6521 = vpop.permute.xlu0 %6520
    %6522 = vrot.lane.b32.xlu0 %v5254, 96
    %v6523 = vpop.permute.xlu0 %6522
    %6524 = vrot.lane.b32.xlu0 %v5255, 96
    %v6525 = vpop.permute.xlu0 %6524
    %6526 = vrot.lane.b32.xlu0 %v5256, 96
    %v6527 = vpop.permute.xlu0 %6526
    %6528 = vrot.lane.b32.xlu0 %v5257, 96
    %v6529 = vpop.permute.xlu0 %6528
    %6530 = vrot.lane.b32.xlu0 %v5258, 96
    %v6531 = vpop.permute.xlu0 %6530
    %6532 = vrot.lane.b32.xlu0 %v5259, 96
    %v6533 = vpop.permute.xlu0 %6532
    %6534 = vrot.lane.b32.xlu0 %v5260, 96
    %v6535 = vpop.permute.xlu0 %6534
    %6536 = vrot.lane.b32.xlu0 %v5261, 96
    %v6537 = vpop.permute.xlu0 %6536
    %6538 = vrot.lane.b32.xlu0 %v5262, 96
    %v6539 = vpop.permute.xlu0 %6538
    %6540 = vrot.lane.b32.xlu0 %v5263, 96
    %v6541 = vpop.permute.xlu0 %6540
    %6542 = vrot.lane.b32.xlu0 %v5264, 96
    %v6543 = vpop.permute.xlu0 %6542
    %6544 = vrot.lane.b32.xlu0 %v5265, 96
    %v6545 = vpop.permute.xlu0 %6544
    %6546 = vrot.lane.b32.xlu0 %v5266, 96
    %v6547 = vpop.permute.xlu0 %6546
    %6548 = vrot.lane.b32.xlu0 %v5267, 96
    %v6549 = vpop.permute.xlu0 %6548
    %6550 = vrot.lane.b32.xlu0 %v5268, 96
    %v6551 = vpop.permute.xlu0 %6550
    %6552 = vrot.lane.b32.xlu0 %v5269, 96
    %v6553 = vpop.permute.xlu0 %6552
    %6554 = vrot.lane.b32.xlu0 %v5292, 96
    %v6555 = vpop.permute.xlu0 %6554
    %6556 = vrot.lane.b32.xlu0 %v5294, 96
    %v6557 = vpop.permute.xlu0 %6556
    %6580 = vrot.lane.b32.xlu0 %v5317, 32
    %v6581 = vpop.permute.xlu0 %6580
    %6582 = vrot.lane.b32.xlu0 %v5318, 32
    %v6583 = vpop.permute.xlu0 %6582
    %6584 = vrot.lane.b32.xlu0 %v5319, 32
    %v6585 = vpop.permute.xlu0 %6584
    %6586 = vrot.lane.b32.xlu0 %v5320, 32
    %v6587 = vpop.permute.xlu0 %6586
    %6588 = vrot.lane.b32.xlu0 %v5321, 32
    %v6589 = vpop.permute.xlu0 %6588
    %6590 = vrot.lane.b32.xlu0 %v5322, 32
    %v6591 = vpop.permute.xlu0 %6590
    %6592 = vrot.lane.b32.xlu0 %v5323, 32
    %v6593 = vpop.permute.xlu0 %6592
    %6594 = vrot.lane.b32.xlu0 %v5324, 32
    %v6595 = vpop.permute.xlu0 %6594
    %6596 = vrot.lane.b32.xlu0 %v5325, 32
    %v6597 = vpop.permute.xlu0 %6596
    %6598 = vrot.lane.b32.xlu0 %v5326, 32
    %v6599 = vpop.permute.xlu0 %6598
    %6600 = vrot.lane.b32.xlu0 %v5327, 32
    %v6601 = vpop.permute.xlu0 %6600
    %6602 = vrot.lane.b32.xlu0 %v5328, 32
    %v6603 = vpop.permute.xlu0 %6602
    %6604 = vrot.lane.b32.xlu0 %v5329, 32
    %v6605 = vpop.permute.xlu0 %6604
    %6606 = vrot.lane.b32.xlu0 %v5330, 32
    %v6607 = vpop.permute.xlu0 %6606
    %6608 = vrot.lane.b32.xlu0 %v5331, 32
    %v6609 = vpop.permute.xlu0 %6608
    %6610 = vrot.lane.b32.xlu0 %v5332, 32
    %v6611 = vpop.permute.xlu0 %6610
    %6612 = vrot.lane.b32.xlu0 %v5333, 32
    %v6613 = vpop.permute.xlu0 %6612
    %6614 = vrot.lane.b32.xlu0 %v5334, 32
    %v6615 = vpop.permute.xlu0 %6614
    %6616 = vrot.lane.b32.xlu0 %v5335, 32
    %v6617 = vpop.permute.xlu0 %6616
    %6618 = vrot.lane.b32.xlu0 %v5336, 32
    %v6619 = vpop.permute.xlu0 %6618
    %6620 = vrot.lane.b32.xlu0 %v5337, 32
    %v6621 = vpop.permute.xlu0 %6620
    %6622 = vrot.lane.b32.xlu0 %v5338, 32
    %v6623 = vpop.permute.xlu0 %6622
    %6646 = vrot.lane.b32.xlu0 %v5296, 64
    %v6647 = vpop.permute.xlu0 %6646
    %6648 = vrot.lane.b32.xlu0 %v5297, 64
    %v6649 = vpop.permute.xlu0 %6648
    %6650 = vrot.lane.b32.xlu0 %v5298, 64
    %v6651 = vpop.permute.xlu0 %6650
    %6652 = vrot.lane.b32.xlu0 %v5299, 64
    %v6653 = vpop.permute.xlu0 %6652
    %6654 = vrot.lane.b32.xlu0 %v5300, 64
    %v6655 = vpop.permute.xlu0 %6654
    %6656 = vrot.lane.b32.xlu0 %v5301, 64
    %v6657 = vpop.permute.xlu0 %6656
    %6658 = vrot.lane.b32.xlu0 %v5302, 64
    %v6659 = vpop.permute.xlu0 %6658
    %6660 = vrot.lane.b32.xlu0 %v5303, 64
    %v6661 = vpop.permute.xlu0 %6660
    %6662 = vrot.lane.b32.xlu0 %v5304, 64
    %v6663 = vpop.permute.xlu0 %6662
    %6664 = vrot.lane.b32.xlu0 %v5305, 64
    %v6665 = vpop.permute.xlu0 %6664
    %6666 = vrot.lane.b32.xlu0 %v5306, 64
    %v6667 = vpop.permute.xlu0 %6666
    %6668 = vrot.lane.b32.xlu0 %v5307, 64
    %v6669 = vpop.permute.xlu0 %6668
    %6670 = vrot.lane.b32.xlu0 %v5308, 64
    %v6671 = vpop.permute.xlu0 %6670
    %6672 = vrot.lane.b32.xlu0 %v5309, 64
    %v6673 = vpop.permute.xlu0 %6672
    %6674 = vrot.lane.b32.xlu0 %v5310, 64
    %v6675 = vpop.permute.xlu0 %6674
    %6676 = vrot.lane.b32.xlu0 %v5311, 64
    %v6677 = vpop.permute.xlu0 %6676
    %6678 = vrot.lane.b32.xlu0 %v5312, 64
    %v6679 = vpop.permute.xlu0 %6678
    %6680 = vrot.lane.b32.xlu0 %v5313, 64
    %v6681 = vpop.permute.xlu0 %6680
    %6682 = vrot.lane.b32.xlu0 %v5314, 64
    %v6683 = vpop.permute.xlu0 %6682
    %6684 = vrot.lane.b32.xlu0 %v5315, 64
    %v6685 = vpop.permute.xlu0 %6684
    %6686 = vrot.lane.b32.xlu0 %v5316, 64
    %v6687 = vpop.permute.xlu0 %6686
    %6688 = vrot.lane.b32.xlu0 %v5339, 64
    %v6689 = vpop.permute.xlu0 %6688
    %6712 = vrot.lane.b32.xlu0 %v5318, 96
    %v6713 = vpop.permute.xlu0 %6712
    %6714 = vrot.lane.b32.xlu0 %v5319, 96
    %v6715 = vpop.permute.xlu0 %6714
    %6716 = vrot.lane.b32.xlu0 %v5320, 96
    %v6717 = vpop.permute.xlu0 %6716
    %6718 = vrot.lane.b32.xlu0 %v5321, 96
    %v6719 = vpop.permute.xlu0 %6718
    %6720 = vrot.lane.b32.xlu0 %v5322, 96
    %v6721 = vpop.permute.xlu0 %6720
    %6722 = vrot.lane.b32.xlu0 %v5323, 96
    %v6723 = vpop.permute.xlu0 %6722
    %6724 = vrot.lane.b32.xlu0 %v5324, 96
    %v6725 = vpop.permute.xlu0 %6724
    %6726 = vrot.lane.b32.xlu0 %v5325, 96
    %v6727 = vpop.permute.xlu0 %6726
    %6728 = vrot.lane.b32.xlu0 %v5326, 96
    %v6729 = vpop.permute.xlu0 %6728
    %6730 = vrot.lane.b32.xlu0 %v5327, 96
    %v6731 = vpop.permute.xlu0 %6730
    %6732 = vrot.lane.b32.xlu0 %v5328, 96
    %v6733 = vpop.permute.xlu0 %6732
    %6734 = vrot.lane.b32.xlu0 %v5329, 96
    %v6735 = vpop.permute.xlu0 %6734
    %6736 = vrot.lane.b32.xlu0 %v5330, 96
    %v6737 = vpop.permute.xlu0 %6736
    %6738 = vrot.lane.b32.xlu0 %v5331, 96
    %v6739 = vpop.permute.xlu0 %6738
    %6740 = vrot.lane.b32.xlu0 %v5332, 96
    %v6741 = vpop.permute.xlu0 %6740
    %6742 = vrot.lane.b32.xlu0 %v5333, 96
    %v6743 = vpop.permute.xlu0 %6742
    %6744 = vrot.lane.b32.xlu0 %v5334, 96
    %v6745 = vpop.permute.xlu0 %6744
    %6746 = vrot.lane.b32.xlu0 %v5335, 96
    %v6747 = vpop.permute.xlu0 %6746
    %6748 = vrot.lane.b32.xlu0 %v5336, 96
    %v6749 = vpop.permute.xlu0 %6748
    %6750 = vrot.lane.b32.xlu0 %v5337, 96
    %v6751 = vpop.permute.xlu0 %6750
    %6752 = vrot.lane.b32.xlu0 %v5338, 96
    %v6753 = vpop.permute.xlu0 %6752
    %6754 = vrot.lane.b32.xlu0 %v5340, 96
    %v6755 = vpop.permute.xlu0 %6754
    %6778 = vrot.lane.b32.xlu0 %v5340, 32
    %v6779 = vpop.permute.xlu0 %6778
    %6780 = vrot.lane.b32.xlu0 %v5358, 32
    %v6781 = vpop.permute.xlu0 %6780
    %6784 = vrot.lane.b32.xlu0 %v5346, 64
    %v6785 = vpop.permute.xlu0 %6784
    %6786 = vrot.lane.b32.xlu0 %v5347, 64
    %v6787 = vpop.permute.xlu0 %6786
    %6788 = vrot.lane.b32.xlu0 %v5348, 64
    %v6789 = vpop.permute.xlu0 %6788
    %6790 = vrot.lane.b32.xlu0 %v5349, 64
    %v6791 = vpop.permute.xlu0 %6790
    %6792 = vrot.lane.b32.xlu0 %v5350, 64
    %v6793 = vpop.permute.xlu0 %6792
    %6799 = vrot.lane.b32.xlu0 %v5342, 96
    %v6800 = vpop.permute.xlu0 %6799
    %6801 = vrot.lane.b32.xlu0 %v5343, 96
    %v6802 = vpop.permute.xlu0 %6801
    %6803 = vrot.lane.b32.xlu0 %v5344, 96
    %v6804 = vpop.permute.xlu0 %6803
    %6805 = vrot.lane.b32.xlu0 %v5345, 96
    %v6806 = vpop.permute.xlu0 %6805
    %6807 = vrot.lane.b32.xlu0 %v5351, 96
    %v6808 = vpop.permute.xlu0 %6807
    %6814 = vrot.lane.b32.xlu0 %v5294, 32
    %v6815 = vpop.permute.xlu0 %6814
    %6816 = vrot.lane.b32.xlu0 %v5342, 32
    %v6817 = vpop.permute.xlu0 %6816
    %6818 = vrot.lane.b32.xlu0 %v5343, 32
    %v6819 = vpop.permute.xlu0 %6818
    %6820 = vrot.lane.b32.xlu0 %v5344, 32
    %v6821 = vpop.permute.xlu0 %6820
    %6822 = vrot.lane.b32.xlu0 %v5345, 32
    %v6823 = vpop.permute.xlu0 %6822
    %6824 = vrot.lane.b32.xlu0 %v5351, 32
    %v6825 = vpop.permute.xlu0 %6824
    %6826 = vrot.lane.b32.xlu0 %v5353, 32
    %v6827 = vpop.permute.xlu0 %6826
    %6835 = vrot.lane.b32.xlu0 %v5352, 64
    %v6836 = vpop.permute.xlu0 %6835
    %6837 = vrot.lane.b32.xlu0 %v5370, 64
    %v6838 = vpop.permute.xlu0 %6837
    %6841 = vrot.lane.b32.xlu0 %v5358, 96
    %v6842 = vpop.permute.xlu0 %6841
    %6843 = vrot.lane.b32.xlu0 %v5359, 96
    %v6844 = vpop.permute.xlu0 %6843
    %6845 = vrot.lane.b32.xlu0 %v5360, 96
    %v6846 = vpop.permute.xlu0 %6845
    %6847 = vrot.lane.b32.xlu0 %v5361, 96
    %v6848 = vpop.permute.xlu0 %6847
    %6849 = vrot.lane.b32.xlu0 %v5362, 96
    %v6850 = vpop.permute.xlu0 %6849
    %v6856 = vsel %vm2066, %v5270, %v6383
    %v6857 = vsel %vm2066, %v5271, %v6385
    %v6858 = vsel %vm2066, %v5272, %v6387
    %v6859 = vsel %vm2066, %v5273, %v6389
    %v6860 = vsel %vm2066, %v5274, %v6391
    %v6861 = vsel %vm2066, %v5275, %v6393
    %v6862 = vsel %vm2066, %v5276, %v6395
    %v6863 = vsel %vm2066, %v5277, %v6397
    %v6864 = vsel %vm2066, %v5278, %v6399
    %v6865 = vsel %vm2066, %v5279, %v6401
    %v6866 = vsel %vm2066, %v5280, %v6403
    %v6867 = vsel %vm2066, %v5281, %v6405
    %v6868 = vsel %vm2066, %v5282, %v6407
    %v6869 = vsel %vm2066, %v5283, %v6409
    %v6870 = vsel %vm2066, %v5284, %v6411
    %v6871 = vsel %vm2066, %v5285, %v6413
    %v6872 = vsel %vm2066, %v5286, %v6415
    %v6873 = vsel %vm2066, %v5287, %v6417
    %v6874 = vsel %vm2066, %v5288, %v6419
    %v6875 = vsel %vm2066, %v5289, %v6421
    %v6876 = vsel %vm2066, %v5290, %v6423
    %v6877 = vsel %vm2066, %v5291, %v6425
    %v6878 = vsel %vm5982, %v6856, %v6449
    %v6879 = vsel %vm5982, %v6857, %v6451
    %v6880 = vsel %vm5982, %v6858, %v6453
    %v6881 = vsel %vm5982, %v6859, %v6455
    %v6882 = vsel %vm5982, %v6860, %v6457
    %v6883 = vsel %vm5982, %v6861, %v6459
    %v6884 = vsel %vm5982, %v6862, %v6461
    %v6885 = vsel %vm5982, %v6863, %v6463
    %v6886 = vsel %vm5982, %v6864, %v6465
    %v6887 = vsel %vm5982, %v6865, %v6467
    %v6888 = vsel %vm5982, %v6866, %v6469
    %v6889 = vsel %vm5982, %v6867, %v6471
    %v6890 = vsel %vm5982, %v6868, %v6473
    %v6891 = vsel %vm5982, %v6869, %v6475
    %v6892 = vsel %vm5982, %v6870, %v6477
    %v6893 = vsel %vm5982, %v6871, %v6479
    %v6894 = vsel %vm5982, %v6872, %v6481
    %v6895 = vsel %vm5982, %v6873, %v6483
    %v6896 = vsel %vm5982, %v6874, %v6485
    %v6897 = vsel %vm5982, %v6875, %v6487
    %v6898 = vsel %vm5982, %v6876, %v6489
    %v6899 = vsel %vm5982, %v6877, %v6491
    %v6900 = vsel %vm6005, %v6878, %v6515
    %v6901 = vsel %vm6005, %v6879, %v6517
    %v6902 = vsel %vm6005, %v6880, %v6519
    %v6903 = vsel %vm6005, %v6881, %v6521
    %v6904 = vsel %vm6005, %v6882, %v6523
    %v6905 = vsel %vm6005, %v6883, %v6525
    %v6906 = vsel %vm6005, %v6884, %v6527
    %v6907 = vsel %vm6005, %v6885, %v6529
    %v6908 = vsel %vm6005, %v6886, %v6531
    %v6909 = vsel %vm6005, %v6887, %v6533
    %v6910 = vsel %vm6005, %v6888, %v6535
    %v6911 = vsel %vm6005, %v6889, %v6537
    %v6912 = vsel %vm6005, %v6890, %v6539
    %v6913 = vsel %vm6005, %v6891, %v6541
    %v6914 = vsel %vm6005, %v6892, %v6543
    %v6915 = vsel %vm6005, %v6893, %v6545
    %v6916 = vsel %vm6005, %v6894, %v6547
    %v6917 = vsel %vm6005, %v6895, %v6549
    %v6918 = vsel %vm6005, %v6896, %v6551
    %v6919 = vsel %vm6005, %v6897, %v6553
    %v6920 = vsel %vm6005, %v6898, %v6555
    %v6921 = vsel %vm6005, %v6899, %v6557
    %v6922 = vsel %vm2066, %v5272, %v6581
    %v6923 = vsel %vm2066, %v5273, %v6583
    %v6924 = vsel %vm2066, %v5274, %v6585
    %v6925 = vsel %vm2066, %v5275, %v6587
    %v6926 = vsel %vm2066, %v5276, %v6589
    %v6927 = vsel %vm2066, %v5277, %v6591
    %v6928 = vsel %vm2066, %v5278, %v6593
    %v6929 = vsel %vm2066, %v5279, %v6595
    %v6930 = vsel %vm2066, %v5280, %v6597
    %v6931 = vsel %vm2066, %v5281, %v6599
    %v6932 = vsel %vm2066, %v5282, %v6601
    %v6933 = vsel %vm2066, %v5283, %v6603
    %v6934 = vsel %vm2066, %v5284, %v6605
    %v6935 = vsel %vm2066, %v5285, %v6607
    %v6936 = vsel %vm2066, %v5286, %v6609
    %v6937 = vsel %vm2066, %v5287, %v6611
    %v6938 = vsel %vm2066, %v5288, %v6613
    %v6939 = vsel %vm2066, %v5289, %v6615
    %v6940 = vsel %vm2066, %v5290, %v6617
    %v6941 = vsel %vm2066, %v5291, %v6619
    %v6942 = vsel %vm2066, %v5293, %v6621
    %v6943 = vsel %vm2066, %v5346, %v6623
    %v6944 = vsel %vm5982, %v6922, %v6647
    %v6945 = vsel %vm5982, %v6923, %v6649
    %v6946 = vsel %vm5982, %v6924, %v6651
    %v6947 = vsel %vm5982, %v6925, %v6653
    %v6948 = vsel %vm5982, %v6926, %v6655
    %v6949 = vsel %vm5982, %v6927, %v6657
    %v6950 = vsel %vm5982, %v6928, %v6659
    %v6951 = vsel %vm5982, %v6929, %v6661
    %v6952 = vsel %vm5982, %v6930, %v6663
    %v6953 = vsel %vm5982, %v6931, %v6665
    %v6954 = vsel %vm5982, %v6932, %v6667
    %v6955 = vsel %vm5982, %v6933, %v6669
    %v6956 = vsel %vm5982, %v6934, %v6671
    %v6957 = vsel %vm5982, %v6935, %v6673
    %v6958 = vsel %vm5982, %v6936, %v6675
    %v6959 = vsel %vm5982, %v6937, %v6677
    %v6960 = vsel %vm5982, %v6938, %v6679
    %v6961 = vsel %vm5982, %v6939, %v6681
    %v6962 = vsel %vm5982, %v6940, %v6683
    %v6963 = vsel %vm5982, %v6941, %v6685
    %v6964 = vsel %vm5982, %v6942, %v6687
    %v6965 = vsel %vm5982, %v6943, %v6689
    %v6966 = vsel %vm6005, %v6944, %v6713
    %v6967 = vsel %vm6005, %v6945, %v6715
    %v6968 = vsel %vm6005, %v6946, %v6717
    %v6969 = vsel %vm6005, %v6947, %v6719
    %v6970 = vsel %vm6005, %v6948, %v6721
    %v6971 = vsel %vm6005, %v6949, %v6723
    %v6972 = vsel %vm6005, %v6950, %v6725
    %v6973 = vsel %vm6005, %v6951, %v6727
    %v6974 = vsel %vm6005, %v6952, %v6729
    %v6975 = vsel %vm6005, %v6953, %v6731
    %v6976 = vsel %vm6005, %v6954, %v6733
    %v6977 = vsel %vm6005, %v6955, %v6735
    %v6978 = vsel %vm6005, %v6956, %v6737
    %v6979 = vsel %vm6005, %v6957, %v6739
    %v6980 = vsel %vm6005, %v6958, %v6741
    %v6981 = vsel %vm6005, %v6959, %v6743
    %v6982 = vsel %vm6005, %v6960, %v6745
    %v6983 = vsel %vm6005, %v6961, %v6747
    %v6984 = vsel %vm6005, %v6962, %v6749
    %v6985 = vsel %vm6005, %v6963, %v6751
    %v6986 = vsel %vm6005, %v6964, %v6753
    %v6987 = vsel %vm6005, %v6965, %v6755
    %v6988 = vsel %vm2066, %v5297, %v6585
    %v6989 = vsel %vm2066, %v5298, %v6587
    %v6990 = vsel %vm2066, %v5299, %v6589
    %v6991 = vsel %vm2066, %v5300, %v6591
    %v6992 = vsel %vm2066, %v5301, %v6593
    %v6993 = vsel %vm2066, %v5302, %v6595
    %v6994 = vsel %vm2066, %v5303, %v6597
    %v6995 = vsel %vm2066, %v5304, %v6599
    %v6996 = vsel %vm2066, %v5305, %v6601
    %v6997 = vsel %vm2066, %v5306, %v6603
    %v6998 = vsel %vm2066, %v5307, %v6605
    %v6999 = vsel %vm2066, %v5308, %v6607
    %v7000 = vsel %vm2066, %v5309, %v6609
    %v7001 = vsel %vm2066, %v5310, %v6611
    %v7002 = vsel %vm2066, %v5311, %v6613
    %v7003 = vsel %vm2066, %v5312, %v6615
    %v7004 = vsel %vm2066, %v5313, %v6617
    %v7005 = vsel %vm2066, %v5314, %v6619
    %v7006 = vsel %vm2066, %v5315, %v6621
    %v7007 = vsel %vm2066, %v5316, %v6623
    %v7008 = vsel %vm2066, %v5339, %v6779
    %v7009 = vsel %vm2066, %v5341, %v6781
    %v7010 = vsel %vm5982, %v6988, %v6459
    %v7011 = vsel %vm5982, %v6989, %v6461
    %v7012 = vsel %vm5982, %v6990, %v6463
    %v7013 = vsel %vm5982, %v6991, %v6465
    %v7014 = vsel %vm5982, %v6992, %v6467
    %v7015 = vsel %vm5982, %v6993, %v6469
    %v7016 = vsel %vm5982, %v6994, %v6471
    %v7017 = vsel %vm5982, %v6995, %v6473
    %v7018 = vsel %vm5982, %v6996, %v6475
    %v7019 = vsel %vm5982, %v6997, %v6477
    %v7020 = vsel %vm5982, %v6998, %v6479
    %v7021 = vsel %vm5982, %v6999, %v6481
    %v7022 = vsel %vm5982, %v7000, %v6483
    %v7023 = vsel %vm5982, %v7001, %v6485
    %v7024 = vsel %vm5982, %v7002, %v6487
    %v7025 = vsel %vm5982, %v7003, %v6489
    %v7026 = vsel %vm5982, %v7004, %v6491
    %v7027 = vsel %vm5982, %v7005, %v6785
    %v7028 = vsel %vm5982, %v7006, %v6787
    %v7029 = vsel %vm5982, %v7007, %v6789
    %v7030 = vsel %vm5982, %v7008, %v6791
    %v7031 = vsel %vm5982, %v7009, %v6793
    %v7032 = vsel %vm6005, %v7010, %v6525
    %v7033 = vsel %vm6005, %v7011, %v6527
    %v7034 = vsel %vm6005, %v7012, %v6529
    %v7035 = vsel %vm6005, %v7013, %v6531
    %v7036 = vsel %vm6005, %v7014, %v6533
    %v7037 = vsel %vm6005, %v7015, %v6535
    %v7038 = vsel %vm6005, %v7016, %v6537
    %v7039 = vsel %vm6005, %v7017, %v6539
    %v7040 = vsel %vm6005, %v7018, %v6541
    %v7041 = vsel %vm6005, %v7019, %v6543
    %v7042 = vsel %vm6005, %v7020, %v6545
    %v7043 = vsel %vm6005, %v7021, %v6547
    %v7044 = vsel %vm6005, %v7022, %v6549
    %v7045 = vsel %vm6005, %v7023, %v6551
    %v7046 = vsel %vm6005, %v7024, %v6553
    %v7047 = vsel %vm6005, %v7025, %v6555
    %v7048 = vsel %vm6005, %v7026, %v6557
    %v7049 = vsel %vm6005, %v7027, %v6800
    %v7050 = vsel %vm6005, %v7028, %v6802
    %v7051 = vsel %vm6005, %v7029, %v6804
    %v7052 = vsel %vm6005, %v7030, %v6806
    %v7053 = vsel %vm6005, %v7031, %v6808
    %v7054 = vsel %vm2066, %v5293, %v6815
    %v7055 = vsel %vm2066, %v5346, %v6817
    %v7056 = vsel %vm2066, %v5347, %v6819
    %v7057 = vsel %vm2066, %v5348, %v6821
    %v7058 = vsel %vm2066, %v5349, %v6823
    %v7059 = vsel %vm2066, %v5350, %v6825
    %v7060 = vsel %vm2066, %v5352, %v6827
    %v7061 = vsel %vm5982, %v7054, %v6785
    %v7062 = vsel %vm5982, %v7055, %v6787
    %v7063 = vsel %vm5982, %v7056, %v6789
    %v7064 = vsel %vm5982, %v7057, %v6791
    %v7065 = vsel %vm5982, %v7058, %v6793
    %v7066 = vsel %vm5982, %v7059, %v6836
    %v7067 = vsel %vm5982, %v7060, %v6838
    %v7068 = vsel %vm6005, %v6885, %v6723
    %v7069 = vsel %vm6005, %v6886, %v6725
    %v7070 = vsel %vm6005, %v6887, %v6727
    %v7071 = vsel %vm6005, %v6888, %v6729
    %v7072 = vsel %vm6005, %v6889, %v6731
    %v7073 = vsel %vm6005, %v6890, %v6733
    %v7074 = vsel %vm6005, %v6891, %v6735
    %v7075 = vsel %vm6005, %v6892, %v6737
    %v7076 = vsel %vm6005, %v6893, %v6739
    %v7077 = vsel %vm6005, %v6894, %v6741
    %v7078 = vsel %vm6005, %v6895, %v6743
    %v7079 = vsel %vm6005, %v6896, %v6745
    %v7080 = vsel %vm6005, %v6897, %v6747
    %v7081 = vsel %vm6005, %v6898, %v6749
    %v7082 = vsel %vm6005, %v6899, %v6751
    %v7083 = vsel %vm6005, %v7061, %v6753
    %v7084 = vsel %vm6005, %v7062, %v6755
    %v7085 = vsel %vm6005, %v7063, %v6842
    %v7086 = vsel %vm6005, %v7064, %v6844
    %v7087 = vsel %vm6005, %v7065, %v6846
    %v7088 = vsel %vm6005, %v7066, %v6848
    %v7089 = vsel %vm6005, %v7067, %v6850
    %7090 = vrot.lane.b32.xlu0 %v5359, 32
    %v7091 = vpop.permute.xlu0 %7090
    %7092 = vrot.lane.b32.xlu0 %v5360, 32
    %v7093 = vpop.permute.xlu0 %7092
    %7094 = vrot.lane.b32.xlu0 %v5361, 32
    %v7095 = vpop.permute.xlu0 %7094
    %7096 = vrot.lane.b32.xlu0 %v5362, 32
    %v7097 = vpop.permute.xlu0 %7096
    %7098 = vrot.lane.b32.xlu0 %v5364, 32
    %v7099 = vpop.permute.xlu0 %7098
    %7105 = vrot.lane.b32.xlu0 %v5341, 64
    %v7106 = vpop.permute.xlu0 %7105
    %7107 = vrot.lane.b32.xlu0 %v5354, 64
    %v7108 = vpop.permute.xlu0 %7107
    %7109 = vrot.lane.b32.xlu0 %v5355, 64
    %v7110 = vpop.permute.xlu0 %7109
    %7111 = vrot.lane.b32.xlu0 %v5356, 64
    %v7112 = vpop.permute.xlu0 %7111
    %7113 = vrot.lane.b32.xlu0 %v5357, 64
    %v7114 = vpop.permute.xlu0 %7113
    %7115 = vrot.lane.b32.xlu0 %v5363, 64
    %v7116 = vpop.permute.xlu0 %7115
    %7117 = vrot.lane.b32.xlu0 %v5365, 64
    %v7118 = vpop.permute.xlu0 %7117
    %7127 = vrot.lane.b32.xlu0 %v5364, 96
    %v7128 = vpop.permute.xlu0 %7127
    %7129 = vrot.lane.b32.xlu0 %v6380, 96
    %v7130 = vpop.permute.xlu0 %7129
    %7133 = vrot.lane.b32.xlu0 %v5366, 32
    %v7134 = vpop.permute.xlu0 %7133
    %7135 = vrot.lane.b32.xlu0 %v5367, 32
    %v7136 = vpop.permute.xlu0 %7135
    %7137 = vrot.lane.b32.xlu0 %v5368, 32
    %v7138 = vpop.permute.xlu0 %7137
    %7139 = vrot.lane.b32.xlu0 %v5369, 32
    %v7140 = vpop.permute.xlu0 %7139
    %7141 = vrot.lane.b32.xlu0 %v5375, 32
    %v7142 = vpop.permute.xlu0 %7141
    %7148 = vrot.lane.b32.xlu0 %v5371, 64
    %v7149 = vpop.permute.xlu0 %7148
    %7150 = vrot.lane.b32.xlu0 %v5372, 64
    %v7151 = vpop.permute.xlu0 %7150
    %7152 = vrot.lane.b32.xlu0 %v5373, 64
    %v7153 = vpop.permute.xlu0 %7152
    %7154 = vrot.lane.b32.xlu0 %v5374, 64
    %v7155 = vpop.permute.xlu0 %7154
    %7156 = vrot.lane.b32.xlu0 %v5376, 64
    %v7157 = vpop.permute.xlu0 %7156
    %7164 = vrot.lane.b32.xlu0 %v5353, 96
    %v7165 = vpop.permute.xlu0 %7164
    %7166 = vrot.lane.b32.xlu0 %v5366, 96
    %v7167 = vpop.permute.xlu0 %7166
    %7168 = vrot.lane.b32.xlu0 %v5367, 96
    %v7169 = vpop.permute.xlu0 %7168
    %7170 = vrot.lane.b32.xlu0 %v5368, 96
    %v7171 = vpop.permute.xlu0 %7170
    %7172 = vrot.lane.b32.xlu0 %v5369, 96
    %v7173 = vpop.permute.xlu0 %7172
    %7174 = vrot.lane.b32.xlu0 %v5375, 96
    %v7175 = vpop.permute.xlu0 %7174
    %7176 = vrot.lane.b32.xlu0 %v5377, 96
    %v7177 = vpop.permute.xlu0 %7176
    %v7185 = vsel %vm2066, %v5354, %v7091
    %v7186 = vsel %vm2066, %v5355, %v7093
    %v7187 = vsel %vm2066, %v5356, %v7095
    %v7188 = vsel %vm2066, %v5357, %v7097
    %v7189 = vsel %vm2066, %v5363, %v7099
    %v7190 = vsel %vm5982, %v6993, %v6661
    %v7191 = vsel %vm5982, %v6994, %v6663
    %v7192 = vsel %vm5982, %v6995, %v6665
    %v7193 = vsel %vm5982, %v6996, %v6667
    %v7194 = vsel %vm5982, %v6997, %v6669
    %v7195 = vsel %vm5982, %v6998, %v6671
    %v7196 = vsel %vm5982, %v6999, %v6673
    %v7197 = vsel %vm5982, %v7000, %v6675
    %v7198 = vsel %vm5982, %v7001, %v6677
    %v7199 = vsel %vm5982, %v7002, %v6679
    %v7200 = vsel %vm5982, %v7003, %v6681
    %v7201 = vsel %vm5982, %v7004, %v6683
    %v7202 = vsel %vm5982, %v7005, %v6685
    %v7203 = vsel %vm5982, %v7006, %v6687
    %v7204 = vsel %vm5982, %v7007, %v6689
    %v7205 = vsel %vm5982, %v7008, %v7106
    %v7206 = vsel %vm5982, %v7009, %v7108
    %v7207 = vsel %vm5982, %v7185, %v7110
    %v7208 = vsel %vm5982, %v7186, %v7112
    %v7209 = vsel %vm5982, %v7187, %v7114
    %v7210 = vsel %vm5982, %v7188, %v7116
    %v7211 = vsel %vm5982, %v7189, %v7118
    %v7212 = vsel %vm6005, %v7190, %v6727
    %v7213 = vsel %vm6005, %v7191, %v6729
    %v7214 = vsel %vm6005, %v7192, %v6731
    %v7215 = vsel %vm6005, %v7193, %v6733
    %v7216 = vsel %vm6005, %v7194, %v6735
    %v7217 = vsel %vm6005, %v7195, %v6737
    %v7218 = vsel %vm6005, %v7196, %v6739
    %v7219 = vsel %vm6005, %v7197, %v6741
    %v7220 = vsel %vm6005, %v7198, %v6743
    %v7221 = vsel %vm6005, %v7199, %v6745
    %v7222 = vsel %vm6005, %v7200, %v6747
    %v7223 = vsel %vm6005, %v7201, %v6749
    %v7224 = vsel %vm6005, %v7202, %v6751
    %v7225 = vsel %vm6005, %v7203, %v6753
    %v7226 = vsel %vm6005, %v7204, %v6755
    %v7227 = vsel %vm6005, %v7205, %v6842
    %v7228 = vsel %vm6005, %v7206, %v6844
    %v7229 = vsel %vm6005, %v7207, %v6846
    %v7230 = vsel %vm6005, %v7208, %v6848
    %v7231 = vsel %vm6005, %v7209, %v6850
    %v7232 = vsel %vm6005, %v7210, %v7128
    %v7233 = vsel %vm6005, %v7211, %v7130
    %v7234 = vsel %vm2066, %v5370, %v7134
    %v7235 = vsel %vm2066, %v5371, %v7136
    %v7236 = vsel %vm2066, %v5372, %v7138
    %v7237 = vsel %vm2066, %v5373, %v7140
    %v7238 = vsel %vm2066, %v5374, %v7142
    %v7239 = vsel %vm5982, %v7234, %v7149
    %v7240 = vsel %vm5982, %v7235, %v7151
    %v7241 = vsel %vm5982, %v7236, %v7153
    %v7242 = vsel %vm5982, %v7237, %v7155
    %v7243 = vsel %vm5982, %v7238, %v7157
    %v7244 = vsel %vm6005, %v7061, %v6800
    %v7245 = vsel %vm6005, %v7062, %v6802
    %v7246 = vsel %vm6005, %v7063, %v6804
    %v7247 = vsel %vm6005, %v7064, %v6806
    %v7248 = vsel %vm6005, %v7065, %v6808
    %v7249 = vsel %vm6005, %v7066, %v7165
    %v7250 = vsel %vm6005, %v7067, %v7167
    %v7251 = vsel %vm6005, %v7239, %v7169
    %v7252 = vsel %vm6005, %v7240, %v7171
    %v7253 = vsel %vm6005, %v7241, %v7173
    %v7254 = vsel %vm6005, %v7242, %v7175
    %v7255 = vsel %vm6005, %v7243, %v7177
    %v7256 = vld [vmem:[#allocation2 + $0x330] sm:$0xff]
    %v7257 = vld [vmem:[#allocation2 + $0x338] sm:$0xff]
    %v7258 = vld [vmem:[#allocation2 + $0x340] sm:$0xff]
    %v7259 = vld [vmem:[#allocation2 + $0x348] sm:$0xff]
    %v7260 = vld [vmem:[#allocation2 + $0x450] sm:$0xff]
    %v7261 = vld [vmem:[#allocation2 + $0x458] sm:$0xff]
    %v7262 = vld [vmem:[#allocation2 + $0x460] sm:$0xff]
    %v7263 = vld [vmem:[#allocation2 + $0x468] sm:$0xff]
    %v7264 = vld [vmem:[#allocation2 + $0x350] sm:$0xff]
    %v7265 = vld [vmem:[#allocation2 + $0x470] sm:$0xff]
    %v7266 = vld [vmem:[#allocation2 + $0x358] sm:$0xff]
    %v7267 = vsel %vm2066, %v5295, %v6581
    %v7268 = vsel %vm2066, %v5296, %v6583
    %v7269 = vsel %vm5982, %v7267, %v6647
    %v7270 = vsel %vm5982, %v7268, %v6649
    %v7271 = vsel %vm5982, %v6988, %v6651
    %v7272 = vsel %vm5982, %v6989, %v6653
    %v7273 = vsel %vm5982, %v6990, %v6655
    %v7274 = vsel %vm5982, %v6991, %v6657
    %v7275 = vsel %vm5982, %v6992, %v6659
    %v7276 = vsel %vm6005, %v7269, %v6713
    %v7277 = vsel %vm6005, %v7270, %v6715
    %v7278 = vsel %vm6005, %v7271, %v6717
    %v7279 = vsel %vm6005, %v7272, %v6719
    %v7280 = vsel %vm6005, %v7273, %v6721
    %v7281 = vsel %vm6005, %v7274, %v6723
    %v7282 = vsel %vm6005, %v7275, %v6725
    %v7283 = vsel %vm2066, %v5297, %v6393
    %v7284 = vsel %vm2066, %v5298, %v6395
    %v7285 = vsel %vm2066, %v5299, %v6397
    %v7286 = vsel %vm2066, %v5300, %v6399
    %v7287 = vsel %vm2066, %v5301, %v6401
    %v7288 = vsel %vm2066, %v5302, %v6403
    %v7289 = vsel %vm2066, %v5303, %v6405
    %v7290 = vsel %vm2066, %v5304, %v6407
    %v7291 = vsel %vm2066, %v5305, %v6409
    %v7292 = vsel %vm2066, %v5306, %v6411
    %v7293 = vsel %vm2066, %v5307, %v6413
    %v7294 = vsel %vm2066, %v5308, %v6415
    %v7295 = vsel %vm2066, %v5309, %v6417
    %v7296 = vsel %vm2066, %v5310, %v6419
    %v7297 = vsel %vm2066, %v5311, %v6421
    %v7298 = vsel %vm2066, %v5312, %v6423
    %v7299 = vsel %vm2066, %v5313, %v6425
    %v7300 = vsel %vm2066, %v5314, %v6815
    %v7301 = vsel %vm2066, %v5315, %v6817
    %v7302 = vsel %vm2066, %v5316, %v6819
    %v7303 = vsel %vm2066, %v5339, %v6821
    %v7304 = vsel %vm2066, %v5341, %v6823
    %v7305 = vsel %vm5982, %v7283, %v6459
    %v7306 = vsel %vm5982, %v7284, %v6461
    %v7307 = vsel %vm5982, %v7285, %v6463
    %v7308 = vsel %vm5982, %v7286, %v6465
    %v7309 = vsel %vm5982, %v7287, %v6467
    %v7310 = vsel %vm5982, %v7288, %v6469
    %v7311 = vsel %vm5982, %v7289, %v6471
    %v7312 = vsel %vm5982, %v7290, %v6473
    %v7313 = vsel %vm5982, %v7291, %v6475
    %v7314 = vsel %vm5982, %v7292, %v6477
    %v7315 = vsel %vm5982, %v7293, %v6479
    %v7316 = vsel %vm5982, %v7294, %v6481
    %v7317 = vsel %vm5982, %v7295, %v6483
    %v7318 = vsel %vm5982, %v7296, %v6485
    %v7319 = vsel %vm5982, %v7297, %v6487
    %v7320 = vsel %vm5982, %v7298, %v6489
    %v7321 = vsel %vm5982, %v7299, %v6491
    %v7322 = vsel %vm5982, %v7300, %v6785
    %v7323 = vsel %vm5982, %v7301, %v6787
    %v7324 = vsel %vm5982, %v7302, %v6789
    %v7325 = vsel %vm5982, %v7303, %v6791
    %v7326 = vsel %vm5982, %v7304, %v6793
    %v7327 = vsel %vm6005, %v7305, %v6525
    %v7328 = vsel %vm6005, %v7306, %v6527
    %v7329 = vsel %vm6005, %v7307, %v6529
    %v7330 = vsel %vm6005, %v7308, %v6531
    %v7331 = vsel %vm6005, %v7309, %v6533
    %v7332 = vsel %vm6005, %v7310, %v6535
    %v7333 = vsel %vm6005, %v7311, %v6537
    %v7334 = vsel %vm6005, %v7312, %v6539
    %v7335 = vsel %vm6005, %v7313, %v6541
    %v7336 = vsel %vm6005, %v7314, %v6543
    %v7337 = vsel %vm6005, %v7315, %v6545
    %v7338 = vsel %vm6005, %v7316, %v6547
    %v7339 = vsel %vm6005, %v7317, %v6549
    %v7340 = vsel %vm6005, %v7318, %v6551
    %v7341 = vsel %vm6005, %v7319, %v6553
    %v7342 = vsel %vm6005, %v7320, %v6555
    %v7343 = vsel %vm6005, %v7321, %v6557
    %v7344 = vsel %vm6005, %v7322, %v6800
    %v7345 = vsel %vm6005, %v7323, %v6802
    %v7346 = vsel %vm6005, %v7324, %v6804
    %v7347 = vsel %vm6005, %v7325, %v6806
    %v7348 = vsel %vm6005, %v7326, %v6808
    %v7349 = vsel %vm5982, %v6863, %v6657
    %v7350 = vsel %vm5982, %v6864, %v6659
    %v7351 = vsel %vm5982, %v6865, %v6661
    %v7352 = vsel %vm5982, %v6866, %v6663
    %v7353 = vsel %vm5982, %v6867, %v6665
    %v7354 = vsel %vm5982, %v6868, %v6667
    %v7355 = vsel %vm5982, %v6869, %v6669
    %v7356 = vsel %vm5982, %v6870, %v6671
    %v7357 = vsel %vm5982, %v6871, %v6673
    %v7358 = vsel %vm5982, %v6872, %v6675
    %v7359 = vsel %vm5982, %v6873, %v6677
    %v7360 = vsel %vm5982, %v6874, %v6679
    %v7361 = vsel %vm5982, %v6875, %v6681
    %v7362 = vsel %vm5982, %v6876, %v6683
    %v7363 = vsel %vm5982, %v6877, %v6685
    %v7364 = vsel %vm5982, %v7054, %v6687
    %v7365 = vsel %vm5982, %v7055, %v6689
    %v7366 = vsel %vm5982, %v7056, %v7106
    %v7367 = vsel %vm5982, %v7057, %v7108
    %v7368 = vsel %vm5982, %v7058, %v7110
    %v7369 = vsel %vm5982, %v7059, %v7112
    %v7370 = vsel %vm5982, %v7060, %v7114
    %v7371 = vsel %vm6005, %v7349, %v6723
    %v7372 = vsel %vm6005, %v7350, %v6725
    %v7373 = vsel %vm6005, %v7351, %v6727
    %v7374 = vsel %vm6005, %v7352, %v6729
    %v7375 = vsel %vm6005, %v7353, %v6731
    %v7376 = vsel %vm6005, %v7354, %v6733
    %v7377 = vsel %vm6005, %v7355, %v6735
    %v7378 = vsel %vm6005, %v7356, %v6737
    %v7379 = vsel %vm6005, %v7357, %v6739
    %v7380 = vsel %vm6005, %v7358, %v6741
    %v7381 = vsel %vm6005, %v7359, %v6743
    %v7382 = vsel %vm6005, %v7360, %v6745
    %v7383 = vsel %vm6005, %v7361, %v6747
    %v7384 = vsel %vm6005, %v7362, %v6749
    %v7385 = vsel %vm6005, %v7363, %v6751
    %v7386 = vsel %vm6005, %v7364, %v6753
    %v7387 = vsel %vm6005, %v7365, %v6755
    %v7388 = vsel %vm6005, %v7366, %v6842
    %v7389 = vsel %vm6005, %v7367, %v6844
    %v7390 = vsel %vm6005, %v7368, %v6846
    %v7391 = vsel %vm6005, %v7369, %v6848
    %v7392 = vsel %vm6005, %v7370, %v6850
    %v7393 = vsel %vm6005, %v7190, %v6535
    %v7394 = vsel %vm6005, %v7191, %v6537
    %v7395 = vsel %vm6005, %v7192, %v6539
    %v7396 = vsel %vm6005, %v7193, %v6541
    %v7397 = vsel %vm6005, %v7194, %v6543
    %v7398 = vsel %vm6005, %v7195, %v6545
    %v7399 = vsel %vm6005, %v7196, %v6547
    %v7400 = vsel %vm6005, %v7197, %v6549
    %v7401 = vsel %vm6005, %v7198, %v6551
    %v7402 = vsel %vm6005, %v7199, %v6553
    %v7403 = vsel %vm6005, %v7200, %v6555
    %v7404 = vsel %vm6005, %v7201, %v6557
    %v7405 = vsel %vm6005, %v7202, %v6800
    %v7406 = vsel %vm6005, %v7203, %v6802
    %v7407 = vsel %vm6005, %v7204, %v6804
    %v7408 = vsel %vm6005, %v7205, %v6806
    %v7409 = vsel %vm6005, %v7206, %v6808
    %v7410 = vsel %vm6005, %v7207, %v7165
    %v7411 = vsel %vm6005, %v7208, %v7167
    %v7412 = vsel %vm6005, %v7209, %v7169
    %v7413 = vsel %vm6005, %v7210, %v7171
    %v7414 = vsel %vm6005, %v7211, %v7173
    %7419 = vrot.lane.b32.xlu0 %v6380, 32
    %v7420 = vpop.permute.xlu0 %7419
    %7421 = vrot.lane.b32.xlu0 %v7260, 32
    %v7422 = vpop.permute.xlu0 %7421
    %7423 = vrot.lane.b32.xlu0 %v7261, 32
    %v7424 = vpop.permute.xlu0 %7423
    %7425 = vrot.lane.b32.xlu0 %v7262, 32
    %v7426 = vpop.permute.xlu0 %7425
    %7427 = vrot.lane.b32.xlu0 %v7263, 32
    %v7428 = vpop.permute.xlu0 %7427
    %7439 = vrot.lane.b32.xlu0 %v7256, 64
    %v7440 = vpop.permute.xlu0 %7439
    %7441 = vrot.lane.b32.xlu0 %v7257, 64
    %v7442 = vpop.permute.xlu0 %7441
    %7443 = vrot.lane.b32.xlu0 %v7258, 64
    %v7444 = vpop.permute.xlu0 %7443
    %7445 = vrot.lane.b32.xlu0 %v7259, 64
    %v7446 = vpop.permute.xlu0 %7445
    %7447 = vrot.lane.b32.xlu0 %v7264, 64
    %v7448 = vpop.permute.xlu0 %7447
    %7455 = vrot.lane.b32.xlu0 %v7260, 96
    %v7456 = vpop.permute.xlu0 %7455
    %7457 = vrot.lane.b32.xlu0 %v7261, 96
    %v7458 = vpop.permute.xlu0 %7457
    %7459 = vrot.lane.b32.xlu0 %v7262, 96
    %v7460 = vpop.permute.xlu0 %7459
    %7461 = vrot.lane.b32.xlu0 %v7263, 96
    %v7462 = vpop.permute.xlu0 %7461
    %7463 = vrot.lane.b32.xlu0 %v7265, 96
    %v7464 = vpop.permute.xlu0 %7463
    %v7470 = vsel %vm2066, %v5365, %v7420
    %v7471 = vsel %vm2066, %v7256, %v7422
    %v7472 = vsel %vm2066, %v7257, %v7424
    %v7473 = vsel %vm2066, %v7258, %v7426
    %v7474 = vsel %vm2066, %v7259, %v7428
    %v7475 = vsel %vm5982, %v7470, %v7440
    %v7476 = vsel %vm5982, %v7471, %v7442
    %v7477 = vsel %vm5982, %v7472, %v7444
    %v7478 = vsel %vm5982, %v7473, %v7446
    %v7479 = vsel %vm5982, %v7474, %v7448
    %v7480 = vsel %vm6005, %v7475, %v7456
    %v7481 = vsel %vm6005, %v7476, %v7458
    %v7482 = vsel %vm6005, %v7477, %v7460
    %v7483 = vsel %vm6005, %v7478, %v7462
    %v7484 = vsel %vm6005, %v7479, %v7464
    %v7485 = vld [vmem:[#allocation2 + $0x478] sm:$0xff]
    %7486 = vrot.lane.b32.xlu0 %v5365, 32
    %v7487 = vpop.permute.xlu0 %7486
    %7489 = vrot.lane.b32.xlu0 %v6380, 64
    %v7490 = vpop.permute.xlu0 %7489
    %v7492 = vsel %vm2066, %v5317, %v5646
    %v7493 = vsel %vm5982, %v7492, %v5734
    %v7494 = vsel %vm5982, %v6094, %v5736
    %v7495 = vsel %vm5982, %v6095, %v5738
    %v7496 = vsel %vm5982, %v6096, %v5740
    %v7497 = vsel %vm5982, %v6097, %v5742
    %v7498 = vsel %vm5982, %v6098, %v5744
    %v7499 = vsel %vm6005, %v7493, %v5801
    %v7500 = vsel %vm6005, %v7494, %v5803
    %v7501 = vsel %vm6005, %v7495, %v5805
    %v7502 = vsel %vm6005, %v7496, %v5807
    %v7503 = vsel %vm6005, %v7497, %v5809
    %v7504 = vsel %vm6005, %v7498, %v5811
    %v7505 = vsel %vm2066, %v5319, %v5413
    %v7506 = vsel %vm2066, %v5320, %v5415
    %v7507 = vsel %vm2066, %v5321, %v5417
    %v7508 = vsel %vm2066, %v5322, %v5419
    %v7509 = vsel %vm2066, %v5323, %v5421
    %v7510 = vsel %vm2066, %v5324, %v5423
    %v7511 = vsel %vm2066, %v5325, %v5425
    %v7512 = vsel %vm2066, %v5326, %v5427
    %v7513 = vsel %vm2066, %v5327, %v5429
    %v7514 = vsel %vm2066, %v5328, %v5431
    %v7515 = vsel %vm2066, %v5329, %v5433
    %v7516 = vsel %vm2066, %v5330, %v5435
    %v7517 = vsel %vm2066, %v5331, %v5437
    %v7518 = vsel %vm2066, %v5332, %v5439
    %v7519 = vsel %vm2066, %v5333, %v5441
    %v7520 = vsel %vm2066, %v5334, %v5443
    %v7521 = vsel %vm2066, %v5335, %v5913
    %v7522 = vsel %vm2066, %v5336, %v5915
    %v7523 = vsel %vm2066, %v5337, %v5917
    %v7524 = vsel %vm2066, %v5338, %v5919
    %v7525 = vsel %vm2066, %v5340, %v5921
    %v7526 = vsel %vm2066, %v5358, %v5923
    %v7527 = vsel %vm5982, %v7505, %v5501
    %v7528 = vsel %vm5982, %v7506, %v5503
    %v7529 = vsel %vm5982, %v7507, %v5505
    %v7530 = vsel %vm5982, %v7508, %v5507
    %v7531 = vsel %vm5982, %v7509, %v5509
    %v7532 = vsel %vm5982, %v7510, %v5511
    %v7533 = vsel %vm5982, %v7511, %v5513
    %v7534 = vsel %vm5982, %v7512, %v5515
    %v7535 = vsel %vm5982, %v7513, %v5517
    %v7536 = vsel %vm5982, %v7514, %v5519
    %v7537 = vsel %vm5982, %v7515, %v5521
    %v7538 = vsel %vm5982, %v7516, %v5523
    %v7539 = vsel %vm5982, %v7517, %v5525
    %v7540 = vsel %vm5982, %v7518, %v5527
    %v7541 = vsel %vm5982, %v7519, %v5529
    %v7542 = vsel %vm5982, %v7520, %v5531
    %v7543 = vsel %vm5982, %v7521, %v5877
    %v7544 = vsel %vm5982, %v7522, %v5879
    %v7545 = vsel %vm5982, %v7523, %v5881
    %v7546 = vsel %vm5982, %v7524, %v5883
    %v7547 = vsel %vm5982, %v7525, %v5885
    %v7548 = vsel %vm5982, %v7526, %v5936
    %v7549 = vsel %vm6005, %v7527, %v5568
    %v7550 = vsel %vm6005, %v7528, %v5570
    %v7551 = vsel %vm6005, %v7529, %v5572
    %v7552 = vsel %vm6005, %v7530, %v5574
    %v7553 = vsel %vm6005, %v7531, %v5576
    %v7554 = vsel %vm6005, %v7532, %v5578
    %v7555 = vsel %vm6005, %v7533, %v5580
    %v7556 = vsel %vm6005, %v7534, %v5582
    %v7557 = vsel %vm6005, %v7535, %v5584
    %v7558 = vsel %vm6005, %v7536, %v5586
    %v7559 = vsel %vm6005, %v7537, %v5588
    %v7560 = vsel %vm6005, %v7538, %v5590
    %v7561 = vsel %vm6005, %v7539, %v5592
    %v7562 = vsel %vm6005, %v7540, %v5594
    %v7563 = vsel %vm6005, %v7541, %v5596
    %v7564 = vsel %vm6005, %v7542, %v5598
    %v7565 = vsel %vm6005, %v7543, %v5897
    %v7566 = vsel %vm6005, %v7544, %v5899
    %v7567 = vsel %vm6005, %v7545, %v5901
    %v7568 = vsel %vm6005, %v7546, %v5903
    %v7569 = vsel %vm6005, %v7547, %v5905
    %v7570 = vsel %vm6005, %v7548, %v6289
    %v7571 = vsel %vm5982, %v5968, %v5744
    %v7572 = vsel %vm5982, %v5969, %v5746
    %v7573 = vsel %vm5982, %v5970, %v5748
    %v7574 = vsel %vm5982, %v5971, %v5750
    %v7575 = vsel %vm5982, %v5972, %v5752
    %v7576 = vsel %vm5982, %v5973, %v5754
    %v7577 = vsel %vm5982, %v5974, %v5756
    %v7578 = vsel %vm5982, %v5975, %v5758
    %v7579 = vsel %vm5982, %v5976, %v5760
    %v7580 = vsel %vm5982, %v5977, %v5762
    %v7581 = vsel %vm5982, %v5978, %v5764
    %v7582 = vsel %vm5982, %v5979, %v5766
    %v7583 = vsel %vm5982, %v5980, %v5768
    %v7584 = vsel %vm5982, %v5981, %v5770
    %v7585 = vsel %vm5982, %v6160, %v5772
    %v7586 = vsel %vm5982, %v6161, %v5774
    %v7587 = vsel %vm5982, %v6162, %v6220
    %v7588 = vsel %vm5982, %v6163, %v6222
    %v7589 = vsel %vm5982, %v6164, %v6224
    %v7590 = vsel %vm5982, %v6165, %v6226
    %v7591 = vsel %vm5982, %v6166, %v6228
    %v7592 = vsel %vm5982, %v6358, %v6230
    %v7593 = vsel %vm6005, %v7571, %v5811
    %v7594 = vsel %vm6005, %v7572, %v5813
    %v7595 = vsel %vm6005, %v7573, %v5815
    %v7596 = vsel %vm6005, %v7574, %v5817
    %v7597 = vsel %vm6005, %v7575, %v5819
    %v7598 = vsel %vm6005, %v7576, %v5821
    %v7599 = vsel %vm6005, %v7577, %v5823
    %v7600 = vsel %vm6005, %v7578, %v5825
    %v7601 = vsel %vm6005, %v7579, %v5827
    %v7602 = vsel %vm6005, %v7580, %v5829
    %v7603 = vsel %vm6005, %v7581, %v5831
    %v7604 = vsel %vm6005, %v7582, %v5833
    %v7605 = vsel %vm6005, %v7583, %v5835
    %v7606 = vsel %vm6005, %v7584, %v5837
    %v7607 = vsel %vm6005, %v7585, %v5839
    %v7608 = vsel %vm6005, %v7586, %v5841
    %v7609 = vsel %vm6005, %v7587, %v5946
    %v7610 = vsel %vm6005, %v7588, %v5948
    %v7611 = vsel %vm6005, %v7589, %v5950
    %v7612 = vsel %vm6005, %v7590, %v5952
    %v7613 = vsel %vm6005, %v7591, %v5954
    %v7614 = vsel %vm6005, %v7592, %v6242
    %v7615 = vsel %vm2066, %v5364, %v7487
    %v7616 = vsel %vm5982, %v7615, %v7490
    %v7617 = vsel %vm6005, %v6315, %v5578
    %v7618 = vsel %vm6005, %v6316, %v5580
    %v7619 = vsel %vm6005, %v6317, %v5582
    %v7620 = vsel %vm6005, %v6318, %v5584
    %v7621 = vsel %vm6005, %v6319, %v5586
    %v7622 = vsel %vm6005, %v6320, %v5588
    %v7623 = vsel %vm6005, %v6321, %v5590
    %v7624 = vsel %vm6005, %v6322, %v5592
    %v7625 = vsel %vm6005, %v6323, %v5594
    %v7626 = vsel %vm6005, %v6324, %v5596
    %v7627 = vsel %vm6005, %v6325, %v5598
    %v7628 = vsel %vm6005, %v6326, %v5897
    %v7629 = vsel %vm6005, %v6327, %v5899
    %v7630 = vsel %vm6005, %v6328, %v5901
    %v7631 = vsel %vm6005, %v6329, %v5903
    %v7632 = vsel %vm6005, %v6330, %v5905
    %v7633 = vsel %vm6005, %v6331, %v6289
    %v7634 = vsel %vm6005, %v6332, %v6291
    %v7635 = vsel %vm6005, %v6333, %v6293
    %v7636 = vsel %vm6005, %v6334, %v6295
    %v7637 = vsel %vm6005, %v6335, %v6297
    %v7638 = vsel %vm6005, %v7616, %v6299
    %7639 = vrot.lane.b32.xlu0 %v5376, 32
    %v7640 = vpop.permute.xlu0 %7639
    %7642 = vrot.lane.b32.xlu0 %v5377, 64
    %v7643 = vpop.permute.xlu0 %7642
    %7646 = vrot.lane.b32.xlu0 %v6381, 96
    %v7647 = vpop.permute.xlu0 %7646
    %7649 = vrot.lane.b32.xlu0 %v7256, 32
    %v7650 = vpop.permute.xlu0 %7649
    %7651 = vrot.lane.b32.xlu0 %v7257, 32
    %v7652 = vpop.permute.xlu0 %7651
    %7653 = vrot.lane.b32.xlu0 %v7258, 32
    %v7654 = vpop.permute.xlu0 %7653
    %7655 = vrot.lane.b32.xlu0 %v7259, 32
    %v7656 = vpop.permute.xlu0 %7655
    %7657 = vrot.lane.b32.xlu0 %v7264, 32
    %v7658 = vpop.permute.xlu0 %7657
    %7664 = vrot.lane.b32.xlu0 %v7260, 64
    %v7665 = vpop.permute.xlu0 %7664
    %7666 = vrot.lane.b32.xlu0 %v7261, 64
    %v7667 = vpop.permute.xlu0 %7666
    %7668 = vrot.lane.b32.xlu0 %v7262, 64
    %v7669 = vpop.permute.xlu0 %7668
    %7670 = vrot.lane.b32.xlu0 %v7263, 64
    %v7671 = vpop.permute.xlu0 %7670
    %7672 = vrot.lane.b32.xlu0 %v7265, 64
    %v7673 = vpop.permute.xlu0 %7672
    %7680 = vrot.lane.b32.xlu0 %v7256, 96
    %v7681 = vpop.permute.xlu0 %7680
    %7682 = vrot.lane.b32.xlu0 %v7257, 96
    %v7683 = vpop.permute.xlu0 %7682
    %7684 = vrot.lane.b32.xlu0 %v7258, 96
    %v7685 = vpop.permute.xlu0 %7684
    %7686 = vrot.lane.b32.xlu0 %v7259, 96
    %v7687 = vpop.permute.xlu0 %7686
    %7688 = vrot.lane.b32.xlu0 %v7264, 96
    %v7689 = vpop.permute.xlu0 %7688
    %7690 = vrot.lane.b32.xlu0 %v7266, 96
    %v7691 = vpop.permute.xlu0 %7690
    %v7698 = vsel %vm2066, %v5375, %v7640
    %v7699 = vsel %vm5982, %v7698, %v7643
    %v7700 = vsel %vm6005, %v7699, %v7647
    %v7701 = vsel %vm2066, %v6380, %v7650
    %v7702 = vsel %vm2066, %v7260, %v7652
    %v7703 = vsel %vm2066, %v7261, %v7654
    %v7704 = vsel %vm2066, %v7262, %v7656
    %v7705 = vsel %vm2066, %v7263, %v7658
    %v7706 = vsel %vm5982, %v7701, %v7665
    %v7707 = vsel %vm5982, %v7702, %v7667
    %v7708 = vsel %vm5982, %v7703, %v7669
    %v7709 = vsel %vm5982, %v7704, %v7671
    %v7710 = vsel %vm5982, %v7705, %v7673
    %v7711 = vsel %vm6005, %v7616, %v7681
    %v7712 = vsel %vm6005, %v7706, %v7683
    %v7713 = vsel %vm6005, %v7707, %v7685
    %v7714 = vsel %vm6005, %v7708, %v7687
    %v7715 = vsel %vm6005, %v7709, %v7689
    %v7716 = vsel %vm6005, %v7710, %v7691
    %v7717 = vpack.c.bf16 %v6007, %v6006
    %v7718 = vpack.c.bf16 %v6073, %v6072
    %v7719 = vpack.c.bf16 %v6139, %v6138
    %v7720 = vpack.c.bf16 %v6175, %v6174
    %v7721 = vpack.c.bf16 %v6337, %v6336
    %v7722 = vpack.c.bf16 %v6019, %v6018
    %v7723 = vpack.c.bf16 %v5263, %v5262
    %v7724 = vpack.c.bf16 %v6009, %v6008
    %v7725 = vpack.c.bf16 %v6075, %v6074
    %v7726 = vpack.c.bf16 %v6141, %v6140
    %v7727 = vpack.c.bf16 %v6177, %v6176
    %v7728 = vpack.c.bf16 %v6339, %v6338
    %v7729 = vpack.c.bf16 %v6021, %v6020
    %v7730 = vpack.c.bf16 %v5265, %v5264
    %v7731 = vpack.c.bf16 %v6011, %v6010
    %v7732 = vpack.c.bf16 %v6077, %v6076
    %v7733 = vpack.c.bf16 %v6143, %v6142
    %v7734 = vpack.c.bf16 %v6179, %v6178
    %v7735 = vpack.c.bf16 %v6341, %v6340
    %v7736 = vpack.c.bf16 %v6023, %v6022
    %v7737 = vpack.c.bf16 %v5267, %v5266
    %v7738 = vpack.c.bf16 %v6013, %v6012
    %v7739 = vpack.c.bf16 %v6079, %v6078
    %v7740 = vpack.c.bf16 %v6145, %v6144
    %v7741 = vpack.c.bf16 %v6181, %v6180
    %v7742 = vpack.c.bf16 %v6343, %v6342
    %v7743 = vpack.c.bf16 %v6025, %v6024
    %v7744 = vpack.c.bf16 %v5269, %v5268
    %v7745 = vpack.c.bf16 %v6015, %v6014
    %v7746 = vpack.c.bf16 %v6081, %v6080
    %v7747 = vpack.c.bf16 %v6147, %v6146
    %v7748 = vpack.c.bf16 %v6183, %v6182
    %v7749 = vpack.c.bf16 %v6345, %v6344
    %v7750 = vpack.c.bf16 %v6027, %v6026
    %v7751 = vpack.c.bf16 %v5294, %v5292
    %v7752 = vpack.c.bf16 %v6017, %v6016
    %v7753 = vpack.c.bf16 %v6083, %v6082
    %v7754 = vpack.c.bf16 %v6149, %v6148
    %v7755 = vpack.c.bf16 %v6185, %v6184
    %v7756 = vpack.c.bf16 %v6347, %v6346
    %v7757 = vpack.c.bf16 %v6369, %v6368
    %v7758 = vpack.c.bf16 %v5343, %v5342
    %v7759 = vpack.c.bf16 %v6085, %v6084
    %v7760 = vpack.c.bf16 %v6151, %v6150
    %v7761 = vpack.c.bf16 %v6187, %v6186
    %v7762 = vpack.c.bf16 %v6349, %v6348
    %v7763 = vpack.c.bf16 %v6371, %v6370
    %v7764 = vpack.c.bf16 %v5345, %v5344
    %v7765 = vpack.c.bf16 %v6087, %v6086
    %v7766 = vpack.c.bf16 %v6153, %v6152
    %v7767 = vpack.c.bf16 %v6189, %v6188
    %v7768 = vpack.c.bf16 %v6351, %v6350
    %v7769 = vpack.c.bf16 %v6373, %v6372
    %v7770 = vpack.c.bf16 %v5353, %v5351
    %v7771 = vpack.c.bf16 %v6089, %v6088
    %v7772 = vpack.c.bf16 %v6155, %v6154
    %v7773 = vpack.c.bf16 %v6191, %v6190
    %v7774 = vpack.c.bf16 %v6353, %v6352
    %v7775 = vpack.c.bf16 %v6375, %v6374
    %v7776 = vpack.c.bf16 %v5367, %v5366
    %v7777 = vpack.c.bf16 %v6091, %v6090
    %v7778 = vpack.c.bf16 %v6157, %v6156
    %v7779 = vpack.c.bf16 %v6193, %v6192
    %v7780 = vpack.c.bf16 %v6355, %v6354
    %v7781 = vpack.c.bf16 %v6377, %v6376
    %v7782 = vpack.c.bf16 %v5369, %v5368
    %v7783 = vpack.c.bf16 %v6093, %v6092
    %v7784 = vpack.c.bf16 %v6159, %v6158
    %v7785 = vpack.c.bf16 %v6195, %v6194
    %v7786 = vpack.c.bf16 %v6357, %v6356
    %v7787 = vpack.c.bf16 %v6379, %v6378
    %v7788 = vpack.c.bf16 %v5377, %v5375
    %v7789 = vpack.c.bf16 %v6901, %v6900
    %v7790 = vpack.c.bf16 %v6967, %v6966
    %v7791 = vpack.c.bf16 %v7033, %v7032
    %v7792 = vpack.c.bf16 %v7069, %v7068
    %v7793 = vpack.c.bf16 %v7213, %v7212
    %v7794 = vpack.c.bf16 %v6913, %v6912
    %v7795 = vpack.c.bf16 %v5285, %v5284
    %v7796 = vpack.c.bf16 %v6903, %v6902
    %v7797 = vpack.c.bf16 %v6969, %v6968
    %v7798 = vpack.c.bf16 %v7035, %v7034
    %v7799 = vpack.c.bf16 %v7071, %v7070
    %v7800 = vpack.c.bf16 %v7215, %v7214
    %v7801 = vpack.c.bf16 %v6915, %v6914
    %v7802 = vpack.c.bf16 %v5287, %v5286
    %v7803 = vpack.c.bf16 %v6905, %v6904
    %v7804 = vpack.c.bf16 %v6971, %v6970
    %v7805 = vpack.c.bf16 %v7037, %v7036
    %v7806 = vpack.c.bf16 %v7073, %v7072
    %v7807 = vpack.c.bf16 %v7217, %v7216
    %v7808 = vpack.c.bf16 %v6917, %v6916
    %v7809 = vpack.c.bf16 %v5289, %v5288
    %v7810 = vpack.c.bf16 %v6907, %v6906
    %v7811 = vpack.c.bf16 %v6973, %v6972
    %v7812 = vpack.c.bf16 %v7039, %v7038
    %v7813 = vpack.c.bf16 %v7075, %v7074
    %v7814 = vpack.c.bf16 %v7219, %v7218
    %v7815 = vpack.c.bf16 %v6919, %v6918
    %v7816 = vpack.c.bf16 %v5291, %v5290
    %v7817 = vpack.c.bf16 %v6909, %v6908
    %v7818 = vpack.c.bf16 %v6975, %v6974
    %v7819 = vpack.c.bf16 %v7041, %v7040
    %v7820 = vpack.c.bf16 %v7077, %v7076
    %v7821 = vpack.c.bf16 %v7221, %v7220
    %v7822 = vpack.c.bf16 %v6921, %v6920
    %v7823 = vpack.c.bf16 %v5346, %v5293
    %v7824 = vpack.c.bf16 %v6911, %v6910
    %v7825 = vpack.c.bf16 %v6977, %v6976
    %v7826 = vpack.c.bf16 %v7043, %v7042
    %v7827 = vpack.c.bf16 %v7079, %v7078
    %v7828 = vpack.c.bf16 %v7223, %v7222
    %v7829 = vpack.c.bf16 %v7245, %v7244
    %v7830 = vpack.c.bf16 %v5348, %v5347
    %v7831 = vpack.c.bf16 %v6979, %v6978
    %v7832 = vpack.c.bf16 %v7045, %v7044
    %v7833 = vpack.c.bf16 %v7081, %v7080
    %v7834 = vpack.c.bf16 %v7225, %v7224
    %v7835 = vpack.c.bf16 %v7247, %v7246
    %v7836 = vpack.c.bf16 %v5350, %v5349
    %v7837 = vpack.c.bf16 %v6981, %v6980
    %v7838 = vpack.c.bf16 %v7047, %v7046
    %v7839 = vpack.c.bf16 %v7083, %v7082
    %v7840 = vpack.c.bf16 %v7227, %v7226
    %v7841 = vpack.c.bf16 %v7249, %v7248
    %v7842 = vpack.c.bf16 %v5370, %v5352
    %v7843 = vpack.c.bf16 %v6983, %v6982
    %v7844 = vpack.c.bf16 %v7049, %v7048
    %v7845 = vpack.c.bf16 %v7085, %v7084
    %v7846 = vpack.c.bf16 %v7229, %v7228
    %v7847 = vpack.c.bf16 %v7251, %v7250
    %v7848 = vpack.c.bf16 %v5372, %v5371
    %v7849 = vpack.c.bf16 %v6985, %v6984
    %v7850 = vpack.c.bf16 %v7051, %v7050
    %v7851 = vpack.c.bf16 %v7087, %v7086
    %v7852 = vpack.c.bf16 %v7231, %v7230
    %v7853 = vpack.c.bf16 %v7253, %v7252
    %v7854 = vpack.c.bf16 %v5374, %v5373
    %v7855 = vpack.c.bf16 %v6987, %v6986
    %v7856 = vpack.c.bf16 %v7053, %v7052
    %v7857 = vpack.c.bf16 %v7089, %v7088
    %v7858 = vpack.c.bf16 %v7233, %v7232
    %v7859 = vpack.c.bf16 %v7255, %v7254
    %v7860 = vpack.c.bf16 %v6381, %v5376
    %v7861 = vpack.c.bf16 %v7277, %v7276
    %v7862 = vpack.c.bf16 %v7328, %v7327
    %v7863 = vpack.c.bf16 %v7372, %v7371
    %v7864 = vpack.c.bf16 %v7394, %v7393
    %v7865 = vpack.c.bf16 %v7218, %v7217
    %v7866 = vpack.c.bf16 %v5310, %v5309
    %v7867 = vpack.c.bf16 %v7279, %v7278
    %v7868 = vpack.c.bf16 %v7330, %v7329
    %v7869 = vpack.c.bf16 %v7374, %v7373
    %v7870 = vpack.c.bf16 %v7396, %v7395
    %v7871 = vpack.c.bf16 %v7220, %v7219
    %v7872 = vpack.c.bf16 %v5312, %v5311
    %v7873 = vpack.c.bf16 %v7281, %v7280
    %v7874 = vpack.c.bf16 %v7332, %v7331
    %v7875 = vpack.c.bf16 %v7376, %v7375
    %v7876 = vpack.c.bf16 %v7398, %v7397
    %v7877 = vpack.c.bf16 %v7222, %v7221
    %v7878 = vpack.c.bf16 %v5314, %v5313
    %v7879 = vpack.c.bf16 %v7212, %v7282
    %v7880 = vpack.c.bf16 %v7334, %v7333
    %v7881 = vpack.c.bf16 %v7378, %v7377
    %v7882 = vpack.c.bf16 %v7400, %v7399
    %v7883 = vpack.c.bf16 %v7224, %v7223
    %v7884 = vpack.c.bf16 %v5316, %v5315
    %v7885 = vpack.c.bf16 %v7214, %v7213
    %v7886 = vpack.c.bf16 %v7336, %v7335
    %v7887 = vpack.c.bf16 %v7380, %v7379
    %v7888 = vpack.c.bf16 %v7402, %v7401
    %v7889 = vpack.c.bf16 %v7226, %v7225
    %v7890 = vpack.c.bf16 %v5341, %v5339
    %v7891 = vpack.c.bf16 %v7216, %v7215
    %v7892 = vpack.c.bf16 %v7338, %v7337
    %v7893 = vpack.c.bf16 %v7382, %v7381
    %v7894 = vpack.c.bf16 %v7404, %v7403
    %v7895 = vpack.c.bf16 %v7228, %v7227
    %v7896 = vpack.c.bf16 %v5355, %v5354
    %v7897 = vpack.c.bf16 %v7340, %v7339
    %v7898 = vpack.c.bf16 %v7384, %v7383
    %v7899 = vpack.c.bf16 %v7406, %v7405
    %v7900 = vpack.c.bf16 %v7230, %v7229
    %v7901 = vpack.c.bf16 %v5357, %v5356
    %v7902 = vpack.c.bf16 %v7342, %v7341
    %v7903 = vpack.c.bf16 %v7386, %v7385
    %v7904 = vpack.c.bf16 %v7408, %v7407
    %v7905 = vpack.c.bf16 %v7232, %v7231
    %v7906 = vpack.c.bf16 %v5365, %v5363
    %v7907 = vpack.c.bf16 %v7344, %v7343
    %v7908 = vpack.c.bf16 %v7388, %v7387
    %v7909 = vpack.c.bf16 %v7410, %v7409
    %v7910 = vpack.c.bf16 %v7480, %v7233
    %v7911 = vpack.c.bf16 %v7257, %v7256
    %v7912 = vpack.c.bf16 %v7346, %v7345
    %v7913 = vpack.c.bf16 %v7390, %v7389
    %v7914 = vpack.c.bf16 %v7412, %v7411
    %v7915 = vpack.c.bf16 %v7482, %v7481
    %v7916 = vpack.c.bf16 %v7259, %v7258
    %v7917 = vpack.c.bf16 %v7348, %v7347
    %v7918 = vpack.c.bf16 %v7392, %v7391
    %v7919 = vpack.c.bf16 %v7414, %v7413
    %v7920 = vpack.c.bf16 %v7484, %v7483
    %v7921 = vpack.c.bf16 %v7266, %v7264
    %v7922 = vpack.c.bf16 %v7500, %v7499
    %v7923 = vpack.c.bf16 %v7550, %v7549
    %v7924 = vpack.c.bf16 %v7594, %v7593
    %v7925 = vpack.c.bf16 %v7618, %v7617
    %v7926 = vpack.c.bf16 %v6020, %v6019
    %v7927 = vpack.c.bf16 %v5332, %v5331
    %v7928 = vpack.c.bf16 %v7502, %v7501
    %v7929 = vpack.c.bf16 %v7552, %v7551
    %v7930 = vpack.c.bf16 %v7596, %v7595
    %v7931 = vpack.c.bf16 %v7620, %v7619
    %v7932 = vpack.c.bf16 %v6022, %v6021
    %v7933 = vpack.c.bf16 %v5334, %v5333
    %v7934 = vpack.c.bf16 %v7504, %v7503
    %v7935 = vpack.c.bf16 %v7554, %v7553
    %v7936 = vpack.c.bf16 %v7598, %v7597
    %v7937 = vpack.c.bf16 %v7622, %v7621
    %v7938 = vpack.c.bf16 %v6024, %v6023
    %v7939 = vpack.c.bf16 %v5336, %v5335
    %v7940 = vpack.c.bf16 %v7556, %v7555
    %v7941 = vpack.c.bf16 %v7600, %v7599
    %v7942 = vpack.c.bf16 %v7624, %v7623
    %v7943 = vpack.c.bf16 %v6026, %v6025
    %v7944 = vpack.c.bf16 %v5338, %v5337
    %v7945 = vpack.c.bf16 %v7558, %v7557
    %v7946 = vpack.c.bf16 %v7602, %v7601
    %v7947 = vpack.c.bf16 %v7626, %v7625
    %v7948 = vpack.c.bf16 %v6368, %v6027
    %v7949 = vpack.c.bf16 %v5358, %v5340
    %v7950 = vpack.c.bf16 %v7560, %v7559
    %v7951 = vpack.c.bf16 %v7604, %v7603
    %v7952 = vpack.c.bf16 %v7628, %v7627
    %v7953 = vpack.c.bf16 %v6370, %v6369
    %v7954 = vpack.c.bf16 %v5360, %v5359
    %v7955 = vpack.c.bf16 %v7562, %v7561
    %v7956 = vpack.c.bf16 %v7606, %v7605
    %v7957 = vpack.c.bf16 %v7630, %v7629
    %v7958 = vpack.c.bf16 %v6372, %v6371
    %v7959 = vpack.c.bf16 %v5362, %v5361
    %v7960 = vpack.c.bf16 %v7564, %v7563
    %v7961 = vpack.c.bf16 %v7608, %v7607
    %v7962 = vpack.c.bf16 %v7632, %v7631
    %v7963 = vpack.c.bf16 %v6374, %v6373
    %v7964 = vpack.c.bf16 %v6380, %v5364
    %v7965 = vpack.c.bf16 %v7566, %v7565
    %v7966 = vpack.c.bf16 %v7610, %v7609
    %v7967 = vpack.c.bf16 %v7634, %v7633
    %v7968 = vpack.c.bf16 %v6376, %v6375
    %v7969 = vpack.c.bf16 %v7712, %v7711
    %v7970 = vpack.c.bf16 %v7261, %v7260
    %v7971 = vpack.c.bf16 %v7568, %v7567
    %v7972 = vpack.c.bf16 %v7612, %v7611
    %v7973 = vpack.c.bf16 %v7636, %v7635
    %v7974 = vpack.c.bf16 %v6378, %v6377
    %v7975 = vpack.c.bf16 %v7714, %v7713
    %v7976 = vpack.c.bf16 %v7263, %v7262
    %v7977 = vpack.c.bf16 %v7570, %v7569
    %v7978 = vpack.c.bf16 %v7614, %v7613
    %v7979 = vpack.c.bf16 %v7638, %v7637
    %v7980 = vpack.c.bf16 %v7700, %v6379
    %v7981 = vpack.c.bf16 %v7716, %v7715
    %v7982 = vpack.c.bf16 %v7485, %v7265
    %v7983 = vld [vmem:[%s3] sm:$0xf]
    %v7984 = vld [vmem:[%s3 + $0x4] sm:$0xf]
    %v7985 = vld [vmem:[%s3 + $0x8] sm:$0xf]
    %v7986 = vld [vmem:[%s3 + $0xc] sm:$0xf]
    %v7987 = vld [vmem:[%s3 + $0x10] sm:$0xf]
    %v7988 = vld [vmem:[%s3 + $0x14] sm:$0xf]
    %v7989 = vld [vmem:[%s3 + $0x18] sm:$0xf]
    %v7990 = vld [vmem:[%s3 + $0x1c] sm:$0xf]
    %v7991 = vld [vmem:[%s3 + $0x20] sm:$0xf]
    %v7992 = vld [vmem:[%s3 + $0x24] sm:$0xf]
    %v7993 = vld [vmem:[%s3 + $0x28] sm:$0xf]
    %v7994 = vld [vmem:[%s3 + $0x2c] sm:$0xf]
    %v7995 = vld [vmem:[%s3 + $0x30] sm:$0xf]
    %v7996 = vld [vmem:[%s3 + $0x34] sm:$0xf]
    %v7997 = vld [vmem:[%s3 + $0x38] sm:$0xf]
    %v7998 = vld [vmem:[%s3 + $0x3c] sm:$0xf]
    %v7999 = vld [vmem:[%s3 + $0x40] sm:$0xf]
    %v8000 = vld [vmem:[%s3 + $0x44] sm:$0xf]
    %v8001 = vld [vmem:[%s3 + $0x48] sm:$0xf]
    %v8002 = vld [vmem:[%s3 + $0x4c] sm:$0xf]
    %v8003 = vld [vmem:[%s3 + $0x50] sm:$0xf]
    %v8004 = vld [vmem:[%s3 + $0x54] sm:$0xf]
    %v8005 = vld [vmem:[%s3 + $0x58] sm:$0xf]
    %v8006 = vld [vmem:[%s3 + $0x5c] sm:$0xf]
    %v8007 = vld [vmem:[%s3 + $0x60] sm:$0xf]
    %v8008 = vld [vmem:[%s3 + $0x64] sm:$0xf]
    %v8009 = vld [vmem:[%s3 + $0x68] sm:$0xf]
    %v8010 = vld [vmem:[%s3 + $0x6c] sm:$0xf]
    %v8011 = vld [vmem:[%s3 + $0x70] sm:$0xf]
    %v8012 = vld [vmem:[%s3 + $0x74] sm:$0xf]
    %v8013 = vld [vmem:[%s3 + $0x78] sm:$0xf]
    %v8014 = vld [vmem:[%s3 + $0x7c] sm:$0xf]
    %v8015 = vld [vmem:[%s3 + $0x80] sm:$0xf]
    %v8016 = vld [vmem:[%s3 + $0x84] sm:$0xf]
    %v8017 = vld [vmem:[%s3 + $0x88] sm:$0xf]
    %v8018 = vld [vmem:[%s3 + $0x8c] sm:$0xf]
    %v8019 = vld [vmem:[%s3 + $0x90] sm:$0xf]
    %v8020 = vld [vmem:[%s3 + $0x94] sm:$0xf]
    %v8021 = vld [vmem:[%s3 + $0x98] sm:$0xf]
    %v8022 = vld [vmem:[%s3 + $0x9c] sm:$0xf]
    %v8023 = vld [vmem:[%s3 + $0xa0] sm:$0xf]
    %v8024 = vld [vmem:[%s3 + $0xa4] sm:$0xf]
    %v8025 = vld [vmem:[%s3 + $0xa8] sm:$0xf]
    %v8026 = vld [vmem:[%s3 + $0xac] sm:$0xf]
    %v8027 = vld [vmem:[%s3 + $0xb0] sm:$0xf]
    %v8028 = vld [vmem:[%s3 + $0xb4] sm:$0xf]
    %v8029 = vld [vmem:[%s3 + $0xb8] sm:$0xf]
    %v8030 = vld [vmem:[%s3 + $0xbc] sm:$0xf]
    %v8031 = vld [vmem:[%s3 + $0xc0] sm:$0xf]
    %v8032 = vld [vmem:[%s3 + $0xc4] sm:$0xf]
    %v8033 = vld [vmem:[%s3 + $0xc8] sm:$0xf]
    %v8034 = vld [vmem:[%s3 + $0xcc] sm:$0xf]
    %v8035 = vld [vmem:[%s3 + $0xd0] sm:$0xf]
    %v8036 = vld [vmem:[%s3 + $0xd4] sm:$0xf]
    %v8037 = vld [vmem:[%s3 + $0xd8] sm:$0xf]
    %v8038 = vld [vmem:[%s3 + $0xdc] sm:$0xf]
    %v8039 = vld [vmem:[%s3 + $0xe0] sm:$0xf]
    %v8040 = vld [vmem:[%s3 + $0xe4] sm:$0xf]
    %v8041 = vld [vmem:[%s3 + $0xe8] sm:$0xf]
    %v8042 = vld [vmem:[%s3 + $0xec] sm:$0xf]
    %v8043 = vld [vmem:[%s3 + $0xf0] sm:$0xf]
    %v8044 = vld [vmem:[%s3 + $0xf4] sm:$0xf]
    %v8045 = vld [vmem:[%s3 + $0xf8] sm:$0xf]
    %v8046 = vld [vmem:[%s3 + $0xfc] sm:$0xf]
    %v8047 = vld [vmem:[%s3 + $0x100] sm:$0xf]
    %v8048 = vld [vmem:[%s3 + $0x104] sm:$0xf]
    %v8049 = vld [vmem:[%s3 + $0x108] sm:$0xf]
    %v8050 = vld [vmem:[%s3 + $0x10c] sm:$0xf]
    %v8051 = vld [vmem:[%s3 + $0x110] sm:$0xf]
    %v8052 = vld [vmem:[%s3 + $0x114] sm:$0xf]
    %v8053 = vld [vmem:[%s3 + $0x118] sm:$0xf]
    %v8054 = vld [vmem:[%s3 + $0x11c] sm:$0xf]
    %v8055 = vld [vmem:[%s3 + $0x120] sm:$0xf]
    %v8056 = vld [vmem:[%s3 + $0x124] sm:$0xf]
    %v8057 = vld [vmem:[%s3 + $0x128] sm:$0xf]
    %v8058 = vld [vmem:[%s3 + $0x12c] sm:$0xf]
    %v8059 = vld [vmem:[%s3 + $0x130] sm:$0xf]
    %v8060 = vld [vmem:[%s3 + $0x134] sm:$0xf]
    %v8061 = vld [vmem:[%s3 + $0x138] sm:$0xf]
    %v8062 = vld [vmem:[%s3 + $0x13c] sm:$0xf]
    %v8063 = vld [vmem:[%s3 + $0x140] sm:$0xf]
    %v8064 = vld [vmem:[%s3 + $0x144] sm:$0xf]
    %v8065 = vld [vmem:[%s3 + $0x148] sm:$0xf]
    %v8066 = vld [vmem:[%s3 + $0x14c] sm:$0xf]
    %v8067 = vld [vmem:[%s3 + $0x150] sm:$0xf]
    %v8068 = vld [vmem:[%s3 + $0x154] sm:$0xf]
    %v8069 = vld [vmem:[%s3 + $0x158] sm:$0xf]
    %v8070 = vld [vmem:[%s3 + $0x15c] sm:$0xf]
    %v8071 = vld [vmem:[%s3 + $0x160] sm:$0xf]
    %v8072 = vld [vmem:[%s3 + $0x164] sm:$0xf]
    %v8073 = vld [vmem:[%s3 + $0x168] sm:$0xf]
    %v8074 = vld [vmem:[%s3 + $0x16c] sm:$0xf]
    %v8075 = vld [vmem:[%s3 + $0x170] sm:$0xf]
    %v8076 = vld [vmem:[%s3 + $0x174] sm:$0xf]
    %v8077 = vld [vmem:[%s3 + $0x178] sm:$0xf]
    %v8078 = vld [vmem:[%s3 + $0x17c] sm:$0xf]
    %v8079 = vld [vmem:[%s3 + $0x180] sm:$0xf]
    %v8080 = vld [vmem:[%s3 + $0x184] sm:$0xf]
    %v8081 = vld [vmem:[%s3 + $0x188] sm:$0xf]
    %v8082 = vld [vmem:[%s3 + $0x18c] sm:$0xf]
    %v8083 = vld [vmem:[%s4] sm:$0x1]
    %v8085 = vperm.slane %v8083, 0
    %v8187 = vunpack.c.l.b16 %v7983
    %v8188 = vunpack.c.l.b16 %v7984
    %v8189 = vunpack.c.l.b16 %v7985
    %v8190 = vunpack.c.l.b16 %v7986
    %v8191 = vunpack.c.l.b16 %v7987
    %v8192 = vunpack.c.l.b16 %v7988
    %v8193 = vunpack.c.l.b16 %v7989
    %v8194 = vunpack.c.l.b16 %v7990
    %v8195 = vunpack.c.l.b16 %v7991
    %v8196 = vunpack.c.l.b16 %v7992
    %v8197 = vunpack.c.l.b16 %v7993
    %v8198 = vunpack.c.l.b16 %v7994
    %v8199 = vunpack.c.l.b16 %v7995
    %v8200 = vunpack.c.l.b16 %v7996
    %v8201 = vunpack.c.l.b16 %v7997
    %v8202 = vunpack.c.l.b16 %v7998
    %v8203 = vunpack.c.l.b16 %v7999
    %v8204 = vunpack.c.l.b16 %v8000
    %v8205 = vunpack.c.l.b16 %v8001
    %v8206 = vunpack.c.l.b16 %v8002
    %v8207 = vunpack.c.l.b16 %v8003
    %v8208 = vunpack.c.l.b16 %v8004
    %v8209 = vunpack.c.l.b16 %v8005
    %v8210 = vunpack.c.l.b16 %v8006
    %v8211 = vunpack.c.l.b16 %v8007
    %v8212 = vunpack.c.l.b16 %v8008
    %v8213 = vunpack.c.l.b16 %v8009
    %v8214 = vunpack.c.l.b16 %v8010
    %v8215 = vunpack.c.l.b16 %v8011
    %v8216 = vunpack.c.l.b16 %v8012
    %v8217 = vunpack.c.l.b16 %v8013
    %v8218 = vunpack.c.l.b16 %v8014
    %v8219 = vunpack.c.l.b16 %v8015
    %v8220 = vunpack.c.l.b16 %v8016
    %v8221 = vunpack.c.l.b16 %v8017
    %v8222 = vunpack.c.l.b16 %v8018
    %v8223 = vunpack.c.l.b16 %v8019
    %v8224 = vunpack.c.l.b16 %v8020
    %v8225 = vunpack.c.l.b16 %v8021
    %v8226 = vunpack.c.l.b16 %v8022
    %v8227 = vunpack.c.l.b16 %v8023
    %v8228 = vunpack.c.l.b16 %v8024
    %v8229 = vunpack.c.l.b16 %v8025
    %v8230 = vunpack.c.l.b16 %v8026
    %v8231 = vunpack.c.l.b16 %v8027
    %v8232 = vunpack.c.l.b16 %v8028
    %v8233 = vunpack.c.l.b16 %v8029
    %v8234 = vunpack.c.l.b16 %v8030
    %v8235 = vunpack.c.l.b16 %v8031
    %v8236 = vunpack.c.l.b16 %v8032
    %v8237 = vunpack.c.l.b16 %v8033
    %v8238 = vunpack.c.l.b16 %v8034
    %v8239 = vunpack.c.l.b16 %v8035
    %v8240 = vunpack.c.l.b16 %v8036
    %v8241 = vunpack.c.l.b16 %v8037
    %v8242 = vunpack.c.l.b16 %v8038
    %v8243 = vunpack.c.l.b16 %v8039
    %v8244 = vunpack.c.l.b16 %v8040
    %v8245 = vunpack.c.l.b16 %v8041
    %v8246 = vunpack.c.l.b16 %v8042
    %v8247 = vunpack.c.l.b16 %v8043
    %v8248 = vunpack.c.l.b16 %v8044
    %v8249 = vunpack.c.l.b16 %v8045
    %v8250 = vunpack.c.l.b16 %v8046
    %v8251 = vunpack.c.l.b16 %v8047
    %v8252 = vunpack.c.l.b16 %v8048
    %v8253 = vunpack.c.l.b16 %v8049
    %v8254 = vunpack.c.l.b16 %v8050
    %v8255 = vunpack.c.l.b16 %v8051
    %v8256 = vunpack.c.l.b16 %v8052
    %v8257 = vunpack.c.l.b16 %v8053
    %v8258 = vunpack.c.l.b16 %v8054
    %v8259 = vunpack.c.l.b16 %v8055
    %v8260 = vunpack.c.l.b16 %v8056
    %v8261 = vunpack.c.l.b16 %v8057
    %v8262 = vunpack.c.l.b16 %v8058
    %v8263 = vunpack.c.l.b16 %v8059
    %v8264 = vunpack.c.l.b16 %v8060
    %v8265 = vunpack.c.l.b16 %v8061
    %v8266 = vunpack.c.l.b16 %v8062
    %v8267 = vunpack.c.l.b16 %v8063
    %v8268 = vunpack.c.l.b16 %v8064
    %v8269 = vunpack.c.l.b16 %v8065
    %v8270 = vunpack.c.l.b16 %v8066
    %v8271 = vunpack.c.l.b16 %v8067
    %v8272 = vunpack.c.l.b16 %v8068
    %v8273 = vunpack.c.l.b16 %v8069
    %v8274 = vunpack.c.l.b16 %v8070
    %v8275 = vunpack.c.l.b16 %v8071
    %v8276 = vunpack.c.l.b16 %v8072
    %v8277 = vunpack.c.l.b16 %v8073
    %v8278 = vunpack.c.l.b16 %v8074
    %v8279 = vunpack.c.l.b16 %v8075
    %v8280 = vunpack.c.l.b16 %v8076
    %v8281 = vunpack.c.l.b16 %v8077
    %v8282 = vunpack.c.l.b16 %v8078
    %v8283 = vunpack.c.l.b16 %v8079
    %v8284 = vunpack.c.l.b16 %v8080
    %v8285 = vunpack.c.l.b16 %v8081
    %v8286 = vunpack.c.l.b16 %v8082
    %v8287 = vpack.c.b16 %v8188, %v8187
    %v8288 = vpack.c.b16 %v8190, %v8189
    %v8289 = vpack.c.b16 %v8192, %v8191
    %v8290 = vpack.c.b16 %v8194, %v8193
    %v8291 = vpack.c.b16 %v8196, %v8195
    %v8292 = vpack.c.b16 %v8198, %v8197
    %v8293 = vpack.c.b16 %v8200, %v8199
    %v8294 = vpack.c.b16 %v8202, %v8201
    %v8295 = vpack.c.b16 %v8204, %v8203
    %v8296 = vpack.c.b16 %v8206, %v8205
    %v8297 = vpack.c.b16 %v8208, %v8207
    %v8298 = vpack.c.b16 %v8210, %v8209
    %v8299 = vpack.c.b16 %v8212, %v8211
    %v8300 = vpack.c.b16 %v8214, %v8213
    %v8301 = vpack.c.b16 %v8216, %v8215
    %v8302 = vpack.c.b16 %v8218, %v8217
    %v8303 = vpack.c.b16 %v8220, %v8219
    %v8304 = vpack.c.b16 %v8222, %v8221
    %v8305 = vpack.c.b16 %v8224, %v8223
    %v8306 = vpack.c.b16 %v8226, %v8225
    %v8307 = vpack.c.b16 %v8228, %v8227
    %v8308 = vpack.c.b16 %v8230, %v8229
    %v8309 = vpack.c.b16 %v8232, %v8231
    %v8310 = vpack.c.b16 %v8234, %v8233
    %v8311 = vpack.c.b16 %v8236, %v8235
    %v8312 = vpack.c.b16 %v8238, %v8237
    %v8313 = vpack.c.b16 %v8240, %v8239
    %v8314 = vpack.c.b16 %v8242, %v8241
    %v8315 = vpack.c.b16 %v8244, %v8243
    %v8316 = vpack.c.b16 %v8246, %v8245
    %v8317 = vpack.c.b16 %v8248, %v8247
    %v8318 = vpack.c.b16 %v8250, %v8249
    %v8319 = vpack.c.b16 %v8252, %v8251
    %v8320 = vpack.c.b16 %v8254, %v8253
    %v8321 = vpack.c.b16 %v8256, %v8255
    %v8322 = vpack.c.b16 %v8258, %v8257
    %v8323 = vpack.c.b16 %v8260, %v8259
    %v8324 = vpack.c.b16 %v8262, %v8261
    %v8325 = vpack.c.b16 %v8264, %v8263
    %v8326 = vpack.c.b16 %v8266, %v8265
    %v8327 = vpack.c.b16 %v8268, %v8267
    %v8328 = vpack.c.b16 %v8270, %v8269
    %v8329 = vpack.c.b16 %v8272, %v8271
    %v8330 = vpack.c.b16 %v8274, %v8273
    %v8331 = vpack.c.b16 %v8276, %v8275
    %v8332 = vpack.c.b16 %v8278, %v8277
    %v8333 = vpack.c.b16 %v8280, %v8279
    %v8334 = vpack.c.b16 %v8282, %v8281
    %v8335 = vpack.c.b16 %v8284, %v8283
    %v8336 = vpack.c.b16 %v8286, %v8285
    %v8388 = vsel %vm2066, %v7723, 0
    %v8391 = vsel %vm2066, %v7730, 0
    %v8394 = vsel %vm2066, %v7737, 0
    %v8397 = vsel %vm2066, %v7744, 0
    %v8400 = vsel %vm2066, %v7751, 0
    %v8403 = vsel %vm2066, %v7758, 0
    %v8406 = vsel %vm2066, %v7764, 0
    %v8409 = vsel %vm2066, %v7770, 0
    %v8412 = vsel %vm2066, %v7776, 0
    %v8415 = vsel %vm2066, %v7782, 0
    %v8418 = vsel %vm2066, %v7788, 0
    %v8421 = vsel %vm2066, %v7795, 0
    %v8424 = vsel %vm2066, %v7802, 0
    %v8427 = vsel %vm2066, %v7809, 0
    %v8430 = vsel %vm2066, %v7816, 0
    %v8433 = vsel %vm2066, %v7823, 0
    %v8436 = vsel %vm2066, %v7830, 0
    %v8439 = vsel %vm2066, %v7836, 0
    %v8442 = vsel %vm2066, %v7842, 0
    %v8445 = vsel %vm2066, %v7848, 0
    %v8448 = vsel %vm2066, %v7854, 0
    %v8451 = vsel %vm2066, %v7860, 0
    %v8454 = vsel %vm2066, %v7866, 0
    %v8457 = vsel %vm2066, %v7872, 0
    %v8460 = vsel %vm2066, %v7878, 0
    %v8463 = vsel %vm2066, %v7884, 0
    %v8466 = vsel %vm2066, %v7890, 0
    %v8469 = vsel %vm2066, %v7896, 0
    %v8472 = vsel %vm2066, %v7901, 0
    %v8475 = vsel %vm2066, %v7906, 0
    %v8478 = vsel %vm2066, %v7911, 0
    %v8481 = vsel %vm2066, %v7916, 0
    %v8484 = vsel %vm2066, %v7921, 0
    %v8487 = vsel %vm2066, %v7927, 0
    %v8490 = vsel %vm2066, %v7933, 0
    %v8493 = vsel %vm2066, %v7939, 0
    %v8496 = vsel %vm2066, %v7944, 0
    %v8499 = vsel %vm2066, %v7949, 0
    %v8502 = vsel %vm2066, %v7954, 0
    %v8505 = vsel %vm2066, %v7959, 0
    %v8508 = vsel %vm2066, %v7964, 0
    %v8511 = vsel %vm2066, %v7970, 0
    %v8514 = vsel %vm2066, %v7976, 0
    %v8517 = vsel %vm2066, %v7982, 0
    %8519 = vmatpush.bf16.msra.mxu0 %v8294
    %8520 = vmatpush.bf16.msra.mxu0 %v8293
    %8521 = vmatpush.bf16.msra.mxu0 %v8292
    %8522 = vmatpush.bf16.msra.mxu0 %v8291
    %8523 = vmatpush.bf16.msra.mxu0 %v8290
    %8524 = vmatpush.bf16.msra.mxu0 %v8289
    %8525 = vmatpush.bf16.msra.mxu0 %v8288
    %8526 = vmatpush.bf16.msra.mxu0 %v8287
    %8527 = vmatmul.bf16.gmra.mxu0 %v7717
    %v8528 = vpop.f32.mrf.mxu0
    %v8529 = vadd.f32 %v8085, %v8528
    %v8530 = vpop.f32.mrf.mxu0
    %v8531 = vadd.f32 %v8085, %v8530
    %8532 = vmatmul.bf16.gmra.mxu0 %v7724
    %v8533 = vpop.f32.mrf.mxu0
    %v8534 = vadd.f32 %v8085, %v8533
    %v8535 = vpop.f32.mrf.mxu0
    %v8536 = vadd.f32 %v8085, %v8535
    %8537 = vmatmul.bf16.gmra.mxu0 %v7731
    %v8538 = vpop.f32.mrf.mxu0
    %v8539 = vpop.f32.mrf.mxu0
    %8540 = vmatmul.bf16.gmra.mxu0 %v7738
    %v8541 = vpop.f32.mrf.mxu0
    %v8542 = vadd.f32 %v8085, %v8541
    %v8543 = vpop.f32.mrf.mxu0
    %v8544 = vadd.f32 %v8085, %v8543
    %8545 = vmatmul.bf16.gmra.mxu0 %v7745
    %v8546 = vpop.f32.mrf.mxu0
    %v8547 = vadd.f32 %v8085, %v8546
    %v8548 = vpop.f32.mrf.mxu0
    %v8549 = vadd.f32 %v8085, %v8548
    %8550 = vmatmul.bf16.gmra.mxu0 %v7752
    %v8551 = vpop.f32.mrf.mxu0
    %v8552 = vpop.f32.mrf.mxu0
    %8553 = vmatmul.bf16.gmra.mxu0 %v7722
    %v8554 = vpop.f32.mrf.mxu0
    %v8555 = vadd.f32 %v8085, %v8554
    %v8556 = vpop.f32.mrf.mxu0
    %v8557 = vadd.f32 %v8085, %v8556
    %8558 = vmatmul.bf16.gmra.mxu0 %v7729
    %v8559 = vpop.f32.mrf.mxu0
    %v8560 = vadd.f32 %v8085, %v8559
    %v8561 = vpop.f32.mrf.mxu0
    %v8562 = vadd.f32 %v8085, %v8561
    %8563 = vmatmul.bf16.gmra.mxu0 %v7736
    %v8564 = vpop.f32.mrf.mxu0
    %v8565 = vpop.f32.mrf.mxu0
    %8566 = vmatmul.bf16.gmra.mxu0 %v7743
    %v8567 = vpop.f32.mrf.mxu0
    %v8568 = vadd.f32 %v8085, %v8567
    %v8569 = vpop.f32.mrf.mxu0
    %v8570 = vadd.f32 %v8085, %v8569
    %8571 = vmatmul.bf16.gmra.mxu0 %v7750
    %v8572 = vpop.f32.mrf.mxu0
    %v8573 = vadd.f32 %v8085, %v8572
    %v8574 = vpop.f32.mrf.mxu0
    %v8575 = vadd.f32 %v8085, %v8574
    %8576 = vmatmul.bf16.gmra.mxu0 %v7789
    %v8577 = vpop.f32.mrf.mxu0
    %v8578 = vadd.f32 %v8085, %v8577
    %v8579 = vpop.f32.mrf.mxu0
    %v8580 = vadd.f32 %v8085, %v8579
    %8581 = vmatmul.bf16.gmra.mxu0 %v7796
    %v8582 = vpop.f32.mrf.mxu0
    %v8583 = vadd.f32 %v8085, %v8582
    %v8584 = vpop.f32.mrf.mxu0
    %v8585 = vadd.f32 %v8085, %v8584
    %8586 = vmatmul.bf16.gmra.mxu0 %v7803
    %v8587 = vpop.f32.mrf.mxu0
    %v8588 = vpop.f32.mrf.mxu0
    %8589 = vmatmul.bf16.gmra.mxu0 %v7810
    %v8590 = vpop.f32.mrf.mxu0
    %v8591 = vadd.f32 %v8085, %v8590
    %v8592 = vpop.f32.mrf.mxu0
    %v8593 = vadd.f32 %v8085, %v8592
    %8594 = vmatmul.bf16.gmra.mxu0 %v7817
    %v8595 = vpop.f32.mrf.mxu0
    %v8596 = vadd.f32 %v8085, %v8595
    %v8597 = vpop.f32.mrf.mxu0
    %v8598 = vadd.f32 %v8085, %v8597
    %8599 = vmatmul.bf16.gmra.mxu0 %v7824
    %v8600 = vpop.f32.mrf.mxu0
    %v8601 = vpop.f32.mrf.mxu0
    %8602 = vmatmul.bf16.gmra.mxu0 %v7794
    %v8603 = vpop.f32.mrf.mxu0
    %v8604 = vadd.f32 %v8085, %v8603
    %v8605 = vpop.f32.mrf.mxu0
    %v8606 = vadd.f32 %v8085, %v8605
    %8607 = vmatmul.bf16.gmra.mxu0 %v7801
    %v8608 = vpop.f32.mrf.mxu0
    %v8609 = vadd.f32 %v8085, %v8608
    %v8610 = vpop.f32.mrf.mxu0
    %v8611 = vadd.f32 %v8085, %v8610
    %8612 = vmatmul.bf16.gmra.mxu0 %v7808
    %v8613 = vpop.f32.mrf.mxu0
    %v8614 = vpop.f32.mrf.mxu0
    %8615 = vmatmul.bf16.gmra.mxu0 %v7815
    %v8616 = vpop.f32.mrf.mxu0
    %v8617 = vadd.f32 %v8085, %v8616
    %v8618 = vpop.f32.mrf.mxu0
    %v8619 = vadd.f32 %v8085, %v8618
    %8620 = vmatmul.bf16.gmra.mxu0 %v7822
    %v8621 = vpop.f32.mrf.mxu0
    %v8622 = vadd.f32 %v8085, %v8621
    %v8623 = vpop.f32.mrf.mxu0
    %v8624 = vadd.f32 %v8085, %v8623
    %8625 = vmatmul.bf16.gmra.mxu0 %v7861
    %v8626 = vpop.f32.mrf.mxu0
    %v8627 = vadd.f32 %v8085, %v8626
    %v8628 = vpop.f32.mrf.mxu0
    %v8629 = vadd.f32 %v8085, %v8628
    %8630 = vmatmul.bf16.gmra.mxu0 %v7867
    %v8631 = vpop.f32.mrf.mxu0
    %v8632 = vadd.f32 %v8085, %v8631
    %v8633 = vpop.f32.mrf.mxu0
    %v8634 = vadd.f32 %v8085, %v8633
    %8635 = vmatmul.bf16.gmra.mxu0 %v7873
    %v8636 = vpop.f32.mrf.mxu0
    %v8637 = vpop.f32.mrf.mxu0
    %8638 = vmatmul.bf16.gmra.mxu0 %v7879
    %v8639 = vpop.f32.mrf.mxu0
    %v8640 = vadd.f32 %v8085, %v8639
    %v8641 = vpop.f32.mrf.mxu0
    %v8642 = vadd.f32 %v8085, %v8641
    %8643 = vmatmul.bf16.gmra.mxu0 %v7885
    %v8644 = vpop.f32.mrf.mxu0
    %v8645 = vadd.f32 %v8085, %v8644
    %v8646 = vpop.f32.mrf.mxu0
    %v8647 = vadd.f32 %v8085, %v8646
    %8648 = vmatmul.bf16.gmra.mxu0 %v7891
    %v8649 = vpop.f32.mrf.mxu0
    %v8650 = vpop.f32.mrf.mxu0
    %8651 = vmatmul.bf16.gmra.mxu0 %v7865
    %v8652 = vpop.f32.mrf.mxu0
    %v8653 = vadd.f32 %v8085, %v8652
    %v8654 = vpop.f32.mrf.mxu0
    %v8655 = vadd.f32 %v8085, %v8654
    %8656 = vmatmul.bf16.gmra.mxu0 %v7871
    %v8657 = vpop.f32.mrf.mxu0
    %v8658 = vadd.f32 %v8085, %v8657
    %v8659 = vpop.f32.mrf.mxu0
    %v8660 = vadd.f32 %v8085, %v8659
    %8661 = vmatmul.bf16.gmra.mxu0 %v7877
    %v8662 = vpop.f32.mrf.mxu0
    %v8663 = vpop.f32.mrf.mxu0
    %8664 = vmatmul.bf16.gmra.mxu0 %v7883
    %v8665 = vpop.f32.mrf.mxu0
    %v8666 = vadd.f32 %v8085, %v8665
    %v8667 = vpop.f32.mrf.mxu0
    %v8668 = vadd.f32 %v8085, %v8667
    %8669 = vmatmul.bf16.gmra.mxu0 %v7889
    %v8670 = vpop.f32.mrf.mxu0
    %v8671 = vadd.f32 %v8085, %v8670
    %v8672 = vpop.f32.mrf.mxu0
    %v8673 = vadd.f32 %v8085, %v8672
    %8674 = vmatmul.bf16.gmra.mxu0 %v7922
    %v8675 = vpop.f32.mrf.mxu0
    %v8676 = vadd.f32 %v8085, %v8675
    %v8677 = vpop.f32.mrf.mxu0
    %v8678 = vadd.f32 %v8085, %v8677
    %8679 = vmatmul.bf16.gmra.mxu0 %v7928
    %v8680 = vpop.f32.mrf.mxu0
    %v8681 = vadd.f32 %v8085, %v8680
    %v8682 = vpop.f32.mrf.mxu0
    %v8683 = vadd.f32 %v8085, %v8682
    %8684 = vmatmul.bf16.gmra.mxu0 %v7934
    %v8685 = vpop.f32.mrf.mxu0
    %v8686 = vpop.f32.mrf.mxu0
    %8687 = vmatmul.bf16.gmra.mxu0 %v7721
    %v8688 = vpop.f32.mrf.mxu0
    %v8689 = vadd.f32 %v8085, %v8688
    %v8690 = vpop.f32.mrf.mxu0
    %v8691 = vadd.f32 %v8085, %v8690
    %8692 = vmatmul.bf16.gmra.mxu0 %v7728
    %v8693 = vpop.f32.mrf.mxu0
    %v8694 = vadd.f32 %v8085, %v8693
    %v8695 = vpop.f32.mrf.mxu0
    %v8696 = vadd.f32 %v8085, %v8695
    %8697 = vmatmul.bf16.gmra.mxu0 %v7735
    %v8698 = vpop.f32.mrf.mxu0
    %v8699 = vpop.f32.mrf.mxu0
    %8700 = vmatmul.bf16.gmra.mxu0 %v7742
    %v8701 = vpop.f32.mrf.mxu0
    %v8702 = vadd.f32 %v8085, %v8701
    %v8703 = vpop.f32.mrf.mxu0
    %v8704 = vadd.f32 %v8085, %v8703
    %8705 = vmatmul.bf16.gmra.mxu0 %v7749
    %v8706 = vpop.f32.mrf.mxu0
    %v8707 = vadd.f32 %v8085, %v8706
    %v8708 = vpop.f32.mrf.mxu0
    %v8709 = vadd.f32 %v8085, %v8708
    %8710 = vmatmul.bf16.gmra.mxu0 %v7756
    %v8711 = vpop.f32.mrf.mxu0
    %v8712 = vpop.f32.mrf.mxu0
    %8713 = vmatmul.bf16.gmra.mxu0 %v7762
    %v8714 = vpop.f32.mrf.mxu0
    %v8715 = vadd.f32 %v8085, %v8714
    %v8716 = vpop.f32.mrf.mxu0
    %v8717 = vadd.f32 %v8085, %v8716
    %8718 = vmatmul.bf16.gmra.mxu0 %v7768
    %v8719 = vpop.f32.mrf.mxu0
    %v8720 = vadd.f32 %v8085, %v8719
    %v8721 = vpop.f32.mrf.mxu0
    %v8722 = vadd.f32 %v8085, %v8721
    %8723 = vdwg.mxu0
    %8724 = vmatpush.bf16.msra.mxu0 %v8302
    %8725 = vmatpush.bf16.msra.mxu0 %v8301
    %8726 = vmatpush.bf16.msra.mxu0 %v8300
    %8727 = vmatpush.bf16.msra.mxu0 %v8299
    %8728 = vmatpush.bf16.msra.mxu0 %v8298
    %8729 = vmatpush.bf16.msra.mxu0 %v8297
    %8730 = vmatpush.bf16.msra.mxu0 %v8296
    %8731 = vmatpush.bf16.msra.mxu0 %v8295
    %8732 = vmatmul.bf16.gmra.mxu0 %v7718
    %v8733 = vpop.f32.mrf.mxu0
    %v8734 = vadd.f32 %v8529, %v8733
    %v8735 = vpop.f32.mrf.mxu0
    %v8736 = vadd.f32 %v8531, %v8735
    %8737 = vmatmul.bf16.gmra.mxu0 %v7725
    %v8738 = vpop.f32.mrf.mxu0
    %v8739 = vadd.f32 %v8534, %v8738
    %v8740 = vpop.f32.mrf.mxu0
    %v8741 = vadd.f32 %v8536, %v8740
    %8742 = vmatmul.bf16.gmra.mxu0 %v7732
    %v8743 = vpop.f32.mrf.mxu0
    %v8744 = vpop.f32.mrf.mxu0
    %8745 = vmatmul.bf16.gmra.mxu0 %v7739
    %v8746 = vpop.f32.mrf.mxu0
    %v8747 = vadd.f32 %v8542, %v8746
    %v8748 = vpop.f32.mrf.mxu0
    %v8749 = vadd.f32 %v8544, %v8748
    %8750 = vmatmul.bf16.gmra.mxu0 %v7746
    %v8751 = vpop.f32.mrf.mxu0
    %v8752 = vadd.f32 %v8547, %v8751
    %v8753 = vpop.f32.mrf.mxu0
    %v8754 = vadd.f32 %v8549, %v8753
    %8755 = vmatmul.bf16.gmra.mxu0 %v7753
    %v8756 = vpop.f32.mrf.mxu0
    %v8757 = vpop.f32.mrf.mxu0
    %8758 = vmatmul.bf16.gmra.mxu0 %v7759
    %v8759 = vpop.f32.mrf.mxu0
    %v8760 = vadd.f32 %v8555, %v8759
    %v8761 = vpop.f32.mrf.mxu0
    %v8762 = vadd.f32 %v8557, %v8761
    %8763 = vmatmul.bf16.gmra.mxu0 %v7765
    %v8764 = vpop.f32.mrf.mxu0
    %v8765 = vadd.f32 %v8560, %v8764
    %v8766 = vpop.f32.mrf.mxu0
    %v8767 = vadd.f32 %v8562, %v8766
    %8768 = vmatmul.bf16.gmra.mxu0 %v7771
    %v8769 = vpop.f32.mrf.mxu0
    %v8770 = vpop.f32.mrf.mxu0
    %8771 = vmatmul.bf16.gmra.mxu0 %v7777
    %v8772 = vpop.f32.mrf.mxu0
    %v8773 = vadd.f32 %v8568, %v8772
    %v8774 = vpop.f32.mrf.mxu0
    %v8775 = vadd.f32 %v8570, %v8774
    %8776 = vmatmul.bf16.gmra.mxu0 %v7783
    %v8777 = vpop.f32.mrf.mxu0
    %v8778 = vadd.f32 %v8573, %v8777
    %v8779 = vpop.f32.mrf.mxu0
    %v8780 = vadd.f32 %v8575, %v8779
    %8781 = vmatmul.bf16.gmra.mxu0 %v7790
    %v8782 = vpop.f32.mrf.mxu0
    %v8783 = vadd.f32 %v8578, %v8782
    %v8784 = vpop.f32.mrf.mxu0
    %v8785 = vadd.f32 %v8580, %v8784
    %8786 = vmatmul.bf16.gmra.mxu0 %v7797
    %v8787 = vpop.f32.mrf.mxu0
    %v8788 = vadd.f32 %v8583, %v8787
    %v8789 = vpop.f32.mrf.mxu0
    %v8790 = vadd.f32 %v8585, %v8789
    %8791 = vmatmul.bf16.gmra.mxu0 %v7804
    %v8792 = vpop.f32.mrf.mxu0
    %v8793 = vpop.f32.mrf.mxu0
    %8794 = vmatmul.bf16.gmra.mxu0 %v7811
    %v8795 = vpop.f32.mrf.mxu0
    %v8796 = vadd.f32 %v8591, %v8795
    %v8797 = vpop.f32.mrf.mxu0
    %v8798 = vadd.f32 %v8593, %v8797
    %8799 = vmatmul.bf16.gmra.mxu0 %v7818
    %v8800 = vpop.f32.mrf.mxu0
    %v8801 = vadd.f32 %v8596, %v8800
    %v8802 = vpop.f32.mrf.mxu0
    %v8803 = vadd.f32 %v8598, %v8802
    %8804 = vmatmul.bf16.gmra.mxu0 %v7825
    %v8805 = vpop.f32.mrf.mxu0
    %v8806 = vpop.f32.mrf.mxu0
    %8807 = vmatmul.bf16.gmra.mxu0 %v7831
    %v8808 = vpop.f32.mrf.mxu0
    %v8809 = vadd.f32 %v8604, %v8808
    %v8810 = vpop.f32.mrf.mxu0
    %v8811 = vadd.f32 %v8606, %v8810
    %8812 = vmatmul.bf16.gmra.mxu0 %v7837
    %v8813 = vpop.f32.mrf.mxu0
    %v8814 = vadd.f32 %v8609, %v8813
    %v8815 = vpop.f32.mrf.mxu0
    %v8816 = vadd.f32 %v8611, %v8815
    %8817 = vmatmul.bf16.gmra.mxu0 %v7843
    %v8818 = vpop.f32.mrf.mxu0
    %v8819 = vpop.f32.mrf.mxu0
    %8820 = vmatmul.bf16.gmra.mxu0 %v7849
    %v8821 = vpop.f32.mrf.mxu0
    %v8822 = vadd.f32 %v8617, %v8821
    %v8823 = vpop.f32.mrf.mxu0
    %v8824 = vadd.f32 %v8619, %v8823
    %8825 = vmatmul.bf16.gmra.mxu0 %v7855
    %v8826 = vpop.f32.mrf.mxu0
    %v8827 = vadd.f32 %v8622, %v8826
    %v8828 = vpop.f32.mrf.mxu0
    %v8829 = vadd.f32 %v8624, %v8828
    %8830 = vmatmul.bf16.gmra.mxu0 %v7862
    %v8831 = vpop.f32.mrf.mxu0
    %v8832 = vadd.f32 %v8627, %v8831
    %v8833 = vpop.f32.mrf.mxu0
    %v8834 = vadd.f32 %v8629, %v8833
    %8835 = vmatmul.bf16.gmra.mxu0 %v7868
    %v8836 = vpop.f32.mrf.mxu0
    %v8837 = vadd.f32 %v8632, %v8836
    %v8838 = vpop.f32.mrf.mxu0
    %v8839 = vadd.f32 %v8634, %v8838
    %8840 = vmatmul.bf16.gmra.mxu0 %v7874
    %v8841 = vpop.f32.mrf.mxu0
    %v8842 = vpop.f32.mrf.mxu0
    %8843 = vmatmul.bf16.gmra.mxu0 %v7880
    %v8844 = vpop.f32.mrf.mxu0
    %v8845 = vadd.f32 %v8640, %v8844
    %v8846 = vpop.f32.mrf.mxu0
    %v8847 = vadd.f32 %v8642, %v8846
    %8848 = vmatmul.bf16.gmra.mxu0 %v7886
    %v8849 = vpop.f32.mrf.mxu0
    %v8850 = vadd.f32 %v8645, %v8849
    %v8851 = vpop.f32.mrf.mxu0
    %v8852 = vadd.f32 %v8647, %v8851
    %8853 = vmatmul.bf16.gmra.mxu0 %v7892
    %v8854 = vpop.f32.mrf.mxu0
    %v8855 = vpop.f32.mrf.mxu0
    %8856 = vmatmul.bf16.gmra.mxu0 %v7897
    %v8857 = vpop.f32.mrf.mxu0
    %v8858 = vadd.f32 %v8653, %v8857
    %v8859 = vpop.f32.mrf.mxu0
    %v8860 = vadd.f32 %v8655, %v8859
    %8861 = vmatmul.bf16.gmra.mxu0 %v7902
    %v8862 = vpop.f32.mrf.mxu0
    %v8863 = vadd.f32 %v8658, %v8862
    %v8864 = vpop.f32.mrf.mxu0
    %v8865 = vadd.f32 %v8660, %v8864
    %8866 = vmatmul.bf16.gmra.mxu0 %v7907
    %v8867 = vpop.f32.mrf.mxu0
    %v8868 = vpop.f32.mrf.mxu0
    %8869 = vmatmul.bf16.gmra.mxu0 %v7912
    %v8870 = vpop.f32.mrf.mxu0
    %v8871 = vadd.f32 %v8666, %v8870
    %v8872 = vpop.f32.mrf.mxu0
    %v8873 = vadd.f32 %v8668, %v8872
    %8874 = vmatmul.bf16.gmra.mxu0 %v7917
    %v8875 = vpop.f32.mrf.mxu0
    %v8876 = vadd.f32 %v8671, %v8875
    %v8877 = vpop.f32.mrf.mxu0
    %v8878 = vadd.f32 %v8673, %v8877
    %8879 = vmatmul.bf16.gmra.mxu0 %v7923
    %v8880 = vpop.f32.mrf.mxu0
    %v8881 = vadd.f32 %v8676, %v8880
    %v8882 = vpop.f32.mrf.mxu0
    %v8883 = vadd.f32 %v8678, %v8882
    %8884 = vmatmul.bf16.gmra.mxu0 %v7929
    %v8885 = vpop.f32.mrf.mxu0
    %v8886 = vadd.f32 %v8681, %v8885
    %v8887 = vpop.f32.mrf.mxu0
    %v8888 = vadd.f32 %v8683, %v8887
    %8889 = vmatmul.bf16.gmra.mxu0 %v7935
    %v8890 = vpop.f32.mrf.mxu0
    %v8891 = vpop.f32.mrf.mxu0
    %8892 = vmatmul.bf16.gmra.mxu0 %v7940
    %v8893 = vpop.f32.mrf.mxu0
    %v8894 = vadd.f32 %v8689, %v8893
    %v8895 = vpop.f32.mrf.mxu0
    %v8896 = vadd.f32 %v8691, %v8895
    %8897 = vmatmul.bf16.gmra.mxu0 %v7945
    %v8898 = vpop.f32.mrf.mxu0
    %v8899 = vadd.f32 %v8694, %v8898
    %v8900 = vpop.f32.mrf.mxu0
    %v8901 = vadd.f32 %v8696, %v8900
    %8902 = vmatmul.bf16.gmra.mxu0 %v7950
    %v8903 = vpop.f32.mrf.mxu0
    %v8904 = vpop.f32.mrf.mxu0
    %8905 = vmatmul.bf16.gmra.mxu0 %v7955
    %v8906 = vpop.f32.mrf.mxu0
    %v8907 = vadd.f32 %v8702, %v8906
    %v8908 = vpop.f32.mrf.mxu0
    %v8909 = vadd.f32 %v8704, %v8908
    %8910 = vmatmul.bf16.gmra.mxu0 %v7960
    %v8911 = vpop.f32.mrf.mxu0
    %v8912 = vadd.f32 %v8707, %v8911
    %v8913 = vpop.f32.mrf.mxu0
    %v8914 = vadd.f32 %v8709, %v8913
    %8915 = vmatmul.bf16.gmra.mxu0 %v7965
    %v8916 = vpop.f32.mrf.mxu0
    %v8917 = vpop.f32.mrf.mxu0
    %8918 = vmatmul.bf16.gmra.mxu0 %v7971
    %v8919 = vpop.f32.mrf.mxu0
    %v8920 = vadd.f32 %v8715, %v8919
    %v8921 = vpop.f32.mrf.mxu0
    %v8922 = vadd.f32 %v8717, %v8921
    %8923 = vmatmul.bf16.gmra.mxu0 %v7977
    %v8924 = vpop.f32.mrf.mxu0
    %v8925 = vadd.f32 %v8720, %v8924
    %v8926 = vpop.f32.mrf.mxu0
    %v8927 = vadd.f32 %v8722, %v8926
    %8928 = vdwg.mxu0
    %8929 = vmatpush.bf16.msra.mxu0 %v8310
    %8930 = vmatpush.bf16.msra.mxu0 %v8309
    %8931 = vmatpush.bf16.msra.mxu0 %v8308
    %8932 = vmatpush.bf16.msra.mxu0 %v8307
    %8933 = vmatpush.bf16.msra.mxu0 %v8306
    %8934 = vmatpush.bf16.msra.mxu0 %v8305
    %8935 = vmatpush.bf16.msra.mxu0 %v8304
    %8936 = vmatpush.bf16.msra.mxu0 %v8303
    %8937 = vmatmul.bf16.gmra.mxu0 %v7719
    %v8938 = vpop.f32.mrf.mxu0
    %v8939 = vadd.f32 %v8734, %v8938
    %v8940 = vpop.f32.mrf.mxu0
    %v8941 = vadd.f32 %v8736, %v8940
    %8942 = vmatmul.bf16.gmra.mxu0 %v7726
    %v8943 = vpop.f32.mrf.mxu0
    %v8944 = vadd.f32 %v8739, %v8943
    %v8945 = vpop.f32.mrf.mxu0
    %v8946 = vadd.f32 %v8741, %v8945
    %8947 = vmatmul.bf16.gmra.mxu0 %v7733
    %v8948 = vpop.f32.mrf.mxu0
    %v8949 = vpop.f32.mrf.mxu0
    %8950 = vmatmul.bf16.gmra.mxu0 %v7740
    %v8951 = vpop.f32.mrf.mxu0
    %v8952 = vadd.f32 %v8747, %v8951
    %v8953 = vpop.f32.mrf.mxu0
    %v8954 = vadd.f32 %v8749, %v8953
    %8955 = vmatmul.bf16.gmra.mxu0 %v7747
    %v8956 = vpop.f32.mrf.mxu0
    %v8957 = vadd.f32 %v8752, %v8956
    %v8958 = vpop.f32.mrf.mxu0
    %v8959 = vadd.f32 %v8754, %v8958
    %8960 = vmatmul.bf16.gmra.mxu0 %v7754
    %v8961 = vpop.f32.mrf.mxu0
    %v8962 = vpop.f32.mrf.mxu0
    %8963 = vmatmul.bf16.gmra.mxu0 %v7760
    %v8964 = vpop.f32.mrf.mxu0
    %v8965 = vadd.f32 %v8760, %v8964
    %v8966 = vpop.f32.mrf.mxu0
    %v8967 = vadd.f32 %v8762, %v8966
    %8968 = vmatmul.bf16.gmra.mxu0 %v7766
    %v8969 = vpop.f32.mrf.mxu0
    %v8970 = vadd.f32 %v8765, %v8969
    %v8971 = vpop.f32.mrf.mxu0
    %v8972 = vadd.f32 %v8767, %v8971
    %8973 = vmatmul.bf16.gmra.mxu0 %v7772
    %v8974 = vpop.f32.mrf.mxu0
    %v8975 = vpop.f32.mrf.mxu0
    %8976 = vmatmul.bf16.gmra.mxu0 %v7778
    %v8977 = vpop.f32.mrf.mxu0
    %v8978 = vadd.f32 %v8773, %v8977
    %v8979 = vpop.f32.mrf.mxu0
    %v8980 = vadd.f32 %v8775, %v8979
    %8981 = vmatmul.bf16.gmra.mxu0 %v7784
    %v8982 = vpop.f32.mrf.mxu0
    %v8983 = vadd.f32 %v8778, %v8982
    %v8984 = vpop.f32.mrf.mxu0
    %v8985 = vadd.f32 %v8780, %v8984
    %8986 = vmatmul.bf16.gmra.mxu0 %v7791
    %v8987 = vpop.f32.mrf.mxu0
    %v8988 = vadd.f32 %v8783, %v8987
    %v8989 = vpop.f32.mrf.mxu0
    %v8990 = vadd.f32 %v8785, %v8989
    %8991 = vmatmul.bf16.gmra.mxu0 %v7798
    %v8992 = vpop.f32.mrf.mxu0
    %v8993 = vadd.f32 %v8788, %v8992
    %v8994 = vpop.f32.mrf.mxu0
    %v8995 = vadd.f32 %v8790, %v8994
    %8996 = vmatmul.bf16.gmra.mxu0 %v7805
    %v8997 = vpop.f32.mrf.mxu0
    %v8998 = vpop.f32.mrf.mxu0
    %8999 = vmatmul.bf16.gmra.mxu0 %v7812
    %v9000 = vpop.f32.mrf.mxu0
    %v9001 = vadd.f32 %v8796, %v9000
    %v9002 = vpop.f32.mrf.mxu0
    %v9003 = vadd.f32 %v8798, %v9002
    %9004 = vmatmul.bf16.gmra.mxu0 %v7819
    %v9005 = vpop.f32.mrf.mxu0
    %v9006 = vadd.f32 %v8801, %v9005
    %v9007 = vpop.f32.mrf.mxu0
    %v9008 = vadd.f32 %v8803, %v9007
    %9009 = vmatmul.bf16.gmra.mxu0 %v7826
    %v9010 = vpop.f32.mrf.mxu0
    %v9011 = vpop.f32.mrf.mxu0
    %9012 = vmatmul.bf16.gmra.mxu0 %v7832
    %v9013 = vpop.f32.mrf.mxu0
    %v9014 = vadd.f32 %v8809, %v9013
    %v9015 = vpop.f32.mrf.mxu0
    %v9016 = vadd.f32 %v8811, %v9015
    %9017 = vmatmul.bf16.gmra.mxu0 %v7838
    %v9018 = vpop.f32.mrf.mxu0
    %v9019 = vadd.f32 %v8814, %v9018
    %v9020 = vpop.f32.mrf.mxu0
    %v9021 = vadd.f32 %v8816, %v9020
    %9022 = vmatmul.bf16.gmra.mxu0 %v7844
    %v9023 = vpop.f32.mrf.mxu0
    %v9024 = vpop.f32.mrf.mxu0
    %9025 = vmatmul.bf16.gmra.mxu0 %v7850
    %v9026 = vpop.f32.mrf.mxu0
    %v9027 = vadd.f32 %v8822, %v9026
    %v9028 = vpop.f32.mrf.mxu0
    %v9029 = vadd.f32 %v8824, %v9028
    %9030 = vmatmul.bf16.gmra.mxu0 %v7856
    %v9031 = vpop.f32.mrf.mxu0
    %v9032 = vadd.f32 %v8827, %v9031
    %v9033 = vpop.f32.mrf.mxu0
    %v9034 = vadd.f32 %v8829, %v9033
    %9035 = vmatmul.bf16.gmra.mxu0 %v7863
    %v9036 = vpop.f32.mrf.mxu0
    %v9037 = vadd.f32 %v8832, %v9036
    %v9038 = vpop.f32.mrf.mxu0
    %v9039 = vadd.f32 %v8834, %v9038
    %9040 = vmatmul.bf16.gmra.mxu0 %v7869
    %v9041 = vpop.f32.mrf.mxu0
    %v9042 = vadd.f32 %v8837, %v9041
    %v9043 = vpop.f32.mrf.mxu0
    %v9044 = vadd.f32 %v8839, %v9043
    %9045 = vmatmul.bf16.gmra.mxu0 %v7875
    %v9046 = vpop.f32.mrf.mxu0
    %v9047 = vpop.f32.mrf.mxu0
    %9048 = vmatmul.bf16.gmra.mxu0 %v7881
    %v9049 = vpop.f32.mrf.mxu0
    %v9050 = vadd.f32 %v8845, %v9049
    %v9051 = vpop.f32.mrf.mxu0
    %v9052 = vadd.f32 %v8847, %v9051
    %9053 = vmatmul.bf16.gmra.mxu0 %v7887
    %v9054 = vpop.f32.mrf.mxu0
    %v9055 = vadd.f32 %v8850, %v9054
    %v9056 = vpop.f32.mrf.mxu0
    %v9057 = vadd.f32 %v8852, %v9056
    %9058 = vmatmul.bf16.gmra.mxu0 %v7893
    %v9059 = vpop.f32.mrf.mxu0
    %v9060 = vpop.f32.mrf.mxu0
    %9061 = vmatmul.bf16.gmra.mxu0 %v7898
    %v9062 = vpop.f32.mrf.mxu0
    %v9063 = vadd.f32 %v8858, %v9062
    %v9064 = vpop.f32.mrf.mxu0
    %v9065 = vadd.f32 %v8860, %v9064
    %9066 = vmatmul.bf16.gmra.mxu0 %v7903
    %v9067 = vpop.f32.mrf.mxu0
    %v9068 = vadd.f32 %v8863, %v9067
    %v9069 = vpop.f32.mrf.mxu0
    %v9070 = vadd.f32 %v8865, %v9069
    %9071 = vmatmul.bf16.gmra.mxu0 %v7908
    %v9072 = vpop.f32.mrf.mxu0
    %v9073 = vpop.f32.mrf.mxu0
    %9074 = vmatmul.bf16.gmra.mxu0 %v7913
    %v9075 = vpop.f32.mrf.mxu0
    %v9076 = vadd.f32 %v8871, %v9075
    %v9077 = vpop.f32.mrf.mxu0
    %v9078 = vadd.f32 %v8873, %v9077
    %9079 = vmatmul.bf16.gmra.mxu0 %v7918
    %v9080 = vpop.f32.mrf.mxu0
    %v9081 = vadd.f32 %v8876, %v9080
    %v9082 = vpop.f32.mrf.mxu0
    %v9083 = vadd.f32 %v8878, %v9082
    %9084 = vmatmul.bf16.gmra.mxu0 %v7924
    %v9085 = vpop.f32.mrf.mxu0
    %v9086 = vadd.f32 %v8881, %v9085
    %v9087 = vpop.f32.mrf.mxu0
    %v9088 = vadd.f32 %v8883, %v9087
    %9089 = vmatmul.bf16.gmra.mxu0 %v7930
    %v9090 = vpop.f32.mrf.mxu0
    %v9091 = vadd.f32 %v8886, %v9090
    %v9092 = vpop.f32.mrf.mxu0
    %v9093 = vadd.f32 %v8888, %v9092
    %9094 = vmatmul.bf16.gmra.mxu0 %v7936
    %v9095 = vpop.f32.mrf.mxu0
    %v9096 = vpop.f32.mrf.mxu0
    %9097 = vmatmul.bf16.gmra.mxu0 %v7941
    %v9098 = vpop.f32.mrf.mxu0
    %v9099 = vadd.f32 %v8894, %v9098
    %v9100 = vpop.f32.mrf.mxu0
    %v9101 = vadd.f32 %v8896, %v9100
    %9102 = vmatmul.bf16.gmra.mxu0 %v7946
    %v9103 = vpop.f32.mrf.mxu0
    %v9104 = vadd.f32 %v8899, %v9103
    %v9105 = vpop.f32.mrf.mxu0
    %v9106 = vadd.f32 %v8901, %v9105
    %9107 = vmatmul.bf16.gmra.mxu0 %v7951
    %v9108 = vpop.f32.mrf.mxu0
    %v9109 = vpop.f32.mrf.mxu0
    %9110 = vmatmul.bf16.gmra.mxu0 %v7956
    %v9111 = vpop.f32.mrf.mxu0
    %v9112 = vadd.f32 %v8907, %v9111
    %v9113 = vpop.f32.mrf.mxu0
    %v9114 = vadd.f32 %v8909, %v9113
    %9115 = vmatmul.bf16.gmra.mxu0 %v7961
    %v9116 = vpop.f32.mrf.mxu0
    %v9117 = vadd.f32 %v8912, %v9116
    %v9118 = vpop.f32.mrf.mxu0
    %v9119 = vadd.f32 %v8914, %v9118
    %9120 = vmatmul.bf16.gmra.mxu0 %v7966
    %v9121 = vpop.f32.mrf.mxu0
    %v9122 = vpop.f32.mrf.mxu0
    %9123 = vmatmul.bf16.gmra.mxu0 %v7972
    %v9124 = vpop.f32.mrf.mxu0
    %v9125 = vadd.f32 %v8920, %v9124
    %v9126 = vpop.f32.mrf.mxu0
    %v9127 = vadd.f32 %v8922, %v9126
    %9128 = vmatmul.bf16.gmra.mxu0 %v7978
    %v9129 = vpop.f32.mrf.mxu0
    %v9130 = vadd.f32 %v8925, %v9129
    %v9131 = vpop.f32.mrf.mxu0
    %v9132 = vadd.f32 %v8927, %v9131
    %9133 = vdwg.mxu0
    %9134 = vmatpush.bf16.msra.mxu0 %v8318
    %9135 = vmatpush.bf16.msra.mxu0 %v8317
    %9136 = vmatpush.bf16.msra.mxu0 %v8316
    %9137 = vmatpush.bf16.msra.mxu0 %v8315
    %9138 = vmatpush.bf16.msra.mxu0 %v8314
    %9139 = vmatpush.bf16.msra.mxu0 %v8313
    %9140 = vmatpush.bf16.msra.mxu0 %v8312
    %9141 = vmatpush.bf16.msra.mxu0 %v8311
    %9142 = vmatmul.bf16.gmra.mxu0 %v7720
    %v9143 = vpop.f32.mrf.mxu0
    %v9144 = vadd.f32 %v8939, %v9143
    %v9145 = vpop.f32.mrf.mxu0
    %v9146 = vadd.f32 %v8941, %v9145
    %9147 = vmatmul.bf16.gmra.mxu0 %v7727
    %v9148 = vpop.f32.mrf.mxu0
    %v9149 = vadd.f32 %v8944, %v9148
    %v9150 = vpop.f32.mrf.mxu0
    %v9151 = vadd.f32 %v8946, %v9150
    %9152 = vmatmul.bf16.gmra.mxu0 %v7734
    %v9153 = vpop.f32.mrf.mxu0
    %v9154 = vpop.f32.mrf.mxu0
    %9155 = vmatmul.bf16.gmra.mxu0 %v7741
    %v9156 = vpop.f32.mrf.mxu0
    %v9157 = vadd.f32 %v8952, %v9156
    %v9158 = vpop.f32.mrf.mxu0
    %v9159 = vadd.f32 %v8954, %v9158
    %9160 = vmatmul.bf16.gmra.mxu0 %v7748
    %v9161 = vpop.f32.mrf.mxu0
    %v9162 = vadd.f32 %v8957, %v9161
    %v9163 = vpop.f32.mrf.mxu0
    %v9164 = vadd.f32 %v8959, %v9163
    %9165 = vmatmul.bf16.gmra.mxu0 %v7755
    %v9166 = vpop.f32.mrf.mxu0
    %v9167 = vpop.f32.mrf.mxu0
    %9168 = vmatmul.bf16.gmra.mxu0 %v7761
    %v9169 = vpop.f32.mrf.mxu0
    %v9170 = vadd.f32 %v8965, %v9169
    %v9171 = vpop.f32.mrf.mxu0
    %v9172 = vadd.f32 %v8967, %v9171
    %9173 = vmatmul.bf16.gmra.mxu0 %v7767
    %v9174 = vpop.f32.mrf.mxu0
    %v9175 = vadd.f32 %v8970, %v9174
    %v9176 = vpop.f32.mrf.mxu0
    %v9177 = vadd.f32 %v8972, %v9176
    %9178 = vmatmul.bf16.gmra.mxu0 %v7773
    %v9179 = vpop.f32.mrf.mxu0
    %v9180 = vpop.f32.mrf.mxu0
    %9181 = vmatmul.bf16.gmra.mxu0 %v7779
    %v9182 = vpop.f32.mrf.mxu0
    %v9183 = vadd.f32 %v8978, %v9182
    %v9184 = vpop.f32.mrf.mxu0
    %v9185 = vadd.f32 %v8980, %v9184
    %9186 = vmatmul.bf16.gmra.mxu0 %v7785
    %v9187 = vpop.f32.mrf.mxu0
    %v9188 = vadd.f32 %v8983, %v9187
    %v9189 = vpop.f32.mrf.mxu0
    %v9190 = vadd.f32 %v8985, %v9189
    %9191 = vmatmul.bf16.gmra.mxu0 %v7792
    %v9192 = vpop.f32.mrf.mxu0
    %v9193 = vadd.f32 %v8988, %v9192
    %v9194 = vpop.f32.mrf.mxu0
    %v9195 = vadd.f32 %v8990, %v9194
    %9196 = vmatmul.bf16.gmra.mxu0 %v7799
    %v9197 = vpop.f32.mrf.mxu0
    %v9198 = vadd.f32 %v8993, %v9197
    %v9199 = vpop.f32.mrf.mxu0
    %v9200 = vadd.f32 %v8995, %v9199
    %9201 = vmatmul.bf16.gmra.mxu0 %v7806
    %v9202 = vpop.f32.mrf.mxu0
    %v9203 = vpop.f32.mrf.mxu0
    %9204 = vmatmul.bf16.gmra.mxu0 %v7813
    %v9205 = vpop.f32.mrf.mxu0
    %v9206 = vadd.f32 %v9001, %v9205
    %v9207 = vpop.f32.mrf.mxu0
    %v9208 = vadd.f32 %v9003, %v9207
    %9209 = vmatmul.bf16.gmra.mxu0 %v7820
    %v9210 = vpop.f32.mrf.mxu0
    %v9211 = vadd.f32 %v9006, %v9210
    %v9212 = vpop.f32.mrf.mxu0
    %v9213 = vadd.f32 %v9008, %v9212
    %9214 = vmatmul.bf16.gmra.mxu0 %v7827
    %v9215 = vpop.f32.mrf.mxu0
    %v9216 = vpop.f32.mrf.mxu0
    %9217 = vmatmul.bf16.gmra.mxu0 %v7833
    %v9218 = vpop.f32.mrf.mxu0
    %v9219 = vadd.f32 %v9014, %v9218
    %v9220 = vpop.f32.mrf.mxu0
    %v9221 = vadd.f32 %v9016, %v9220
    %9222 = vmatmul.bf16.gmra.mxu0 %v7839
    %v9223 = vpop.f32.mrf.mxu0
    %v9224 = vadd.f32 %v9019, %v9223
    %v9225 = vpop.f32.mrf.mxu0
    %v9226 = vadd.f32 %v9021, %v9225
    %9227 = vmatmul.bf16.gmra.mxu0 %v7845
    %v9228 = vpop.f32.mrf.mxu0
    %v9229 = vpop.f32.mrf.mxu0
    %9230 = vmatmul.bf16.gmra.mxu0 %v7851
    %v9231 = vpop.f32.mrf.mxu0
    %v9232 = vadd.f32 %v9027, %v9231
    %v9233 = vpop.f32.mrf.mxu0
    %v9234 = vadd.f32 %v9029, %v9233
    %9235 = vmatmul.bf16.gmra.mxu0 %v7857
    %v9236 = vpop.f32.mrf.mxu0
    %v9237 = vadd.f32 %v9032, %v9236
    %v9238 = vpop.f32.mrf.mxu0
    %v9239 = vadd.f32 %v9034, %v9238
    %9240 = vmatmul.bf16.gmra.mxu0 %v7864
    %v9241 = vpop.f32.mrf.mxu0
    %v9242 = vadd.f32 %v9037, %v9241
    %v9243 = vpop.f32.mrf.mxu0
    %v9244 = vadd.f32 %v9039, %v9243
    %9245 = vmatmul.bf16.gmra.mxu0 %v7870
    %v9246 = vpop.f32.mrf.mxu0
    %v9247 = vadd.f32 %v9042, %v9246
    %v9248 = vpop.f32.mrf.mxu0
    %v9249 = vadd.f32 %v9044, %v9248
    %9250 = vmatmul.bf16.gmra.mxu0 %v7876
    %v9251 = vpop.f32.mrf.mxu0
    %v9252 = vpop.f32.mrf.mxu0
    %9253 = vmatmul.bf16.gmra.mxu0 %v7882
    %v9254 = vpop.f32.mrf.mxu0
    %v9255 = vadd.f32 %v9050, %v9254
    %v9256 = vpop.f32.mrf.mxu0
    %v9257 = vadd.f32 %v9052, %v9256
    %9258 = vmatmul.bf16.gmra.mxu0 %v7888
    %v9259 = vpop.f32.mrf.mxu0
    %v9260 = vadd.f32 %v9055, %v9259
    %v9261 = vpop.f32.mrf.mxu0
    %v9262 = vadd.f32 %v9057, %v9261
    %9263 = vmatmul.bf16.gmra.mxu0 %v7894
    %v9264 = vpop.f32.mrf.mxu0
    %v9265 = vpop.f32.mrf.mxu0
    %9266 = vmatmul.bf16.gmra.mxu0 %v7899
    %v9267 = vpop.f32.mrf.mxu0
    %v9268 = vadd.f32 %v9063, %v9267
    %v9269 = vpop.f32.mrf.mxu0
    %v9270 = vadd.f32 %v9065, %v9269
    %9271 = vmatmul.bf16.gmra.mxu0 %v7904
    %v9272 = vpop.f32.mrf.mxu0
    %v9273 = vadd.f32 %v9068, %v9272
    %v9274 = vpop.f32.mrf.mxu0
    %v9275 = vadd.f32 %v9070, %v9274
    %9276 = vmatmul.bf16.gmra.mxu0 %v7909
    %v9277 = vpop.f32.mrf.mxu0
    %v9278 = vpop.f32.mrf.mxu0
    %9279 = vmatmul.bf16.gmra.mxu0 %v7914
    %v9280 = vpop.f32.mrf.mxu0
    %v9281 = vadd.f32 %v9076, %v9280
    %v9282 = vpop.f32.mrf.mxu0
    %v9283 = vadd.f32 %v9078, %v9282
    %9284 = vmatmul.bf16.gmra.mxu0 %v7919
    %v9285 = vpop.f32.mrf.mxu0
    %v9286 = vadd.f32 %v9081, %v9285
    %v9287 = vpop.f32.mrf.mxu0
    %v9288 = vadd.f32 %v9083, %v9287
    %9289 = vmatmul.bf16.gmra.mxu0 %v7925
    %v9290 = vpop.f32.mrf.mxu0
    %v9291 = vadd.f32 %v9086, %v9290
    %v9292 = vpop.f32.mrf.mxu0
    %v9293 = vadd.f32 %v9088, %v9292
    %9294 = vmatmul.bf16.gmra.mxu0 %v7931
    %v9295 = vpop.f32.mrf.mxu0
    %v9296 = vadd.f32 %v9091, %v9295
    %v9297 = vpop.f32.mrf.mxu0
    %v9298 = vadd.f32 %v9093, %v9297
    %9299 = vmatmul.bf16.gmra.mxu0 %v7937
    %v9300 = vpop.f32.mrf.mxu0
    %v9301 = vpop.f32.mrf.mxu0
    %9302 = vmatmul.bf16.gmra.mxu0 %v7942
    %v9303 = vpop.f32.mrf.mxu0
    %v9304 = vadd.f32 %v9099, %v9303
    %v9305 = vpop.f32.mrf.mxu0
    %v9306 = vadd.f32 %v9101, %v9305
    %9307 = vmatmul.bf16.gmra.mxu0 %v7947
    %v9308 = vpop.f32.mrf.mxu0
    %v9309 = vadd.f32 %v9104, %v9308
    %v9310 = vpop.f32.mrf.mxu0
    %v9311 = vadd.f32 %v9106, %v9310
    %9312 = vmatmul.bf16.gmra.mxu0 %v7952
    %v9313 = vpop.f32.mrf.mxu0
    %v9314 = vpop.f32.mrf.mxu0
    %9315 = vmatmul.bf16.gmra.mxu0 %v7957
    %v9316 = vpop.f32.mrf.mxu0
    %v9317 = vadd.f32 %v9112, %v9316
    %v9318 = vpop.f32.mrf.mxu0
    %v9319 = vadd.f32 %v9114, %v9318
    %9320 = vmatmul.bf16.gmra.mxu0 %v7962
    %v9321 = vpop.f32.mrf.mxu0
    %v9322 = vadd.f32 %v9117, %v9321
    %v9323 = vpop.f32.mrf.mxu0
    %v9324 = vadd.f32 %v9119, %v9323
    %9325 = vmatmul.bf16.gmra.mxu0 %v7967
    %v9326 = vpop.f32.mrf.mxu0
    %v9327 = vpop.f32.mrf.mxu0
    %9328 = vmatmul.bf16.gmra.mxu0 %v7973
    %v9329 = vpop.f32.mrf.mxu0
    %v9330 = vadd.f32 %v9125, %v9329
    %v9331 = vpop.f32.mrf.mxu0
    %v9332 = vadd.f32 %v9127, %v9331
    %9333 = vmatmul.bf16.gmra.mxu0 %v7979
    %v9334 = vpop.f32.mrf.mxu0
    %v9335 = vadd.f32 %v9130, %v9334
    %v9336 = vpop.f32.mrf.mxu0
    %v9337 = vadd.f32 %v9132, %v9336
    %9338 = vdwg.mxu0
    %9339 = vmatpush.bf16.msra.mxu0 %v8326
    %9340 = vmatpush.bf16.msra.mxu0 %v8325
    %9341 = vmatpush.bf16.msra.mxu0 %v8324
    %9342 = vmatpush.bf16.msra.mxu0 %v8323
    %9343 = vmatpush.bf16.msra.mxu0 %v8322
    %9344 = vmatpush.bf16.msra.mxu0 %v8321
    %9345 = vmatpush.bf16.msra.mxu0 %v8320
    %9346 = vmatpush.bf16.msra.mxu0 %v8319
    %9347 = vmatmul.bf16.gmra.mxu0 %v7721
    %v9348 = vpop.f32.mrf.mxu0
    %v9349 = vadd.f32 %v9144, %v9348
    %v9350 = vpop.f32.mrf.mxu0
    %v9351 = vadd.f32 %v9146, %v9350
    %9352 = vmatmul.bf16.gmra.mxu0 %v7728
    %v9353 = vpop.f32.mrf.mxu0
    %v9354 = vadd.f32 %v9149, %v9353
    %v9355 = vpop.f32.mrf.mxu0
    %v9356 = vadd.f32 %v9151, %v9355
    %9357 = vmatmul.bf16.gmra.mxu0 %v7735
    %v9358 = vpop.f32.mrf.mxu0
    %v9359 = vpop.f32.mrf.mxu0
    %9360 = vmatmul.bf16.gmra.mxu0 %v7742
    %v9361 = vpop.f32.mrf.mxu0
    %v9362 = vadd.f32 %v9157, %v9361
    %v9363 = vpop.f32.mrf.mxu0
    %v9364 = vadd.f32 %v9159, %v9363
    %9365 = vmatmul.bf16.gmra.mxu0 %v7749
    %v9366 = vpop.f32.mrf.mxu0
    %v9367 = vadd.f32 %v9162, %v9366
    %v9368 = vpop.f32.mrf.mxu0
    %v9369 = vadd.f32 %v9164, %v9368
    %9370 = vmatmul.bf16.gmra.mxu0 %v7756
    %v9371 = vpop.f32.mrf.mxu0
    %v9372 = vpop.f32.mrf.mxu0
    %9373 = vmatmul.bf16.gmra.mxu0 %v7762
    %v9374 = vpop.f32.mrf.mxu0
    %v9375 = vadd.f32 %v9170, %v9374
    %v9376 = vpop.f32.mrf.mxu0
    %v9377 = vadd.f32 %v9172, %v9376
    %9378 = vmatmul.bf16.gmra.mxu0 %v7768
    %v9379 = vpop.f32.mrf.mxu0
    %v9380 = vadd.f32 %v9175, %v9379
    %v9381 = vpop.f32.mrf.mxu0
    %v9382 = vadd.f32 %v9177, %v9381
    %9383 = vmatmul.bf16.gmra.mxu0 %v7774
    %v9384 = vpop.f32.mrf.mxu0
    %v9385 = vpop.f32.mrf.mxu0
    %9386 = vmatmul.bf16.gmra.mxu0 %v7780
    %v9387 = vpop.f32.mrf.mxu0
    %v9388 = vadd.f32 %v9183, %v9387
    %v9389 = vpop.f32.mrf.mxu0
    %v9390 = vadd.f32 %v9185, %v9389
    %9391 = vmatmul.bf16.gmra.mxu0 %v7786
    %v9392 = vpop.f32.mrf.mxu0
    %v9393 = vadd.f32 %v9188, %v9392
    %v9394 = vpop.f32.mrf.mxu0
    %v9395 = vadd.f32 %v9190, %v9394
    %9396 = vmatmul.bf16.gmra.mxu0 %v7793
    %v9397 = vpop.f32.mrf.mxu0
    %v9398 = vadd.f32 %v9193, %v9397
    %v9399 = vpop.f32.mrf.mxu0
    %v9400 = vadd.f32 %v9195, %v9399
    %9401 = vmatmul.bf16.gmra.mxu0 %v7800
    %v9402 = vpop.f32.mrf.mxu0
    %v9403 = vadd.f32 %v9198, %v9402
    %v9404 = vpop.f32.mrf.mxu0
    %v9405 = vadd.f32 %v9200, %v9404
    %9406 = vmatmul.bf16.gmra.mxu0 %v7807
    %v9407 = vpop.f32.mrf.mxu0
    %v9408 = vpop.f32.mrf.mxu0
    %9409 = vmatmul.bf16.gmra.mxu0 %v7814
    %v9410 = vpop.f32.mrf.mxu0
    %v9411 = vadd.f32 %v9206, %v9410
    %v9412 = vpop.f32.mrf.mxu0
    %v9413 = vadd.f32 %v9208, %v9412
    %9414 = vmatmul.bf16.gmra.mxu0 %v7821
    %v9415 = vpop.f32.mrf.mxu0
    %v9416 = vadd.f32 %v9211, %v9415
    %v9417 = vpop.f32.mrf.mxu0
    %v9418 = vadd.f32 %v9213, %v9417
    %9419 = vmatmul.bf16.gmra.mxu0 %v7828
    %v9420 = vpop.f32.mrf.mxu0
    %v9421 = vpop.f32.mrf.mxu0
    %9422 = vmatmul.bf16.gmra.mxu0 %v7834
    %v9423 = vpop.f32.mrf.mxu0
    %v9424 = vadd.f32 %v9219, %v9423
    %v9425 = vpop.f32.mrf.mxu0
    %v9426 = vadd.f32 %v9221, %v9425
    %9427 = vmatmul.bf16.gmra.mxu0 %v7840
    %v9428 = vpop.f32.mrf.mxu0
    %v9429 = vadd.f32 %v9224, %v9428
    %v9430 = vpop.f32.mrf.mxu0
    %v9431 = vadd.f32 %v9226, %v9430
    %9432 = vmatmul.bf16.gmra.mxu0 %v7846
    %v9433 = vpop.f32.mrf.mxu0
    %v9434 = vpop.f32.mrf.mxu0
    %9435 = vmatmul.bf16.gmra.mxu0 %v7852
    %v9436 = vpop.f32.mrf.mxu0
    %v9437 = vadd.f32 %v9232, %v9436
    %v9438 = vpop.f32.mrf.mxu0
    %v9439 = vadd.f32 %v9234, %v9438
    %9440 = vmatmul.bf16.gmra.mxu0 %v7858
    %v9441 = vpop.f32.mrf.mxu0
    %v9442 = vadd.f32 %v9237, %v9441
    %v9443 = vpop.f32.mrf.mxu0
    %v9444 = vadd.f32 %v9239, %v9443
    %9445 = vmatmul.bf16.gmra.mxu0 %v7794
    %v9446 = vpop.f32.mrf.mxu0
    %v9447 = vadd.f32 %v9242, %v9446
    %v9448 = vpop.f32.mrf.mxu0
    %v9449 = vadd.f32 %v9244, %v9448
    %9450 = vmatmul.bf16.gmra.mxu0 %v7801
    %v9451 = vpop.f32.mrf.mxu0
    %v9452 = vadd.f32 %v9247, %v9451
    %v9453 = vpop.f32.mrf.mxu0
    %v9454 = vadd.f32 %v9249, %v9453
    %9455 = vmatmul.bf16.gmra.mxu0 %v7808
    %v9456 = vpop.f32.mrf.mxu0
    %v9457 = vpop.f32.mrf.mxu0
    %9458 = vmatmul.bf16.gmra.mxu0 %v7815
    %v9459 = vpop.f32.mrf.mxu0
    %v9460 = vadd.f32 %v9255, %v9459
    %v9461 = vpop.f32.mrf.mxu0
    %v9462 = vadd.f32 %v9257, %v9461
    %9463 = vmatmul.bf16.gmra.mxu0 %v7822
    %v9464 = vpop.f32.mrf.mxu0
    %v9465 = vadd.f32 %v9260, %v9464
    %v9466 = vpop.f32.mrf.mxu0
    %v9467 = vadd.f32 %v9262, %v9466
    %9468 = vmatmul.bf16.gmra.mxu0 %v7829
    %v9469 = vpop.f32.mrf.mxu0
    %v9470 = vpop.f32.mrf.mxu0
    %9471 = vmatmul.bf16.gmra.mxu0 %v7835
    %v9472 = vpop.f32.mrf.mxu0
    %v9473 = vadd.f32 %v9268, %v9472
    %v9474 = vpop.f32.mrf.mxu0
    %v9475 = vadd.f32 %v9270, %v9474
    %9476 = vmatmul.bf16.gmra.mxu0 %v7841
    %v9477 = vpop.f32.mrf.mxu0
    %v9478 = vadd.f32 %v9273, %v9477
    %v9479 = vpop.f32.mrf.mxu0
    %v9480 = vadd.f32 %v9275, %v9479
    %9481 = vmatmul.bf16.gmra.mxu0 %v7847
    %v9482 = vpop.f32.mrf.mxu0
    %v9483 = vpop.f32.mrf.mxu0
    %9484 = vmatmul.bf16.gmra.mxu0 %v7853
    %v9485 = vpop.f32.mrf.mxu0
    %v9486 = vadd.f32 %v9281, %v9485
    %v9487 = vpop.f32.mrf.mxu0
    %v9488 = vadd.f32 %v9283, %v9487
    %9489 = vmatmul.bf16.gmra.mxu0 %v7859
    %v9490 = vpop.f32.mrf.mxu0
    %v9491 = vadd.f32 %v9286, %v9490
    %v9492 = vpop.f32.mrf.mxu0
    %v9493 = vadd.f32 %v9288, %v9492
    %9494 = vmatmul.bf16.gmra.mxu0 %v7926
    %v9495 = vpop.f32.mrf.mxu0
    %v9496 = vadd.f32 %v9291, %v9495
    %v9497 = vpop.f32.mrf.mxu0
    %v9498 = vadd.f32 %v9293, %v9497
    %9499 = vmatmul.bf16.gmra.mxu0 %v7932
    %v9500 = vpop.f32.mrf.mxu0
    %v9501 = vadd.f32 %v9296, %v9500
    %v9502 = vpop.f32.mrf.mxu0
    %v9503 = vadd.f32 %v9298, %v9502
    %9504 = vmatmul.bf16.gmra.mxu0 %v7938
    %v9505 = vpop.f32.mrf.mxu0
    %v9506 = vpop.f32.mrf.mxu0
    %9507 = vmatmul.bf16.gmra.mxu0 %v7943
    %v9508 = vpop.f32.mrf.mxu0
    %v9509 = vadd.f32 %v9304, %v9508
    %v9510 = vpop.f32.mrf.mxu0
    %v9511 = vadd.f32 %v9306, %v9510
    %9512 = vmatmul.bf16.gmra.mxu0 %v7948
    %v9513 = vpop.f32.mrf.mxu0
    %v9514 = vadd.f32 %v9309, %v9513
    %v9515 = vpop.f32.mrf.mxu0
    %v9516 = vadd.f32 %v9311, %v9515
    %9517 = vmatmul.bf16.gmra.mxu0 %v7953
    %v9518 = vpop.f32.mrf.mxu0
    %v9519 = vpop.f32.mrf.mxu0
    %9520 = vmatmul.bf16.gmra.mxu0 %v7958
    %v9521 = vpop.f32.mrf.mxu0
    %v9522 = vadd.f32 %v9317, %v9521
    %v9523 = vpop.f32.mrf.mxu0
    %v9524 = vadd.f32 %v9319, %v9523
    %9525 = vmatmul.bf16.gmra.mxu0 %v7963
    %v9526 = vpop.f32.mrf.mxu0
    %v9527 = vadd.f32 %v9322, %v9526
    %v9528 = vpop.f32.mrf.mxu0
    %v9529 = vadd.f32 %v9324, %v9528
    %9530 = vmatmul.bf16.gmra.mxu0 %v7968
    %v9531 = vpop.f32.mrf.mxu0
    %v9532 = vpop.f32.mrf.mxu0
    %9533 = vmatmul.bf16.gmra.mxu0 %v7974
    %v9534 = vpop.f32.mrf.mxu0
    %v9535 = vadd.f32 %v9330, %v9534
    %v9536 = vpop.f32.mrf.mxu0
    %v9537 = vadd.f32 %v9332, %v9536
    %9538 = vmatmul.bf16.gmra.mxu0 %v7980
    %v9539 = vpop.f32.mrf.mxu0
    %v9540 = vadd.f32 %v9335, %v9539
    %v9541 = vpop.f32.mrf.mxu0
    %v9542 = vadd.f32 %v9337, %v9541
    %9543 = vdwg.mxu0
    %9544 = vmatpush.bf16.msra.mxu0 %v8334
    %9545 = vmatpush.bf16.msra.mxu0 %v8333
    %9546 = vmatpush.bf16.msra.mxu0 %v8332
    %9547 = vmatpush.bf16.msra.mxu0 %v8331
    %9548 = vmatpush.bf16.msra.mxu0 %v8330
    %9549 = vmatpush.bf16.msra.mxu0 %v8329
    %9550 = vmatpush.bf16.msra.mxu0 %v8328
    %9551 = vmatpush.bf16.msra.mxu0 %v8327
    %9552 = vmatmul.bf16.gmra.mxu0 %v7722
    %v9553 = vpop.f32.mrf.mxu0
    %v9554 = vadd.f32 %v9349, %v9553
    %v9555 = vpop.f32.mrf.mxu0
    %v9556 = vadd.f32 %v9351, %v9555
    %9557 = vmatmul.bf16.gmra.mxu0 %v7729
    %v9558 = vpop.f32.mrf.mxu0
    %v9559 = vadd.f32 %v9354, %v9558
    %v9560 = vpop.f32.mrf.mxu0
    %v9561 = vadd.f32 %v9356, %v9560
    %9562 = vmatmul.bf16.gmra.mxu0 %v7736
    %v9563 = vpop.f32.mrf.mxu0
    %v9564 = vpop.f32.mrf.mxu0
    %9565 = vmatmul.bf16.gmra.mxu0 %v7743
    %v9566 = vpop.f32.mrf.mxu0
    %v9567 = vadd.f32 %v9362, %v9566
    %v9568 = vpop.f32.mrf.mxu0
    %v9569 = vadd.f32 %v9364, %v9568
    %9570 = vmatmul.bf16.gmra.mxu0 %v7750
    %v9571 = vpop.f32.mrf.mxu0
    %v9572 = vadd.f32 %v9367, %v9571
    %v9573 = vpop.f32.mrf.mxu0
    %v9574 = vadd.f32 %v9369, %v9573
    %9575 = vmatmul.bf16.gmra.mxu0 %v7757
    %v9576 = vpop.f32.mrf.mxu0
    %v9577 = vpop.f32.mrf.mxu0
    %9578 = vmatmul.bf16.gmra.mxu0 %v7763
    %v9579 = vpop.f32.mrf.mxu0
    %v9580 = vadd.f32 %v9375, %v9579
    %v9581 = vpop.f32.mrf.mxu0
    %v9582 = vadd.f32 %v9377, %v9581
    %9583 = vmatmul.bf16.gmra.mxu0 %v7769
    %v9584 = vpop.f32.mrf.mxu0
    %v9585 = vadd.f32 %v9380, %v9584
    %v9586 = vpop.f32.mrf.mxu0
    %v9587 = vadd.f32 %v9382, %v9586
    %9588 = vmatmul.bf16.gmra.mxu0 %v7775
    %v9589 = vpop.f32.mrf.mxu0
    %v9590 = vpop.f32.mrf.mxu0
    %9591 = vmatmul.bf16.gmra.mxu0 %v7781
    %v9592 = vpop.f32.mrf.mxu0
    %v9593 = vadd.f32 %v9388, %v9592
    %v9594 = vpop.f32.mrf.mxu0
    %v9595 = vadd.f32 %v9390, %v9594
    %9596 = vmatmul.bf16.gmra.mxu0 %v7787
    %v9597 = vpop.f32.mrf.mxu0
    %v9598 = vadd.f32 %v9393, %v9597
    %v9599 = vpop.f32.mrf.mxu0
    %v9600 = vadd.f32 %v9395, %v9599
    %9601 = vmatmul.bf16.gmra.mxu0 %v7794
    %v9602 = vpop.f32.mrf.mxu0
    %v9603 = vadd.f32 %v9398, %v9602
    %v9604 = vpop.f32.mrf.mxu0
    %v9605 = vadd.f32 %v9400, %v9604
    %9606 = vmatmul.bf16.gmra.mxu0 %v7801
    %v9607 = vpop.f32.mrf.mxu0
    %v9608 = vadd.f32 %v9403, %v9607
    %v9609 = vpop.f32.mrf.mxu0
    %v9610 = vadd.f32 %v9405, %v9609
    %9611 = vmatmul.bf16.gmra.mxu0 %v7808
    %v9612 = vpop.f32.mrf.mxu0
    %v9613 = vpop.f32.mrf.mxu0
    %9614 = vmatmul.bf16.gmra.mxu0 %v7815
    %v9615 = vpop.f32.mrf.mxu0
    %v9616 = vadd.f32 %v9411, %v9615
    %v9617 = vpop.f32.mrf.mxu0
    %v9618 = vadd.f32 %v9413, %v9617
    %9619 = vmatmul.bf16.gmra.mxu0 %v7822
    %v9620 = vpop.f32.mrf.mxu0
    %v9621 = vadd.f32 %v9416, %v9620
    %v9622 = vpop.f32.mrf.mxu0
    %v9623 = vadd.f32 %v9418, %v9622
    %9624 = vmatmul.bf16.gmra.mxu0 %v7829
    %v9625 = vpop.f32.mrf.mxu0
    %v9626 = vpop.f32.mrf.mxu0
    %9627 = vmatmul.bf16.gmra.mxu0 %v7835
    %v9628 = vpop.f32.mrf.mxu0
    %v9629 = vadd.f32 %v9424, %v9628
    %v9630 = vpop.f32.mrf.mxu0
    %v9631 = vadd.f32 %v9426, %v9630
    %9632 = vmatmul.bf16.gmra.mxu0 %v7841
    %v9633 = vpop.f32.mrf.mxu0
    %v9634 = vadd.f32 %v9429, %v9633
    %v9635 = vpop.f32.mrf.mxu0
    %v9636 = vadd.f32 %v9431, %v9635
    %9637 = vmatmul.bf16.gmra.mxu0 %v7847
    %v9638 = vpop.f32.mrf.mxu0
    %v9639 = vpop.f32.mrf.mxu0
    %9640 = vmatmul.bf16.gmra.mxu0 %v7853
    %v9641 = vpop.f32.mrf.mxu0
    %v9642 = vadd.f32 %v9437, %v9641
    %v9643 = vpop.f32.mrf.mxu0
    %v9644 = vadd.f32 %v9439, %v9643
    %9645 = vmatmul.bf16.gmra.mxu0 %v7859
    %v9646 = vpop.f32.mrf.mxu0
    %v9647 = vadd.f32 %v9442, %v9646
    %v9648 = vpop.f32.mrf.mxu0
    %v9649 = vadd.f32 %v9444, %v9648
    %9650 = vmatmul.bf16.gmra.mxu0 %v7865
    %v9651 = vpop.f32.mrf.mxu0
    %v9652 = vadd.f32 %v9447, %v9651
    %v9653 = vpop.f32.mrf.mxu0
    %v9654 = vadd.f32 %v9449, %v9653
    %9655 = vmatmul.bf16.gmra.mxu0 %v7871
    %v9656 = vpop.f32.mrf.mxu0
    %v9657 = vadd.f32 %v9452, %v9656
    %v9658 = vpop.f32.mrf.mxu0
    %v9659 = vadd.f32 %v9454, %v9658
    %9660 = vmatmul.bf16.gmra.mxu0 %v7877
    %v9661 = vpop.f32.mrf.mxu0
    %v9662 = vpop.f32.mrf.mxu0
    %9663 = vmatmul.bf16.gmra.mxu0 %v7883
    %v9664 = vpop.f32.mrf.mxu0
    %v9665 = vadd.f32 %v9460, %v9664
    %v9666 = vpop.f32.mrf.mxu0
    %v9667 = vadd.f32 %v9462, %v9666
    %9668 = vmatmul.bf16.gmra.mxu0 %v7889
    %v9669 = vpop.f32.mrf.mxu0
    %v9670 = vadd.f32 %v9465, %v9669
    %v9671 = vpop.f32.mrf.mxu0
    %v9672 = vadd.f32 %v9467, %v9671
    %9673 = vmatmul.bf16.gmra.mxu0 %v7895
    %v9674 = vpop.f32.mrf.mxu0
    %v9675 = vpop.f32.mrf.mxu0
    %9676 = vmatmul.bf16.gmra.mxu0 %v7900
    %v9677 = vpop.f32.mrf.mxu0
    %v9678 = vadd.f32 %v9473, %v9677
    %v9679 = vpop.f32.mrf.mxu0
    %v9680 = vadd.f32 %v9475, %v9679
    %9681 = vmatmul.bf16.gmra.mxu0 %v7905
    %v9682 = vpop.f32.mrf.mxu0
    %v9683 = vadd.f32 %v9478, %v9682
    %v9684 = vpop.f32.mrf.mxu0
    %v9685 = vadd.f32 %v9480, %v9684
    %9686 = vmatmul.bf16.gmra.mxu0 %v7910
    %v9687 = vpop.f32.mrf.mxu0
    %v9688 = vpop.f32.mrf.mxu0
    %9689 = vmatmul.bf16.gmra.mxu0 %v7915
    %v9690 = vpop.f32.mrf.mxu0
    %v9691 = vadd.f32 %v9486, %v9690
    %v9692 = vpop.f32.mrf.mxu0
    %v9693 = vadd.f32 %v9488, %v9692
    %9694 = vmatmul.bf16.gmra.mxu0 %v7920
    %v9695 = vpop.f32.mrf.mxu0
    %v9696 = vadd.f32 %v9491, %v9695
    %v9697 = vpop.f32.mrf.mxu0
    %v9698 = vadd.f32 %v9493, %v9697
    %9699 = vmatmul.bf16.gmra.mxu0 %v7742
    %v9700 = vpop.f32.mrf.mxu0
    %v9701 = vadd.f32 %v9496, %v9700
    %v9702 = vpop.f32.mrf.mxu0
    %v9703 = vadd.f32 %v9498, %v9702
    %9704 = vmatmul.bf16.gmra.mxu0 %v7749
    %v9705 = vpop.f32.mrf.mxu0
    %v9706 = vadd.f32 %v9501, %v9705
    %v9707 = vpop.f32.mrf.mxu0
    %v9708 = vadd.f32 %v9503, %v9707
    %9709 = vmatmul.bf16.gmra.mxu0 %v7756
    %v9710 = vpop.f32.mrf.mxu0
    %v9711 = vpop.f32.mrf.mxu0
    %9712 = vmatmul.bf16.gmra.mxu0 %v7762
    %v9713 = vpop.f32.mrf.mxu0
    %v9714 = vadd.f32 %v9509, %v9713
    %v9715 = vpop.f32.mrf.mxu0
    %v9716 = vadd.f32 %v9511, %v9715
    %9717 = vmatmul.bf16.gmra.mxu0 %v7768
    %v9718 = vpop.f32.mrf.mxu0
    %v9719 = vadd.f32 %v9514, %v9718
    %v9720 = vpop.f32.mrf.mxu0
    %v9721 = vadd.f32 %v9516, %v9720
    %9722 = vmatmul.bf16.gmra.mxu0 %v7774
    %v9723 = vpop.f32.mrf.mxu0
    %v9724 = vpop.f32.mrf.mxu0
    %9725 = vmatmul.bf16.gmra.mxu0 %v7780
    %v9726 = vpop.f32.mrf.mxu0
    %v9727 = vadd.f32 %v9522, %v9726
    %v9728 = vpop.f32.mrf.mxu0
    %v9729 = vadd.f32 %v9524, %v9728
    %9730 = vmatmul.bf16.gmra.mxu0 %v7786
    %v9731 = vpop.f32.mrf.mxu0
    %v9732 = vadd.f32 %v9527, %v9731
    %v9733 = vpop.f32.mrf.mxu0
    %v9734 = vadd.f32 %v9529, %v9733
    %9735 = vmatmul.bf16.gmra.mxu0 %v7969
    %v9736 = vpop.f32.mrf.mxu0
    %v9737 = vpop.f32.mrf.mxu0
    %9738 = vmatmul.bf16.gmra.mxu0 %v7975
    %v9739 = vpop.f32.mrf.mxu0
    %v9740 = vadd.f32 %v9535, %v9739
    %v9741 = vpop.f32.mrf.mxu0
    %v9742 = vadd.f32 %v9537, %v9741
    %9743 = vmatmul.bf16.gmra.mxu0 %v7981
    %v9744 = vpop.f32.mrf.mxu0
    %v9745 = vadd.f32 %v9540, %v9744
    %v9746 = vpop.f32.mrf.mxu0
    %v9747 = vadd.f32 %v9542, %v9746
    %9748 = vdwg.mxu0
    %9749 = vmatpush.bf16.msra.mxu0 0
    %9750 = vmatpush.bf16.msra.mxu0 0
    %9751 = vmatpush.bf16.msra.mxu0 0
    %9752 = vmatpush.bf16.msra.mxu0 0
    %9753 = vmatpush.bf16.msra.mxu0 0
    %9754 = vmatpush.bf16.msra.mxu0 0
    %9755 = vmatpush.bf16.msra.mxu0 %v8336
    %9756 = vmatpush.bf16.msra.mxu0 %v8335
    %9757 = vmatmul.bf16.gmra.mxu0 %v8388
    %v9758 = vpop.f32.mrf.mxu0
    %v9759 = vadd.f32 %v9554, %v9758
    %v9760 = vpop.f32.mrf.mxu0
    %v9761 = vadd.f32 %v9556, %v9760
    %9762 = vmatmul.bf16.gmra.mxu0 %v8391
    %v9763 = vpop.f32.mrf.mxu0
    %v9764 = vadd.f32 %v9559, %v9763
    %v9765 = vpop.f32.mrf.mxu0
    %v9766 = vadd.f32 %v9561, %v9765
    %9767 = vmatmul.bf16.gmra.mxu0 %v8394
    %v9768 = vpop.f32.mrf.mxu0
    %v9769 = vpop.f32.mrf.mxu0
    %9770 = vmatmul.bf16.gmra.mxu0 %v8397
    %v9771 = vpop.f32.mrf.mxu0
    %v9772 = vadd.f32 %v9567, %v9771
    %v9773 = vpop.f32.mrf.mxu0
    %v9774 = vadd.f32 %v9569, %v9773
    %9775 = vmatmul.bf16.gmra.mxu0 %v8400
    %v9776 = vpop.f32.mrf.mxu0
    %v9777 = vadd.f32 %v9572, %v9776
    %v9778 = vpop.f32.mrf.mxu0
    %v9779 = vadd.f32 %v9574, %v9778
    %9780 = vmatmul.bf16.gmra.mxu0 %v8403
    %v9781 = vpop.f32.mrf.mxu0
    %v9782 = vpop.f32.mrf.mxu0
    %9783 = vmatmul.bf16.gmra.mxu0 %v8406
    %v9784 = vpop.f32.mrf.mxu0
    %v9785 = vadd.f32 %v9580, %v9784
    %v9786 = vpop.f32.mrf.mxu0
    %v9787 = vadd.f32 %v9582, %v9786
    %9788 = vmatmul.bf16.gmra.mxu0 %v8409
    %v9789 = vpop.f32.mrf.mxu0
    %v9790 = vadd.f32 %v9585, %v9789
    %v9791 = vpop.f32.mrf.mxu0
    %v9792 = vadd.f32 %v9587, %v9791
    %9793 = vmatmul.bf16.gmra.mxu0 %v8412
    %v9794 = vpop.f32.mrf.mxu0
    %v9795 = vpop.f32.mrf.mxu0
    %9796 = vmatmul.bf16.gmra.mxu0 %v8415
    %v9797 = vpop.f32.mrf.mxu0
    %v9798 = vadd.f32 %v9593, %v9797
    %v9799 = vpop.f32.mrf.mxu0
    %v9800 = vadd.f32 %v9595, %v9799
    %9801 = vmatmul.bf16.gmra.mxu0 %v8418
    %v9802 = vpop.f32.mrf.mxu0
    %v9803 = vadd.f32 %v9598, %v9802
    %v9804 = vpop.f32.mrf.mxu0
    %v9805 = vadd.f32 %v9600, %v9804
    %9806 = vmatmul.bf16.gmra.mxu0 %v8421
    %v9807 = vpop.f32.mrf.mxu0
    %v9808 = vadd.f32 %v9603, %v9807
    %v9809 = vpop.f32.mrf.mxu0
    %v9810 = vadd.f32 %v9605, %v9809
    %9811 = vmatmul.bf16.gmra.mxu0 %v8424
    %v9812 = vpop.f32.mrf.mxu0
    %v9813 = vadd.f32 %v9608, %v9812
    %v9814 = vpop.f32.mrf.mxu0
    %v9815 = vadd.f32 %v9610, %v9814
    %9816 = vmatmul.bf16.gmra.mxu0 %v8427
    %v9817 = vpop.f32.mrf.mxu0
    %v9818 = vpop.f32.mrf.mxu0
    %9819 = vmatmul.bf16.gmra.mxu0 %v8430
    %v9820 = vpop.f32.mrf.mxu0
    %v9821 = vadd.f32 %v9616, %v9820
    %v9822 = vpop.f32.mrf.mxu0
    %v9823 = vadd.f32 %v9618, %v9822
    %9824 = vmatmul.bf16.gmra.mxu0 %v8433
    %v9825 = vpop.f32.mrf.mxu0
    %v9826 = vadd.f32 %v9621, %v9825
    %v9827 = vpop.f32.mrf.mxu0
    %v9828 = vadd.f32 %v9623, %v9827
    %9829 = vmatmul.bf16.gmra.mxu0 %v8436
    %v9830 = vpop.f32.mrf.mxu0
    %v9831 = vpop.f32.mrf.mxu0
    %9832 = vmatmul.bf16.gmra.mxu0 %v8439
    %v9833 = vpop.f32.mrf.mxu0
    %v9834 = vadd.f32 %v9629, %v9833
    %v9835 = vpop.f32.mrf.mxu0
    %v9836 = vadd.f32 %v9631, %v9835
    %9837 = vmatmul.bf16.gmra.mxu0 %v8442
    %v9838 = vpop.f32.mrf.mxu0
    %v9839 = vadd.f32 %v9634, %v9838
    %v9840 = vpop.f32.mrf.mxu0
    %v9841 = vadd.f32 %v9636, %v9840
    %9842 = vmatmul.bf16.gmra.mxu0 %v8445
    %v9843 = vpop.f32.mrf.mxu0
    %v9844 = vpop.f32.mrf.mxu0
    %9845 = vmatmul.bf16.gmra.mxu0 %v8448
    %v9846 = vpop.f32.mrf.mxu0
    %v9847 = vadd.f32 %v9642, %v9846
    %v9848 = vpop.f32.mrf.mxu0
    %v9849 = vadd.f32 %v9644, %v9848
    %9850 = vmatmul.bf16.gmra.mxu0 %v8451
    %v9851 = vpop.f32.mrf.mxu0
    %v9852 = vadd.f32 %v9647, %v9851
    %v9853 = vpop.f32.mrf.mxu0
    %v9854 = vadd.f32 %v9649, %v9853
    %9855 = vmatmul.bf16.gmra.mxu0 %v8454
    %v9856 = vpop.f32.mrf.mxu0
    %v9857 = vadd.f32 %v9652, %v9856
    %v9858 = vpop.f32.mrf.mxu0
    %v9859 = vadd.f32 %v9654, %v9858
    %9860 = vmatmul.bf16.gmra.mxu0 %v8457
    %v9861 = vpop.f32.mrf.mxu0
    %v9862 = vadd.f32 %v9657, %v9861
    %v9863 = vpop.f32.mrf.mxu0
    %v9864 = vadd.f32 %v9659, %v9863
    %9865 = vmatmul.bf16.gmra.mxu0 %v8460
    %v9866 = vpop.f32.mrf.mxu0
    %v9867 = vpop.f32.mrf.mxu0
    %9868 = vmatmul.bf16.gmra.mxu0 %v8463
    %v9869 = vpop.f32.mrf.mxu0
    %v9870 = vadd.f32 %v9665, %v9869
    %v9871 = vpop.f32.mrf.mxu0
    %v9872 = vadd.f32 %v9667, %v9871
    %9873 = vmatmul.bf16.gmra.mxu0 %v8466
    %v9874 = vpop.f32.mrf.mxu0
    %v9875 = vadd.f32 %v9670, %v9874
    %v9876 = vpop.f32.mrf.mxu0
    %v9877 = vadd.f32 %v9672, %v9876
    %9878 = vmatmul.bf16.gmra.mxu0 %v8469
    %v9879 = vpop.f32.mrf.mxu0
    %v9880 = vpop.f32.mrf.mxu0
    %9881 = vmatmul.bf16.gmra.mxu0 %v8472
    %v9882 = vpop.f32.mrf.mxu0
    %v9883 = vadd.f32 %v9678, %v9882
    %v9884 = vpop.f32.mrf.mxu0
    %v9885 = vadd.f32 %v9680, %v9884
    %9886 = vmatmul.bf16.gmra.mxu0 %v8475
    %v9887 = vpop.f32.mrf.mxu0
    %v9888 = vadd.f32 %v9683, %v9887
    %v9889 = vpop.f32.mrf.mxu0
    %v9890 = vadd.f32 %v9685, %v9889
    %9891 = vmatmul.bf16.gmra.mxu0 %v8478
    %v9892 = vpop.f32.mrf.mxu0
    %v9893 = vpop.f32.mrf.mxu0
    %9894 = vmatmul.bf16.gmra.mxu0 %v8481
    %v9895 = vpop.f32.mrf.mxu0
    %v9896 = vadd.f32 %v9691, %v9895
    %v9897 = vpop.f32.mrf.mxu0
    %v9898 = vadd.f32 %v9693, %v9897
    %9899 = vmatmul.bf16.gmra.mxu0 %v8484
    %v9900 = vpop.f32.mrf.mxu0
    %v9901 = vadd.f32 %v9696, %v9900
    %v9902 = vpop.f32.mrf.mxu0
    %v9903 = vadd.f32 %v9698, %v9902
    %9904 = vmatmul.bf16.gmra.mxu0 %v8487
    %v9905 = vpop.f32.mrf.mxu0
    %v9906 = vadd.f32 %v9701, %v9905
    %v9907 = vpop.f32.mrf.mxu0
    %v9908 = vadd.f32 %v9703, %v9907
    %9909 = vmatmul.bf16.gmra.mxu0 %v8490
    %v9910 = vpop.f32.mrf.mxu0
    %v9911 = vadd.f32 %v9706, %v9910
    %v9912 = vpop.f32.mrf.mxu0
    %v9913 = vadd.f32 %v9708, %v9912
    %9914 = vmatmul.bf16.gmra.mxu0 %v8493
    %v9915 = vpop.f32.mrf.mxu0
    %v9916 = vpop.f32.mrf.mxu0
    %9917 = vmatmul.bf16.gmra.mxu0 %v8496
    %v9918 = vpop.f32.mrf.mxu0
    %v9919 = vadd.f32 %v9714, %v9918
    %v9920 = vpop.f32.mrf.mxu0
    %v9921 = vadd.f32 %v9716, %v9920
    %9922 = vmatmul.bf16.gmra.mxu0 %v8499
    %v9923 = vpop.f32.mrf.mxu0
    %v9924 = vadd.f32 %v9719, %v9923
    %v9925 = vpop.f32.mrf.mxu0
    %v9926 = vadd.f32 %v9721, %v9925
    %9927 = vmatmul.bf16.gmra.mxu0 %v8502
    %v9928 = vpop.f32.mrf.mxu0
    %v9929 = vpop.f32.mrf.mxu0
    %9930 = vmatmul.bf16.gmra.mxu0 %v8505
    %v9931 = vpop.f32.mrf.mxu0
    %v9932 = vadd.f32 %v9727, %v9931
    %v9933 = vpop.f32.mrf.mxu0
    %v9934 = vadd.f32 %v9729, %v9933
    %9935 = vmatmul.bf16.gmra.mxu0 %v8508
    %v9936 = vpop.f32.mrf.mxu0
    %v9937 = vadd.f32 %v9732, %v9936
    %v9938 = vpop.f32.mrf.mxu0
    %v9939 = vadd.f32 %v9734, %v9938
    %9940 = vmatmul.bf16.gmra.mxu0 %v8511
    %v9941 = vpop.f32.mrf.mxu0
    %v9942 = vpop.f32.mrf.mxu0
    %9943 = vmatmul.bf16.gmra.mxu0 %v8514
    %v9944 = vpop.f32.mrf.mxu0
    %v9945 = vadd.f32 %v9740, %v9944
    %v9946 = vpop.f32.mrf.mxu0
    %v9947 = vadd.f32 %v9742, %v9946
    %9948 = vmatmul.bf16.gmra.mxu0 %v8517
    %v9949 = vpop.f32.mrf.mxu0
    %v9950 = vadd.f32 %v9745, %v9949
    %v9951 = vpop.f32.mrf.mxu0
    %v9952 = vadd.f32 %v9747, %v9951
    %9953 = vdwg.mxu0
    %v9954 = vmax.f32 %v9759, 0.0
    %v9955 = vmax.f32 %v9761, 0.0
    %v9956 = vmax.f32 %v9764, 0.0
    %v9957 = vmax.f32 %v9766, 0.0
    %v9958 = vmax.f32 %v9772, 0.0
    %v9959 = vmax.f32 %v9774, 0.0
    %v9960 = vmax.f32 %v9777, 0.0
    %v9961 = vmax.f32 %v9779, 0.0
    %v9962 = vmax.f32 %v9785, 0.0
    %v9963 = vmax.f32 %v9787, 0.0
    %v9964 = vmax.f32 %v9790, 0.0
    %v9965 = vmax.f32 %v9792, 0.0
    %v9966 = vmax.f32 %v9798, 0.0
    %v9967 = vmax.f32 %v9800, 0.0
    %v9968 = vmax.f32 %v9803, 0.0
    %v9969 = vmax.f32 %v9805, 0.0
    %v9970 = vmax.f32 %v9808, 0.0
    %v9971 = vmax.f32 %v9810, 0.0
    %v9972 = vmax.f32 %v9813, 0.0
    %v9973 = vmax.f32 %v9815, 0.0
    %v9974 = vmax.f32 %v9821, 0.0
    %v9975 = vmax.f32 %v9823, 0.0
    %v9976 = vmax.f32 %v9826, 0.0
    %v9977 = vmax.f32 %v9828, 0.0
    %v9978 = vmax.f32 %v9834, 0.0
    %v9979 = vmax.f32 %v9836, 0.0
    %v9980 = vmax.f32 %v9839, 0.0
    %v9981 = vmax.f32 %v9841, 0.0
    %v9982 = vmax.f32 %v9847, 0.0
    %v9983 = vmax.f32 %v9849, 0.0
    %v9984 = vmax.f32 %v9852, 0.0
    %v9985 = vmax.f32 %v9854, 0.0
    %v9986 = vmax.f32 %v9857, 0.0
    %v9987 = vmax.f32 %v9859, 0.0
    %v9988 = vmax.f32 %v9862, 0.0
    %v9989 = vmax.f32 %v9864, 0.0
    %v9990 = vmax.f32 %v9870, 0.0
    %v9991 = vmax.f32 %v9872, 0.0
    %v9992 = vmax.f32 %v9875, 0.0
    %v9993 = vmax.f32 %v9877, 0.0
    %v9994 = vmax.f32 %v9883, 0.0
    %v9995 = vmax.f32 %v9885, 0.0
    %v9996 = vmax.f32 %v9888, 0.0
    %v9997 = vmax.f32 %v9890, 0.0
    %v9998 = vmax.f32 %v9896, 0.0
    %v9999 = vmax.f32 %v9898, 0.0
    %v10000 = vmax.f32 %v9901, 0.0
    %v10001 = vmax.f32 %v9903, 0.0
    %v10002 = vmax.f32 %v9906, 0.0
    %v10003 = vmax.f32 %v9908, 0.0
    %v10004 = vmax.f32 %v9911, 0.0
    %v10005 = vmax.f32 %v9913, 0.0
    %v10006 = vmax.f32 %v9919, 0.0
    %v10007 = vmax.f32 %v9921, 0.0
    %v10008 = vmax.f32 %v9924, 0.0
    %v10009 = vmax.f32 %v9926, 0.0
    %v10010 = vmax.f32 %v9932, 0.0
    %v10011 = vmax.f32 %v9934, 0.0
    %v10012 = vmax.f32 %v9937, 0.0
    %v10013 = vmax.f32 %v9939, 0.0
    %v10014 = vmax.f32 %v9945, 0.0
    %v10015 = vmax.f32 %v9947, 0.0
    %v10016 = vmax.f32 %v9950, 0.0
    %v10017 = vmax.f32 %v9952, 0.0
    %v10018 = vmax.f32 %v9954, %v9970
    %v10019 = vmax.f32 %v9955, %v9971
    %v10020 = vmax.f32 %v9956, %v9972
    %v10021 = vmax.f32 %v9957, %v9973
    %v10022 = vmax.f32 %v9958, %v9974
    %v10023 = vmax.f32 %v9959, %v9975
    %v10024 = vmax.f32 %v9960, %v9976
    %v10025 = vmax.f32 %v9961, %v9977
    %v10026 = vmax.f32 %v9962, %v9978
    %v10027 = vmax.f32 %v9963, %v9979
    %v10028 = vmax.f32 %v9964, %v9980
    %v10029 = vmax.f32 %v9965, %v9981
    %v10030 = vmax.f32 %v9966, %v9982
    %v10031 = vmax.f32 %v9967, %v9983
    %v10032 = vmax.f32 %v9968, %v9984
    %v10033 = vmax.f32 %v9969, %v9985
    %v10034 = vmax.f32 %v9986, %v10002
    %v10035 = vmax.f32 %v9987, %v10003
    %v10036 = vmax.f32 %v9988, %v10004
    %v10037 = vmax.f32 %v9989, %v10005
    %v10038 = vmax.f32 %v9990, %v10006
    %v10039 = vmax.f32 %v9991, %v10007
    %v10040 = vmax.f32 %v9992, %v10008
    %v10041 = vmax.f32 %v9993, %v10009
    %v10042 = vmax.f32 %v9994, %v10010
    %v10043 = vmax.f32 %v9995, %v10011
    %v10044 = vmax.f32 %v9996, %v10012
    %v10045 = vmax.f32 %v9997, %v10013
    %v10046 = vmax.f32 %v9998, %v10014
    %v10047 = vmax.f32 %v9999, %v10015
    %v10048 = vmax.f32 %v10000, %v10016
    %v10049 = vmax.f32 %v10001, %v10017
    %v10050 = vmax.f32 %v10018, %v10034
    %v10051 = vmax.f32 %v10019, %v10035
    %v10052 = vmax.f32 %v10020, %v10036
    %v10053 = vmax.f32 %v10021, %v10037
    %v10054 = vmax.f32 %v10022, %v10038
    %v10055 = vmax.f32 %v10023, %v10039
    %v10056 = vmax.f32 %v10024, %v10040
    %v10057 = vmax.f32 %v10025, %v10041
    %v10058 = vmax.f32 %v10026, %v10042
    %v10059 = vmax.f32 %v10027, %v10043
    %v10060 = vmax.f32 %v10028, %v10044
    %v10061 = vmax.f32 %v10029, %v10045
    %v10062 = vmax.f32 %v10030, %v10046
    %v10063 = vmax.f32 %v10031, %v10047
    %v10064 = vmax.f32 %v10032, %v10048
    %v10065 = vmax.f32 %v10033, %v10049
    %10067 = vrot.lane.b32.xlu0 %v10051, 64
    %v10068 = vpop.permute.xlu0 %10067
    %10071 = vrot.lane.b32.xlu0 %v10053, 64
    %v10072 = vpop.permute.xlu0 %10071
    %10075 = vrot.lane.b32.xlu0 %v10055, 64
    %v10076 = vpop.permute.xlu0 %10075
    %10079 = vrot.lane.b32.xlu0 %v10057, 64
    %v10080 = vpop.permute.xlu0 %10079
    %10083 = vrot.lane.b32.xlu0 %v10059, 64
    %v10084 = vpop.permute.xlu0 %10083
    %10087 = vrot.lane.b32.xlu0 %v10061, 64
    %v10088 = vpop.permute.xlu0 %10087
    %10091 = vrot.lane.b32.xlu0 %v10063, 64
    %v10092 = vpop.permute.xlu0 %10091
    %10095 = vrot.lane.b32.xlu0 %v10065, 64
    %v10096 = vpop.permute.xlu0 %10095
    %v10098 = vsel %vm5982, %v10050, %v10068
    %v10099 = vsel %vm5982, %v10052, %v10072
    %v10100 = vsel %vm5982, %v10054, %v10076
    %v10101 = vsel %vm5982, %v10056, %v10080
    %v10102 = vsel %vm5982, %v10058, %v10084
    %v10103 = vsel %vm5982, %v10060, %v10088
    %v10104 = vsel %vm5982, %v10062, %v10092
    %v10105 = vsel %vm5982, %v10064, %v10096
    %v10106 = vpack.c.bf16 %v10098, %v10098
    %v10107 = vpack.c.bf16 %v10099, %v10099
    %v10108 = vpack.c.bf16 %v10100, %v10100
    %v10109 = vpack.c.bf16 %v10101, %v10101
    %v10110 = vpack.c.bf16 %v10102, %v10102
    %v10111 = vpack.c.bf16 %v10103, %v10103
    %v10112 = vpack.c.bf16 %v10104, %v10104
    %v10113 = vpack.c.bf16 %v10105, %v10105
    %v10114 = vld [vmem:[%s5] sm:$0xff]
    %v10115 = vld [vmem:[%s5 + $0x8] sm:$0xff]
    %v10116 = vld [vmem:[%s5 + $0x10] sm:$0xff]
    %v10117 = vld [vmem:[%s5 + $0x18] sm:$0xff]
    %v10118 = vld [vmem:[%s5 + $0x20] sm:$0xff]
    %v10119 = vld [vmem:[%s5 + $0x28] sm:$0xff]
    %v10120 = vld [vmem:[%s5 + $0x30] sm:$0xff]
    %v10121 = vld [vmem:[%s5 + $0x38] sm:$0xff]
    %v10122 = vld [vmem:[%s5 + $0x40] sm:$0xff]
    %v10123 = vld [vmem:[%s5 + $0x48] sm:$0xff]
    %v10124 = vld [vmem:[%s5 + $0x50] sm:$0xff]
    %v10125 = vld [vmem:[%s5 + $0x58] sm:$0xff]
    %v10126 = vld [vmem:[%s5 + $0x60] sm:$0xff]
    %v10127 = vld [vmem:[%s5 + $0x68] sm:$0xff]
    %v10128 = vld [vmem:[%s5 + $0x70] sm:$0xff]
    %v10129 = vld [vmem:[%s5 + $0x78] sm:$0xff]
    %v10130 = vld [vmem:[%s5 + $0x80] sm:$0xff]
    %v10131 = vld [vmem:[%s5 + $0x88] sm:$0xff]
    %v10132 = vld [vmem:[%s5 + $0x90] sm:$0xff]
    %v10133 = vld [vmem:[%s5 + $0x98] sm:$0xff]
    %v10134 = vld [vmem:[%s5 + $0xa0] sm:$0xff]
    %v10135 = vld [vmem:[%s5 + $0xa8] sm:$0xff]
    %v10136 = vld [vmem:[%s5 + $0xb0] sm:$0xff]
    %v10137 = vld [vmem:[%s5 + $0xb8] sm:$0xff]
    %v10138 = vld [vmem:[%s5 + $0xc0] sm:$0xff]
    %v10139 = vld [vmem:[%s5 + $0xc8] sm:$0xff]
    %v10140 = vld [vmem:[%s5 + $0xd0] sm:$0xff]
    %v10141 = vld [vmem:[%s5 + $0xd8] sm:$0xff]
    %v10142 = vld [vmem:[%s5 + $0xe0] sm:$0xff]
    %v10143 = vld [vmem:[%s5 + $0xe8] sm:$0xff]
    %v10144 = vld [vmem:[%s5 + $0xf0] sm:$0xff]
    %v10145 = vld [vmem:[%s5 + $0xf8] sm:$0xff]
    %v10146 = vld [vmem:[%s5 + $0x100] sm:$0xff]
    %v10147 = vld [vmem:[%s5 + $0x108] sm:$0xff]
    %v10148 = vld [vmem:[%s5 + $0x110] sm:$0xff]
    %v10149 = vld [vmem:[%s5 + $0x118] sm:$0xff]
    %v10150 = vld [vmem:[%s5 + $0x120] sm:$0xff]
    %v10151 = vld [vmem:[%s5 + $0x128] sm:$0xff]
    %v10152 = vld [vmem:[%s5 + $0x130] sm:$0xff]
    %v10153 = vld [vmem:[%s5 + $0x138] sm:$0xff]
    %v10154 = vld [vmem:[%s5 + $0x140] sm:$0xff]
    %v10155 = vld [vmem:[%s5 + $0x148] sm:$0xff]
    %v10156 = vld [vmem:[%s5 + $0x150] sm:$0xff]
    %v10157 = vld [vmem:[%s5 + $0x158] sm:$0xff]
    %v10158 = vld [vmem:[%s5 + $0x160] sm:$0xff]
    %v10159 = vld [vmem:[%s5 + $0x168] sm:$0xff]
    %v10160 = vld [vmem:[%s5 + $0x170] sm:$0xff]
    %v10161 = vld [vmem:[%s5 + $0x178] sm:$0xff]
    %v10162 = vld [vmem:[%s5 + $0x180] sm:$0xff]
    %v10163 = vld [vmem:[%s5 + $0x188] sm:$0xff]
    %v10164 = vld [vmem:[%s5 + $0x190] sm:$0xff]
    %v10165 = vld [vmem:[%s5 + $0x198] sm:$0xff]
    %v10166 = vld [vmem:[%s5 + $0x1a0] sm:$0xff]
    %v10167 = vld [vmem:[%s5 + $0x1a8] sm:$0xff]
    %v10168 = vld [vmem:[%s5 + $0x1b0] sm:$0xff]
    %v10169 = vld [vmem:[%s5 + $0x1b8] sm:$0xff]
    %v10170 = vld [vmem:[%s5 + $0x1c0] sm:$0xff]
    %v10171 = vld [vmem:[%s5 + $0x1c8] sm:$0xff]
    %v10172 = vld [vmem:[%s5 + $0x1d0] sm:$0xff]
    %v10173 = vld [vmem:[%s5 + $0x1d8] sm:$0xff]
    %v10174 = vld [vmem:[%s5 + $0x1e0] sm:$0xff]
    %v10175 = vld [vmem:[%s5 + $0x1e8] sm:$0xff]
    %v10176 = vld [vmem:[%s5 + $0x1f0] sm:$0xff]
    %v10177 = vld [vmem:[%s5 + $0x1f8] sm:$0xff]
    %v10178 = vld [vmem:[%s5 + $0x200] sm:$0xff]
    %v10179 = vld [vmem:[%s5 + $0x208] sm:$0xff]
    %v10180 = vld [vmem:[%s5 + $0x210] sm:$0xff]
    %v10181 = vld [vmem:[%s5 + $0x218] sm:$0xff]
    %v10182 = vld [vmem:[%s5 + $0x220] sm:$0xff]
    %v10183 = vld [vmem:[%s5 + $0x228] sm:$0xff]
    %v10184 = vld [vmem:[%s5 + $0x230] sm:$0xff]
    %v10185 = vld [vmem:[%s5 + $0x238] sm:$0xff]
    %v10186 = vld [vmem:[%s5 + $0x240] sm:$0xff]
    %v10187 = vld [vmem:[%s5 + $0x248] sm:$0xff]
    %v10188 = vld [vmem:[%s5 + $0x250] sm:$0xff]
    %v10189 = vld [vmem:[%s5 + $0x258] sm:$0xff]
    %v10190 = vld [vmem:[%s5 + $0x260] sm:$0xff]
    %v10191 = vld [vmem:[%s5 + $0x268] sm:$0xff]
    %v10192 = vld [vmem:[%s5 + $0x270] sm:$0xff]
    %v10193 = vld [vmem:[%s5 + $0x278] sm:$0xff]
    %v10194 = vld [vmem:[%s5 + $0x280] sm:$0xff]
    %v10195 = vld [vmem:[%s5 + $0x288] sm:$0xff]
    %v10196 = vld [vmem:[%s5 + $0x290] sm:$0xff]
    %v10197 = vld [vmem:[%s5 + $0x298] sm:$0xff]
    %v10198 = vld [vmem:[%s5 + $0x2a0] sm:$0xff]
    %v10199 = vld [vmem:[%s5 + $0x2a8] sm:$0xff]
    %v10200 = vld [vmem:[%s5 + $0x2b0] sm:$0xff]
    %v10201 = vld [vmem:[%s5 + $0x2b8] sm:$0xff]
    %v10202 = vld [vmem:[%s5 + $0x2c0] sm:$0xff]
    %v10203 = vld [vmem:[%s5 + $0x2c8] sm:$0xff]
    %v10204 = vld [vmem:[%s5 + $0x2d0] sm:$0xff]
    %v10205 = vld [vmem:[%s5 + $0x2d8] sm:$0xff]
    %v10206 = vld [vmem:[%s5 + $0x2e0] sm:$0xff]
    %v10207 = vld [vmem:[%s5 + $0x2e8] sm:$0xff]
    %v10208 = vld [vmem:[%s5 + $0x2f0] sm:$0xff]
    %v10209 = vld [vmem:[%s5 + $0x2f8] sm:$0xff]
    %v10210 = vld [vmem:[%s5 + $0x300] sm:$0xff]
    %v10211 = vld [vmem:[%s5 + $0x308] sm:$0xff]
    %v10212 = vld [vmem:[%s5 + $0x310] sm:$0xff]
    %v10213 = vld [vmem:[%s5 + $0x318] sm:$0xff]
    %v10214 = vld [vmem:[%s5 + $0x320] sm:$0xff]
    %v10215 = vld [vmem:[%s5 + $0x328] sm:$0xff]
    %v10216 = vld [vmem:[%s5 + $0x330] sm:$0xff]
    %v10217 = vld [vmem:[%s5 + $0x338] sm:$0xff]
    %v10218 = vld [vmem:[%s5 + $0x340] sm:$0xff]
    %v10219 = vld [vmem:[%s5 + $0x348] sm:$0xff]
    %v10220 = vld [vmem:[%s5 + $0x350] sm:$0xff]
    %v10221 = vld [vmem:[%s5 + $0x358] sm:$0xff]
    %v10222 = vld [vmem:[%s5 + $0x360] sm:$0xff]
    %v10223 = vld [vmem:[%s5 + $0x368] sm:$0xff]
    %v10224 = vld [vmem:[%s5 + $0x370] sm:$0xff]
    %v10225 = vld [vmem:[%s5 + $0x378] sm:$0xff]
    %v10226 = vld [vmem:[%s5 + $0x380] sm:$0xff]
    %v10227 = vld [vmem:[%s5 + $0x388] sm:$0xff]
    %v10228 = vld [vmem:[%s5 + $0x390] sm:$0xff]
    %v10229 = vld [vmem:[%s5 + $0x398] sm:$0xff]
    %v10230 = vld [vmem:[%s5 + $0x3a0] sm:$0xff]
    %v10231 = vld [vmem:[%s5 + $0x3a8] sm:$0xff]
    %v10232 = vld [vmem:[%s5 + $0x3b0] sm:$0xff]
    %v10233 = vld [vmem:[%s5 + $0x3b8] sm:$0xff]
    %v10234 = vld [vmem:[%s5 + $0x3c0] sm:$0xff]
    %v10235 = vld [vmem:[%s5 + $0x3c8] sm:$0xff]
    %v10236 = vld [vmem:[%s5 + $0x3d0] sm:$0xff]
    %v10237 = vld [vmem:[%s5 + $0x3d8] sm:$0xff]
    %v10238 = vld [vmem:[%s5 + $0x3e0] sm:$0xff]
    %v10239 = vld [vmem:[%s5 + $0x3e8] sm:$0xff]
    %v10240 = vld [vmem:[%s5 + $0x3f0] sm:$0xff]
    %v10241 = vld [vmem:[%s5 + $0x3f8] sm:$0xff]
    %v10242 = vld [vmem:[%s5 + $0x400] sm:$0xff]
    %v10243 = vld [vmem:[%s5 + $0x408] sm:$0xff]
    %v10244 = vld [vmem:[%s5 + $0x410] sm:$0xff]
    %v10245 = vld [vmem:[%s5 + $0x418] sm:$0xff]
    %v10246 = vld [vmem:[%s5 + $0x420] sm:$0xff]
    %v10247 = vld [vmem:[%s5 + $0x428] sm:$0xff]
    %v10248 = vld [vmem:[%s5 + $0x430] sm:$0xff]
    %v10249 = vld [vmem:[%s5 + $0x438] sm:$0xff]
    %v10250 = vld [vmem:[%s5 + $0x440] sm:$0xff]
    %v10251 = vld [vmem:[%s5 + $0x448] sm:$0xff]
    %v10252 = vld [vmem:[%s5 + $0x450] sm:$0xff]
    %v10253 = vld [vmem:[%s5 + $0x458] sm:$0xff]
    %v10254 = vld [vmem:[%s5 + $0x460] sm:$0xff]
    %v10255 = vld [vmem:[%s5 + $0x468] sm:$0xff]
    %v10256 = vld [vmem:[%s5 + $0x470] sm:$0xff]
    %v10257 = vld [vmem:[%s5 + $0x478] sm:$0xff]
    %v10258 = vld [vmem:[%s5 + $0x480] sm:$0xff]
    %v10259 = vld [vmem:[%s5 + $0x488] sm:$0xff]
    %v10260 = vld [vmem:[%s5 + $0x490] sm:$0xff]
    %v10261 = vld [vmem:[%s5 + $0x498] sm:$0xff]
    %v10262 = vld [vmem:[%s5 + $0x4a0] sm:$0xff]
    %v10263 = vld [vmem:[%s5 + $0x4a8] sm:$0xff]
    %v10264 = vld [vmem:[%s5 + $0x4b0] sm:$0xff]
    %v10265 = vld [vmem:[%s5 + $0x4b8] sm:$0xff]
    %v10266 = vld [vmem:[%s5 + $0x4c0] sm:$0xff]
    %v10267 = vld [vmem:[%s5 + $0x4c8] sm:$0xff]
    %v10268 = vld [vmem:[%s5 + $0x4d0] sm:$0xff]
    %v10269 = vld [vmem:[%s5 + $0x4d8] sm:$0xff]
    %v10270 = vld [vmem:[%s5 + $0x4e0] sm:$0xff]
    %v10271 = vld [vmem:[%s5 + $0x4e8] sm:$0xff]
    %v10272 = vld [vmem:[%s5 + $0x4f0] sm:$0xff]
    %v10273 = vld [vmem:[%s5 + $0x4f8] sm:$0xff]
    %v10274 = vld [vmem:[%s5 + $0x500] sm:$0xff]
    %v10275 = vld [vmem:[%s5 + $0x508] sm:$0xff]
    %v10276 = vld [vmem:[%s5 + $0x510] sm:$0xff]
    %v10277 = vld [vmem:[%s5 + $0x518] sm:$0xff]
    %v10278 = vld [vmem:[%s5 + $0x520] sm:$0xff]
    %v10279 = vld [vmem:[%s5 + $0x528] sm:$0xff]
    %v10280 = vld [vmem:[%s5 + $0x530] sm:$0xff]
    %v10281 = vld [vmem:[%s5 + $0x538] sm:$0xff]
    %v10282 = vld [vmem:[%s5 + $0x540] sm:$0xff]
    %v10283 = vld [vmem:[%s5 + $0x548] sm:$0xff]
    %v10284 = vld [vmem:[%s5 + $0x550] sm:$0xff]
    %v10285 = vld [vmem:[%s5 + $0x558] sm:$0xff]
    %v10286 = vld [vmem:[%s5 + $0x560] sm:$0xff]
    %v10287 = vld [vmem:[%s5 + $0x568] sm:$0xff]
    %v10288 = vld [vmem:[%s5 + $0x570] sm:$0xff]
    %v10289 = vld [vmem:[%s5 + $0x578] sm:$0xff]
    %v10290 = vld [vmem:[%s5 + $0x580] sm:$0xff]
    %v10291 = vld [vmem:[%s5 + $0x588] sm:$0xff]
    %v10292 = vld [vmem:[%s5 + $0x590] sm:$0xff]
    %v10293 = vld [vmem:[%s5 + $0x598] sm:$0xff]
    %v10294 = vld [vmem:[%s5 + $0x5a0] sm:$0xff]
    %v10295 = vld [vmem:[%s5 + $0x5a8] sm:$0xff]
    %v10296 = vld [vmem:[%s5 + $0x5b0] sm:$0xff]
    %v10297 = vld [vmem:[%s5 + $0x5b8] sm:$0xff]
    %v10298 = vld [vmem:[%s5 + $0x5c0] sm:$0xff]
    %v10299 = vld [vmem:[%s5 + $0x5c8] sm:$0xff]
    %v10300 = vld [vmem:[%s5 + $0x5d0] sm:$0xff]
    %v10301 = vld [vmem:[%s5 + $0x5d8] sm:$0xff]
    %v10302 = vld [vmem:[%s5 + $0x5e0] sm:$0xff]
    %v10303 = vld [vmem:[%s5 + $0x5e8] sm:$0xff]
    %v10304 = vld [vmem:[%s5 + $0x5f0] sm:$0xff]
    %v10305 = vld [vmem:[%s5 + $0x5f8] sm:$0xff]
    %v10306 = vld [vmem:[%s5 + $0x600] sm:$0xff]
    %v10307 = vld [vmem:[%s5 + $0x608] sm:$0xff]
    %v10308 = vld [vmem:[%s5 + $0x610] sm:$0xff]
    %v10309 = vld [vmem:[%s5 + $0x618] sm:$0xff]
    %v10310 = vld [vmem:[%s5 + $0x620] sm:$0xff]
    %v10311 = vld [vmem:[%s5 + $0x628] sm:$0xff]
    %v10312 = vld [vmem:[%s5 + $0x630] sm:$0xff]
    %v10313 = vld [vmem:[%s5 + $0x638] sm:$0xff]
    %v10314 = vld [vmem:[%s5 + $0x640] sm:$0xff]
    %v10315 = vld [vmem:[%s5 + $0x648] sm:$0xff]
    %v10316 = vld [vmem:[%s5 + $0x650] sm:$0xff]
    %v10317 = vld [vmem:[%s5 + $0x658] sm:$0xff]
    %v10318 = vld [vmem:[%s5 + $0x660] sm:$0xff]
    %v10319 = vld [vmem:[%s5 + $0x668] sm:$0xff]
    %v10320 = vld [vmem:[%s5 + $0x670] sm:$0xff]
    %v10321 = vld [vmem:[%s5 + $0x678] sm:$0xff]
    %v10322 = vld [vmem:[%s5 + $0x680] sm:$0xff]
    %v10323 = vld [vmem:[%s5 + $0x688] sm:$0xff]
    %v10324 = vld [vmem:[%s5 + $0x690] sm:$0xff]
    %v10325 = vld [vmem:[%s5 + $0x698] sm:$0xff]
    %v10326 = vld [vmem:[%s5 + $0x6a0] sm:$0xff]
    %v10327 = vld [vmem:[%s5 + $0x6a8] sm:$0xff]
    %v10328 = vld [vmem:[%s5 + $0x6b0] sm:$0xff]
    %v10329 = vld [vmem:[%s5 + $0x6b8] sm:$0xff]
    %v10330 = vld [vmem:[%s5 + $0x6c0] sm:$0xff]
    %v10331 = vld [vmem:[%s5 + $0x6c8] sm:$0xff]
    %v10332 = vld [vmem:[%s5 + $0x6d0] sm:$0xff]
    %v10333 = vld [vmem:[%s5 + $0x6d8] sm:$0xff]
    %v10334 = vld [vmem:[%s5 + $0x6e0] sm:$0xff]
    %v10335 = vld [vmem:[%s5 + $0x6e8] sm:$0xff]
    %v10336 = vld [vmem:[%s5 + $0x6f0] sm:$0xff]
    %v10337 = vld [vmem:[%s5 + $0x6f8] sm:$0xff]
    %v10338 = vld [vmem:[%s5 + $0x700] sm:$0xff]
    %v10339 = vld [vmem:[%s5 + $0x708] sm:$0xff]
    %v10340 = vld [vmem:[%s5 + $0x710] sm:$0xff]
    %v10341 = vld [vmem:[%s5 + $0x718] sm:$0xff]
    %v10342 = vld [vmem:[%s5 + $0x720] sm:$0xff]
    %v10343 = vld [vmem:[%s5 + $0x728] sm:$0xff]
    %v10344 = vld [vmem:[%s5 + $0x730] sm:$0xff]
    %v10345 = vld [vmem:[%s5 + $0x738] sm:$0xff]
    %v10346 = vld [vmem:[%s5 + $0x740] sm:$0xff]
    %v10347 = vld [vmem:[%s5 + $0x748] sm:$0xff]
    %v10348 = vld [vmem:[%s5 + $0x750] sm:$0xff]
    %v10349 = vld [vmem:[%s5 + $0x758] sm:$0xff]
    %v10350 = vld [vmem:[%s5 + $0x760] sm:$0xff]
    %v10351 = vld [vmem:[%s5 + $0x768] sm:$0xff]
    %v10352 = vld [vmem:[%s5 + $0x770] sm:$0xff]
    %v10353 = vld [vmem:[%s5 + $0x778] sm:$0xff]
    %v10354 = vld [vmem:[%s5 + $0x780] sm:$0xff]
    %v10355 = vld [vmem:[%s5 + $0x788] sm:$0xff]
    %v10356 = vld [vmem:[%s5 + $0x790] sm:$0xff]
    %v10357 = vld [vmem:[%s5 + $0x798] sm:$0xff]
    %v10358 = vld [vmem:[%s5 + $0x7a0] sm:$0xff]
    %v10359 = vld [vmem:[%s5 + $0x7a8] sm:$0xff]
    %v10360 = vld [vmem:[%s5 + $0x7b0] sm:$0xff]
    %v10361 = vld [vmem:[%s5 + $0x7b8] sm:$0xff]
    %v10362 = vld [vmem:[%s5 + $0x7c0] sm:$0xff]
    %v10363 = vld [vmem:[%s5 + $0x7c8] sm:$0xff]
    %v10364 = vld [vmem:[%s5 + $0x7d0] sm:$0xff]
    %v10365 = vld [vmem:[%s5 + $0x7d8] sm:$0xff]
    %v10366 = vld [vmem:[%s5 + $0x7e0] sm:$0xff]
    %v10367 = vld [vmem:[%s5 + $0x7e8] sm:$0xff]
    %v10368 = vld [vmem:[%s5 + $0x7f0] sm:$0xff]
    %v10369 = vld [vmem:[%s5 + $0x7f8] sm:$0xff]
    %v10370 = vld [vmem:[%s6] sm:$0xf]
    %v10372 = vperm.slane %v10370, 0
    %v10373 = vperm.slane %v10370, 1
    %v10374 = vperm.slane %v10370, 2
    %v10375 = vperm.slane %v10370, 3
    %v10636 = vunpack.c.l.b16 %v10114
    %v10637 = vunpack.c.h.b16 %v10114
    %v10638 = vunpack.c.l.b16 %v10115
    %v10639 = vunpack.c.h.b16 %v10115
    %v10640 = vunpack.c.l.b16 %v10116
    %v10641 = vunpack.c.h.b16 %v10116
    %v10642 = vunpack.c.l.b16 %v10117
    %v10643 = vunpack.c.h.b16 %v10117
    %v10644 = vunpack.c.l.b16 %v10118
    %v10645 = vunpack.c.h.b16 %v10118
    %v10646 = vunpack.c.l.b16 %v10119
    %v10647 = vunpack.c.h.b16 %v10119
    %v10648 = vunpack.c.l.b16 %v10120
    %v10649 = vunpack.c.h.b16 %v10120
    %v10650 = vunpack.c.l.b16 %v10121
    %v10651 = vunpack.c.h.b16 %v10121
    %v10652 = vunpack.c.l.b16 %v10122
    %v10653 = vunpack.c.h.b16 %v10122
    %v10654 = vunpack.c.l.b16 %v10123
    %v10655 = vunpack.c.h.b16 %v10123
    %v10656 = vunpack.c.l.b16 %v10124
    %v10657 = vunpack.c.h.b16 %v10124
    %v10658 = vunpack.c.l.b16 %v10125
    %v10659 = vunpack.c.h.b16 %v10125
    %v10660 = vunpack.c.l.b16 %v10126
    %v10661 = vunpack.c.h.b16 %v10126
    %v10662 = vunpack.c.l.b16 %v10127
    %v10663 = vunpack.c.h.b16 %v10127
    %v10664 = vunpack.c.l.b16 %v10128
    %v10665 = vunpack.c.h.b16 %v10128
    %v10666 = vunpack.c.l.b16 %v10129
    %v10667 = vunpack.c.h.b16 %v10129
    %v10668 = vunpack.c.l.b16 %v10130
    %v10669 = vunpack.c.h.b16 %v10130
    %v10670 = vunpack.c.l.b16 %v10131
    %v10671 = vunpack.c.h.b16 %v10131
    %v10672 = vunpack.c.l.b16 %v10132
    %v10673 = vunpack.c.h.b16 %v10132
    %v10674 = vunpack.c.l.b16 %v10133
    %v10675 = vunpack.c.h.b16 %v10133
    %v10676 = vunpack.c.l.b16 %v10134
    %v10677 = vunpack.c.h.b16 %v10134
    %v10678 = vunpack.c.l.b16 %v10135
    %v10679 = vunpack.c.h.b16 %v10135
    %v10680 = vunpack.c.l.b16 %v10136
    %v10681 = vunpack.c.h.b16 %v10136
    %v10682 = vunpack.c.l.b16 %v10137
    %v10683 = vunpack.c.h.b16 %v10137
    %v10684 = vunpack.c.l.b16 %v10138
    %v10685 = vunpack.c.h.b16 %v10138
    %v10686 = vunpack.c.l.b16 %v10139
    %v10687 = vunpack.c.h.b16 %v10139
    %v10688 = vunpack.c.l.b16 %v10140
    %v10689 = vunpack.c.h.b16 %v10140
    %v10690 = vunpack.c.l.b16 %v10141
    %v10691 = vunpack.c.h.b16 %v10141
    %v10692 = vunpack.c.l.b16 %v10142
    %v10693 = vunpack.c.h.b16 %v10142
    %v10694 = vunpack.c.l.b16 %v10143
    %v10695 = vunpack.c.h.b16 %v10143
    %v10696 = vunpack.c.l.b16 %v10144
    %v10697 = vunpack.c.h.b16 %v10144
    %v10698 = vunpack.c.l.b16 %v10145
    %v10699 = vunpack.c.h.b16 %v10145
    %v10700 = vunpack.c.l.b16 %v10146
    %v10701 = vunpack.c.h.b16 %v10146
    %v10702 = vunpack.c.l.b16 %v10147
    %v10703 = vunpack.c.h.b16 %v10147
    %v10704 = vunpack.c.l.b16 %v10148
    %v10705 = vunpack.c.h.b16 %v10148
    %v10706 = vunpack.c.l.b16 %v10149
    %v10707 = vunpack.c.h.b16 %v10149
    %v10708 = vunpack.c.l.b16 %v10150
    %v10709 = vunpack.c.h.b16 %v10150
    %v10710 = vunpack.c.l.b16 %v10151
    %v10711 = vunpack.c.h.b16 %v10151
    %v10712 = vunpack.c.l.b16 %v10152
    %v10713 = vunpack.c.h.b16 %v10152
    %v10714 = vunpack.c.l.b16 %v10153
    %v10715 = vunpack.c.h.b16 %v10153
    %v10716 = vunpack.c.l.b16 %v10154
    %v10717 = vunpack.c.h.b16 %v10154
    %v10718 = vunpack.c.l.b16 %v10155
    %v10719 = vunpack.c.h.b16 %v10155
    %v10720 = vunpack.c.l.b16 %v10156
    %v10721 = vunpack.c.h.b16 %v10156
    %v10722 = vunpack.c.l.b16 %v10157
    %v10723 = vunpack.c.h.b16 %v10157
    %v10724 = vunpack.c.l.b16 %v10158
    %v10725 = vunpack.c.h.b16 %v10158
    %v10726 = vunpack.c.l.b16 %v10159
    %v10727 = vunpack.c.h.b16 %v10159
    %v10728 = vunpack.c.l.b16 %v10160
    %v10729 = vunpack.c.h.b16 %v10160
    %v10730 = vunpack.c.l.b16 %v10161
    %v10731 = vunpack.c.h.b16 %v10161
    %v10732 = vunpack.c.l.b16 %v10162
    %v10733 = vunpack.c.h.b16 %v10162
    %v10734 = vunpack.c.l.b16 %v10163
    %v10735 = vunpack.c.h.b16 %v10163
    %v10736 = vunpack.c.l.b16 %v10164
    %v10737 = vunpack.c.h.b16 %v10164
    %v10738 = vunpack.c.l.b16 %v10165
    %v10739 = vunpack.c.h.b16 %v10165
    %v10740 = vunpack.c.l.b16 %v10166
    %v10741 = vunpack.c.h.b16 %v10166
    %v10742 = vunpack.c.l.b16 %v10167
    %v10743 = vunpack.c.h.b16 %v10167
    %v10744 = vunpack.c.l.b16 %v10168
    %v10745 = vunpack.c.h.b16 %v10168
    %v10746 = vunpack.c.l.b16 %v10169
    %v10747 = vunpack.c.h.b16 %v10169
    %v10748 = vunpack.c.l.b16 %v10170
    %v10749 = vunpack.c.h.b16 %v10170
    %v10750 = vunpack.c.l.b16 %v10171
    %v10751 = vunpack.c.h.b16 %v10171
    %v10752 = vunpack.c.l.b16 %v10172
    %v10753 = vunpack.c.h.b16 %v10172
    %v10754 = vunpack.c.l.b16 %v10173
    %v10755 = vunpack.c.h.b16 %v10173
    %v10756 = vunpack.c.l.b16 %v10174
    %v10757 = vunpack.c.h.b16 %v10174
    %v10758 = vunpack.c.l.b16 %v10175
    %v10759 = vunpack.c.h.b16 %v10175
    %v10760 = vunpack.c.l.b16 %v10176
    %v10761 = vunpack.c.h.b16 %v10176
    %v10762 = vunpack.c.l.b16 %v10177
    %v10763 = vunpack.c.h.b16 %v10177
    %v10764 = vunpack.c.l.b16 %v10178
    %v10765 = vunpack.c.h.b16 %v10178
    %v10766 = vunpack.c.l.b16 %v10179
    %v10767 = vunpack.c.h.b16 %v10179
    %v10768 = vunpack.c.l.b16 %v10180
    %v10769 = vunpack.c.h.b16 %v10180
    %v10770 = vunpack.c.l.b16 %v10181
    %v10771 = vunpack.c.h.b16 %v10181
    %v10772 = vunpack.c.l.b16 %v10182
    %v10773 = vunpack.c.h.b16 %v10182
    %v10774 = vunpack.c.l.b16 %v10183
    %v10775 = vunpack.c.h.b16 %v10183
    %v10776 = vunpack.c.l.b16 %v10184
    %v10777 = vunpack.c.h.b16 %v10184
    %v10778 = vunpack.c.l.b16 %v10185
    %v10779 = vunpack.c.h.b16 %v10185
    %v10780 = vunpack.c.l.b16 %v10186
    %v10781 = vunpack.c.h.b16 %v10186
    %v10782 = vunpack.c.l.b16 %v10187
    %v10783 = vunpack.c.h.b16 %v10187
    %v10784 = vunpack.c.l.b16 %v10188
    %v10785 = vunpack.c.h.b16 %v10188
    %v10786 = vunpack.c.l.b16 %v10189
    %v10787 = vunpack.c.h.b16 %v10189
    %v10788 = vunpack.c.l.b16 %v10190
    %v10789 = vunpack.c.h.b16 %v10190
    %v10790 = vunpack.c.l.b16 %v10191
    %v10791 = vunpack.c.h.b16 %v10191
    %v10792 = vunpack.c.l.b16 %v10192
    %v10793 = vunpack.c.h.b16 %v10192
    %v10794 = vunpack.c.l.b16 %v10193
    %v10795 = vunpack.c.h.b16 %v10193
    %v10796 = vunpack.c.l.b16 %v10194
    %v10797 = vunpack.c.h.b16 %v10194
    %v10798 = vunpack.c.l.b16 %v10195
    %v10799 = vunpack.c.h.b16 %v10195
    %v10800 = vunpack.c.l.b16 %v10196
    %v10801 = vunpack.c.h.b16 %v10196
    %v10802 = vunpack.c.l.b16 %v10197
    %v10803 = vunpack.c.h.b16 %v10197
    %v10804 = vunpack.c.l.b16 %v10198
    %v10805 = vunpack.c.h.b16 %v10198
    %v10806 = vunpack.c.l.b16 %v10199
    %v10807 = vunpack.c.h.b16 %v10199
    %v10808 = vunpack.c.l.b16 %v10200
    %v10809 = vunpack.c.h.b16 %v10200
    %v10810 = vunpack.c.l.b16 %v10201
    %v10811 = vunpack.c.h.b16 %v10201
    %v10812 = vunpack.c.l.b16 %v10202
    %v10813 = vunpack.c.h.b16 %v10202
    %v10814 = vunpack.c.l.b16 %v10203
    %v10815 = vunpack.c.h.b16 %v10203
    %v10816 = vunpack.c.l.b16 %v10204
    %v10817 = vunpack.c.h.b16 %v10204
    %v10818 = vunpack.c.l.b16 %v10205
    %v10819 = vunpack.c.h.b16 %v10205
    %v10820 = vunpack.c.l.b16 %v10206
    %v10821 = vunpack.c.h.b16 %v10206
    %v10822 = vunpack.c.l.b16 %v10207
    %v10823 = vunpack.c.h.b16 %v10207
    %v10824 = vunpack.c.l.b16 %v10208
    %v10825 = vunpack.c.h.b16 %v10208
    %v10826 = vunpack.c.l.b16 %v10209
    %v10827 = vunpack.c.h.b16 %v10209
    %v10828 = vunpack.c.l.b16 %v10210
    %v10829 = vunpack.c.h.b16 %v10210
    %v10830 = vunpack.c.l.b16 %v10211
    %v10831 = vunpack.c.h.b16 %v10211
    %v10832 = vunpack.c.l.b16 %v10212
    %v10833 = vunpack.c.h.b16 %v10212
    %v10834 = vunpack.c.l.b16 %v10213
    %v10835 = vunpack.c.h.b16 %v10213
    %v10836 = vunpack.c.l.b16 %v10214
    %v10837 = vunpack.c.h.b16 %v10214
    %v10838 = vunpack.c.l.b16 %v10215
    %v10839 = vunpack.c.h.b16 %v10215
    %v10840 = vunpack.c.l.b16 %v10216
    %v10841 = vunpack.c.h.b16 %v10216
    %v10842 = vunpack.c.l.b16 %v10217
    %v10843 = vunpack.c.h.b16 %v10217
    %v10844 = vunpack.c.l.b16 %v10218
    %v10845 = vunpack.c.h.b16 %v10218
    %v10846 = vunpack.c.l.b16 %v10219
    %v10847 = vunpack.c.h.b16 %v10219
    %v10848 = vunpack.c.l.b16 %v10220
    %v10849 = vunpack.c.h.b16 %v10220
    %v10850 = vunpack.c.l.b16 %v10221
    %v10851 = vunpack.c.h.b16 %v10221
    %v10852 = vunpack.c.l.b16 %v10222
    %v10853 = vunpack.c.h.b16 %v10222
    %v10854 = vunpack.c.l.b16 %v10223
    %v10855 = vunpack.c.h.b16 %v10223
    %v10856 = vunpack.c.l.b16 %v10224
    %v10857 = vunpack.c.h.b16 %v10224
    %v10858 = vunpack.c.l.b16 %v10225
    %v10859 = vunpack.c.h.b16 %v10225
    %v10860 = vunpack.c.l.b16 %v10226
    %v10861 = vunpack.c.h.b16 %v10226
    %v10862 = vunpack.c.l.b16 %v10227
    %v10863 = vunpack.c.h.b16 %v10227
    %v10864 = vunpack.c.l.b16 %v10228
    %v10865 = vunpack.c.h.b16 %v10228
    %v10866 = vunpack.c.l.b16 %v10229
    %v10867 = vunpack.c.h.b16 %v10229
    %v10868 = vunpack.c.l.b16 %v10230
    %v10869 = vunpack.c.h.b16 %v10230
    %v10870 = vunpack.c.l.b16 %v10231
    %v10871 = vunpack.c.h.b16 %v10231
    %v10872 = vunpack.c.l.b16 %v10232
    %v10873 = vunpack.c.h.b16 %v10232
    %v10874 = vunpack.c.l.b16 %v10233
    %v10875 = vunpack.c.h.b16 %v10233
    %v10876 = vunpack.c.l.b16 %v10234
    %v10877 = vunpack.c.h.b16 %v10234
    %v10878 = vunpack.c.l.b16 %v10235
    %v10879 = vunpack.c.h.b16 %v10235
    %v10880 = vunpack.c.l.b16 %v10236
    %v10881 = vunpack.c.h.b16 %v10236
    %v10882 = vunpack.c.l.b16 %v10237
    %v10883 = vunpack.c.h.b16 %v10237
    %v10884 = vunpack.c.l.b16 %v10238
    %v10885 = vunpack.c.h.b16 %v10238
    %v10886 = vunpack.c.l.b16 %v10239
    %v10887 = vunpack.c.h.b16 %v10239
    %v10888 = vunpack.c.l.b16 %v10240
    %v10889 = vunpack.c.h.b16 %v10240
    %v10890 = vunpack.c.l.b16 %v10241
    %v10891 = vunpack.c.h.b16 %v10241
    %v10892 = vunpack.c.l.b16 %v10242
    %v10893 = vunpack.c.h.b16 %v10242
    %v10894 = vunpack.c.l.b16 %v10243
    %v10895 = vunpack.c.h.b16 %v10243
    %v10896 = vunpack.c.l.b16 %v10244
    %v10897 = vunpack.c.h.b16 %v10244
    %v10898 = vunpack.c.l.b16 %v10245
    %v10899 = vunpack.c.h.b16 %v10245
    %v10900 = vunpack.c.l.b16 %v10246
    %v10901 = vunpack.c.h.b16 %v10246
    %v10902 = vunpack.c.l.b16 %v10247
    %v10903 = vunpack.c.h.b16 %v10247
    %v10904 = vunpack.c.l.b16 %v10248
    %v10905 = vunpack.c.h.b16 %v10248
    %v10906 = vunpack.c.l.b16 %v10249
    %v10907 = vunpack.c.h.b16 %v10249
    %v10908 = vunpack.c.l.b16 %v10250
    %v10909 = vunpack.c.h.b16 %v10250
    %v10910 = vunpack.c.l.b16 %v10251
    %v10911 = vunpack.c.h.b16 %v10251
    %v10912 = vunpack.c.l.b16 %v10252
    %v10913 = vunpack.c.h.b16 %v10252
    %v10914 = vunpack.c.l.b16 %v10253
    %v10915 = vunpack.c.h.b16 %v10253
    %v10916 = vunpack.c.l.b16 %v10254
    %v10917 = vunpack.c.h.b16 %v10254
    %v10918 = vunpack.c.l.b16 %v10255
    %v10919 = vunpack.c.h.b16 %v10255
    %v10920 = vunpack.c.l.b16 %v10256
    %v10921 = vunpack.c.h.b16 %v10256
    %v10922 = vunpack.c.l.b16 %v10257
    %v10923 = vunpack.c.h.b16 %v10257
    %v10924 = vunpack.c.l.b16 %v10258
    %v10925 = vunpack.c.h.b16 %v10258
    %v10926 = vunpack.c.l.b16 %v10259
    %v10927 = vunpack.c.h.b16 %v10259
    %v10928 = vunpack.c.l.b16 %v10260
    %v10929 = vunpack.c.h.b16 %v10260
    %v10930 = vunpack.c.l.b16 %v10261
    %v10931 = vunpack.c.h.b16 %v10261
    %v10932 = vunpack.c.l.b16 %v10262
    %v10933 = vunpack.c.h.b16 %v10262
    %v10934 = vunpack.c.l.b16 %v10263
    %v10935 = vunpack.c.h.b16 %v10263
    %v10936 = vunpack.c.l.b16 %v10264
    %v10937 = vunpack.c.h.b16 %v10264
    %v10938 = vunpack.c.l.b16 %v10265
    %v10939 = vunpack.c.h.b16 %v10265
    %v10940 = vunpack.c.l.b16 %v10266
    %v10941 = vunpack.c.h.b16 %v10266
    %v10942 = vunpack.c.l.b16 %v10267
    %v10943 = vunpack.c.h.b16 %v10267
    %v10944 = vunpack.c.l.b16 %v10268
    %v10945 = vunpack.c.h.b16 %v10268
    %v10946 = vunpack.c.l.b16 %v10269
    %v10947 = vunpack.c.h.b16 %v10269
    %v10948 = vunpack.c.l.b16 %v10270
    %v10949 = vunpack.c.h.b16 %v10270
    %v10950 = vunpack.c.l.b16 %v10271
    %v10951 = vunpack.c.h.b16 %v10271
    %v10952 = vunpack.c.l.b16 %v10272
    %v10953 = vunpack.c.h.b16 %v10272
    %v10954 = vunpack.c.l.b16 %v10273
    %v10955 = vunpack.c.h.b16 %v10273
    %v10956 = vunpack.c.l.b16 %v10274
    %v10957 = vunpack.c.h.b16 %v10274
    %v10958 = vunpack.c.l.b16 %v10275
    %v10959 = vunpack.c.h.b16 %v10275
    %v10960 = vunpack.c.l.b16 %v10276
    %v10961 = vunpack.c.h.b16 %v10276
    %v10962 = vunpack.c.l.b16 %v10277
    %v10963 = vunpack.c.h.b16 %v10277
    %v10964 = vunpack.c.l.b16 %v10278
    %v10965 = vunpack.c.h.b16 %v10278
    %v10966 = vunpack.c.l.b16 %v10279
    %v10967 = vunpack.c.h.b16 %v10279
    %v10968 = vunpack.c.l.b16 %v10280
    %v10969 = vunpack.c.h.b16 %v10280
    %v10970 = vunpack.c.l.b16 %v10281
    %v10971 = vunpack.c.h.b16 %v10281
    %v10972 = vunpack.c.l.b16 %v10282
    %v10973 = vunpack.c.h.b16 %v10282
    %v10974 = vunpack.c.l.b16 %v10283
    %v10975 = vunpack.c.h.b16 %v10283
    %v10976 = vunpack.c.l.b16 %v10284
    %v10977 = vunpack.c.h.b16 %v10284
    %v10978 = vunpack.c.l.b16 %v10285
    %v10979 = vunpack.c.h.b16 %v10285
    %v10980 = vunpack.c.l.b16 %v10286
    %v10981 = vunpack.c.h.b16 %v10286
    %v10982 = vunpack.c.l.b16 %v10287
    %v10983 = vunpack.c.h.b16 %v10287
    %v10984 = vunpack.c.l.b16 %v10288
    %v10985 = vunpack.c.h.b16 %v10288
    %v10986 = vunpack.c.l.b16 %v10289
    %v10987 = vunpack.c.h.b16 %v10289
    %v10988 = vunpack.c.l.b16 %v10290
    %v10989 = vunpack.c.h.b16 %v10290
    %v10990 = vunpack.c.l.b16 %v10291
    %v10991 = vunpack.c.h.b16 %v10291
    %v10992 = vunpack.c.l.b16 %v10292
    %v10993 = vunpack.c.h.b16 %v10292
    %v10994 = vunpack.c.l.b16 %v10293
    %v10995 = vunpack.c.h.b16 %v10293
    %v10996 = vunpack.c.l.b16 %v10294
    %v10997 = vunpack.c.h.b16 %v10294
    %v10998 = vunpack.c.l.b16 %v10295
    %v10999 = vunpack.c.h.b16 %v10295
    %v11000 = vunpack.c.l.b16 %v10296
    %v11001 = vunpack.c.h.b16 %v10296
    %v11002 = vunpack.c.l.b16 %v10297
    %v11003 = vunpack.c.h.b16 %v10297
    %v11004 = vunpack.c.l.b16 %v10298
    %v11005 = vunpack.c.h.b16 %v10298
    %v11006 = vunpack.c.l.b16 %v10299
    %v11007 = vunpack.c.h.b16 %v10299
    %v11008 = vunpack.c.l.b16 %v10300
    %v11009 = vunpack.c.h.b16 %v10300
    %v11010 = vunpack.c.l.b16 %v10301
    %v11011 = vunpack.c.h.b16 %v10301
    %v11012 = vunpack.c.l.b16 %v10302
    %v11013 = vunpack.c.h.b16 %v10302
    %v11014 = vunpack.c.l.b16 %v10303
    %v11015 = vunpack.c.h.b16 %v10303
    %v11016 = vunpack.c.l.b16 %v10304
    %v11017 = vunpack.c.h.b16 %v10304
    %v11018 = vunpack.c.l.b16 %v10305
    %v11019 = vunpack.c.h.b16 %v10305
    %v11020 = vunpack.c.l.b16 %v10306
    %v11021 = vunpack.c.h.b16 %v10306
    %v11022 = vunpack.c.l.b16 %v10307
    %v11023 = vunpack.c.h.b16 %v10307
    %v11024 = vunpack.c.l.b16 %v10308
    %v11025 = vunpack.c.h.b16 %v10308
    %v11026 = vunpack.c.l.b16 %v10309
    %v11027 = vunpack.c.h.b16 %v10309
    %v11028 = vunpack.c.l.b16 %v10310
    %v11029 = vunpack.c.h.b16 %v10310
    %v11030 = vunpack.c.l.b16 %v10311
    %v11031 = vunpack.c.h.b16 %v10311
    %v11032 = vunpack.c.l.b16 %v10312
    %v11033 = vunpack.c.h.b16 %v10312
    %v11034 = vunpack.c.l.b16 %v10313
    %v11035 = vunpack.c.h.b16 %v10313
    %v11036 = vunpack.c.l.b16 %v10314
    %v11037 = vunpack.c.h.b16 %v10314
    %v11038 = vunpack.c.l.b16 %v10315
    %v11039 = vunpack.c.h.b16 %v10315
    %v11040 = vunpack.c.l.b16 %v10316
    %v11041 = vunpack.c.h.b16 %v10316
    %v11042 = vunpack.c.l.b16 %v10317
    %v11043 = vunpack.c.h.b16 %v10317
    %v11044 = vunpack.c.l.b16 %v10318
    %v11045 = vunpack.c.h.b16 %v10318
    %v11046 = vunpack.c.l.b16 %v10319
    %v11047 = vunpack.c.h.b16 %v10319
    %v11048 = vunpack.c.l.b16 %v10320
    %v11049 = vunpack.c.h.b16 %v10320
    %v11050 = vunpack.c.l.b16 %v10321
    %v11051 = vunpack.c.h.b16 %v10321
    %v11052 = vunpack.c.l.b16 %v10322
    %v11053 = vunpack.c.h.b16 %v10322
    %v11054 = vunpack.c.l.b16 %v10323
    %v11055 = vunpack.c.h.b16 %v10323
    %v11056 = vunpack.c.l.b16 %v10324
    %v11057 = vunpack.c.h.b16 %v10324
    %v11058 = vunpack.c.l.b16 %v10325
    %v11059 = vunpack.c.h.b16 %v10325
    %v11060 = vunpack.c.l.b16 %v10326
    %v11061 = vunpack.c.h.b16 %v10326
    %v11062 = vunpack.c.l.b16 %v10327
    %v11063 = vunpack.c.h.b16 %v10327
    %v11064 = vunpack.c.l.b16 %v10328
    %v11065 = vunpack.c.h.b16 %v10328
    %v11066 = vunpack.c.l.b16 %v10329
    %v11067 = vunpack.c.h.b16 %v10329
    %v11068 = vunpack.c.l.b16 %v10330
    %v11069 = vunpack.c.h.b16 %v10330
    %v11070 = vunpack.c.l.b16 %v10331
    %v11071 = vunpack.c.h.b16 %v10331
    %v11072 = vunpack.c.l.b16 %v10332
    %v11073 = vunpack.c.h.b16 %v10332
    %v11074 = vunpack.c.l.b16 %v10333
    %v11075 = vunpack.c.h.b16 %v10333
    %v11076 = vunpack.c.l.b16 %v10334
    %v11077 = vunpack.c.h.b16 %v10334
    %v11078 = vunpack.c.l.b16 %v10335
    %v11079 = vunpack.c.h.b16 %v10335
    %v11080 = vunpack.c.l.b16 %v10336
    %v11081 = vunpack.c.h.b16 %v10336
    %v11082 = vunpack.c.l.b16 %v10337
    %v11083 = vunpack.c.h.b16 %v10337
    %v11084 = vunpack.c.l.b16 %v10338
    %v11085 = vunpack.c.h.b16 %v10338
    %v11086 = vunpack.c.l.b16 %v10339
    %v11087 = vunpack.c.h.b16 %v10339
    %v11088 = vunpack.c.l.b16 %v10340
    %v11089 = vunpack.c.h.b16 %v10340
    %v11090 = vunpack.c.l.b16 %v10341
    %v11091 = vunpack.c.h.b16 %v10341
    %v11092 = vunpack.c.l.b16 %v10342
    %v11093 = vunpack.c.h.b16 %v10342
    %v11094 = vunpack.c.l.b16 %v10343
    %v11095 = vunpack.c.h.b16 %v10343
    %v11096 = vunpack.c.l.b16 %v10344
    %v11097 = vunpack.c.h.b16 %v10344
    %v11098 = vunpack.c.l.b16 %v10345
    %v11099 = vunpack.c.h.b16 %v10345
    %v11100 = vunpack.c.l.b16 %v10346
    %v11101 = vunpack.c.h.b16 %v10346
    %v11102 = vunpack.c.l.b16 %v10347
    %v11103 = vunpack.c.h.b16 %v10347
    %v11104 = vunpack.c.l.b16 %v10348
    %v11105 = vunpack.c.h.b16 %v10348
    %v11106 = vunpack.c.l.b16 %v10349
    %v11107 = vunpack.c.h.b16 %v10349
    %v11108 = vunpack.c.l.b16 %v10350
    %v11109 = vunpack.c.h.b16 %v10350
    %v11110 = vunpack.c.l.b16 %v10351
    %v11111 = vunpack.c.h.b16 %v10351
    %v11112 = vunpack.c.l.b16 %v10352
    %v11113 = vunpack.c.h.b16 %v10352
    %v11114 = vunpack.c.l.b16 %v10353
    %v11115 = vunpack.c.h.b16 %v10353
    %v11116 = vunpack.c.l.b16 %v10354
    %v11117 = vunpack.c.h.b16 %v10354
    %v11118 = vunpack.c.l.b16 %v10355
    %v11119 = vunpack.c.h.b16 %v10355
    %v11120 = vunpack.c.l.b16 %v10356
    %v11121 = vunpack.c.h.b16 %v10356
    %v11122 = vunpack.c.l.b16 %v10357
    %v11123 = vunpack.c.h.b16 %v10357
    %v11124 = vunpack.c.l.b16 %v10358
    %v11125 = vunpack.c.h.b16 %v10358
    %v11126 = vunpack.c.l.b16 %v10359
    %v11127 = vunpack.c.h.b16 %v10359
    %v11128 = vunpack.c.l.b16 %v10360
    %v11129 = vunpack.c.h.b16 %v10360
    %v11130 = vunpack.c.l.b16 %v10361
    %v11131 = vunpack.c.h.b16 %v10361
    %v11132 = vunpack.c.l.b16 %v10362
    %v11133 = vunpack.c.h.b16 %v10362
    %v11134 = vunpack.c.l.b16 %v10363
    %v11135 = vunpack.c.h.b16 %v10363
    %v11136 = vunpack.c.l.b16 %v10364
    %v11137 = vunpack.c.h.b16 %v10364
    %v11138 = vunpack.c.l.b16 %v10365
    %v11139 = vunpack.c.h.b16 %v10365
    %v11140 = vunpack.c.l.b16 %v10366
    %v11141 = vunpack.c.h.b16 %v10366
    %v11142 = vunpack.c.l.b16 %v10367
    %v11143 = vunpack.c.h.b16 %v10367
    %v11144 = vunpack.c.l.b16 %v10368
    %v11145 = vunpack.c.h.b16 %v10368
    %v11146 = vunpack.c.l.b16 %v10369
    %v11147 = vunpack.c.h.b16 %v10369
    %v11148 = vpack.c.b16 %v10640, %v10636
    %v11149 = vpack.c.b16 %v10641, %v10637
    %v11150 = vpack.c.b16 %v10642, %v10638
    %v11151 = vpack.c.b16 %v10643, %v10639
    %v11152 = vpack.c.b16 %v10648, %v10644
    %v11153 = vpack.c.b16 %v10649, %v10645
    %v11154 = vpack.c.b16 %v10650, %v10646
    %v11155 = vpack.c.b16 %v10651, %v10647
    %v11156 = vpack.c.b16 %v10656, %v10652
    %v11157 = vpack.c.b16 %v10657, %v10653
    %v11158 = vpack.c.b16 %v10658, %v10654
    %v11159 = vpack.c.b16 %v10659, %v10655
    %v11160 = vpack.c.b16 %v10664, %v10660
    %v11161 = vpack.c.b16 %v10665, %v10661
    %v11162 = vpack.c.b16 %v10666, %v10662
    %v11163 = vpack.c.b16 %v10667, %v10663
    %v11164 = vpack.c.b16 %v10672, %v10668
    %v11165 = vpack.c.b16 %v10673, %v10669
    %v11166 = vpack.c.b16 %v10674, %v10670
    %v11167 = vpack.c.b16 %v10675, %v10671
    %v11168 = vpack.c.b16 %v10680, %v10676
    %v11169 = vpack.c.b16 %v10681, %v10677
    %v11170 = vpack.c.b16 %v10682, %v10678
    %v11171 = vpack.c.b16 %v10683, %v10679
    %v11172 = vpack.c.b16 %v10688, %v10684
    %v11173 = vpack.c.b16 %v10689, %v10685
    %v11174 = vpack.c.b16 %v10690, %v10686
    %v11175 = vpack.c.b16 %v10691, %v10687
    %v11176 = vpack.c.b16 %v10696, %v10692
    %v11177 = vpack.c.b16 %v10697, %v10693
    %v11178 = vpack.c.b16 %v10698, %v10694
    %v11179 = vpack.c.b16 %v10699, %v10695
    %v11180 = vpack.c.b16 %v10704, %v10700
    %v11181 = vpack.c.b16 %v10705, %v10701
    %v11182 = vpack.c.b16 %v10706, %v10702
    %v11183 = vpack.c.b16 %v10707, %v10703
    %v11184 = vpack.c.b16 %v10712, %v10708
    %v11185 = vpack.c.b16 %v10713, %v10709
    %v11186 = vpack.c.b16 %v10714, %v10710
    %v11187 = vpack.c.b16 %v10715, %v10711
    %v11188 = vpack.c.b16 %v10720, %v10716
    %v11189 = vpack.c.b16 %v10721, %v10717
    %v11190 = vpack.c.b16 %v10722, %v10718
    %v11191 = vpack.c.b16 %v10723, %v10719
    %v11192 = vpack.c.b16 %v10728, %v10724
    %v11193 = vpack.c.b16 %v10729, %v10725
    %v11194 = vpack.c.b16 %v10730, %v10726
    %v11195 = vpack.c.b16 %v10731, %v10727
    %v11196 = vpack.c.b16 %v10736, %v10732
    %v11197 = vpack.c.b16 %v10737, %v10733
    %v11198 = vpack.c.b16 %v10738, %v10734
    %v11199 = vpack.c.b16 %v10739, %v10735
    %v11200 = vpack.c.b16 %v10744, %v10740
    %v11201 = vpack.c.b16 %v10745, %v10741
    %v11202 = vpack.c.b16 %v10746, %v10742
    %v11203 = vpack.c.b16 %v10747, %v10743
    %v11204 = vpack.c.b16 %v10752, %v10748
    %v11205 = vpack.c.b16 %v10753, %v10749
    %v11206 = vpack.c.b16 %v10754, %v10750
    %v11207 = vpack.c.b16 %v10755, %v10751
    %v11208 = vpack.c.b16 %v10760, %v10756
    %v11209 = vpack.c.b16 %v10761, %v10757
    %v11210 = vpack.c.b16 %v10762, %v10758
    %v11211 = vpack.c.b16 %v10763, %v10759
    %v11212 = vpack.c.b16 %v10768, %v10764
    %v11213 = vpack.c.b16 %v10769, %v10765
    %v11214 = vpack.c.b16 %v10770, %v10766
    %v11215 = vpack.c.b16 %v10771, %v10767
    %v11216 = vpack.c.b16 %v10776, %v10772
    %v11217 = vpack.c.b16 %v10777, %v10773
    %v11218 = vpack.c.b16 %v10778, %v10774
    %v11219 = vpack.c.b16 %v10779, %v10775
    %v11220 = vpack.c.b16 %v10784, %v10780
    %v11221 = vpack.c.b16 %v10785, %v10781
    %v11222 = vpack.c.b16 %v10786, %v10782
    %v11223 = vpack.c.b16 %v10787, %v10783
    %v11224 = vpack.c.b16 %v10792, %v10788
    %v11225 = vpack.c.b16 %v10793, %v10789
    %v11226 = vpack.c.b16 %v10794, %v10790
    %v11227 = vpack.c.b16 %v10795, %v10791
    %v11228 = vpack.c.b16 %v10800, %v10796
    %v11229 = vpack.c.b16 %v10801, %v10797
    %v11230 = vpack.c.b16 %v10802, %v10798
    %v11231 = vpack.c.b16 %v10803, %v10799
    %v11232 = vpack.c.b16 %v10808, %v10804
    %v11233 = vpack.c.b16 %v10809, %v10805
    %v11234 = vpack.c.b16 %v10810, %v10806
    %v11235 = vpack.c.b16 %v10811, %v10807
    %v11236 = vpack.c.b16 %v10816, %v10812
    %v11237 = vpack.c.b16 %v10817, %v10813
    %v11238 = vpack.c.b16 %v10818, %v10814
    %v11239 = vpack.c.b16 %v10819, %v10815
    %v11240 = vpack.c.b16 %v10824, %v10820
    %v11241 = vpack.c.b16 %v10825, %v10821
    %v11242 = vpack.c.b16 %v10826, %v10822
    %v11243 = vpack.c.b16 %v10827, %v10823
    %v11244 = vpack.c.b16 %v10832, %v10828
    %v11245 = vpack.c.b16 %v10833, %v10829
    %v11246 = vpack.c.b16 %v10834, %v10830
    %v11247 = vpack.c.b16 %v10835, %v10831
    %v11248 = vpack.c.b16 %v10840, %v10836
    %v11249 = vpack.c.b16 %v10841, %v10837
    %v11250 = vpack.c.b16 %v10842, %v10838
    %v11251 = vpack.c.b16 %v10843, %v10839
    %v11252 = vpack.c.b16 %v10848, %v10844
    %v11253 = vpack.c.b16 %v10849, %v10845
    %v11254 = vpack.c.b16 %v10850, %v10846
    %v11255 = vpack.c.b16 %v10851, %v10847
    %v11256 = vpack.c.b16 %v10856, %v10852
    %v11257 = vpack.c.b16 %v10857, %v10853
    %v11258 = vpack.c.b16 %v10858, %v10854
    %v11259 = vpack.c.b16 %v10859, %v10855
    %v11260 = vpack.c.b16 %v10864, %v10860
    %v11261 = vpack.c.b16 %v10865, %v10861
    %v11262 = vpack.c.b16 %v10866, %v10862
    %v11263 = vpack.c.b16 %v10867, %v10863
    %v11264 = vpack.c.b16 %v10872, %v10868
    %v11265 = vpack.c.b16 %v10873, %v10869
    %v11266 = vpack.c.b16 %v10874, %v10870
    %v11267 = vpack.c.b16 %v10875, %v10871
    %v11268 = vpack.c.b16 %v10880, %v10876
    %v11269 = vpack.c.b16 %v10881, %v10877
    %v11270 = vpack.c.b16 %v10882, %v10878
    %v11271 = vpack.c.b16 %v10883, %v10879
    %v11272 = vpack.c.b16 %v10888, %v10884
    %v11273 = vpack.c.b16 %v10889, %v10885
    %v11274 = vpack.c.b16 %v10890, %v10886
    %v11275 = vpack.c.b16 %v10891, %v10887
    %v11276 = vpack.c.b16 %v10896, %v10892
    %v11277 = vpack.c.b16 %v10897, %v10893
    %v11278 = vpack.c.b16 %v10898, %v10894
    %v11279 = vpack.c.b16 %v10899, %v10895
    %v11280 = vpack.c.b16 %v10904, %v10900
    %v11281 = vpack.c.b16 %v10905, %v10901
    %v11282 = vpack.c.b16 %v10906, %v10902
    %v11283 = vpack.c.b16 %v10907, %v10903
    %v11284 = vpack.c.b16 %v10912, %v10908
    %v11285 = vpack.c.b16 %v10913, %v10909
    %v11286 = vpack.c.b16 %v10914, %v10910
    %v11287 = vpack.c.b16 %v10915, %v10911
    %v11288 = vpack.c.b16 %v10920, %v10916
    %v11289 = vpack.c.b16 %v10921, %v10917
    %v11290 = vpack.c.b16 %v10922, %v10918
    %v11291 = vpack.c.b16 %v10923, %v10919
    %v11292 = vpack.c.b16 %v10928, %v10924
    %v11293 = vpack.c.b16 %v10929, %v10925
    %v11294 = vpack.c.b16 %v10930, %v10926
    %v11295 = vpack.c.b16 %v10931, %v10927
    %v11296 = vpack.c.b16 %v10936, %v10932
    %v11297 = vpack.c.b16 %v10937, %v10933
    %v11298 = vpack.c.b16 %v10938, %v10934
    %v11299 = vpack.c.b16 %v10939, %v10935
    %v11300 = vpack.c.b16 %v10944, %v10940
    %v11301 = vpack.c.b16 %v10945, %v10941
    %v11302 = vpack.c.b16 %v10946, %v10942
    %v11303 = vpack.c.b16 %v10947, %v10943
    %v11304 = vpack.c.b16 %v10952, %v10948
    %v11305 = vpack.c.b16 %v10953, %v10949
    %v11306 = vpack.c.b16 %v10954, %v10950
    %v11307 = vpack.c.b16 %v10955, %v10951
    %v11308 = vpack.c.b16 %v10960, %v10956
    %v11309 = vpack.c.b16 %v10961, %v10957
    %v11310 = vpack.c.b16 %v10962, %v10958
    %v11311 = vpack.c.b16 %v10963, %v10959
    %v11312 = vpack.c.b16 %v10968, %v10964
    %v11313 = vpack.c.b16 %v10969, %v10965
    %v11314 = vpack.c.b16 %v10970, %v10966
    %v11315 = vpack.c.b16 %v10971, %v10967
    %v11316 = vpack.c.b16 %v10976, %v10972
    %v11317 = vpack.c.b16 %v10977, %v10973
    %v11318 = vpack.c.b16 %v10978, %v10974
    %v11319 = vpack.c.b16 %v10979, %v10975
    %v11320 = vpack.c.b16 %v10984, %v10980
    %v11321 = vpack.c.b16 %v10985, %v10981
    %v11322 = vpack.c.b16 %v10986, %v10982
    %v11323 = vpack.c.b16 %v10987, %v10983
    %v11324 = vpack.c.b16 %v10992, %v10988
    %v11325 = vpack.c.b16 %v10993, %v10989
    %v11326 = vpack.c.b16 %v10994, %v10990
    %v11327 = vpack.c.b16 %v10995, %v10991
    %v11328 = vpack.c.b16 %v11000, %v10996
    %v11329 = vpack.c.b16 %v11001, %v10997
    %v11330 = vpack.c.b16 %v11002, %v10998
    %v11331 = vpack.c.b16 %v11003, %v10999
    %v11332 = vpack.c.b16 %v11008, %v11004
    %v11333 = vpack.c.b16 %v11009, %v11005
    %v11334 = vpack.c.b16 %v11010, %v11006
    %v11335 = vpack.c.b16 %v11011, %v11007
    %v11336 = vpack.c.b16 %v11016, %v11012
    %v11337 = vpack.c.b16 %v11017, %v11013
    %v11338 = vpack.c.b16 %v11018, %v11014
    %v11339 = vpack.c.b16 %v11019, %v11015
    %v11340 = vpack.c.b16 %v11024, %v11020
    %v11341 = vpack.c.b16 %v11025, %v11021
    %v11342 = vpack.c.b16 %v11026, %v11022
    %v11343 = vpack.c.b16 %v11027, %v11023
    %v11344 = vpack.c.b16 %v11032, %v11028
    %v11345 = vpack.c.b16 %v11033, %v11029
    %v11346 = vpack.c.b16 %v11034, %v11030
    %v11347 = vpack.c.b16 %v11035, %v11031
    %v11348 = vpack.c.b16 %v11040, %v11036
    %v11349 = vpack.c.b16 %v11041, %v11037
    %v11350 = vpack.c.b16 %v11042, %v11038
    %v11351 = vpack.c.b16 %v11043, %v11039
    %v11352 = vpack.c.b16 %v11048, %v11044
    %v11353 = vpack.c.b16 %v11049, %v11045
    %v11354 = vpack.c.b16 %v11050, %v11046
    %v11355 = vpack.c.b16 %v11051, %v11047
    %v11356 = vpack.c.b16 %v11056, %v11052
    %v11357 = vpack.c.b16 %v11057, %v11053
    %v11358 = vpack.c.b16 %v11058, %v11054
    %v11359 = vpack.c.b16 %v11059, %v11055
    %v11360 = vpack.c.b16 %v11064, %v11060
    %v11361 = vpack.c.b16 %v11065, %v11061
    %v11362 = vpack.c.b16 %v11066, %v11062
    %v11363 = vpack.c.b16 %v11067, %v11063
    %v11364 = vpack.c.b16 %v11072, %v11068
    %v11365 = vpack.c.b16 %v11073, %v11069
    %v11366 = vpack.c.b16 %v11074, %v11070
    %v11367 = vpack.c.b16 %v11075, %v11071
    %v11368 = vpack.c.b16 %v11080, %v11076
    %v11369 = vpack.c.b16 %v11081, %v11077
    %v11370 = vpack.c.b16 %v11082, %v11078
    %v11371 = vpack.c.b16 %v11083, %v11079
    %v11372 = vpack.c.b16 %v11088, %v11084
    %v11373 = vpack.c.b16 %v11089, %v11085
    %v11374 = vpack.c.b16 %v11090, %v11086
    %v11375 = vpack.c.b16 %v11091, %v11087
    %v11376 = vpack.c.b16 %v11096, %v11092
    %v11377 = vpack.c.b16 %v11097, %v11093
    %v11378 = vpack.c.b16 %v11098, %v11094
    %v11379 = vpack.c.b16 %v11099, %v11095
    %v11380 = vpack.c.b16 %v11104, %v11100
    %v11381 = vpack.c.b16 %v11105, %v11101
    %v11382 = vpack.c.b16 %v11106, %v11102
    %v11383 = vpack.c.b16 %v11107, %v11103
    %v11384 = vpack.c.b16 %v11112, %v11108
    %v11385 = vpack.c.b16 %v11113, %v11109
    %v11386 = vpack.c.b16 %v11114, %v11110
    %v11387 = vpack.c.b16 %v11115, %v11111
    %v11388 = vpack.c.b16 %v11120, %v11116
    %v11389 = vpack.c.b16 %v11121, %v11117
    %v11390 = vpack.c.b16 %v11122, %v11118
    %v11391 = vpack.c.b16 %v11123, %v11119
    %v11392 = vpack.c.b16 %v11128, %v11124
    %v11393 = vpack.c.b16 %v11129, %v11125
    %v11394 = vpack.c.b16 %v11130, %v11126
    %v11395 = vpack.c.b16 %v11131, %v11127
    %v11396 = vpack.c.b16 %v11136, %v11132
    %v11397 = vpack.c.b16 %v11137, %v11133
    %v11398 = vpack.c.b16 %v11138, %v11134
    %v11399 = vpack.c.b16 %v11139, %v11135
    %v11400 = vpack.c.b16 %v11144, %v11140
    %v11401 = vpack.c.b16 %v11145, %v11141
    %v11402 = vpack.c.b16 %v11146, %v11142
    %v11403 = vpack.c.b16 %v11147, %v11143
    %11660 = vmatpush.bf16.msra.mxu0 %v11176
    %11661 = vmatpush.bf16.msra.mxu0 %v11172
    %11662 = vmatpush.bf16.msra.mxu0 %v11168
    %11663 = vmatpush.bf16.msra.mxu0 %v11164
    %11664 = vmatpush.bf16.msra.mxu0 %v11160
    %11665 = vmatpush.bf16.msra.mxu0 %v11156
    %11666 = vmatpush.bf16.msra.mxu0 %v11152
    %11667 = vmatpush.bf16.msra.mxu0 %v11148
    %11668 = vmatmul.bf16.gmra.mxu0 %v10106
    %v11669 = vpop.f32.mrf.mxu0
    %v11670 = vadd.f32 %v10372, %v11669
    %v11671 = vpop.f32.mrf.mxu0
    %11672 = vdwg.mxu0
    %11673 = vmatpush.bf16.msra.mxu0 %v11208
    %11674 = vmatpush.bf16.msra.mxu0 %v11204
    %11675 = vmatpush.bf16.msra.mxu0 %v11200
    %11676 = vmatpush.bf16.msra.mxu0 %v11196
    %11677 = vmatpush.bf16.msra.mxu0 %v11192
    %11678 = vmatpush.bf16.msra.mxu0 %v11188
    %11679 = vmatpush.bf16.msra.mxu0 %v11184
    %11680 = vmatpush.bf16.msra.mxu0 %v11180
    %11681 = vmatmul.bf16.gmra.mxu0 %v10107
    %v11682 = vpop.f32.mrf.mxu0
    %v11683 = vadd.f32 %v11670, %v11682
    %v11684 = vpop.f32.mrf.mxu0
    %11685 = vdwg.mxu0
    %11686 = vmatpush.bf16.msra.mxu0 %v11240
    %11687 = vmatpush.bf16.msra.mxu0 %v11236
    %11688 = vmatpush.bf16.msra.mxu0 %v11232
    %11689 = vmatpush.bf16.msra.mxu0 %v11228
    %11690 = vmatpush.bf16.msra.mxu0 %v11224
    %11691 = vmatpush.bf16.msra.mxu0 %v11220
    %11692 = vmatpush.bf16.msra.mxu0 %v11216
    %11693 = vmatpush.bf16.msra.mxu0 %v11212
    %11694 = vmatmul.bf16.gmra.mxu0 %v10108
    %v11695 = vpop.f32.mrf.mxu0
    %v11696 = vadd.f32 %v11683, %v11695
    %v11697 = vpop.f32.mrf.mxu0
    %11698 = vdwg.mxu0
    %11699 = vmatpush.bf16.msra.mxu0 %v11272
    %11700 = vmatpush.bf16.msra.mxu0 %v11268
    %11701 = vmatpush.bf16.msra.mxu0 %v11264
    %11702 = vmatpush.bf16.msra.mxu0 %v11260
    %11703 = vmatpush.bf16.msra.mxu0 %v11256
    %11704 = vmatpush.bf16.msra.mxu0 %v11252
    %11705 = vmatpush.bf16.msra.mxu0 %v11248
    %11706 = vmatpush.bf16.msra.mxu0 %v11244
    %11707 = vmatmul.bf16.gmra.mxu0 %v10109
    %v11708 = vpop.f32.mrf.mxu0
    %v11709 = vadd.f32 %v11696, %v11708
    %v11710 = vpop.f32.mrf.mxu0
    %11711 = vdwg.mxu0
    %11712 = vmatpush.bf16.msra.mxu0 %v11304
    %11713 = vmatpush.bf16.msra.mxu0 %v11300
    %11714 = vmatpush.bf16.msra.mxu0 %v11296
    %11715 = vmatpush.bf16.msra.mxu0 %v11292
    %11716 = vmatpush.bf16.msra.mxu0 %v11288
    %11717 = vmatpush.bf16.msra.mxu0 %v11284
    %11718 = vmatpush.bf16.msra.mxu0 %v11280
    %11719 = vmatpush.bf16.msra.mxu0 %v11276
    %11720 = vmatmul.bf16.gmra.mxu0 %v10110
    %v11721 = vpop.f32.mrf.mxu0
    %v11722 = vadd.f32 %v11709, %v11721
    %v11723 = vpop.f32.mrf.mxu0
    %11724 = vdwg.mxu0
    %11725 = vmatpush.bf16.msra.mxu0 %v11336
    %11726 = vmatpush.bf16.msra.mxu0 %v11332
    %11727 = vmatpush.bf16.msra.mxu0 %v11328
    %11728 = vmatpush.bf16.msra.mxu0 %v11324
    %11729 = vmatpush.bf16.msra.mxu0 %v11320
    %11730 = vmatpush.bf16.msra.mxu0 %v11316
    %11731 = vmatpush.bf16.msra.mxu0 %v11312
    %11732 = vmatpush.bf16.msra.mxu0 %v11308
    %11733 = vmatmul.bf16.gmra.mxu0 %v10111
    %v11734 = vpop.f32.mrf.mxu0
    %v11735 = vadd.f32 %v11722, %v11734
    %v11736 = vpop.f32.mrf.mxu0
    %11737 = vdwg.mxu0
    %11738 = vmatpush.bf16.msra.mxu0 %v11368
    %11739 = vmatpush.bf16.msra.mxu0 %v11364
    %11740 = vmatpush.bf16.msra.mxu0 %v11360
    %11741 = vmatpush.bf16.msra.mxu0 %v11356
    %11742 = vmatpush.bf16.msra.mxu0 %v11352
    %11743 = vmatpush.bf16.msra.mxu0 %v11348
    %11744 = vmatpush.bf16.msra.mxu0 %v11344
    %11745 = vmatpush.bf16.msra.mxu0 %v11340
    %11746 = vmatmul.bf16.gmra.mxu0 %v10112
    %v11747 = vpop.f32.mrf.mxu0
    %v11748 = vadd.f32 %v11735, %v11747
    %v11749 = vpop.f32.mrf.mxu0
    %11750 = vdwg.mxu0
    %11751 = vmatpush.bf16.msra.mxu0 %v11400
    %11752 = vmatpush.bf16.msra.mxu0 %v11396
    %11753 = vmatpush.bf16.msra.mxu0 %v11392
    %11754 = vmatpush.bf16.msra.mxu0 %v11388
    %11755 = vmatpush.bf16.msra.mxu0 %v11384
    %11756 = vmatpush.bf16.msra.mxu0 %v11380
    %11757 = vmatpush.bf16.msra.mxu0 %v11376
    %11758 = vmatpush.bf16.msra.mxu0 %v11372
    %11759 = vmatmul.bf16.gmra.mxu0 %v10113
    %v11760 = vpop.f32.mrf.mxu0
    %v11761 = vadd.f32 %v11748, %v11760
    %v11762 = vpop.f32.mrf.mxu0
    %11763 = vdwg.mxu0
    %11764 = vmatpush.bf16.msra.mxu0 %v11177
    %11765 = vmatpush.bf16.msra.mxu0 %v11173
    %11766 = vmatpush.bf16.msra.mxu0 %v11169
    %11767 = vmatpush.bf16.msra.mxu0 %v11165
    %11768 = vmatpush.bf16.msra.mxu0 %v11161
    %11769 = vmatpush.bf16.msra.mxu0 %v11157
    %11770 = vmatpush.bf16.msra.mxu0 %v11153
    %11771 = vmatpush.bf16.msra.mxu0 %v11149
    %11772 = vmatmul.bf16.gmra.mxu0 %v10106
    %v11773 = vpop.f32.mrf.mxu0
    %v11774 = vadd.f32 %v10373, %v11773
    %v11775 = vpop.f32.mrf.mxu0
    %11776 = vdwg.mxu0
    %11777 = vmatpush.bf16.msra.mxu0 %v11209
    %11778 = vmatpush.bf16.msra.mxu0 %v11205
    %11779 = vmatpush.bf16.msra.mxu0 %v11201
    %11780 = vmatpush.bf16.msra.mxu0 %v11197
    %11781 = vmatpush.bf16.msra.mxu0 %v11193
    %11782 = vmatpush.bf16.msra.mxu0 %v11189
    %11783 = vmatpush.bf16.msra.mxu0 %v11185
    %11784 = vmatpush.bf16.msra.mxu0 %v11181
    %11785 = vmatmul.bf16.gmra.mxu0 %v10107
    %v11786 = vpop.f32.mrf.mxu0
    %v11787 = vadd.f32 %v11774, %v11786
    %v11788 = vpop.f32.mrf.mxu0
    %11789 = vdwg.mxu0
    %11790 = vmatpush.bf16.msra.mxu0 %v11241
    %11791 = vmatpush.bf16.msra.mxu0 %v11237
    %11792 = vmatpush.bf16.msra.mxu0 %v11233
    %11793 = vmatpush.bf16.msra.mxu0 %v11229
    %11794 = vmatpush.bf16.msra.mxu0 %v11225
    %11795 = vmatpush.bf16.msra.mxu0 %v11221
    %11796 = vmatpush.bf16.msra.mxu0 %v11217
    %11797 = vmatpush.bf16.msra.mxu0 %v11213
    %11798 = vmatmul.bf16.gmra.mxu0 %v10108
    %v11799 = vpop.f32.mrf.mxu0
    %v11800 = vadd.f32 %v11787, %v11799
    %v11801 = vpop.f32.mrf.mxu0
    %11802 = vdwg.mxu0
    %11803 = vmatpush.bf16.msra.mxu0 %v11273
    %11804 = vmatpush.bf16.msra.mxu0 %v11269
    %11805 = vmatpush.bf16.msra.mxu0 %v11265
    %11806 = vmatpush.bf16.msra.mxu0 %v11261
    %11807 = vmatpush.bf16.msra.mxu0 %v11257
    %11808 = vmatpush.bf16.msra.mxu0 %v11253
    %11809 = vmatpush.bf16.msra.mxu0 %v11249
    %11810 = vmatpush.bf16.msra.mxu0 %v11245
    %11811 = vmatmul.bf16.gmra.mxu0 %v10109
    %v11812 = vpop.f32.mrf.mxu0
    %v11813 = vadd.f32 %v11800, %v11812
    %v11814 = vpop.f32.mrf.mxu0
    %11815 = vdwg.mxu0
    %11816 = vmatpush.bf16.msra.mxu0 %v11305
    %11817 = vmatpush.bf16.msra.mxu0 %v11301
    %11818 = vmatpush.bf16.msra.mxu0 %v11297
    %11819 = vmatpush.bf16.msra.mxu0 %v11293
    %11820 = vmatpush.bf16.msra.mxu0 %v11289
    %11821 = vmatpush.bf16.msra.mxu0 %v11285
    %11822 = vmatpush.bf16.msra.mxu0 %v11281
    %11823 = vmatpush.bf16.msra.mxu0 %v11277
    %11824 = vmatmul.bf16.gmra.mxu0 %v10110
    %v11825 = vpop.f32.mrf.mxu0
    %v11826 = vadd.f32 %v11813, %v11825
    %v11827 = vpop.f32.mrf.mxu0
    %11828 = vdwg.mxu0
    %11829 = vmatpush.bf16.msra.mxu0 %v11337
    %11830 = vmatpush.bf16.msra.mxu0 %v11333
    %11831 = vmatpush.bf16.msra.mxu0 %v11329
    %11832 = vmatpush.bf16.msra.mxu0 %v11325
    %11833 = vmatpush.bf16.msra.mxu0 %v11321
    %11834 = vmatpush.bf16.msra.mxu0 %v11317
    %11835 = vmatpush.bf16.msra.mxu0 %v11313
    %11836 = vmatpush.bf16.msra.mxu0 %v11309
    %11837 = vmatmul.bf16.gmra.mxu0 %v10111
    %v11838 = vpop.f32.mrf.mxu0
    %v11839 = vadd.f32 %v11826, %v11838
    %v11840 = vpop.f32.mrf.mxu0
    %11841 = vdwg.mxu0
    %11842 = vmatpush.bf16.msra.mxu0 %v11369
    %11843 = vmatpush.bf16.msra.mxu0 %v11365
    %11844 = vmatpush.bf16.msra.mxu0 %v11361
    %11845 = vmatpush.bf16.msra.mxu0 %v11357
    %11846 = vmatpush.bf16.msra.mxu0 %v11353
    %11847 = vmatpush.bf16.msra.mxu0 %v11349
    %11848 = vmatpush.bf16.msra.mxu0 %v11345
    %11849 = vmatpush.bf16.msra.mxu0 %v11341
    %11850 = vmatmul.bf16.gmra.mxu0 %v10112
    %v11851 = vpop.f32.mrf.mxu0
    %v11852 = vadd.f32 %v11839, %v11851
    %v11853 = vpop.f32.mrf.mxu0
    %11854 = vdwg.mxu0
    %11855 = vmatpush.bf16.msra.mxu0 %v11401
    %11856 = vmatpush.bf16.msra.mxu0 %v11397
    %11857 = vmatpush.bf16.msra.mxu0 %v11393
    %11858 = vmatpush.bf16.msra.mxu0 %v11389
    %11859 = vmatpush.bf16.msra.mxu0 %v11385
    %11860 = vmatpush.bf16.msra.mxu0 %v11381
    %11861 = vmatpush.bf16.msra.mxu0 %v11377
    %11862 = vmatpush.bf16.msra.mxu0 %v11373
    %11863 = vmatmul.bf16.gmra.mxu0 %v10113
    %v11864 = vpop.f32.mrf.mxu0
    %v11865 = vadd.f32 %v11852, %v11864
    %v11866 = vpop.f32.mrf.mxu0
    %11867 = vdwg.mxu0
    %11868 = vmatpush.bf16.msra.mxu0 %v11178
    %11869 = vmatpush.bf16.msra.mxu0 %v11174
    %11870 = vmatpush.bf16.msra.mxu0 %v11170
    %11871 = vmatpush.bf16.msra.mxu0 %v11166
    %11872 = vmatpush.bf16.msra.mxu0 %v11162
    %11873 = vmatpush.bf16.msra.mxu0 %v11158
    %11874 = vmatpush.bf16.msra.mxu0 %v11154
    %11875 = vmatpush.bf16.msra.mxu0 %v11150
    %11876 = vmatmul.bf16.gmra.mxu0 %v10106
    %v11877 = vpop.f32.mrf.mxu0
    %v11878 = vadd.f32 %v10374, %v11877
    %v11879 = vpop.f32.mrf.mxu0
    %11880 = vdwg.mxu0
    %11881 = vmatpush.bf16.msra.mxu0 %v11210
    %11882 = vmatpush.bf16.msra.mxu0 %v11206
    %11883 = vmatpush.bf16.msra.mxu0 %v11202
    %11884 = vmatpush.bf16.msra.mxu0 %v11198
    %11885 = vmatpush.bf16.msra.mxu0 %v11194
    %11886 = vmatpush.bf16.msra.mxu0 %v11190
    %11887 = vmatpush.bf16.msra.mxu0 %v11186
    %11888 = vmatpush.bf16.msra.mxu0 %v11182
    %11889 = vmatmul.bf16.gmra.mxu0 %v10107
    %v11890 = vpop.f32.mrf.mxu0
    %v11891 = vadd.f32 %v11878, %v11890
    %v11892 = vpop.f32.mrf.mxu0
    %11893 = vdwg.mxu0
    %11894 = vmatpush.bf16.msra.mxu0 %v11242
    %11895 = vmatpush.bf16.msra.mxu0 %v11238
    %11896 = vmatpush.bf16.msra.mxu0 %v11234
    %11897 = vmatpush.bf16.msra.mxu0 %v11230
    %11898 = vmatpush.bf16.msra.mxu0 %v11226
    %11899 = vmatpush.bf16.msra.mxu0 %v11222
    %11900 = vmatpush.bf16.msra.mxu0 %v11218
    %11901 = vmatpush.bf16.msra.mxu0 %v11214
    %11902 = vmatmul.bf16.gmra.mxu0 %v10108
    %v11903 = vpop.f32.mrf.mxu0
    %v11904 = vadd.f32 %v11891, %v11903
    %v11905 = vpop.f32.mrf.mxu0
    %11906 = vdwg.mxu0
    %11907 = vmatpush.bf16.msra.mxu0 %v11274
    %11908 = vmatpush.bf16.msra.mxu0 %v11270
    %11909 = vmatpush.bf16.msra.mxu0 %v11266
    %11910 = vmatpush.bf16.msra.mxu0 %v11262
    %11911 = vmatpush.bf16.msra.mxu0 %v11258
    %11912 = vmatpush.bf16.msra.mxu0 %v11254
    %11913 = vmatpush.bf16.msra.mxu0 %v11250
    %11914 = vmatpush.bf16.msra.mxu0 %v11246
    %11915 = vmatmul.bf16.gmra.mxu0 %v10109
    %v11916 = vpop.f32.mrf.mxu0
    %v11917 = vadd.f32 %v11904, %v11916
    %v11918 = vpop.f32.mrf.mxu0
    %11919 = vdwg.mxu0
    %11920 = vmatpush.bf16.msra.mxu0 %v11306
    %11921 = vmatpush.bf16.msra.mxu0 %v11302
    %11922 = vmatpush.bf16.msra.mxu0 %v11298
    %11923 = vmatpush.bf16.msra.mxu0 %v11294
    %11924 = vmatpush.bf16.msra.mxu0 %v11290
    %11925 = vmatpush.bf16.msra.mxu0 %v11286
    %11926 = vmatpush.bf16.msra.mxu0 %v11282
    %11927 = vmatpush.bf16.msra.mxu0 %v11278
    %11928 = vmatmul.bf16.gmra.mxu0 %v10110
    %v11929 = vpop.f32.mrf.mxu0
    %v11930 = vadd.f32 %v11917, %v11929
    %v11931 = vpop.f32.mrf.mxu0
    %11932 = vdwg.mxu0
    %11933 = vmatpush.bf16.msra.mxu0 %v11338
    %11934 = vmatpush.bf16.msra.mxu0 %v11334
    %11935 = vmatpush.bf16.msra.mxu0 %v11330
    %11936 = vmatpush.bf16.msra.mxu0 %v11326
    %11937 = vmatpush.bf16.msra.mxu0 %v11322
    %11938 = vmatpush.bf16.msra.mxu0 %v11318
    %11939 = vmatpush.bf16.msra.mxu0 %v11314
    %11940 = vmatpush.bf16.msra.mxu0 %v11310
    %11941 = vmatmul.bf16.gmra.mxu0 %v10111
    %v11942 = vpop.f32.mrf.mxu0
    %v11943 = vadd.f32 %v11930, %v11942
    %v11944 = vpop.f32.mrf.mxu0
    %11945 = vdwg.mxu0
    %11946 = vmatpush.bf16.msra.mxu0 %v11370
    %11947 = vmatpush.bf16.msra.mxu0 %v11366
    %11948 = vmatpush.bf16.msra.mxu0 %v11362
    %11949 = vmatpush.bf16.msra.mxu0 %v11358
    %11950 = vmatpush.bf16.msra.mxu0 %v11354
    %11951 = vmatpush.bf16.msra.mxu0 %v11350
    %11952 = vmatpush.bf16.msra.mxu0 %v11346
    %11953 = vmatpush.bf16.msra.mxu0 %v11342
    %11954 = vmatmul.bf16.gmra.mxu0 %v10112
    %v11955 = vpop.f32.mrf.mxu0
    %v11956 = vadd.f32 %v11943, %v11955
    %v11957 = vpop.f32.mrf.mxu0
    %11958 = vdwg.mxu0
    %11959 = vmatpush.bf16.msra.mxu0 %v11402
    %11960 = vmatpush.bf16.msra.mxu0 %v11398
    %11961 = vmatpush.bf16.msra.mxu0 %v11394
    %11962 = vmatpush.bf16.msra.mxu0 %v11390
    %11963 = vmatpush.bf16.msra.mxu0 %v11386
    %11964 = vmatpush.bf16.msra.mxu0 %v11382
    %11965 = vmatpush.bf16.msra.mxu0 %v11378
    %11966 = vmatpush.bf16.msra.mxu0 %v11374
    %11967 = vmatmul.bf16.gmra.mxu0 %v10113
    %v11968 = vpop.f32.mrf.mxu0
    %v11969 = vadd.f32 %v11956, %v11968
    %v11970 = vpop.f32.mrf.mxu0
    %11971 = vdwg.mxu0
    %11972 = vmatpush.bf16.msra.mxu0 %v11179
    %11973 = vmatpush.bf16.msra.mxu0 %v11175
    %11974 = vmatpush.bf16.msra.mxu0 %v11171
    %11975 = vmatpush.bf16.msra.mxu0 %v11167
    %11976 = vmatpush.bf16.msra.mxu0 %v11163
    %11977 = vmatpush.bf16.msra.mxu0 %v11159
    %11978 = vmatpush.bf16.msra.mxu0 %v11155
    %11979 = vmatpush.bf16.msra.mxu0 %v11151
    %11980 = vmatmul.bf16.gmra.mxu0 %v10106
    %v11981 = vpop.f32.mrf.mxu0
    %v11982 = vadd.f32 %v10375, %v11981
    %v11983 = vpop.f32.mrf.mxu0
    %11984 = vdwg.mxu0
    %11985 = vmatpush.bf16.msra.mxu0 %v11211
    %11986 = vmatpush.bf16.msra.mxu0 %v11207
    %11987 = vmatpush.bf16.msra.mxu0 %v11203
    %11988 = vmatpush.bf16.msra.mxu0 %v11199
    %11989 = vmatpush.bf16.msra.mxu0 %v11195
    %11990 = vmatpush.bf16.msra.mxu0 %v11191
    %11991 = vmatpush.bf16.msra.mxu0 %v11187
    %11992 = vmatpush.bf16.msra.mxu0 %v11183
    %11993 = vmatmul.bf16.gmra.mxu0 %v10107
    %v11994 = vpop.f32.mrf.mxu0
    %v11995 = vadd.f32 %v11982, %v11994
    %v11996 = vpop.f32.mrf.mxu0
    %11997 = vdwg.mxu0
    %11998 = vmatpush.bf16.msra.mxu0 %v11243
    %11999 = vmatpush.bf16.msra.mxu0 %v11239
    %12000 = vmatpush.bf16.msra.mxu0 %v11235
    %12001 = vmatpush.bf16.msra.mxu0 %v11231
    %12002 = vmatpush.bf16.msra.mxu0 %v11227
    %12003 = vmatpush.bf16.msra.mxu0 %v11223
    %12004 = vmatpush.bf16.msra.mxu0 %v11219
    %12005 = vmatpush.bf16.msra.mxu0 %v11215
    %12006 = vmatmul.bf16.gmra.mxu0 %v10108
    %v12007 = vpop.f32.mrf.mxu0
    %v12008 = vadd.f32 %v11995, %v12007
    %v12009 = vpop.f32.mrf.mxu0
    %12010 = vdwg.mxu0
    %12011 = vmatpush.bf16.msra.mxu0 %v11275
    %12012 = vmatpush.bf16.msra.mxu0 %v11271
    %12013 = vmatpush.bf16.msra.mxu0 %v11267
    %12014 = vmatpush.bf16.msra.mxu0 %v11263
    %12015 = vmatpush.bf16.msra.mxu0 %v11259
    %12016 = vmatpush.bf16.msra.mxu0 %v11255
    %12017 = vmatpush.bf16.msra.mxu0 %v11251
    %12018 = vmatpush.bf16.msra.mxu0 %v11247
    %12019 = vmatmul.bf16.gmra.mxu0 %v10109
    %v12020 = vpop.f32.mrf.mxu0
    %v12021 = vadd.f32 %v12008, %v12020
    %v12022 = vpop.f32.mrf.mxu0
    %12023 = vdwg.mxu0
    %12024 = vmatpush.bf16.msra.mxu0 %v11307
    %12025 = vmatpush.bf16.msra.mxu0 %v11303
    %12026 = vmatpush.bf16.msra.mxu0 %v11299
    %12027 = vmatpush.bf16.msra.mxu0 %v11295
    %12028 = vmatpush.bf16.msra.mxu0 %v11291
    %12029 = vmatpush.bf16.msra.mxu0 %v11287
    %12030 = vmatpush.bf16.msra.mxu0 %v11283
    %12031 = vmatpush.bf16.msra.mxu0 %v11279
    %12032 = vmatmul.bf16.gmra.mxu0 %v10110
    %v12033 = vpop.f32.mrf.mxu0
    %v12034 = vadd.f32 %v12021, %v12033
    %v12035 = vpop.f32.mrf.mxu0
    %12036 = vdwg.mxu0
    %12037 = vmatpush.bf16.msra.mxu0 %v11339
    %12038 = vmatpush.bf16.msra.mxu0 %v11335
    %12039 = vmatpush.bf16.msra.mxu0 %v11331
    %12040 = vmatpush.bf16.msra.mxu0 %v11327
    %12041 = vmatpush.bf16.msra.mxu0 %v11323
    %12042 = vmatpush.bf16.msra.mxu0 %v11319
    %12043 = vmatpush.bf16.msra.mxu0 %v11315
    %12044 = vmatpush.bf16.msra.mxu0 %v11311
    %12045 = vmatmul.bf16.gmra.mxu0 %v10111
    %v12046 = vpop.f32.mrf.mxu0
    %v12047 = vadd.f32 %v12034, %v12046
    %v12048 = vpop.f32.mrf.mxu0
    %12049 = vdwg.mxu0
    %12050 = vmatpush.bf16.msra.mxu0 %v11371
    %12051 = vmatpush.bf16.msra.mxu0 %v11367
    %12052 = vmatpush.bf16.msra.mxu0 %v11363
    %12053 = vmatpush.bf16.msra.mxu0 %v11359
    %12054 = vmatpush.bf16.msra.mxu0 %v11355
    %12055 = vmatpush.bf16.msra.mxu0 %v11351
    %12056 = vmatpush.bf16.msra.mxu0 %v11347
    %12057 = vmatpush.bf16.msra.mxu0 %v11343
    %12058 = vmatmul.bf16.gmra.mxu0 %v10112
    %v12059 = vpop.f32.mrf.mxu0
    %v12060 = vadd.f32 %v12047, %v12059
    %v12061 = vpop.f32.mrf.mxu0
    %12062 = vdwg.mxu0
    %12063 = vmatpush.bf16.msra.mxu0 %v11403
    %12064 = vmatpush.bf16.msra.mxu0 %v11399
    %12065 = vmatpush.bf16.msra.mxu0 %v11395
    %12066 = vmatpush.bf16.msra.mxu0 %v11391
    %12067 = vmatpush.bf16.msra.mxu0 %v11387
    %12068 = vmatpush.bf16.msra.mxu0 %v11383
    %12069 = vmatpush.bf16.msra.mxu0 %v11379
    %12070 = vmatpush.bf16.msra.mxu0 %v11375
    %12071 = vmatmul.bf16.gmra.mxu0 %v10113
    %v12072 = vpop.f32.mrf.mxu0
    %v12073 = vadd.f32 %v12060, %v12072
    %v12074 = vpop.f32.mrf.mxu0
    %12075 = vdwg.mxu0
    %v12076 = vmax.f32 %v11761, 0.0
    %v12077 = vmax.f32 %v11865, 0.0
    %v12078 = vmax.f32 %v11969, 0.0
    %v12079 = vmax.f32 %v12073, 0.0
    %v12080 = vpack.c.bf16 %v12076, %v12076
    %v12081 = vpack.c.bf16 %v12077, %v12077
    %v12082 = vpack.c.bf16 %v12078, %v12078
    %v12083 = vpack.c.bf16 %v12079, %v12079
    %v12084 = vld [vmem:[%s7] sm:$0xf]
    %v12085 = vld [vmem:[%s7 + $0x4] sm:$0xf]
    %v12086 = vld [vmem:[%s7 + $0x8] sm:$0xf]
    %v12087 = vld [vmem:[%s7 + $0xc] sm:$0xf]
    %v12088 = vld [vmem:[%s7 + $0x10] sm:$0xf]
    %v12089 = vld [vmem:[%s7 + $0x14] sm:$0xf]
    %v12090 = vld [vmem:[%s7 + $0x18] sm:$0xf]
    %v12091 = vld [vmem:[%s7 + $0x1c] sm:$0xf]
    %v12092 = vld [vmem:[%s7 + $0x20] sm:$0xf]
    %v12093 = vld [vmem:[%s7 + $0x24] sm:$0xf]
    %v12094 = vld [vmem:[%s7 + $0x28] sm:$0xf]
    %v12095 = vld [vmem:[%s7 + $0x2c] sm:$0xf]
    %v12096 = vld [vmem:[%s7 + $0x30] sm:$0xf]
    %v12097 = vld [vmem:[%s7 + $0x34] sm:$0xf]
    %v12098 = vld [vmem:[%s7 + $0x38] sm:$0xf]
    %v12099 = vld [vmem:[%s7 + $0x3c] sm:$0xf]
    %v12100 = vld [vmem:[%s7 + $0x40] sm:$0xf]
    %v12101 = vld [vmem:[%s7 + $0x44] sm:$0xf]
    %v12102 = vld [vmem:[%s7 + $0x48] sm:$0xf]
    %v12103 = vld [vmem:[%s7 + $0x4c] sm:$0xf]
    %v12104 = vld [vmem:[%s7 + $0x50] sm:$0xf]
    %v12105 = vld [vmem:[%s7 + $0x54] sm:$0xf]
    %v12106 = vld [vmem:[%s7 + $0x58] sm:$0xf]
    %v12107 = vld [vmem:[%s7 + $0x5c] sm:$0xf]
    %v12108 = vld [vmem:[%s7 + $0x60] sm:$0xf]
    %v12109 = vld [vmem:[%s7 + $0x64] sm:$0xf]
    %v12110 = vld [vmem:[%s7 + $0x68] sm:$0xf]
    %v12111 = vld [vmem:[%s7 + $0x6c] sm:$0xf]
    %v12112 = vld [vmem:[%s7 + $0x70] sm:$0xf]
    %v12113 = vld [vmem:[%s7 + $0x74] sm:$0xf]
    %v12114 = vld [vmem:[%s7 + $0x78] sm:$0xf]
    %v12115 = vld [vmem:[%s7 + $0x7c] sm:$0xf]
    %v12116 = vld [vmem:[%s7 + $0x80] sm:$0xf]
    %v12117 = vld [vmem:[%s7 + $0x84] sm:$0xf]
    %v12118 = vld [vmem:[%s7 + $0x88] sm:$0xf]
    %v12119 = vld [vmem:[%s7 + $0x8c] sm:$0xf]
    %v12120 = vld [vmem:[%s7 + $0x90] sm:$0xf]
    %v12121 = vld [vmem:[%s7 + $0x94] sm:$0xf]
    %v12122 = vld [vmem:[%s7 + $0x98] sm:$0xf]
    %v12123 = vld [vmem:[%s7 + $0x9c] sm:$0xf]
    %v12124 = vld [vmem:[%s7 + $0xa0] sm:$0xf]
    %v12125 = vld [vmem:[%s7 + $0xa4] sm:$0xf]
    %v12126 = vld [vmem:[%s7 + $0xa8] sm:$0xf]
    %v12127 = vld [vmem:[%s7 + $0xac] sm:$0xf]
    %v12128 = vld [vmem:[%s7 + $0xb0] sm:$0xf]
    %v12129 = vld [vmem:[%s7 + $0xb4] sm:$0xf]
    %v12130 = vld [vmem:[%s7 + $0xb8] sm:$0xf]
    %v12131 = vld [vmem:[%s7 + $0xbc] sm:$0xf]
    %v12132 = vld [vmem:[%s7 + $0xc0] sm:$0xf]
    %v12133 = vld [vmem:[%s7 + $0xc4] sm:$0xf]
    %v12134 = vld [vmem:[%s7 + $0xc8] sm:$0xf]
    %v12135 = vld [vmem:[%s7 + $0xcc] sm:$0xf]
    %v12136 = vld [vmem:[%s7 + $0xd0] sm:$0xf]
    %v12137 = vld [vmem:[%s7 + $0xd4] sm:$0xf]
    %v12138 = vld [vmem:[%s7 + $0xd8] sm:$0xf]
    %v12139 = vld [vmem:[%s7 + $0xdc] sm:$0xf]
    %v12140 = vld [vmem:[%s7 + $0xe0] sm:$0xf]
    %v12141 = vld [vmem:[%s7 + $0xe4] sm:$0xf]
    %v12142 = vld [vmem:[%s7 + $0xe8] sm:$0xf]
    %v12143 = vld [vmem:[%s7 + $0xec] sm:$0xf]
    %v12144 = vld [vmem:[%s7 + $0xf0] sm:$0xf]
    %v12145 = vld [vmem:[%s7 + $0xf4] sm:$0xf]
    %v12146 = vld [vmem:[%s7 + $0xf8] sm:$0xf]
    %v12147 = vld [vmem:[%s7 + $0xfc] sm:$0xf]
    %v12148 = vld [vmem:[%s8] sm:$0x1]
    %v12150 = vperm.slane %v12148, 0
    %v12216 = vunpack.c.l.b16 %v12084
    %v12217 = vunpack.c.l.b16 %v12085
    %v12218 = vunpack.c.l.b16 %v12086
    %v12219 = vunpack.c.l.b16 %v12087
    %v12220 = vunpack.c.l.b16 %v12088
    %v12221 = vunpack.c.l.b16 %v12089
    %v12222 = vunpack.c.l.b16 %v12090
    %v12223 = vunpack.c.l.b16 %v12091
    %v12224 = vunpack.c.l.b16 %v12092
    %v12225 = vunpack.c.l.b16 %v12093
    %v12226 = vunpack.c.l.b16 %v12094
    %v12227 = vunpack.c.l.b16 %v12095
    %v12228 = vunpack.c.l.b16 %v12096
    %v12229 = vunpack.c.l.b16 %v12097
    %v12230 = vunpack.c.l.b16 %v12098
    %v12231 = vunpack.c.l.b16 %v12099
    %v12232 = vunpack.c.l.b16 %v12100
    %v12233 = vunpack.c.l.b16 %v12101
    %v12234 = vunpack.c.l.b16 %v12102
    %v12235 = vunpack.c.l.b16 %v12103
    %v12236 = vunpack.c.l.b16 %v12104
    %v12237 = vunpack.c.l.b16 %v12105
    %v12238 = vunpack.c.l.b16 %v12106
    %v12239 = vunpack.c.l.b16 %v12107
    %v12240 = vunpack.c.l.b16 %v12108
    %v12241 = vunpack.c.l.b16 %v12109
    %v12242 = vunpack.c.l.b16 %v12110
    %v12243 = vunpack.c.l.b16 %v12111
    %v12244 = vunpack.c.l.b16 %v12112
    %v12245 = vunpack.c.l.b16 %v12113
    %v12246 = vunpack.c.l.b16 %v12114
    %v12247 = vunpack.c.l.b16 %v12115
    %v12248 = vunpack.c.l.b16 %v12116
    %v12249 = vunpack.c.l.b16 %v12117
    %v12250 = vunpack.c.l.b16 %v12118
    %v12251 = vunpack.c.l.b16 %v12119
    %v12252 = vunpack.c.l.b16 %v12120
    %v12253 = vunpack.c.l.b16 %v12121
    %v12254 = vunpack.c.l.b16 %v12122
    %v12255 = vunpack.c.l.b16 %v12123
    %v12256 = vunpack.c.l.b16 %v12124
    %v12257 = vunpack.c.l.b16 %v12125
    %v12258 = vunpack.c.l.b16 %v12126
    %v12259 = vunpack.c.l.b16 %v12127
    %v12260 = vunpack.c.l.b16 %v12128
    %v12261 = vunpack.c.l.b16 %v12129
    %v12262 = vunpack.c.l.b16 %v12130
    %v12263 = vunpack.c.l.b16 %v12131
    %v12264 = vunpack.c.l.b16 %v12132
    %v12265 = vunpack.c.l.b16 %v12133
    %v12266 = vunpack.c.l.b16 %v12134
    %v12267 = vunpack.c.l.b16 %v12135
    %v12268 = vunpack.c.l.b16 %v12136
    %v12269 = vunpack.c.l.b16 %v12137
    %v12270 = vunpack.c.l.b16 %v12138
    %v12271 = vunpack.c.l.b16 %v12139
    %v12272 = vunpack.c.l.b16 %v12140
    %v12273 = vunpack.c.l.b16 %v12141
    %v12274 = vunpack.c.l.b16 %v12142
    %v12275 = vunpack.c.l.b16 %v12143
    %v12276 = vunpack.c.l.b16 %v12144
    %v12277 = vunpack.c.l.b16 %v12145
    %v12278 = vunpack.c.l.b16 %v12146
    %v12279 = vunpack.c.l.b16 %v12147
    %v12280 = vpack.c.b16 %v12217, %v12216
    %v12281 = vpack.c.b16 %v12219, %v12218
    %v12282 = vpack.c.b16 %v12221, %v12220
    %v12283 = vpack.c.b16 %v12223, %v12222
    %v12284 = vpack.c.b16 %v12225, %v12224
    %v12285 = vpack.c.b16 %v12227, %v12226
    %v12286 = vpack.c.b16 %v12229, %v12228
    %v12287 = vpack.c.b16 %v12231, %v12230
    %v12288 = vpack.c.b16 %v12233, %v12232
    %v12289 = vpack.c.b16 %v12235, %v12234
    %v12290 = vpack.c.b16 %v12237, %v12236
    %v12291 = vpack.c.b16 %v12239, %v12238
    %v12292 = vpack.c.b16 %v12241, %v12240
    %v12293 = vpack.c.b16 %v12243, %v12242
    %v12294 = vpack.c.b16 %v12245, %v12244
    %v12295 = vpack.c.b16 %v12247, %v12246
    %v12296 = vpack.c.b16 %v12249, %v12248
    %v12297 = vpack.c.b16 %v12251, %v12250
    %v12298 = vpack.c.b16 %v12253, %v12252
    %v12299 = vpack.c.b16 %v12255, %v12254
    %v12300 = vpack.c.b16 %v12257, %v12256
    %v12301 = vpack.c.b16 %v12259, %v12258
    %v12302 = vpack.c.b16 %v12261, %v12260
    %v12303 = vpack.c.b16 %v12263, %v12262
    %v12304 = vpack.c.b16 %v12265, %v12264
    %v12305 = vpack.c.b16 %v12267, %v12266
    %v12306 = vpack.c.b16 %v12269, %v12268
    %v12307 = vpack.c.b16 %v12271, %v12270
    %v12308 = vpack.c.b16 %v12273, %v12272
    %v12309 = vpack.c.b16 %v12275, %v12274
    %v12310 = vpack.c.b16 %v12277, %v12276
    %v12311 = vpack.c.b16 %v12279, %v12278
    %12344 = vmatpush.bf16.msra.mxu0 %v12287
    %12345 = vmatpush.bf16.msra.mxu0 %v12286
    %12346 = vmatpush.bf16.msra.mxu0 %v12285
    %12347 = vmatpush.bf16.msra.mxu0 %v12284
    %12348 = vmatpush.bf16.msra.mxu0 %v12283
    %12349 = vmatpush.bf16.msra.mxu0 %v12282
    %12350 = vmatpush.bf16.msra.mxu0 %v12281
    %12351 = vmatpush.bf16.msra.mxu0 %v12280
    %12352 = vmatmul.bf16.gmra.mxu0 %v12080
    %v12353 = vpop.f32.mrf.mxu0
    %v12354 = vadd.f32 %v12150, %v12353
    %v12355 = vpop.f32.mrf.mxu0
    %12356 = vdwg.mxu0
    %12357 = vmatpush.bf16.msra.mxu0 %v12295
    %12358 = vmatpush.bf16.msra.mxu0 %v12294
    %12359 = vmatpush.bf16.msra.mxu0 %v12293
    %12360 = vmatpush.bf16.msra.mxu0 %v12292
    %12361 = vmatpush.bf16.msra.mxu0 %v12291
    %12362 = vmatpush.bf16.msra.mxu0 %v12290
    %12363 = vmatpush.bf16.msra.mxu0 %v12289
    %12364 = vmatpush.bf16.msra.mxu0 %v12288
    %12365 = vmatmul.bf16.gmra.mxu0 %v12081
    %v12366 = vpop.f32.mrf.mxu0
    %v12367 = vadd.f32 %v12354, %v12366
    %v12368 = vpop.f32.mrf.mxu0
    %12369 = vdwg.mxu0
    %12370 = vmatpush.bf16.msra.mxu0 %v12303
    %12371 = vmatpush.bf16.msra.mxu0 %v12302
    %12372 = vmatpush.bf16.msra.mxu0 %v12301
    %12373 = vmatpush.bf16.msra.mxu0 %v12300
    %12374 = vmatpush.bf16.msra.mxu0 %v12299
    %12375 = vmatpush.bf16.msra.mxu0 %v12298
    %12376 = vmatpush.bf16.msra.mxu0 %v12297
    %12377 = vmatpush.bf16.msra.mxu0 %v12296
    %12378 = vmatmul.bf16.gmra.mxu0 %v12082
    %v12379 = vpop.f32.mrf.mxu0
    %v12380 = vadd.f32 %v12367, %v12379
    %v12381 = vpop.f32.mrf.mxu0
    %12382 = vdwg.mxu0
    %12383 = vmatpush.bf16.msra.mxu0 %v12311
    %12384 = vmatpush.bf16.msra.mxu0 %v12310
    %12385 = vmatpush.bf16.msra.mxu0 %v12309
    %12386 = vmatpush.bf16.msra.mxu0 %v12308
    %12387 = vmatpush.bf16.msra.mxu0 %v12307
    %12388 = vmatpush.bf16.msra.mxu0 %v12306
    %12389 = vmatpush.bf16.msra.mxu0 %v12305
    %12390 = vmatpush.bf16.msra.mxu0 %v12304
    %12391 = vmatmul.bf16.gmra.mxu0 %v12083
    %v12392 = vpop.f32.mrf.mxu0
    %v12393 = vadd.f32 %v12380, %v12392
    %v12394 = vpop.f32.mrf.mxu0
    %12395 = vdwg.mxu0
    %vm12396 = vcmask 80896
    %v12397 = vsel %vm12396, %v12393, -inf
    %12398 = vmax.xlane.f32.xlu0 %v12397
    %v12399 = vpop.xlane.xlu0 %12398
    %v12400 = vsub.f32 %v12393, %v12399
    %v12401 = vmul.f32 %v12400, 1.442695
    %v12402 = vpow.pop %v12401
    %v12403 = vsel %vm12396, %v12402, 0.0
    %12404 = vadd.xlane.f32.xlu0 %v12403
    %v12405 = vpop.xlane.xlu0 %12404
    %v12406 = vrcp.pop %v12405
    %v12407 = vmul.f32 %v12405, %v12406
    %v12408 = vsub.f32 1.0, %v12407
    %v12409 = vmul.f32 %v12406, %v12408
    %v12410 = vadd.f32 %v12406, %v12409
    %vm12411 = vweird.f32 %v12405
    %vm12412 = vweird.f32 %v12406
    %vm12413 = vmor %vm12411, %vm12412
    %v12414 = vsel %vm12413, %v12406, %v12410
    %v12415 = vand.u32 2147483647, %v12405
    %vm12416 = vcmp.eq.f32.partialorder %v12415, 8.507059e+37
    %v12417 = vand.u32 %v12405, 2147483648
    %v12418 = vor.u32 1.1754944e-38, %v12417
    %v12419 = vsel %vm12416, %v12418, %v12414
    %v12420 = vmul.f32 %v12402, %v12419
    %vm12421 = vcmask 74752
    %12422 = vst.msk [vmem:[#allocation3] sm:$0x3] %vm12421, %v12420
    // Predicated region
    $region38: #{lenet5_forward.1} parent=1 // pred_check
      _
    $region39: #{lenet5_forward.1} parent=1 // pred_check_branch
      %12424 = sbr.rel (0) target = $region41
    $region40: #{lenet5_forward.1} parent=1 // pred_region
      %12426 = vsyncadd [#allocation4], 0
      %s12428 = sshll.u32 [#allocation3], 4
      %s12429 = int_to_ptr.vmem [resolvable:$true] %s12428
      %s12430 = sshll.u32 %s9, 4
      %s12431 = int_to_ptr.hbm [resolvable:$true] %s12430
      %12433 = dma.vmem_to_hbm [thread:$0]  %s12429, 32, %s12431, [#allocation4]
    $region41: #{lenet5_forward.1} parent=1 // pred_fallthru
      _
    // Predicated region
    $region42: #{lenet5_forward.1} parent=1 // pred_check
      _
    $region43: #{lenet5_forward.1} parent=1 // pred_check_branch
      %12435 = sbr.rel (0) target = $region45
    $region44: #{lenet5_forward.1} parent=1 // pred_region
      %12437 = dma.done [#allocation4], 32
    $region45: #{lenet5_forward.1} parent=1 // pred_fallthru
      _
    %12438 = vsyncpa [#allocation4], 1

</llo_original>
